<compile_context>
chip_gen: v5e
topology: v5e:2x2
jax: 0.10.0
libtpu: 0.0.40
codegen_flags: <defaults>
</compile_context>

<pallas_src>
import jax
import jax.numpy as jnp
from jax.experimental import pallas as pl
from jax.experimental.pallas import tpu as pltpu

# ----------------------------- configuration -------------------------------
B = 2             # batch
C_LEN = 16        # context length
Q_LEN = 8         # question length
L_TOT = C_LEN + Q_LEN          # 24 tokens per batch element (context ++ question)
M_TOK = B * L_TOT              # 48 token rows (time-major: row = t*B + b)
CHAR_LEN = 12     # chars per word
W_VOCAB = 50
C_VOCAB = 30
W_EMB = 16        # word embedding size
C_EMB = 8         # char embedding size
HIDDEN = 8        # hidden_size
D = 2 * HIDDEN    # encoder output dim == attention hidden (2 * hidden_size)
CNN_K = 3         # char CNN kernel width
CNN_P = CHAR_LEN - CNN_K + 1   # conv output positions (valid conv)
H3 = 3 * HIDDEN
H4 = 4 * HIDDEN   # LSTM gates per direction
H8 = 8 * HIDDEN   # LSTM gates, both directions stacked
EMB_IN = W_EMB + CHAR_LEN * C_EMB      # 112 fused embedding-matmul input cols
EMB_OUT = HIDDEN + CNN_P * HIDDEN      # 88  fused embedding-matmul output cols
NEG_INF = -1e30   # mask constant (kept in f32 only)


# ----------------------------- fused Pallas kernel --------------------------
def _bidaf_fused_kernel(emb_ref, mlstm_ref, cmask_ref, qmask_ref,
                        embw_ref, cnnb_ref,
                        hw0_ref, hb0_ref, hw1_ref, hb1_ref,
                        wih_ref, bih_ref, whh_ref, attw_ref,
                        out_ref, ys_ref):
    # ===== 1. embedding: fused word-proj + block-Toeplitz char-CNN, 2x highway
    # One MXU push does both the word projection (cols [0:H]) and all CNN_P
    # im2col windows (cols [H:]), thanks to the block-diag/Toeplitz weight.
    y = jnp.dot(emb_ref[...], embw_ref[...],
                preferred_element_type=jnp.float32)            # (M, EMB_OUT)
    wp = y[:, 0:HIDDEN]                                        # word projection
    conv = jax.nn.relu(y[:, HIDDEN:] + cnnb_ref[...])          # (M, CNN_P*H)
    # max-pool over conv positions as a balanced maximum tree over lane groups
    parts = [conv[:, p * HIDDEN:(p + 1) * HIDDEN] for p in range(CNN_P)]
    while len(parts) > 1:
        nxt = [jnp.maximum(parts[k], parts[k + 1])
               for k in range(0, len(parts) - 1, 2)]
        if len(parts) % 2:
            nxt.append(parts[-1])
        parts = nxt
    x = jnp.concatenate([wp, parts[0]], axis=-1)               # (M, D)

    # 2-layer highway; [Wt|Wg] fused so each layer is one matmul.
    for hw_ref, hb_ref in ((hw0_ref, hb0_ref), (hw1_ref, hb1_ref)):
        tg = jnp.dot(x, hw_ref[...], preferred_element_type=jnp.float32) + hb_ref[...]
        t = jax.nn.relu(tg[:, :D])
        g = jax.nn.sigmoid(tg[:, D:])
        x = g * t + (1.0 - g) * x                              # (M, D)

    # ===== 2. BiLSTM encoder (1 layer), fwd+bwd fused per step ===============
    # Gate-input projection for BOTH directions in one matmul; gate column
    # order per direction is [i, f, o, g] (repacked in the wrapper).
    xp = jnp.dot(x, wih_ref[...], preferred_element_type=jnp.float32) + bih_ref[...]
    whh = whh_ref[...]                                         # (H, 8H)
    m_lstm = mlstm_ref[...]                                    # (2B, L_TOT) per-step mask

    # TODO(synk): the recurrence is inherently sequential; it is fully unrolled
    # in-kernel (T<=16) so every ref index is static.
    def run_seq(base, seq_len):
        # packed state rows: [fwd_b0, fwd_b1, bwd_b0, bwd_b1]
        h = jnp.zeros((2 * B, HIDDEN), jnp.float32)
        c = jnp.zeros((2 * B, HIDDEN), jnp.float32)
        for t in range(seq_len):
            tf = base + t                                      # fwd timestep
            tb = base + (seq_len - 1 - t)                      # bwd timestep
            ms = m_lstm[:, base + t: base + t + 1]             # (2B, 1) 0/1 mask
            # per-step gate inputs for both directions (fwd@tf, bwd@tb)
            xin = jnp.concatenate([xp[tf * B:(tf + 1) * B, 0:H4],
                                   xp[tb * B:(tb + 1) * B, H4:H8]], axis=0)
            # one recurrent matmul for both directions; keep block-diag slices
            rec = jnp.dot(h, whh, preferred_element_type=jnp.float32)   # (2B, 8H)
            gates = xin + jnp.concatenate([rec[0:B, 0:H4],
                                           rec[B:, H4:H8]], axis=0)     # (2B, 4H)
            sg = jax.nn.sigmoid(gates[:, 0:H3])                # i, f, o (both dirs)
            gg = jnp.tanh(gates[:, H3:H4])                     # g (both dirs)
            i_g = sg[:, 0:HIDDEN]
            f_g = sg[:, HIDDEN:2 * HIDDEN]
            o_g = sg[:, 2 * HIDDEN:H3]
            c_new = f_g * c + i_g * gg
            h_new = o_g * jnp.tanh(c_new)
            # pack_padded semantics: pad outputs = 0, state frozen at pads.
            h_out = ms * h_new
            ys_ref[tf, :, 0:HIDDEN] = h_out[0:B]               # fwd half of enc row
            ys_ref[tb, :, HIDDEN:D] = h_out[B:]                # bwd half of enc row
            h = h + ms * (h_new - h)
            c = c + ms * (c_new - c)

    run_seq(0, C_LEN)        # context
    run_seq(C_LEN, Q_LEN)    # question

    # ===== 3. BiDAF attention, batched over b ================================
    ys = ys_ref[...]                                           # (L_TOT, B, D)
    cmat = jnp.stack([ys[0:C_LEN, 0, :], ys[0:C_LEN, 1, :]], axis=0)   # (B, Lc, D)
    qmat = jnp.stack([ys[C_LEN:, 0, :], ys[C_LEN:, 1, :]], axis=0)     # (B, Lq, D)

    cmask = cmask_ref[...]                                     # (B, Lc, 1)
    qmask = qmask_ref[...]                                     # (B, 1, Lq)
    one_m_c = 1.0 - cmask
    one_m_q = 1.0 - qmask

    attw = attw_ref[...]                                       # (4, D) packed weights
    cw = attw[0]
    qw = attw[1]
    cqw = attw[2]
    bias = attw[3:4, 0:1]                                      # (1, 1)

    # similarity: fold the rank-1 terms (c@w_c, q@w_q) and the bias into the
    # same contraction via two extra columns -> one batched MXU einsum.
    s0 = jnp.sum(cmat * cw, axis=-1, keepdims=True)            # (B, Lc, 1)
    s1 = jnp.sum(qmat * qw, axis=-1, keepdims=True) + bias     # (B, Lq, 1)
    c_ext = jnp.concatenate([cmat * cqw, s0,
                             jnp.ones((B, C_LEN, 1), jnp.float32)], axis=-1)
    q_ext = jnp.concatenate([qmat,
                             jnp.ones((B, Q_LEN, 1), jnp.float32), s1], axis=-1)
    s = jnp.einsum('bcd,bqd->bcq', c_ext, q_ext,
                   preferred_element_type=jnp.float32)         # (B, Lc, Lq)

    def msoftmax(logits, axis):
        m = jnp.max(logits, axis=axis, keepdims=True)
        e = jnp.exp(logits - m)
        return e * pl.reciprocal(jnp.sum(e, axis=axis, keepdims=True), approx=True)

    # masked softmax over q (dim=-1) and over c (dim=1), as in docqa (f32 only)
    sm_q = msoftmax(qmask * s + one_m_q * NEG_INF, axis=-1)    # (B, Lc, Lq)
    sm_c = msoftmax(cmask * s + one_m_c * NEG_INF, axis=1)     # (B, Lc, Lq)

    a = jnp.einsum('bcq,bqd->bcd', sm_q, qmat,
                   preferred_element_type=jnp.float32)         # (B, Lc, D)
    tmat = jnp.einsum('bcq,bkq->bck', sm_q, sm_c,
                      preferred_element_type=jnp.float32)      # (B, Lc, Lc)
    bb = jnp.einsum('bck,bkd->bcd', tmat, cmat,
                    preferred_element_type=jnp.float32)        # (B, Lc, D)

    g_all = jnp.concatenate([cmat, a, cmat * a, cmat * bb], axis=-1)    # (B, Lc, 4D)
    # lane-dense (16, 128) output slab: [b0 | b1] side by side, one full store
    out_ref[...] = jnp.concatenate([g_all[0], g_all[1]], axis=-1)


def _full_spec(shape):
    zeros = (0,) * len(shape)
    return pl.BlockSpec(shape, lambda i, _z=zeros: _z)


# ----------------------------- forward wrapper ------------------------------
def bidaf_forward(params, cw_idxs, cc_idxs, qw_idxs, qc_idxs):
    cm = (cw_idxs != 0).astype(jnp.float32)                    # (B, Lc)
    qm = (qw_idxs != 0).astype(jnp.float32)                    # (B, Lq)

    # Embedding-table gathers stay in XLA (glue); rows laid out time-major
    # (row = t*B + b) so the in-kernel LSTM reads contiguous (B, ·) slabs.
    def gather_time_major(w_idxs, c_idxs):
        L = w_idxs.shape[1]
        w = params["word_emb"][w_idxs]                         # (B, L, W_EMB)
        ch = params["char_emb"][c_idxs]                        # (B, L, CHAR_LEN, C_EMB)
        w_tm = w.transpose(1, 0, 2).reshape(L * B, W_EMB)
        ch_tm = ch.transpose(1, 0, 2, 3).reshape(L * B, CHAR_LEN * C_EMB)
        return jnp.concatenate([w_tm, ch_tm], axis=1)          # (L*B, EMB_IN)

    emb_in = jnp.concatenate([gather_time_major(cw_idxs, cc_idxs),
                              gather_time_major(qw_idxs, qc_idxs)], axis=0)  # (M, 112)

    # per-step LSTM mask, rows = [fwd_b0, fwd_b1, bwd_b0, bwd_b1], cols = step
    m_lstm = jnp.concatenate(
        [jnp.concatenate([cm, cm[:, ::-1]], axis=0),
         jnp.concatenate([qm, qm[:, ::-1]], axis=0)], axis=1)  # (2B, L_TOT)
    cmask3 = cm[:, :, None]                                    # (B, Lc, 1)
    qmask3 = qm[:, None, :]                                    # (B, 1, Lq)

    # ---- one-time weight packing (cheap XLA concats; one DMA per operand) ----
    # fused word-proj + block-Toeplitz char-CNN weight
    embw = jnp.zeros((EMB_IN, EMB_OUT), jnp.float32)
    embw = embw.at[0:W_EMB, 0:HIDDEN].set(params["proj_w"])
    for p in range(CNN_P):
        r0 = W_EMB + p * C_EMB
        embw = embw.at[r0:r0 + CNN_K * C_EMB,
                       HIDDEN + p * HIDDEN: HIDDEN + (p + 1) * HIDDEN].set(params["cnn_w"])
    cnnb = jnp.tile(params["cnn_b"], CNN_P).reshape(1, CNN_P * HIDDEN)

    hw0 = jnp.concatenate([params["hwy_wt0"], params["hwy_wg0"]], axis=1)      # (D, 2D)
    hb0 = jnp.concatenate([params["hwy_bt0"], params["hwy_bg0"]]).reshape(1, 2 * D)
    hw1 = jnp.concatenate([params["hwy_wt1"], params["hwy_wg1"]], axis=1)
    hb1 = jnp.concatenate([params["hwy_bt1"], params["hwy_bg1"]]).reshape(1, 2 * D)

    # LSTM weights: torch gate-row blocks [i,f,g,o] -> column order [i,f,o,g],
    # transposed, fwd|bwd stacked along columns.
    def repack_w(w):                       # (4H, X) -> (X, 4H)
        return jnp.concatenate([w[0:HIDDEN], w[HIDDEN:2 * HIDDEN],
                                w[3 * HIDDEN:4 * HIDDEN],
                                w[2 * HIDDEN:3 * HIDDEN]], axis=0).T

    def repack_b(b):
        return jnp.concatenate([b[0:HIDDEN], b[HIDDEN:2 * HIDDEN],
                                b[3 * HIDDEN:4 * HIDDEN], b[2 * HIDDEN:3 * HIDDEN]])

    ef, eb = params["enc"]["fwd"], params["enc"]["bwd"]
    wih = jnp.concatenate([repack_w(ef["w_ih"]), repack_w(eb["w_ih"])], axis=1)   # (D, 8H)
    whh = jnp.concatenate([repack_w(ef["w_hh"]), repack_w(eb["w_hh"])], axis=1)   # (H, 8H)
    bih = jnp.concatenate([repack_b(ef["b_ih"] + ef["b_hh"]),
                           repack_b(eb["b_ih"] + eb["b_hh"])]).reshape(1, H8)

    att = params["att"]
    attw = jnp.stack([
        att["c_weight"][:, 0],
        att["q_weight"][0],
        att["cq_weight"][0],
        jnp.concatenate([att["bias"].reshape(1), jnp.zeros((D - 1,), jnp.float32)]),
    ], axis=0)                                                                    # (4, D)

    inputs = (emb_in, m_lstm, cmask3, qmask3, embw, cnnb,
              hw0, hb0, hw1, hb1, wih, bih, whh, attw)

    out2d = pl.pallas_call(
        _bidaf_fused_kernel,
        out_shape=jax.ShapeDtypeStruct((C_LEN, B * 4 * D), jnp.float32),  # (16, 128)
        grid=(1,),
        in_specs=[_full_spec(a.shape) for a in inputs],
        out_specs=_full_spec((C_LEN, B * 4 * D)),
        scratch_shapes=[
            pltpu.VMEM((L_TOT, B, D), jnp.float32),   # BiLSTM outputs: fwd|bwd lane-adjacent
        ],
        compiler_params=pltpu.CompilerParams(dimension_semantics=("arbitrary",)),
    )(*inputs)

    # layout plumbing only: (Lc, B*4D) slab -> (B, Lc, 4D)
    return out2d.reshape(C_LEN, B, 4 * D).transpose(1, 0, 2)


# ----------------------------- parameter init ------------------------------
def init_params(key):
    ks = jax.random.split(key, 32)

    def nrm(k, shape, scale=0.1):
        return (scale * jax.random.normal(k, shape)).astype(jnp.float32)

    p = {
        "word_emb": nrm(ks[0], (W_VOCAB, W_EMB)),        # "pretrained" embedding
        "char_emb": nrm(ks[1], (C_VOCAB, C_EMB)),
        "proj_w": nrm(ks[2], (W_EMB, HIDDEN)),           # Linear(w_emb, H, bias=False)
        "cnn_w": nrm(ks[3], (CNN_K * C_EMB, HIDDEN)),
        "cnn_b": nrm(ks[4], (HIDDEN,)),
    }
    for i in range(2):
        p[f"hwy_wt{i}"] = nrm(ks[5 + 4 * i], (D, D))
        p[f"hwy_bt{i}"] = nrm(ks[6 + 4 * i], (D,))
        p[f"hwy_wg{i}"] = nrm(ks[7 + 4 * i], (D, D))
        p[f"hwy_bg{i}"] = nrm(ks[8 + 4 * i], (D,))

    def lstm_dir(base):
        return {
            "w_ih": nrm(ks[base + 0], (4 * HIDDEN, D)),
            "w_hh": nrm(ks[base + 1], (4 * HIDDEN, HIDDEN)),
            "b_ih": nrm(ks[base + 2], (4 * HIDDEN,)),
            "b_hh": nrm(ks[base + 3], (4 * HIDDEN,)),
        }

    p["enc"] = {"fwd": lstm_dir(13), "bwd": lstm_dir(17)}
    p["att"] = {
        "c_weight": nrm(ks[21], (D, 1)),
        "q_weight": nrm(ks[22], (1, D)),   # stored row-wise (torch: (D,1))
        "cq_weight": nrm(ks[23], (1, D)),  # torch: (1,1,D)
        "bias": nrm(ks[24], (1, 1)),       # torch: (1,)
    }
    return p


# --------------------------------- main -------------------------------------
if __name__ == "__main__":
    root = jax.random.PRNGKey(0)
    kp, k1, k2, k3, k4 = jax.random.split(root, 5)
    params = init_params(kp)

    cw_idxs = jax.random.randint(k1, (B, C_LEN), 1, W_VOCAB, dtype=jnp.int32)
    qw_idxs = jax.random.randint(k2, (B, Q_LEN), 1, W_VOCAB, dtype=jnp.int32)
    # introduce padding (idx 0) at the tail of the second batch element
    cw_idxs = cw_idxs.at[1, 12:].set(0)
    qw_idxs = qw_idxs.at[1, 6:].set(0)
    cc_idxs = jax.random.randint(k3, (B, C_LEN, CHAR_LEN), 1, C_VOCAB, dtype=jnp.int32)
    qc_idxs = jax.random.randint(k4, (B, Q_LEN, CHAR_LEN), 1, C_VOCAB, dtype=jnp.int32)

    fwd = jax.jit(bidaf_forward)
    out = fwd(params, cw_idxs, cc_idxs, qw_idxs, qc_idxs)
    out = jax.block_until_ready(out)

    assert out.shape == (B, C_LEN, 4 * D), out.shape
    assert bool(jnp.all(jnp.isfinite(out)))
    print("KERNEL_OK")
</pallas_src>

<mosaic_0001>
module attributes {stable_mosaic.version = 11 : i64} {
  func.func @_bidaf_fused_kernel(%arg0: i32, %arg1: memref<48x112xf32, #tpu.memory_space<vmem>>, %arg2: memref<4x24xf32, #tpu.memory_space<vmem>>, %arg3: memref<2x16x1xf32, #tpu.memory_space<vmem>>, %arg4: memref<2x1x8xf32, #tpu.memory_space<vmem>>, %arg5: memref<112x88xf32, #tpu.memory_space<vmem>>, %arg6: memref<1x80xf32, #tpu.memory_space<vmem>>, %arg7: memref<16x32xf32, #tpu.memory_space<vmem>>, %arg8: memref<1x32xf32, #tpu.memory_space<vmem>>, %arg9: memref<16x32xf32, #tpu.memory_space<vmem>>, %arg10: memref<1x32xf32, #tpu.memory_space<vmem>>, %arg11: memref<16x64xf32, #tpu.memory_space<vmem>>, %arg12: memref<1x64xf32, #tpu.memory_space<vmem>>, %arg13: memref<8x64xf32, #tpu.memory_space<vmem>>, %arg14: memref<4x16xf32, #tpu.memory_space<vmem>>, %arg15: memref<16x128xf32, #tpu.memory_space<vmem>>, %arg16: memref<24x2x16xf32, #tpu.memory_space<vmem>>) attributes {dimension_semantics = [#tpu.dimension_semantics<arbitrary>], iteration_bounds = array<i64: 1>, scalar_prefetch = 0 : i64, scratch_operands = 1 : i64, tpu.core_type = #tpu.core_type<tc>, window_params = [{pipeline_mode = #tpu.pipeline_mode<synchronous>, transform_indices = @transform_0, window_bounds = array<i64: 48, 112>}, {pipeline_mode = #tpu.pipeline_mode<synchronous>, transform_indices = @transform_1, window_bounds = array<i64: 4, 24>}, {pipeline_mode = #tpu.pipeline_mode<synchronous>, transform_indices = @transform_2, window_bounds = array<i64: 2, 16, 1>}, {pipeline_mode = #tpu.pipeline_mode<synchronous>, transform_indices = @transform_3, window_bounds = array<i64: 2, 1, 8>}, {pipeline_mode = #tpu.pipeline_mode<synchronous>, transform_indices = @transform_4, window_bounds = array<i64: 112, 88>}, {pipeline_mode = #tpu.pipeline_mode<synchronous>, transform_indices = @transform_5, window_bounds = array<i64: 1, 80>}, {pipeline_mode = #tpu.pipeline_mode<synchronous>, transform_indices = @transform_6, window_bounds = array<i64: 16, 32>}, {pipeline_mode = #tpu.pipeline_mode<synchronous>, transform_indices = @transform_7, window_bounds = array<i64: 1, 32>}, {pipeline_mode = #tpu.pipeline_mode<synchronous>, transform_indices = @transform_8, window_bounds = array<i64: 16, 32>}, {pipeline_mode = #tpu.pipeline_mode<synchronous>, transform_indices = @transform_9, window_bounds = array<i64: 1, 32>}, {pipeline_mode = #tpu.pipeline_mode<synchronous>, transform_indices = @transform_10, window_bounds = array<i64: 16, 64>}, {pipeline_mode = #tpu.pipeline_mode<synchronous>, transform_indices = @transform_11, window_bounds = array<i64: 1, 64>}, {pipeline_mode = #tpu.pipeline_mode<synchronous>, transform_indices = @transform_12, window_bounds = array<i64: 8, 64>}, {pipeline_mode = #tpu.pipeline_mode<synchronous>, transform_indices = @transform_13, window_bounds = array<i64: 4, 16>}, {pipeline_mode = #tpu.pipeline_mode<synchronous>, transform_indices = @transform_14, window_bounds = array<i64: 16, 128>}]} {
    %c0 = arith.constant 0 : index
    %c0_0 = arith.constant 0 : index
    %0 = vector.load %arg1[%c0, %c0_0] : memref<48x112xf32, #tpu.memory_space<vmem>>, vector<48x112xf32>
    %c0_1 = arith.constant 0 : index
    %c0_2 = arith.constant 0 : index
    %1 = vector.load %arg5[%c0_1, %c0_2] : memref<112x88xf32, #tpu.memory_space<vmem>>, vector<112x88xf32>
    %cst = arith.constant dense<0.000000e+00> : vector<48x88xf32>
    %2 = tpu.matmul %0, %1, %cst {dimension_numbers = #tpu.dot_dimension_numbers<[1], [0], [0], [1], [0, 0, 1, 1], [], []>} : vector<48x112xf32>, vector<112x88xf32>, vector<48x88xf32> -> vector<48x88xf32>
    %3 = vector.extract_strided_slice %2 {offsets = [0, 0], sizes = [48, 8], strides = [1, 1]} : vector<48x88xf32> to vector<48x8xf32>
    %4 = vector.extract_strided_slice %2 {offsets = [0, 8], sizes = [48, 80], strides = [1, 1]} : vector<48x88xf32> to vector<48x80xf32>
    %c0_3 = arith.constant 0 : index
    %c0_4 = arith.constant 0 : index
    %5 = vector.load %arg6[%c0_3, %c0_4] : memref<1x80xf32, #tpu.memory_space<vmem>>, vector<1x80xf32>
    %6 = vector.broadcast %5 : vector<1x80xf32> to vector<48x80xf32>
    %7 = arith.addf %4, %6 : vector<48x80xf32>
    %cst_5 = arith.constant 0.000000e+00 : f32
    %8 = vector.broadcast %cst_5 : f32 to vector<48x80xf32>
    %9 = arith.maximumf %7, %8 : vector<48x80xf32>
    %10 = vector.extract_strided_slice %9 {offsets = [0, 0], sizes = [48, 8], strides = [1, 1]} : vector<48x80xf32> to vector<48x8xf32>
    %11 = vector.extract_strided_slice %9 {offsets = [0, 8], sizes = [48, 8], strides = [1, 1]} : vector<48x80xf32> to vector<48x8xf32>
    %12 = vector.extract_strided_slice %9 {offsets = [0, 16], sizes = [48, 8], strides = [1, 1]} : vector<48x80xf32> to vector<48x8xf32>
    %13 = vector.extract_strided_slice %9 {offsets = [0, 24], sizes = [48, 8], strides = [1, 1]} : vector<48x80xf32> to vector<48x8xf32>
    %14 = vector.extract_strided_slice %9 {offsets = [0, 32], sizes = [48, 8], strides = [1, 1]} : vector<48x80xf32> to vector<48x8xf32>
    %15 = vector.extract_strided_slice %9 {offsets = [0, 40], sizes = [48, 8], strides = [1, 1]} : vector<48x80xf32> to vector<48x8xf32>
    %16 = vector.extract_strided_slice %9 {offsets = [0, 48], sizes = [48, 8], strides = [1, 1]} : vector<48x80xf32> to vector<48x8xf32>
    %17 = vector.extract_strided_slice %9 {offsets = [0, 56], sizes = [48, 8], strides = [1, 1]} : vector<48x80xf32> to vector<48x8xf32>
    %18 = vector.extract_strided_slice %9 {offsets = [0, 64], sizes = [48, 8], strides = [1, 1]} : vector<48x80xf32> to vector<48x8xf32>
    %19 = vector.extract_strided_slice %9 {offsets = [0, 72], sizes = [48, 8], strides = [1, 1]} : vector<48x80xf32> to vector<48x8xf32>
    %20 = arith.maximumf %10, %11 : vector<48x8xf32>
    %21 = arith.maximumf %12, %13 : vector<48x8xf32>
    %22 = arith.maximumf %14, %15 : vector<48x8xf32>
    %23 = arith.maximumf %16, %17 : vector<48x8xf32>
    %24 = arith.maximumf %18, %19 : vector<48x8xf32>
    %25 = arith.maximumf %20, %21 : vector<48x8xf32>
    %26 = arith.maximumf %22, %23 : vector<48x8xf32>
    %27 = arith.maximumf %25, %26 : vector<48x8xf32>
    %28 = arith.maximumf %27, %24 : vector<48x8xf32>
    %29 = tpu.concatenate %3, %28 in 1 : vector<48x8xf32>, vector<48x8xf32> -> vector<48x16xf32>
    %c0_6 = arith.constant 0 : index
    %c0_7 = arith.constant 0 : index
    %30 = vector.load %arg7[%c0_6, %c0_7] : memref<16x32xf32, #tpu.memory_space<vmem>>, vector<16x32xf32>
    %cst_8 = arith.constant dense<0.000000e+00> : vector<48x32xf32>
    %31 = tpu.matmul %29, %30, %cst_8 {dimension_numbers = #tpu.dot_dimension_numbers<[1], [0], [0], [1], [0, 0, 1, 1], [], []>} : vector<48x16xf32>, vector<16x32xf32>, vector<48x32xf32> -> vector<48x32xf32>
    %c0_9 = arith.constant 0 : index
    %c0_10 = arith.constant 0 : index
    %32 = vector.load %arg8[%c0_9, %c0_10] : memref<1x32xf32, #tpu.memory_space<vmem>>, vector<1x32xf32>
    %33 = vector.broadcast %32 : vector<1x32xf32> to vector<48x32xf32>
    %34 = arith.addf %31, %33 : vector<48x32xf32>
    %35 = vector.extract_strided_slice %34 {offsets = [0, 0], sizes = [48, 16], strides = [1, 1]} : vector<48x32xf32> to vector<48x16xf32>
    %cst_11 = arith.constant 0.000000e+00 : f32
    %36 = vector.broadcast %cst_11 : f32 to vector<48x16xf32>
    %37 = arith.maximumf %35, %36 : vector<48x16xf32>
    %38 = vector.extract_strided_slice %34 {offsets = [0, 16], sizes = [48, 16], strides = [1, 1]} : vector<48x32xf32> to vector<48x16xf32>
    %39 = arith.negf %38 : vector<48x16xf32>
    %40 = math.exp %39 : vector<48x16xf32>
    %cst_12 = arith.constant 1.000000e+00 : f32
    %41 = vector.broadcast %cst_12 : f32 to vector<48x16xf32>
    %42 = arith.addf %41, %40 : vector<48x16xf32>
    %43 = arith.divf %41, %42 : vector<48x16xf32>
    %44 = arith.mulf %43, %37 : vector<48x16xf32>
    %cst_13 = arith.constant 1.000000e+00 : f32
    %45 = vector.broadcast %cst_13 : f32 to vector<48x16xf32>
    %46 = arith.subf %45, %43 : vector<48x16xf32>
    %47 = arith.mulf %46, %29 : vector<48x16xf32>
    %48 = arith.addf %44, %47 : vector<48x16xf32>
    %c0_14 = arith.constant 0 : index
    %c0_15 = arith.constant 0 : index
    %49 = vector.load %arg9[%c0_14, %c0_15] : memref<16x32xf32, #tpu.memory_space<vmem>>, vector<16x32xf32>
    %cst_16 = arith.constant dense<0.000000e+00> : vector<48x32xf32>
    %50 = tpu.matmul %48, %49, %cst_16 {dimension_numbers = #tpu.dot_dimension_numbers<[1], [0], [0], [1], [0, 0, 1, 1], [], []>} : vector<48x16xf32>, vector<16x32xf32>, vector<48x32xf32> -> vector<48x32xf32>
    %c0_17 = arith.constant 0 : index
    %c0_18 = arith.constant 0 : index
    %51 = vector.load %arg10[%c0_17, %c0_18] : memref<1x32xf32, #tpu.memory_space<vmem>>, vector<1x32xf32>
    %52 = vector.broadcast %51 : vector<1x32xf32> to vector<48x32xf32>
    %53 = arith.addf %50, %52 : vector<48x32xf32>
    %54 = vector.extract_strided_slice %53 {offsets = [0, 0], sizes = [48, 16], strides = [1, 1]} : vector<48x32xf32> to vector<48x16xf32>
    %cst_19 = arith.constant 0.000000e+00 : f32
    %55 = vector.broadcast %cst_19 : f32 to vector<48x16xf32>
    %56 = arith.maximumf %54, %55 : vector<48x16xf32>
    %57 = vector.extract_strided_slice %53 {offsets = [0, 16], sizes = [48, 16], strides = [1, 1]} : vector<48x32xf32> to vector<48x16xf32>
    %58 = arith.negf %57 : vector<48x16xf32>
    %59 = math.exp %58 : vector<48x16xf32>
    %cst_20 = arith.constant 1.000000e+00 : f32
    %60 = vector.broadcast %cst_20 : f32 to vector<48x16xf32>
    %61 = arith.addf %60, %59 : vector<48x16xf32>
    %62 = arith.divf %60, %61 : vector<48x16xf32>
    %63 = arith.mulf %62, %56 : vector<48x16xf32>
    %cst_21 = arith.constant 1.000000e+00 : f32
    %64 = vector.broadcast %cst_21 : f32 to vector<48x16xf32>
    %65 = arith.subf %64, %62 : vector<48x16xf32>
    %66 = arith.mulf %65, %48 : vector<48x16xf32>
    %67 = arith.addf %63, %66 : vector<48x16xf32>
    %c0_22 = arith.constant 0 : index
    %c0_23 = arith.constant 0 : index
    %68 = vector.load %arg11[%c0_22, %c0_23] : memref<16x64xf32, #tpu.memory_space<vmem>>, vector<16x64xf32>
    %cst_24 = arith.constant dense<0.000000e+00> : vector<48x64xf32>
    %69 = tpu.matmul %67, %68, %cst_24 {dimension_numbers = #tpu.dot_dimension_numbers<[1], [0], [0], [1], [0, 0, 1, 1], [], []>} : vector<48x16xf32>, vector<16x64xf32>, vector<48x64xf32> -> vector<48x64xf32>
    %c0_25 = arith.constant 0 : index
    %c0_26 = arith.constant 0 : index
    %70 = vector.load %arg12[%c0_25, %c0_26] : memref<1x64xf32, #tpu.memory_space<vmem>>, vector<1x64xf32>
    %71 = vector.broadcast %70 : vector<1x64xf32> to vector<48x64xf32>
    %72 = arith.addf %69, %71 : vector<48x64xf32>
    %c0_27 = arith.constant 0 : index
    %c0_28 = arith.constant 0 : index
    %73 = vector.load %arg13[%c0_27, %c0_28] : memref<8x64xf32, #tpu.memory_space<vmem>>, vector<8x64xf32>
    %c0_29 = arith.constant 0 : index
    %c0_30 = arith.constant 0 : index
    %74 = vector.load %arg2[%c0_29, %c0_30] : memref<4x24xf32, #tpu.memory_space<vmem>>, vector<4x24xf32>
    %cst_31 = arith.constant 0.000000e+00 : f32
    %75 = vector.broadcast %cst_31 : f32 to vector<4x8xf32>
    %cst_32 = arith.constant 0.000000e+00 : f32
    %76 = vector.broadcast %cst_32 : f32 to vector<4x8xf32>
    %77 = vector.extract_strided_slice %74 {offsets = [0, 0], sizes = [4, 1], strides = [1, 1]} : vector<4x24xf32> to vector<4x1xf32>
    %78 = vector.extract_strided_slice %72 {offsets = [0, 0], sizes = [2, 32], strides = [1, 1]} : vector<48x64xf32> to vector<2x32xf32>
    %79 = vector.extract_strided_slice %72 {offsets = [30, 32], sizes = [2, 32], strides = [1, 1]} : vector<48x64xf32> to vector<2x32xf32>
    %80 = tpu.concatenate %78, %79 in 0 : vector<2x32xf32>, vector<2x32xf32> -> vector<4x32xf32>
    %cst_33 = arith.constant dense<0.000000e+00> : vector<4x64xf32>
    %81 = tpu.matmul %75, %73, %cst_33 {dimension_numbers = #tpu.dot_dimension_numbers<[1], [0], [0], [1], [0, 0, 1, 1], [], []>} : vector<4x8xf32>, vector<8x64xf32>, vector<4x64xf32> -> vector<4x64xf32>
    %82 = vector.extract_strided_slice %81 {offsets = [0, 0], sizes = [2, 32], strides = [1, 1]} : vector<4x64xf32> to vector<2x32xf32>
    %83 = vector.extract_strided_slice %81 {offsets = [2, 32], sizes = [2, 32], strides = [1, 1]} : vector<4x64xf32> to vector<2x32xf32>
    %84 = tpu.concatenate %82, %83 in 0 : vector<2x32xf32>, vector<2x32xf32> -> vector<4x32xf32>
    %85 = arith.addf %80, %84 : vector<4x32xf32>
    %86 = vector.extract_strided_slice %85 {offsets = [0, 0], sizes = [4, 24], strides = [1, 1]} : vector<4x32xf32> to vector<4x24xf32>
    %87 = arith.negf %86 : vector<4x24xf32>
    %88 = math.exp %87 : vector<4x24xf32>
    %cst_34 = arith.constant 1.000000e+00 : f32
    %89 = vector.broadcast %cst_34 : f32 to vector<4x24xf32>
    %90 = arith.addf %89, %88 : vector<4x24xf32>
    %91 = arith.divf %89, %90 : vector<4x24xf32>
    %92 = vector.extract_strided_slice %85 {offsets = [0, 24], sizes = [4, 8], strides = [1, 1]} : vector<4x32xf32> to vector<4x8xf32>
    %93 = math.tanh %92 : vector<4x8xf32>
    %94 = vector.extract_strided_slice %91 {offsets = [0, 0], sizes = [4, 8], strides = [1, 1]} : vector<4x24xf32> to vector<4x8xf32>
    %95 = vector.extract_strided_slice %91 {offsets = [0, 8], sizes = [4, 8], strides = [1, 1]} : vector<4x24xf32> to vector<4x8xf32>
    %96 = vector.extract_strided_slice %91 {offsets = [0, 16], sizes = [4, 8], strides = [1, 1]} : vector<4x24xf32> to vector<4x8xf32>
    %97 = arith.mulf %95, %76 : vector<4x8xf32>
    %98 = arith.mulf %94, %93 : vector<4x8xf32>
    %99 = arith.addf %97, %98 : vector<4x8xf32>
    %100 = math.tanh %99 : vector<4x8xf32>
    %101 = arith.mulf %96, %100 : vector<4x8xf32>
    %102 = vector.broadcast %77 : vector<4x1xf32> to vector<4x8xf32>
    %103 = arith.mulf %102, %101 : vector<4x8xf32>
    %104 = vector.extract_strided_slice %103 {offsets = [0, 0], sizes = [2, 8], strides = [1, 1]} : vector<4x8xf32> to vector<2x8xf32>
    %c0_35 = arith.constant 0 : index
    %c0_36 = arith.constant 0 : index
    %c0_37 = arith.constant 0 : index
    %105 = vector.load %arg16[%c0_35, %c0_36, %c0_37] : memref<24x2x16xf32, #tpu.memory_space<vmem>>, vector<1x2x8xf32>
    %106 = vector.shape_cast %105 : vector<1x2x8xf32> to vector<2x8xf32>
    %107 = vector.shape_cast %104 : vector<2x8xf32> to vector<1x2x8xf32>
    tpu.vector_store %arg16[%c0_35, %c0_36, %c0_37], %107 {strides = array<i32>} : memref<24x2x16xf32, #tpu.memory_space<vmem>>, vector<1x2x8xf32>,
    %108 = vector.extract_strided_slice %103 {offsets = [2, 0], sizes = [2, 8], strides = [1, 1]} : vector<4x8xf32> to vector<2x8xf32>
    %c15 = arith.constant 15 : index
    %c0_38 = arith.constant 0 : index
    %c8 = arith.constant 8 : index
    %109 = vector.load %arg16[%c15, %c0_38, %c8] : memref<24x2x16xf32, #tpu.memory_space<vmem>>, vector<1x2x8xf32>
    %110 = vector.shape_cast %109 : vector<1x2x8xf32> to vector<2x8xf32>
    %111 = vector.shape_cast %108 : vector<2x8xf32> to vector<1x2x8xf32>
    tpu.vector_store %arg16[%c15, %c0_38, %c8], %111 {strides = array<i32>} : memref<24x2x16xf32, #tpu.memory_space<vmem>>, vector<1x2x8xf32>,
    %112 = arith.subf %101, %75 : vector<4x8xf32>
    %113 = vector.broadcast %77 : vector<4x1xf32> to vector<4x8xf32>
    %114 = arith.mulf %113, %112 : vector<4x8xf32>
    %115 = arith.addf %75, %114 : vector<4x8xf32>
    %116 = arith.subf %99, %76 : vector<4x8xf32>
    %117 = vector.broadcast %77 : vector<4x1xf32> to vector<4x8xf32>
    %118 = arith.mulf %117, %116 : vector<4x8xf32>
    %119 = arith.addf %76, %118 : vector<4x8xf32>
    %120 = vector.extract_strided_slice %74 {offsets = [0, 1], sizes = [4, 1], strides = [1, 1]} : vector<4x24xf32> to vector<4x1xf32>
    %121 = vector.extract_strided_slice %72 {offsets = [2, 0], sizes = [2, 32], strides = [1, 1]} : vector<48x64xf32> to vector<2x32xf32>
    %122 = vector.extract_strided_slice %72 {offsets = [28, 32], sizes = [2, 32], strides = [1, 1]} : vector<48x64xf32> to vector<2x32xf32>
    %123 = tpu.concatenate %121, %122 in 0 : vector<2x32xf32>, vector<2x32xf32> -> vector<4x32xf32>
    %cst_39 = arith.constant dense<0.000000e+00> : vector<4x64xf32>
    %124 = tpu.matmul %115, %73, %cst_39 {dimension_numbers = #tpu.dot_dimension_numbers<[1], [0], [0], [1], [0, 0, 1, 1], [], []>} : vector<4x8xf32>, vector<8x64xf32>, vector<4x64xf32> -> vector<4x64xf32>
    %125 = vector.extract_strided_slice %124 {offsets = [0, 0], sizes = [2, 32], strides = [1, 1]} : vector<4x64xf32> to vector<2x32xf32>
    %126 = vector.extract_strided_slice %124 {offsets = [2, 32], sizes = [2, 32], strides = [1, 1]} : vector<4x64xf32> to vector<2x32xf32>
    %127 = tpu.concatenate %125, %126 in 0 : vector<2x32xf32>, vector<2x32xf32> -> vector<4x32xf32>
    %128 = arith.addf %123, %127 : vector<4x32xf32>
    %129 = vector.extract_strided_slice %128 {offsets = [0, 0], sizes = [4, 24], strides = [1, 1]} : vector<4x32xf32> to vector<4x24xf32>
    %130 = arith.negf %129 : vector<4x24xf32>
    %131 = math.exp %130 : vector<4x24xf32>
    %cst_40 = arith.constant 1.000000e+00 : f32
    %132 = vector.broadcast %cst_40 : f32 to vector<4x24xf32>
    %133 = arith.addf %132, %131 : vector<4x24xf32>
    %134 = arith.divf %132, %133 : vector<4x24xf32>
    %135 = vector.extract_strided_slice %128 {offsets = [0, 24], sizes = [4, 8], strides = [1, 1]} : vector<4x32xf32> to vector<4x8xf32>
    %136 = math.tanh %135 : vector<4x8xf32>
    %137 = vector.extract_strided_slice %134 {offsets = [0, 0], sizes = [4, 8], strides = [1, 1]} : vector<4x24xf32> to vector<4x8xf32>
    %138 = vector.extract_strided_slice %134 {offsets = [0, 8], sizes = [4, 8], strides = [1, 1]} : vector<4x24xf32> to vector<4x8xf32>
    %139 = vector.extract_strided_slice %134 {offsets = [0, 16], sizes = [4, 8], strides = [1, 1]} : vector<4x24xf32> to vector<4x8xf32>
    %140 = arith.mulf %138, %119 : vector<4x8xf32>
    %141 = arith.mulf %137, %136 : vector<4x8xf32>
    %142 = arith.addf %140, %141 : vector<4x8xf32>
    %143 = math.tanh %142 : vector<4x8xf32>
    %144 = arith.mulf %139, %143 : vector<4x8xf32>
    %145 = vector.broadcast %120 : vector<4x1xf32> to vector<4x8xf32>
    %146 = arith.mulf %145, %144 : vector<4x8xf32>
    %147 = vector.extract_strided_slice %146 {offsets = [0, 0], sizes = [2, 8], strides = [1, 1]} : vector<4x8xf32> to vector<2x8xf32>
    %c1 = arith.constant 1 : index
    %c0_41 = arith.constant 0 : index
    %c0_42 = arith.constant 0 : index
    %148 = vector.load %arg16[%c1, %c0_41, %c0_42] : memref<24x2x16xf32, #tpu.memory_space<vmem>>, vector<1x2x8xf32>
    %149 = vector.shape_cast %148 : vector<1x2x8xf32> to vector<2x8xf32>
    %150 = vector.shape_cast %147 : vector<2x8xf32> to vector<1x2x8xf32>
    tpu.vector_store %arg16[%c1, %c0_41, %c0_42], %150 {strides = array<i32>} : memref<24x2x16xf32, #tpu.memory_space<vmem>>, vector<1x2x8xf32>,
    %151 = vector.extract_strided_slice %146 {offsets = [2, 0], sizes = [2, 8], strides = [1, 1]} : vector<4x8xf32> to vector<2x8xf32>
    %c14 = arith.constant 14 : index
    %c0_43 = arith.constant 0 : index
    %c8_44 = arith.constant 8 : index
    %152 = vector.load %arg16[%c14, %c0_43, %c8_44] : memref<24x2x16xf32, #tpu.memory_space<vmem>>, vector<1x2x8xf32>
    %153 = vector.shape_cast %152 : vector<1x2x8xf32> to vector<2x8xf32>
    %154 = vector.shape_cast %151 : vector<2x8xf32> to vector<1x2x8xf32>
    tpu.vector_store %arg16[%c14, %c0_43, %c8_44], %154 {strides = array<i32>} : memref<24x2x16xf32, #tpu.memory_space<vmem>>, vector<1x2x8xf32>,
    %155 = arith.subf %144, %115 : vector<4x8xf32>
    %156 = vector.broadcast %120 : vector<4x1xf32> to vector<4x8xf32>
    %157 = arith.mulf %156, %155 : vector<4x8xf32>
    %158 = arith.addf %115, %157 : vector<4x8xf32>
    %159 = arith.subf %142, %119 : vector<4x8xf32>
    %160 = vector.broadcast %120 : vector<4x1xf32> to vector<4x8xf32>
    %161 = arith.mulf %160, %159 : vector<4x8xf32>
    %162 = arith.addf %119, %161 : vector<4x8xf32>
    %163 = vector.extract_strided_slice %74 {offsets = [0, 2], sizes = [4, 1], strides = [1, 1]} : vector<4x24xf32> to vector<4x1xf32>
    %164 = vector.extract_strided_slice %72 {offsets = [4, 0], sizes = [2, 32], strides = [1, 1]} : vector<48x64xf32> to vector<2x32xf32>
    %165 = vector.extract_strided_slice %72 {offsets = [26, 32], sizes = [2, 32], strides = [1, 1]} : vector<48x64xf32> to vector<2x32xf32>
    %166 = tpu.concatenate %164, %165 in 0 : vector<2x32xf32>, vector<2x32xf32> -> vector<4x32xf32>
    %cst_45 = arith.constant dense<0.000000e+00> : vector<4x64xf32>
    %167 = tpu.matmul %158, %73, %cst_45 {dimension_numbers = #tpu.dot_dimension_numbers<[1], [0], [0], [1], [0, 0, 1, 1], [], []>} : vector<4x8xf32>, vector<8x64xf32>, vector<4x64xf32> -> vector<4x64xf32>
    %168 = vector.extract_strided_slice %167 {offsets = [0, 0], sizes = [2, 32], strides = [1, 1]} : vector<4x64xf32> to vector<2x32xf32>
    %169 = vector.extract_strided_slice %167 {offsets = [2, 32], sizes = [2, 32], strides = [1, 1]} : vector<4x64xf32> to vector<2x32xf32>
    %170 = tpu.concatenate %168, %169 in 0 : vector<2x32xf32>, vector<2x32xf32> -> vector<4x32xf32>
    %171 = arith.addf %166, %170 : vector<4x32xf32>
    %172 = vector.extract_strided_slice %171 {offsets = [0, 0], sizes = [4, 24], strides = [1, 1]} : vector<4x32xf32> to vector<4x24xf32>
    %173 = arith.negf %172 : vector<4x24xf32>
    %174 = math.exp %173 : vector<4x24xf32>
    %cst_46 = arith.constant 1.000000e+00 : f32
    %175 = vector.broadcast %cst_46 : f32 to vector<4x24xf32>
    %176 = arith.addf %175, %174 : vector<4x24xf32>
    %177 = arith.divf %175, %176 : vector<4x24xf32>
    %178 = vector.extract_strided_slice %171 {offsets = [0, 24], sizes = [4, 8], strides = [1, 1]} : vector<4x32xf32> to vector<4x8xf32>
    %179 = math.tanh %178 : vector<4x8xf32>
    %180 = vector.extract_strided_slice %177 {offsets = [0, 0], sizes = [4, 8], strides = [1, 1]} : vector<4x24xf32> to vector<4x8xf32>
    %181 = vector.extract_strided_slice %177 {offsets = [0, 8], sizes = [4, 8], strides = [1, 1]} : vector<4x24xf32> to vector<4x8xf32>
    %182 = vector.extract_strided_slice %177 {offsets = [0, 16], sizes = [4, 8], strides = [1, 1]} : vector<4x24xf32> to vector<4x8xf32>
    %183 = arith.mulf %181, %162 : vector<4x8xf32>
    %184 = arith.mulf %180, %179 : vector<4x8xf32>
    %185 = arith.addf %183, %184 : vector<4x8xf32>
    %186 = math.tanh %185 : vector<4x8xf32>
    %187 = arith.mulf %182, %186 : vector<4x8xf32>
    %188 = vector.broadcast %163 : vector<4x1xf32> to vector<4x8xf32>
    %189 = arith.mulf %188, %187 : vector<4x8xf32>
    %190 = vector.extract_strided_slice %189 {offsets = [0, 0], sizes = [2, 8], strides = [1, 1]} : vector<4x8xf32> to vector<2x8xf32>
    %c2 = arith.constant 2 : index
    %c0_47 = arith.constant 0 : index
    %c0_48 = arith.constant 0 : index
    %191 = vector.load %arg16[%c2, %c0_47, %c0_48] : memref<24x2x16xf32, #tpu.memory_space<vmem>>, vector<1x2x8xf32>
    %192 = vector.shape_cast %191 : vector<1x2x8xf32> to vector<2x8xf32>
    %193 = vector.shape_cast %190 : vector<2x8xf32> to vector<1x2x8xf32>
    tpu.vector_store %arg16[%c2, %c0_47, %c0_48], %193 {strides = array<i32>} : memref<24x2x16xf32, #tpu.memory_space<vmem>>, vector<1x2x8xf32>,
    %194 = vector.extract_strided_slice %189 {offsets = [2, 0], sizes = [2, 8], strides = [1, 1]} : vector<4x8xf32> to vector<2x8xf32>
    %c13 = arith.constant 13 : index
    %c0_49 = arith.constant 0 : index
    %c8_50 = arith.constant 8 : index
    %195 = vector.load %arg16[%c13, %c0_49, %c8_50] : memref<24x2x16xf32, #tpu.memory_space<vmem>>, vector<1x2x8xf32>
    %196 = vector.shape_cast %195 : vector<1x2x8xf32> to vector<2x8xf32>
    %197 = vector.shape_cast %194 : vector<2x8xf32> to vector<1x2x8xf32>
    tpu.vector_store %arg16[%c13, %c0_49, %c8_50], %197 {strides = array<i32>} : memref<24x2x16xf32, #tpu.memory_space<vmem>>, vector<1x2x8xf32>,
    %198 = arith.subf %187, %158 : vector<4x8xf32>
    %199 = vector.broadcast %163 : vector<4x1xf32> to vector<4x8xf32>
    %200 = arith.mulf %199, %198 : vector<4x8xf32>
    %201 = arith.addf %158, %200 : vector<4x8xf32>
    %202 = arith.subf %185, %162 : vector<4x8xf32>
    %203 = vector.broadcast %163 : vector<4x1xf32> to vector<4x8xf32>
    %204 = arith.mulf %203, %202 : vector<4x8xf32>
    %205 = arith.addf %162, %204 : vector<4x8xf32>
    %206 = vector.extract_strided_slice %74 {offsets = [0, 3], sizes = [4, 1], strides = [1, 1]} : vector<4x24xf32> to vector<4x1xf32>
    %207 = vector.extract_strided_slice %72 {offsets = [6, 0], sizes = [2, 32], strides = [1, 1]} : vector<48x64xf32> to vector<2x32xf32>
    %208 = vector.extract_strided_slice %72 {offsets = [24, 32], sizes = [2, 32], strides = [1, 1]} : vector<48x64xf32> to vector<2x32xf32>
    %209 = tpu.concatenate %207, %208 in 0 : vector<2x32xf32>, vector<2x32xf32> -> vector<4x32xf32>
    %cst_51 = arith.constant dense<0.000000e+00> : vector<4x64xf32>
    %210 = tpu.matmul %201, %73, %cst_51 {dimension_numbers = #tpu.dot_dimension_numbers<[1], [0], [0], [1], [0, 0, 1, 1], [], []>} : vector<4x8xf32>, vector<8x64xf32>, vector<4x64xf32> -> vector<4x64xf32>
    %211 = vector.extract_strided_slice %210 {offsets = [0, 0], sizes = [2, 32], strides = [1, 1]} : vector<4x64xf32> to vector<2x32xf32>
    %212 = vector.extract_strided_slice %210 {offsets = [2, 32], sizes = [2, 32], strides = [1, 1]} : vector<4x64xf32> to vector<2x32xf32>
    %213 = tpu.concatenate %211, %212 in 0 : vector<2x32xf32>, vector<2x32xf32> -> vector<4x32xf32>
    %214 = arith.addf %209, %213 : vector<4x32xf32>
    %215 = vector.extract_strided_slice %214 {offsets = [0, 0], sizes = [4, 24], strides = [1, 1]} : vector<4x32xf32> to vector<4x24xf32>
    %216 = arith.negf %215 : vector<4x24xf32>
    %217 = math.exp %216 : vector<4x24xf32>
    %cst_52 = arith.constant 1.000000e+00 : f32
    %218 = vector.broadcast %cst_52 : f32 to vector<4x24xf32>
    %219 = arith.addf %218, %217 : vector<4x24xf32>
    %220 = arith.divf %218, %219 : vector<4x24xf32>
    %221 = vector.extract_strided_slice %214 {offsets = [0, 24], sizes = [4, 8], strides = [1, 1]} : vector<4x32xf32> to vector<4x8xf32>
    %222 = math.tanh %221 : vector<4x8xf32>
    %223 = vector.extract_strided_slice %220 {offsets = [0, 0], sizes = [4, 8], strides = [1, 1]} : vector<4x24xf32> to vector<4x8xf32>
    %224 = vector.extract_strided_slice %220 {offsets = [0, 8], sizes = [4, 8], strides = [1, 1]} : vector<4x24xf32> to vector<4x8xf32>
    %225 = vector.extract_strided_slice %220 {offsets = [0, 16], sizes = [4, 8], strides = [1, 1]} : vector<4x24xf32> to vector<4x8xf32>
    %226 = arith.mulf %224, %205 : vector<4x8xf32>
    %227 = arith.mulf %223, %222 : vector<4x8xf32>
    %228 = arith.addf %226, %227 : vector<4x8xf32>
    %229 = math.tanh %228 : vector<4x8xf32>
    %230 = arith.mulf %225, %229 : vector<4x8xf32>
    %231 = vector.broadcast %206 : vector<4x1xf32> to vector<4x8xf32>
    %232 = arith.mulf %231, %230 : vector<4x8xf32>
    %233 = vector.extract_strided_slice %232 {offsets = [0, 0], sizes = [2, 8], strides = [1, 1]} : vector<4x8xf32> to vector<2x8xf32>
    %c3 = arith.constant 3 : index
    %c0_53 = arith.constant 0 : index
    %c0_54 = arith.constant 0 : index
    %234 = vector.load %arg16[%c3, %c0_53, %c0_54] : memref<24x2x16xf32, #tpu.memory_space<vmem>>, vector<1x2x8xf32>
    %235 = vector.shape_cast %234 : vector<1x2x8xf32> to vector<2x8xf32>
    %236 = vector.shape_cast %233 : vector<2x8xf32> to vector<1x2x8xf32>
    tpu.vector_store %arg16[%c3, %c0_53, %c0_54], %236 {strides = array<i32>} : memref<24x2x16xf32, #tpu.memory_space<vmem>>, vector<1x2x8xf32>,
    %237 = vector.extract_strided_slice %232 {offsets = [2, 0], sizes = [2, 8], strides = [1, 1]} : vector<4x8xf32> to vector<2x8xf32>
    %c12 = arith.constant 12 : index
    %c0_55 = arith.constant 0 : index
    %c8_56 = arith.constant 8 : index
    %238 = vector.load %arg16[%c12, %c0_55, %c8_56] : memref<24x2x16xf32, #tpu.memory_space<vmem>>, vector<1x2x8xf32>
    %239 = vector.shape_cast %238 : vector<1x2x8xf32> to vector<2x8xf32>
    %240 = vector.shape_cast %237 : vector<2x8xf32> to vector<1x2x8xf32>
    tpu.vector_store %arg16[%c12, %c0_55, %c8_56], %240 {strides = array<i32>} : memref<24x2x16xf32, #tpu.memory_space<vmem>>, vector<1x2x8xf32>,
    %241 = arith.subf %230, %201 : vector<4x8xf32>
    %242 = vector.broadcast %206 : vector<4x1xf32> to vector<4x8xf32>
    %243 = arith.mulf %242, %241 : vector<4x8xf32>
    %244 = arith.addf %201, %243 : vector<4x8xf32>
    %245 = arith.subf %228, %205 : vector<4x8xf32>
    %246 = vector.broadcast %206 : vector<4x1xf32> to vector<4x8xf32>
    %247 = arith.mulf %246, %245 : vector<4x8xf32>
    %248 = arith.addf %205, %247 : vector<4x8xf32>
    %249 = vector.extract_strided_slice %74 {offsets = [0, 4], sizes = [4, 1], strides = [1, 1]} : vector<4x24xf32> to vector<4x1xf32>
    %250 = vector.extract_strided_slice %72 {offsets = [8, 0], sizes = [2, 32], strides = [1, 1]} : vector<48x64xf32> to vector<2x32xf32>
    %251 = vector.extract_strided_slice %72 {offsets = [22, 32], sizes = [2, 32], strides = [1, 1]} : vector<48x64xf32> to vector<2x32xf32>
    %252 = tpu.concatenate %250, %251 in 0 : vector<2x32xf32>, vector<2x32xf32> -> vector<4x32xf32>
    %cst_57 = arith.constant dense<0.000000e+00> : vector<4x64xf32>
    %253 = tpu.matmul %244, %73, %cst_57 {dimension_numbers = #tpu.dot_dimension_numbers<[1], [0], [0], [1], [0, 0, 1, 1], [], []>} : vector<4x8xf32>, vector<8x64xf32>, vector<4x64xf32> -> vector<4x64xf32>
    %254 = vector.extract_strided_slice %253 {offsets = [0, 0], sizes = [2, 32], strides = [1, 1]} : vector<4x64xf32> to vector<2x32xf32>
    %255 = vector.extract_strided_slice %253 {offsets = [2, 32], sizes = [2, 32], strides = [1, 1]} : vector<4x64xf32> to vector<2x32xf32>
    %256 = tpu.concatenate %254, %255 in 0 : vector<2x32xf32>, vector<2x32xf32> -> vector<4x32xf32>
    %257 = arith.addf %252, %256 : vector<4x32xf32>
    %258 = vector.extract_strided_slice %257 {offsets = [0, 0], sizes = [4, 24], strides = [1, 1]} : vector<4x32xf32> to vector<4x24xf32>
    %259 = arith.negf %258 : vector<4x24xf32>
    %260 = math.exp %259 : vector<4x24xf32>
    %cst_58 = arith.constant 1.000000e+00 : f32
    %261 = vector.broadcast %cst_58 : f32 to vector<4x24xf32>
    %262 = arith.addf %261, %260 : vector<4x24xf32>
    %263 = arith.divf %261, %262 : vector<4x24xf32>
    %264 = vector.extract_strided_slice %257 {offsets = [0, 24], sizes = [4, 8], strides = [1, 1]} : vector<4x32xf32> to vector<4x8xf32>
    %265 = math.tanh %264 : vector<4x8xf32>
    %266 = vector.extract_strided_slice %263 {offsets = [0, 0], sizes = [4, 8], strides = [1, 1]} : vector<4x24xf32> to vector<4x8xf32>
    %267 = vector.extract_strided_slice %263 {offsets = [0, 8], sizes = [4, 8], strides = [1, 1]} : vector<4x24xf32> to vector<4x8xf32>
    %268 = vector.extract_strided_slice %263 {offsets = [0, 16], sizes = [4, 8], strides = [1, 1]} : vector<4x24xf32> to vector<4x8xf32>
    %269 = arith.mulf %267, %248 : vector<4x8xf32>
    %270 = arith.mulf %266, %265 : vector<4x8xf32>
    %271 = arith.addf %269, %270 : vector<4x8xf32>
    %272 = math.tanh %271 : vector<4x8xf32>
    %273 = arith.mulf %268, %272 : vector<4x8xf32>
    %274 = vector.broadcast %249 : vector<4x1xf32> to vector<4x8xf32>
    %275 = arith.mulf %274, %273 : vector<4x8xf32>
    %276 = vector.extract_strided_slice %275 {offsets = [0, 0], sizes = [2, 8], strides = [1, 1]} : vector<4x8xf32> to vector<2x8xf32>
    %c4 = arith.constant 4 : index
    %c0_59 = arith.constant 0 : index
    %c0_60 = arith.constant 0 : index
    %277 = vector.load %arg16[%c4, %c0_59, %c0_60] : memref<24x2x16xf32, #tpu.memory_space<vmem>>, vector<1x2x8xf32>
    %278 = vector.shape_cast %277 : vector<1x2x8xf32> to vector<2x8xf32>
    %279 = vector.shape_cast %276 : vector<2x8xf32> to vector<1x2x8xf32>
    tpu.vector_store %arg16[%c4, %c0_59, %c0_60], %279 {strides = array<i32>} : memref<24x2x16xf32, #tpu.memory_space<vmem>>, vector<1x2x8xf32>,
    %280 = vector.extract_strided_slice %275 {offsets = [2, 0], sizes = [2, 8], strides = [1, 1]} : vector<4x8xf32> to vector<2x8xf32>
    %c11 = arith.constant 11 : index
    %c0_61 = arith.constant 0 : index
    %c8_62 = arith.constant 8 : index
    %281 = vector.load %arg16[%c11, %c0_61, %c8_62] : memref<24x2x16xf32, #tpu.memory_space<vmem>>, vector<1x2x8xf32>
    %282 = vector.shape_cast %281 : vector<1x2x8xf32> to vector<2x8xf32>
    %283 = vector.shape_cast %280 : vector<2x8xf32> to vector<1x2x8xf32>
    tpu.vector_store %arg16[%c11, %c0_61, %c8_62], %283 {strides = array<i32>} : memref<24x2x16xf32, #tpu.memory_space<vmem>>, vector<1x2x8xf32>,
    %284 = arith.subf %273, %244 : vector<4x8xf32>
    %285 = vector.broadcast %249 : vector<4x1xf32> to vector<4x8xf32>
    %286 = arith.mulf %285, %284 : vector<4x8xf32>
    %287 = arith.addf %244, %286 : vector<4x8xf32>
    %288 = arith.subf %271, %248 : vector<4x8xf32>
    %289 = vector.broadcast %249 : vector<4x1xf32> to vector<4x8xf32>
    %290 = arith.mulf %289, %288 : vector<4x8xf32>
    %291 = arith.addf %248, %290 : vector<4x8xf32>
    %292 = vector.extract_strided_slice %74 {offsets = [0, 5], sizes = [4, 1], strides = [1, 1]} : vector<4x24xf32> to vector<4x1xf32>
    %293 = vector.extract_strided_slice %72 {offsets = [10, 0], sizes = [2, 32], strides = [1, 1]} : vector<48x64xf32> to vector<2x32xf32>
    %294 = vector.extract_strided_slice %72 {offsets = [20, 32], sizes = [2, 32], strides = [1, 1]} : vector<48x64xf32> to vector<2x32xf32>
    %295 = tpu.concatenate %293, %294 in 0 : vector<2x32xf32>, vector<2x32xf32> -> vector<4x32xf32>
    %cst_63 = arith.constant dense<0.000000e+00> : vector<4x64xf32>
    %296 = tpu.matmul %287, %73, %cst_63 {dimension_numbers = #tpu.dot_dimension_numbers<[1], [0], [0], [1], [0, 0, 1, 1], [], []>} : vector<4x8xf32>, vector<8x64xf32>, vector<4x64xf32> -> vector<4x64xf32>
    %297 = vector.extract_strided_slice %296 {offsets = [0, 0], sizes = [2, 32], strides = [1, 1]} : vector<4x64xf32> to vector<2x32xf32>
    %298 = vector.extract_strided_slice %296 {offsets = [2, 32], sizes = [2, 32], strides = [1, 1]} : vector<4x64xf32> to vector<2x32xf32>
    %299 = tpu.concatenate %297, %298 in 0 : vector<2x32xf32>, vector<2x32xf32> -> vector<4x32xf32>
    %300 = arith.addf %295, %299 : vector<4x32xf32>
    %301 = vector.extract_strided_slice %300 {offsets = [0, 0], sizes = [4, 24], strides = [1, 1]} : vector<4x32xf32> to vector<4x24xf32>
    %302 = arith.negf %301 : vector<4x24xf32>
    %303 = math.exp %302 : vector<4x24xf32>
    %cst_64 = arith.constant 1.000000e+00 : f32
    %304 = vector.broadcast %cst_64 : f32 to vector<4x24xf32>
    %305 = arith.addf %304, %303 : vector<4x24xf32>
    %306 = arith.divf %304, %305 : vector<4x24xf32>
    %307 = vector.extract_strided_slice %300 {offsets = [0, 24], sizes = [4, 8], strides = [1, 1]} : vector<4x32xf32> to vector<4x8xf32>
    %308 = math.tanh %307 : vector<4x8xf32>
    %309 = vector.extract_strided_slice %306 {offsets = [0, 0], sizes = [4, 8], strides = [1, 1]} : vector<4x24xf32> to vector<4x8xf32>
    %310 = vector.extract_strided_slice %306 {offsets = [0, 8], sizes = [4, 8], strides = [1, 1]} : vector<4x24xf32> to vector<4x8xf32>
    %311 = vector.extract_strided_slice %306 {offsets = [0, 16], sizes = [4, 8], strides = [1, 1]} : vector<4x24xf32> to vector<4x8xf32>
    %312 = arith.mulf %310, %291 : vector<4x8xf32>
    %313 = arith.mulf %309, %308 : vector<4x8xf32>
    %314 = arith.addf %312, %313 : vector<4x8xf32>
    %315 = math.tanh %314 : vector<4x8xf32>
    %316 = arith.mulf %311, %315 : vector<4x8xf32>
    %317 = vector.broadcast %292 : vector<4x1xf32> to vector<4x8xf32>
    %318 = arith.mulf %317, %316 : vector<4x8xf32>
    %319 = vector.extract_strided_slice %318 {offsets = [0, 0], sizes = [2, 8], strides = [1, 1]} : vector<4x8xf32> to vector<2x8xf32>
    %c5 = arith.constant 5 : index
    %c0_65 = arith.constant 0 : index
    %c0_66 = arith.constant 0 : index
    %320 = vector.load %arg16[%c5, %c0_65, %c0_66] : memref<24x2x16xf32, #tpu.memory_space<vmem>>, vector<1x2x8xf32>
    %321 = vector.shape_cast %320 : vector<1x2x8xf32> to vector<2x8xf32>
    %322 = vector.shape_cast %319 : vector<2x8xf32> to vector<1x2x8xf32>
    tpu.vector_store %arg16[%c5, %c0_65, %c0_66], %322 {strides = array<i32>} : memref<24x2x16xf32, #tpu.memory_space<vmem>>, vector<1x2x8xf32>,
    %323 = vector.extract_strided_slice %318 {offsets = [2, 0], sizes = [2, 8], strides = [1, 1]} : vector<4x8xf32> to vector<2x8xf32>
    %c10 = arith.constant 10 : index
    %c0_67 = arith.constant 0 : index
    %c8_68 = arith.constant 8 : index
    %324 = vector.load %arg16[%c10, %c0_67, %c8_68] : memref<24x2x16xf32, #tpu.memory_space<vmem>>, vector<1x2x8xf32>
    %325 = vector.shape_cast %324 : vector<1x2x8xf32> to vector<2x8xf32>
    %326 = vector.shape_cast %323 : vector<2x8xf32> to vector<1x2x8xf32>
    tpu.vector_store %arg16[%c10, %c0_67, %c8_68], %326 {strides = array<i32>} : memref<24x2x16xf32, #tpu.memory_space<vmem>>, vector<1x2x8xf32>,
    %327 = arith.subf %316, %287 : vector<4x8xf32>
    %328 = vector.broadcast %292 : vector<4x1xf32> to vector<4x8xf32>
    %329 = arith.mulf %328, %327 : vector<4x8xf32>
    %330 = arith.addf %287, %329 : vector<4x8xf32>
    %331 = arith.subf %314, %291 : vector<4x8xf32>
    %332 = vector.broadcast %292 : vector<4x1xf32> to vector<4x8xf32>
    %333 = arith.mulf %332, %331 : vector<4x8xf32>
    %334 = arith.addf %291, %333 : vector<4x8xf32>
    %335 = vector.extract_strided_slice %74 {offsets = [0, 6], sizes = [4, 1], strides = [1, 1]} : vector<4x24xf32> to vector<4x1xf32>
    %336 = vector.extract_strided_slice %72 {offsets = [12, 0], sizes = [2, 32], strides = [1, 1]} : vector<48x64xf32> to vector<2x32xf32>
    %337 = vector.extract_strided_slice %72 {offsets = [18, 32], sizes = [2, 32], strides = [1, 1]} : vector<48x64xf32> to vector<2x32xf32>
    %338 = tpu.concatenate %336, %337 in 0 : vector<2x32xf32>, vector<2x32xf32> -> vector<4x32xf32>
    %cst_69 = arith.constant dense<0.000000e+00> : vector<4x64xf32>
    %339 = tpu.matmul %330, %73, %cst_69 {dimension_numbers = #tpu.dot_dimension_numbers<[1], [0], [0], [1], [0, 0, 1, 1], [], []>} : vector<4x8xf32>, vector<8x64xf32>, vector<4x64xf32> -> vector<4x64xf32>
    %340 = vector.extract_strided_slice %339 {offsets = [0, 0], sizes = [2, 32], strides = [1, 1]} : vector<4x64xf32> to vector<2x32xf32>
    %341 = vector.extract_strided_slice %339 {offsets = [2, 32], sizes = [2, 32], strides = [1, 1]} : vector<4x64xf32> to vector<2x32xf32>
    %342 = tpu.concatenate %340, %341 in 0 : vector<2x32xf32>, vector<2x32xf32> -> vector<4x32xf32>
    %343 = arith.addf %338, %342 : vector<4x32xf32>
    %344 = vector.extract_strided_slice %343 {offsets = [0, 0], sizes = [4, 24], strides = [1, 1]} : vector<4x32xf32> to vector<4x24xf32>
    %345 = arith.negf %344 : vector<4x24xf32>
    %346 = math.exp %345 : vector<4x24xf32>
    %cst_70 = arith.constant 1.000000e+00 : f32
    %347 = vector.broadcast %cst_70 : f32 to vector<4x24xf32>
    %348 = arith.addf %347, %346 : vector<4x24xf32>
    %349 = arith.divf %347, %348 : vector<4x24xf32>
    %350 = vector.extract_strided_slice %343 {offsets = [0, 24], sizes = [4, 8], strides = [1, 1]} : vector<4x32xf32> to vector<4x8xf32>
    %351 = math.tanh %350 : vector<4x8xf32>
    %352 = vector.extract_strided_slice %349 {offsets = [0, 0], sizes = [4, 8], strides = [1, 1]} : vector<4x24xf32> to vector<4x8xf32>
    %353 = vector.extract_strided_slice %349 {offsets = [0, 8], sizes = [4, 8], strides = [1, 1]} : vector<4x24xf32> to vector<4x8xf32>
    %354 = vector.extract_strided_slice %349 {offsets = [0, 16], sizes = [4, 8], strides = [1, 1]} : vector<4x24xf32> to vector<4x8xf32>
    %355 = arith.mulf %353, %334 : vector<4x8xf32>
    %356 = arith.mulf %352, %351 : vector<4x8xf32>
    %357 = arith.addf %355, %356 : vector<4x8xf32>
    %358 = math.tanh %357 : vector<4x8xf32>
    %359 = arith.mulf %354, %358 : vector<4x8xf32>
    %360 = vector.broadcast %335 : vector<4x1xf32> to vector<4x8xf32>
    %361 = arith.mulf %360, %359 : vector<4x8xf32>
    %362 = vector.extract_strided_slice %361 {offsets = [0, 0], sizes = [2, 8], strides = [1, 1]} : vector<4x8xf32> to vector<2x8xf32>
    %c6 = arith.constant 6 : index
    %c0_71 = arith.constant 0 : index
    %c0_72 = arith.constant 0 : index
    %363 = vector.load %arg16[%c6, %c0_71, %c0_72] : memref<24x2x16xf32, #tpu.memory_space<vmem>>, vector<1x2x8xf32>
    %364 = vector.shape_cast %363 : vector<1x2x8xf32> to vector<2x8xf32>
    %365 = vector.shape_cast %362 : vector<2x8xf32> to vector<1x2x8xf32>
    tpu.vector_store %arg16[%c6, %c0_71, %c0_72], %365 {strides = array<i32>} : memref<24x2x16xf32, #tpu.memory_space<vmem>>, vector<1x2x8xf32>,
    %366 = vector.extract_strided_slice %361 {offsets = [2, 0], sizes = [2, 8], strides = [1, 1]} : vector<4x8xf32> to vector<2x8xf32>
    %c9 = arith.constant 9 : index
    %c0_73 = arith.constant 0 : index
    %c8_74 = arith.constant 8 : index
    %367 = vector.load %arg16[%c9, %c0_73, %c8_74] : memref<24x2x16xf32, #tpu.memory_space<vmem>>, vector<1x2x8xf32>
    %368 = vector.shape_cast %367 : vector<1x2x8xf32> to vector<2x8xf32>
    %369 = vector.shape_cast %366 : vector<2x8xf32> to vector<1x2x8xf32>
    tpu.vector_store %arg16[%c9, %c0_73, %c8_74], %369 {strides = array<i32>} : memref<24x2x16xf32, #tpu.memory_space<vmem>>, vector<1x2x8xf32>,
    %370 = arith.subf %359, %330 : vector<4x8xf32>
    %371 = vector.broadcast %335 : vector<4x1xf32> to vector<4x8xf32>
    %372 = arith.mulf %371, %370 : vector<4x8xf32>
    %373 = arith.addf %330, %372 : vector<4x8xf32>
    %374 = arith.subf %357, %334 : vector<4x8xf32>
    %375 = vector.broadcast %335 : vector<4x1xf32> to vector<4x8xf32>
    %376 = arith.mulf %375, %374 : vector<4x8xf32>
    %377 = arith.addf %334, %376 : vector<4x8xf32>
    %378 = vector.extract_strided_slice %74 {offsets = [0, 7], sizes = [4, 1], strides = [1, 1]} : vector<4x24xf32> to vector<4x1xf32>
    %379 = vector.extract_strided_slice %72 {offsets = [14, 0], sizes = [2, 32], strides = [1, 1]} : vector<48x64xf32> to vector<2x32xf32>
    %380 = vector.extract_strided_slice %72 {offsets = [16, 32], sizes = [2, 32], strides = [1, 1]} : vector<48x64xf32> to vector<2x32xf32>
    %381 = tpu.concatenate %379, %380 in 0 : vector<2x32xf32>, vector<2x32xf32> -> vector<4x32xf32>
    %cst_75 = arith.constant dense<0.000000e+00> : vector<4x64xf32>
    %382 = tpu.matmul %373, %73, %cst_75 {dimension_numbers = #tpu.dot_dimension_numbers<[1], [0], [0], [1], [0, 0, 1, 1], [], []>} : vector<4x8xf32>, vector<8x64xf32>, vector<4x64xf32> -> vector<4x64xf32>
    %383 = vector.extract_strided_slice %382 {offsets = [0, 0], sizes = [2, 32], strides = [1, 1]} : vector<4x64xf32> to vector<2x32xf32>
    %384 = vector.extract_strided_slice %382 {offsets = [2, 32], sizes = [2, 32], strides = [1, 1]} : vector<4x64xf32> to vector<2x32xf32>
    %385 = tpu.concatenate %383, %384 in 0 : vector<2x32xf32>, vector<2x32xf32> -> vector<4x32xf32>
    %386 = arith.addf %381, %385 : vector<4x32xf32>
    %387 = vector.extract_strided_slice %386 {offsets = [0, 0], sizes = [4, 24], strides = [1, 1]} : vector<4x32xf32> to vector<4x24xf32>
    %388 = arith.negf %387 : vector<4x24xf32>
    %389 = math.exp %388 : vector<4x24xf32>
    %cst_76 = arith.constant 1.000000e+00 : f32
    %390 = vector.broadcast %cst_76 : f32 to vector<4x24xf32>
    %391 = arith.addf %390, %389 : vector<4x24xf32>
    %392 = arith.divf %390, %391 : vector<4x24xf32>
    %393 = vector.extract_strided_slice %386 {offsets = [0, 24], sizes = [4, 8], strides = [1, 1]} : vector<4x32xf32> to vector<4x8xf32>
    %394 = math.tanh %393 : vector<4x8xf32>
    %395 = vector.extract_strided_slice %392 {offsets = [0, 0], sizes = [4, 8], strides = [1, 1]} : vector<4x24xf32> to vector<4x8xf32>
    %396 = vector.extract_strided_slice %392 {offsets = [0, 8], sizes = [4, 8], strides = [1, 1]} : vector<4x24xf32> to vector<4x8xf32>
    %397 = vector.extract_strided_slice %392 {offsets = [0, 16], sizes = [4, 8], strides = [1, 1]} : vector<4x24xf32> to vector<4x8xf32>
    %398 = arith.mulf %396, %377 : vector<4x8xf32>
    %399 = arith.mulf %395, %394 : vector<4x8xf32>
    %400 = arith.addf %398, %399 : vector<4x8xf32>
    %401 = math.tanh %400 : vector<4x8xf32>
    %402 = arith.mulf %397, %401 : vector<4x8xf32>
    %403 = vector.broadcast %378 : vector<4x1xf32> to vector<4x8xf32>
    %404 = arith.mulf %403, %402 : vector<4x8xf32>
    %405 = vector.extract_strided_slice %404 {offsets = [0, 0], sizes = [2, 8], strides = [1, 1]} : vector<4x8xf32> to vector<2x8xf32>
    %c7 = arith.constant 7 : index
    %c0_77 = arith.constant 0 : index
    %c0_78 = arith.constant 0 : index
    %406 = vector.load %arg16[%c7, %c0_77, %c0_78] : memref<24x2x16xf32, #tpu.memory_space<vmem>>, vector<1x2x8xf32>
    %407 = vector.shape_cast %406 : vector<1x2x8xf32> to vector<2x8xf32>
    %408 = vector.shape_cast %405 : vector<2x8xf32> to vector<1x2x8xf32>
    tpu.vector_store %arg16[%c7, %c0_77, %c0_78], %408 {strides = array<i32>} : memref<24x2x16xf32, #tpu.memory_space<vmem>>, vector<1x2x8xf32>,
    %409 = vector.extract_strided_slice %404 {offsets = [2, 0], sizes = [2, 8], strides = [1, 1]} : vector<4x8xf32> to vector<2x8xf32>
    %c8_79 = arith.constant 8 : index
    %c0_80 = arith.constant 0 : index
    %c8_81 = arith.constant 8 : index
    %410 = vector.load %arg16[%c8_79, %c0_80, %c8_81] : memref<24x2x16xf32, #tpu.memory_space<vmem>>, vector<1x2x8xf32>
    %411 = vector.shape_cast %410 : vector<1x2x8xf32> to vector<2x8xf32>
    %412 = vector.shape_cast %409 : vector<2x8xf32> to vector<1x2x8xf32>
    tpu.vector_store %arg16[%c8_79, %c0_80, %c8_81], %412 {strides = array<i32>} : memref<24x2x16xf32, #tpu.memory_space<vmem>>, vector<1x2x8xf32>,
    %413 = arith.subf %402, %373 : vector<4x8xf32>
    %414 = vector.broadcast %378 : vector<4x1xf32> to vector<4x8xf32>
    %415 = arith.mulf %414, %413 : vector<4x8xf32>
    %416 = arith.addf %373, %415 : vector<4x8xf32>
    %417 = arith.subf %400, %377 : vector<4x8xf32>
    %418 = vector.broadcast %378 : vector<4x1xf32> to vector<4x8xf32>
    %419 = arith.mulf %418, %417 : vector<4x8xf32>
    %420 = arith.addf %377, %419 : vector<4x8xf32>
    %421 = vector.extract_strided_slice %74 {offsets = [0, 8], sizes = [4, 1], strides = [1, 1]} : vector<4x24xf32> to vector<4x1xf32>
    %422 = vector.extract_strided_slice %72 {offsets = [16, 0], sizes = [2, 32], strides = [1, 1]} : vector<48x64xf32> to vector<2x32xf32>
    %423 = vector.extract_strided_slice %72 {offsets = [14, 32], sizes = [2, 32], strides = [1, 1]} : vector<48x64xf32> to vector<2x32xf32>
    %424 = tpu.concatenate %422, %423 in 0 : vector<2x32xf32>, vector<2x32xf32> -> vector<4x32xf32>
    %cst_82 = arith.constant dense<0.000000e+00> : vector<4x64xf32>
    %425 = tpu.matmul %416, %73, %cst_82 {dimension_numbers = #tpu.dot_dimension_numbers<[1], [0], [0], [1], [0, 0, 1, 1], [], []>} : vector<4x8xf32>, vector<8x64xf32>, vector<4x64xf32> -> vector<4x64xf32>
    %426 = vector.extract_strided_slice %425 {offsets = [0, 0], sizes = [2, 32], strides = [1, 1]} : vector<4x64xf32> to vector<2x32xf32>
    %427 = vector.extract_strided_slice %425 {offsets = [2, 32], sizes = [2, 32], strides = [1, 1]} : vector<4x64xf32> to vector<2x32xf32>
    %428 = tpu.concatenate %426, %427 in 0 : vector<2x32xf32>, vector<2x32xf32> -> vector<4x32xf32>
    %429 = arith.addf %424, %428 : vector<4x32xf32>
    %430 = vector.extract_strided_slice %429 {offsets = [0, 0], sizes = [4, 24], strides = [1, 1]} : vector<4x32xf32> to vector<4x24xf32>
    %431 = arith.negf %430 : vector<4x24xf32>
    %432 = math.exp %431 : vector<4x24xf32>
    %cst_83 = arith.constant 1.000000e+00 : f32
    %433 = vector.broadcast %cst_83 : f32 to vector<4x24xf32>
    %434 = arith.addf %433, %432 : vector<4x24xf32>
    %435 = arith.divf %433, %434 : vector<4x24xf32>
    %436 = vector.extract_strided_slice %429 {offsets = [0, 24], sizes = [4, 8], strides = [1, 1]} : vector<4x32xf32> to vector<4x8xf32>
    %437 = math.tanh %436 : vector<4x8xf32>
    %438 = vector.extract_strided_slice %435 {offsets = [0, 0], sizes = [4, 8], strides = [1, 1]} : vector<4x24xf32> to vector<4x8xf32>
    %439 = vector.extract_strided_slice %435 {offsets = [0, 8], sizes = [4, 8], strides = [1, 1]} : vector<4x24xf32> to vector<4x8xf32>
    %440 = vector.extract_strided_slice %435 {offsets = [0, 16], sizes = [4, 8], strides = [1, 1]} : vector<4x24xf32> to vector<4x8xf32>
    %441 = arith.mulf %439, %420 : vector<4x8xf32>
    %442 = arith.mulf %438, %437 : vector<4x8xf32>
    %443 = arith.addf %441, %442 : vector<4x8xf32>
    %444 = math.tanh %443 : vector<4x8xf32>
    %445 = arith.mulf %440, %444 : vector<4x8xf32>
    %446 = vector.broadcast %421 : vector<4x1xf32> to vector<4x8xf32>
    %447 = arith.mulf %446, %445 : vector<4x8xf32>
    %448 = vector.extract_strided_slice %447 {offsets = [0, 0], sizes = [2, 8], strides = [1, 1]} : vector<4x8xf32> to vector<2x8xf32>
    %c8_84 = arith.constant 8 : index
    %c0_85 = arith.constant 0 : index
    %c0_86 = arith.constant 0 : index
    %449 = vector.load %arg16[%c8_84, %c0_85, %c0_86] : memref<24x2x16xf32, #tpu.memory_space<vmem>>, vector<1x2x8xf32>
    %450 = vector.shape_cast %449 : vector<1x2x8xf32> to vector<2x8xf32>
    %451 = vector.shape_cast %448 : vector<2x8xf32> to vector<1x2x8xf32>
    tpu.vector_store %arg16[%c8_84, %c0_85, %c0_86], %451 {strides = array<i32>} : memref<24x2x16xf32, #tpu.memory_space<vmem>>, vector<1x2x8xf32>,
    %452 = vector.extract_strided_slice %447 {offsets = [2, 0], sizes = [2, 8], strides = [1, 1]} : vector<4x8xf32> to vector<2x8xf32>
    %c7_87 = arith.constant 7 : index
    %c0_88 = arith.constant 0 : index
    %c8_89 = arith.constant 8 : index
    %453 = vector.load %arg16[%c7_87, %c0_88, %c8_89] : memref<24x2x16xf32, #tpu.memory_space<vmem>>, vector<1x2x8xf32>
    %454 = vector.shape_cast %453 : vector<1x2x8xf32> to vector<2x8xf32>
    %455 = vector.shape_cast %452 : vector<2x8xf32> to vector<1x2x8xf32>
    tpu.vector_store %arg16[%c7_87, %c0_88, %c8_89], %455 {strides = array<i32>} : memref<24x2x16xf32, #tpu.memory_space<vmem>>, vector<1x2x8xf32>,
    %456 = arith.subf %445, %416 : vector<4x8xf32>
    %457 = vector.broadcast %421 : vector<4x1xf32> to vector<4x8xf32>
    %458 = arith.mulf %457, %456 : vector<4x8xf32>
    %459 = arith.addf %416, %458 : vector<4x8xf32>
    %460 = arith.subf %443, %420 : vector<4x8xf32>
    %461 = vector.broadcast %421 : vector<4x1xf32> to vector<4x8xf32>
    %462 = arith.mulf %461, %460 : vector<4x8xf32>
    %463 = arith.addf %420, %462 : vector<4x8xf32>
    %464 = vector.extract_strided_slice %74 {offsets = [0, 9], sizes = [4, 1], strides = [1, 1]} : vector<4x24xf32> to vector<4x1xf32>
    %465 = vector.extract_strided_slice %72 {offsets = [18, 0], sizes = [2, 32], strides = [1, 1]} : vector<48x64xf32> to vector<2x32xf32>
    %466 = vector.extract_strided_slice %72 {offsets = [12, 32], sizes = [2, 32], strides = [1, 1]} : vector<48x64xf32> to vector<2x32xf32>
    %467 = tpu.concatenate %465, %466 in 0 : vector<2x32xf32>, vector<2x32xf32> -> vector<4x32xf32>
    %cst_90 = arith.constant dense<0.000000e+00> : vector<4x64xf32>
    %468 = tpu.matmul %459, %73, %cst_90 {dimension_numbers = #tpu.dot_dimension_numbers<[1], [0], [0], [1], [0, 0, 1, 1], [], []>} : vector<4x8xf32>, vector<8x64xf32>, vector<4x64xf32> -> vector<4x64xf32>
    %469 = vector.extract_strided_slice %468 {offsets = [0, 0], sizes = [2, 32], strides = [1, 1]} : vector<4x64xf32> to vector<2x32xf32>
    %470 = vector.extract_strided_slice %468 {offsets = [2, 32], sizes = [2, 32], strides = [1, 1]} : vector<4x64xf32> to vector<2x32xf32>
    %471 = tpu.concatenate %469, %470 in 0 : vector<2x32xf32>, vector<2x32xf32> -> vector<4x32xf32>
    %472 = arith.addf %467, %471 : vector<4x32xf32>
    %473 = vector.extract_strided_slice %472 {offsets = [0, 0], sizes = [4, 24], strides = [1, 1]} : vector<4x32xf32> to vector<4x24xf32>
    %474 = arith.negf %473 : vector<4x24xf32>
    %475 = math.exp %474 : vector<4x24xf32>
    %cst_91 = arith.constant 1.000000e+00 : f32
    %476 = vector.broadcast %cst_91 : f32 to vector<4x24xf32>
    %477 = arith.addf %476, %475 : vector<4x24xf32>
    %478 = arith.divf %476, %477 : vector<4x24xf32>
    %479 = vector.extract_strided_slice %472 {offsets = [0, 24], sizes = [4, 8], strides = [1, 1]} : vector<4x32xf32> to vector<4x8xf32>
    %480 = math.tanh %479 : vector<4x8xf32>
    %481 = vector.extract_strided_slice %478 {offsets = [0, 0], sizes = [4, 8], strides = [1, 1]} : vector<4x24xf32> to vector<4x8xf32>
    %482 = vector.extract_strided_slice %478 {offsets = [0, 8], sizes = [4, 8], strides = [1, 1]} : vector<4x24xf32> to vector<4x8xf32>
    %483 = vector.extract_strided_slice %478 {offsets = [0, 16], sizes = [4, 8], strides = [1, 1]} : vector<4x24xf32> to vector<4x8xf32>
    %484 = arith.mulf %482, %463 : vector<4x8xf32>
    %485 = arith.mulf %481, %480 : vector<4x8xf32>
    %486 = arith.addf %484, %485 : vector<4x8xf32>
    %487 = math.tanh %486 : vector<4x8xf32>
    %488 = arith.mulf %483, %487 : vector<4x8xf32>
    %489 = vector.broadcast %464 : vector<4x1xf32> to vector<4x8xf32>
    %490 = arith.mulf %489, %488 : vector<4x8xf32>
    %491 = vector.extract_strided_slice %490 {offsets = [0, 0], sizes = [2, 8], strides = [1, 1]} : vector<4x8xf32> to vector<2x8xf32>
    %c9_92 = arith.constant 9 : index
    %c0_93 = arith.constant 0 : index
    %c0_94 = arith.constant 0 : index
    %492 = vector.load %arg16[%c9_92, %c0_93, %c0_94] : memref<24x2x16xf32, #tpu.memory_space<vmem>>, vector<1x2x8xf32>
    %493 = vector.shape_cast %492 : vector<1x2x8xf32> to vector<2x8xf32>
    %494 = vector.shape_cast %491 : vector<2x8xf32> to vector<1x2x8xf32>
    tpu.vector_store %arg16[%c9_92, %c0_93, %c0_94], %494 {strides = array<i32>} : memref<24x2x16xf32, #tpu.memory_space<vmem>>, vector<1x2x8xf32>,
    %495 = vector.extract_strided_slice %490 {offsets = [2, 0], sizes = [2, 8], strides = [1, 1]} : vector<4x8xf32> to vector<2x8xf32>
    %c6_95 = arith.constant 6 : index
    %c0_96 = arith.constant 0 : index
    %c8_97 = arith.constant 8 : index
    %496 = vector.load %arg16[%c6_95, %c0_96, %c8_97] : memref<24x2x16xf32, #tpu.memory_space<vmem>>, vector<1x2x8xf32>
    %497 = vector.shape_cast %496 : vector<1x2x8xf32> to vector<2x8xf32>
    %498 = vector.shape_cast %495 : vector<2x8xf32> to vector<1x2x8xf32>
    tpu.vector_store %arg16[%c6_95, %c0_96, %c8_97], %498 {strides = array<i32>} : memref<24x2x16xf32, #tpu.memory_space<vmem>>, vector<1x2x8xf32>,
    %499 = arith.subf %488, %459 : vector<4x8xf32>
    %500 = vector.broadcast %464 : vector<4x1xf32> to vector<4x8xf32>
    %501 = arith.mulf %500, %499 : vector<4x8xf32>
    %502 = arith.addf %459, %501 : vector<4x8xf32>
    %503 = arith.subf %486, %463 : vector<4x8xf32>
    %504 = vector.broadcast %464 : vector<4x1xf32> to vector<4x8xf32>
    %505 = arith.mulf %504, %503 : vector<4x8xf32>
    %506 = arith.addf %463, %505 : vector<4x8xf32>
    %507 = vector.extract_strided_slice %74 {offsets = [0, 10], sizes = [4, 1], strides = [1, 1]} : vector<4x24xf32> to vector<4x1xf32>
    %508 = vector.extract_strided_slice %72 {offsets = [20, 0], sizes = [2, 32], strides = [1, 1]} : vector<48x64xf32> to vector<2x32xf32>
    %509 = vector.extract_strided_slice %72 {offsets = [10, 32], sizes = [2, 32], strides = [1, 1]} : vector<48x64xf32> to vector<2x32xf32>
    %510 = tpu.concatenate %508, %509 in 0 : vector<2x32xf32>, vector<2x32xf32> -> vector<4x32xf32>
    %cst_98 = arith.constant dense<0.000000e+00> : vector<4x64xf32>
    %511 = tpu.matmul %502, %73, %cst_98 {dimension_numbers = #tpu.dot_dimension_numbers<[1], [0], [0], [1], [0, 0, 1, 1], [], []>} : vector<4x8xf32>, vector<8x64xf32>, vector<4x64xf32> -> vector<4x64xf32>
    %512 = vector.extract_strided_slice %511 {offsets = [0, 0], sizes = [2, 32], strides = [1, 1]} : vector<4x64xf32> to vector<2x32xf32>
    %513 = vector.extract_strided_slice %511 {offsets = [2, 32], sizes = [2, 32], strides = [1, 1]} : vector<4x64xf32> to vector<2x32xf32>
    %514 = tpu.concatenate %512, %513 in 0 : vector<2x32xf32>, vector<2x32xf32> -> vector<4x32xf32>
    %515 = arith.addf %510, %514 : vector<4x32xf32>
    %516 = vector.extract_strided_slice %515 {offsets = [0, 0], sizes = [4, 24], strides = [1, 1]} : vector<4x32xf32> to vector<4x24xf32>
    %517 = arith.negf %516 : vector<4x24xf32>
    %518 = math.exp %517 : vector<4x24xf32>
    %cst_99 = arith.constant 1.000000e+00 : f32
    %519 = vector.broadcast %cst_99 : f32 to vector<4x24xf32>
    %520 = arith.addf %519, %518 : vector<4x24xf32>
    %521 = arith.divf %519, %520 : vector<4x24xf32>
    %522 = vector.extract_strided_slice %515 {offsets = [0, 24], sizes = [4, 8], strides = [1, 1]} : vector<4x32xf32> to vector<4x8xf32>
    %523 = math.tanh %522 : vector<4x8xf32>
    %524 = vector.extract_strided_slice %521 {offsets = [0, 0], sizes = [4, 8], strides = [1, 1]} : vector<4x24xf32> to vector<4x8xf32>
    %525 = vector.extract_strided_slice %521 {offsets = [0, 8], sizes = [4, 8], strides = [1, 1]} : vector<4x24xf32> to vector<4x8xf32>
    %526 = vector.extract_strided_slice %521 {offsets = [0, 16], sizes = [4, 8], strides = [1, 1]} : vector<4x24xf32> to vector<4x8xf32>
    %527 = arith.mulf %525, %506 : vector<4x8xf32>
    %528 = arith.mulf %524, %523 : vector<4x8xf32>
    %529 = arith.addf %527, %528 : vector<4x8xf32>
    %530 = math.tanh %529 : vector<4x8xf32>
    %531 = arith.mulf %526, %530 : vector<4x8xf32>
    %532 = vector.broadcast %507 : vector<4x1xf32> to vector<4x8xf32>
    %533 = arith.mulf %532, %531 : vector<4x8xf32>
    %534 = vector.extract_strided_slice %533 {offsets = [0, 0], sizes = [2, 8], strides = [1, 1]} : vector<4x8xf32> to vector<2x8xf32>
    %c10_100 = arith.constant 10 : index
    %c0_101 = arith.constant 0 : index
    %c0_102 = arith.constant 0 : index
    %535 = vector.load %arg16[%c10_100, %c0_101, %c0_102] : memref<24x2x16xf32, #tpu.memory_space<vmem>>, vector<1x2x8xf32>
    %536 = vector.shape_cast %535 : vector<1x2x8xf32> to vector<2x8xf32>
    %537 = vector.shape_cast %534 : vector<2x8xf32> to vector<1x2x8xf32>
    tpu.vector_store %arg16[%c10_100, %c0_101, %c0_102], %537 {strides = array<i32>} : memref<24x2x16xf32, #tpu.memory_space<vmem>>, vector<1x2x8xf32>,
    %538 = vector.extract_strided_slice %533 {offsets = [2, 0], sizes = [2, 8], strides = [1, 1]} : vector<4x8xf32> to vector<2x8xf32>
    %c5_103 = arith.constant 5 : index
    %c0_104 = arith.constant 0 : index
    %c8_105 = arith.constant 8 : index
    %539 = vector.load %arg16[%c5_103, %c0_104, %c8_105] : memref<24x2x16xf32, #tpu.memory_space<vmem>>, vector<1x2x8xf32>
    %540 = vector.shape_cast %539 : vector<1x2x8xf32> to vector<2x8xf32>
    %541 = vector.shape_cast %538 : vector<2x8xf32> to vector<1x2x8xf32>
    tpu.vector_store %arg16[%c5_103, %c0_104, %c8_105], %541 {strides = array<i32>} : memref<24x2x16xf32, #tpu.memory_space<vmem>>, vector<1x2x8xf32>,
    %542 = arith.subf %531, %502 : vector<4x8xf32>
    %543 = vector.broadcast %507 : vector<4x1xf32> to vector<4x8xf32>
    %544 = arith.mulf %543, %542 : vector<4x8xf32>
    %545 = arith.addf %502, %544 : vector<4x8xf32>
    %546 = arith.subf %529, %506 : vector<4x8xf32>
    %547 = vector.broadcast %507 : vector<4x1xf32> to vector<4x8xf32>
    %548 = arith.mulf %547, %546 : vector<4x8xf32>
    %549 = arith.addf %506, %548 : vector<4x8xf32>
    %550 = vector.extract_strided_slice %74 {offsets = [0, 11], sizes = [4, 1], strides = [1, 1]} : vector<4x24xf32> to vector<4x1xf32>
    %551 = vector.extract_strided_slice %72 {offsets = [22, 0], sizes = [2, 32], strides = [1, 1]} : vector<48x64xf32> to vector<2x32xf32>
    %552 = vector.extract_strided_slice %72 {offsets = [8, 32], sizes = [2, 32], strides = [1, 1]} : vector<48x64xf32> to vector<2x32xf32>
    %553 = tpu.concatenate %551, %552 in 0 : vector<2x32xf32>, vector<2x32xf32> -> vector<4x32xf32>
    %cst_106 = arith.constant dense<0.000000e+00> : vector<4x64xf32>
    %554 = tpu.matmul %545, %73, %cst_106 {dimension_numbers = #tpu.dot_dimension_numbers<[1], [0], [0], [1], [0, 0, 1, 1], [], []>} : vector<4x8xf32>, vector<8x64xf32>, vector<4x64xf32> -> vector<4x64xf32>
    %555 = vector.extract_strided_slice %554 {offsets = [0, 0], sizes = [2, 32], strides = [1, 1]} : vector<4x64xf32> to vector<2x32xf32>
    %556 = vector.extract_strided_slice %554 {offsets = [2, 32], sizes = [2, 32], strides = [1, 1]} : vector<4x64xf32> to vector<2x32xf32>
    %557 = tpu.concatenate %555, %556 in 0 : vector<2x32xf32>, vector<2x32xf32> -> vector<4x32xf32>
    %558 = arith.addf %553, %557 : vector<4x32xf32>
    %559 = vector.extract_strided_slice %558 {offsets = [0, 0], sizes = [4, 24], strides = [1, 1]} : vector<4x32xf32> to vector<4x24xf32>
    %560 = arith.negf %559 : vector<4x24xf32>
    %561 = math.exp %560 : vector<4x24xf32>
    %cst_107 = arith.constant 1.000000e+00 : f32
    %562 = vector.broadcast %cst_107 : f32 to vector<4x24xf32>
    %563 = arith.addf %562, %561 : vector<4x24xf32>
    %564 = arith.divf %562, %563 : vector<4x24xf32>
    %565 = vector.extract_strided_slice %558 {offsets = [0, 24], sizes = [4, 8], strides = [1, 1]} : vector<4x32xf32> to vector<4x8xf32>
    %566 = math.tanh %565 : vector<4x8xf32>
    %567 = vector.extract_strided_slice %564 {offsets = [0, 0], sizes = [4, 8], strides = [1, 1]} : vector<4x24xf32> to vector<4x8xf32>
    %568 = vector.extract_strided_slice %564 {offsets = [0, 8], sizes = [4, 8], strides = [1, 1]} : vector<4x24xf32> to vector<4x8xf32>
    %569 = vector.extract_strided_slice %564 {offsets = [0, 16], sizes = [4, 8], strides = [1, 1]} : vector<4x24xf32> to vector<4x8xf32>
    %570 = arith.mulf %568, %549 : vector<4x8xf32>
    %571 = arith.mulf %567, %566 : vector<4x8xf32>
    %572 = arith.addf %570, %571 : vector<4x8xf32>
    %573 = math.tanh %572 : vector<4x8xf32>
    %574 = arith.mulf %569, %573 : vector<4x8xf32>
    %575 = vector.broadcast %550 : vector<4x1xf32> to vector<4x8xf32>
    %576 = arith.mulf %575, %574 : vector<4x8xf32>
    %577 = vector.extract_strided_slice %576 {offsets = [0, 0], sizes = [2, 8], strides = [1, 1]} : vector<4x8xf32> to vector<2x8xf32>
    %c11_108 = arith.constant 11 : index
    %c0_109 = arith.constant 0 : index
    %c0_110 = arith.constant 0 : index
    %578 = vector.load %arg16[%c11_108, %c0_109, %c0_110] : memref<24x2x16xf32, #tpu.memory_space<vmem>>, vector<1x2x8xf32>
    %579 = vector.shape_cast %578 : vector<1x2x8xf32> to vector<2x8xf32>
    %580 = vector.shape_cast %577 : vector<2x8xf32> to vector<1x2x8xf32>
    tpu.vector_store %arg16[%c11_108, %c0_109, %c0_110], %580 {strides = array<i32>} : memref<24x2x16xf32, #tpu.memory_space<vmem>>, vector<1x2x8xf32>,
    %581 = vector.extract_strided_slice %576 {offsets = [2, 0], sizes = [2, 8], strides = [1, 1]} : vector<4x8xf32> to vector<2x8xf32>
    %c4_111 = arith.constant 4 : index
    %c0_112 = arith.constant 0 : index
    %c8_113 = arith.constant 8 : index
    %582 = vector.load %arg16[%c4_111, %c0_112, %c8_113] : memref<24x2x16xf32, #tpu.memory_space<vmem>>, vector<1x2x8xf32>
    %583 = vector.shape_cast %582 : vector<1x2x8xf32> to vector<2x8xf32>
    %584 = vector.shape_cast %581 : vector<2x8xf32> to vector<1x2x8xf32>
    tpu.vector_store %arg16[%c4_111, %c0_112, %c8_113], %584 {strides = array<i32>} : memref<24x2x16xf32, #tpu.memory_space<vmem>>, vector<1x2x8xf32>,
    %585 = arith.subf %574, %545 : vector<4x8xf32>
    %586 = vector.broadcast %550 : vector<4x1xf32> to vector<4x8xf32>
    %587 = arith.mulf %586, %585 : vector<4x8xf32>
    %588 = arith.addf %545, %587 : vector<4x8xf32>
    %589 = arith.subf %572, %549 : vector<4x8xf32>
    %590 = vector.broadcast %550 : vector<4x1xf32> to vector<4x8xf32>
    %591 = arith.mulf %590, %589 : vector<4x8xf32>
    %592 = arith.addf %549, %591 : vector<4x8xf32>
    %593 = vector.extract_strided_slice %74 {offsets = [0, 12], sizes = [4, 1], strides = [1, 1]} : vector<4x24xf32> to vector<4x1xf32>
    %594 = vector.extract_strided_slice %72 {offsets = [24, 0], sizes = [2, 32], strides = [1, 1]} : vector<48x64xf32> to vector<2x32xf32>
    %595 = vector.extract_strided_slice %72 {offsets = [6, 32], sizes = [2, 32], strides = [1, 1]} : vector<48x64xf32> to vector<2x32xf32>
    %596 = tpu.concatenate %594, %595 in 0 : vector<2x32xf32>, vector<2x32xf32> -> vector<4x32xf32>
    %cst_114 = arith.constant dense<0.000000e+00> : vector<4x64xf32>
    %597 = tpu.matmul %588, %73, %cst_114 {dimension_numbers = #tpu.dot_dimension_numbers<[1], [0], [0], [1], [0, 0, 1, 1], [], []>} : vector<4x8xf32>, vector<8x64xf32>, vector<4x64xf32> -> vector<4x64xf32>
    %598 = vector.extract_strided_slice %597 {offsets = [0, 0], sizes = [2, 32], strides = [1, 1]} : vector<4x64xf32> to vector<2x32xf32>
    %599 = vector.extract_strided_slice %597 {offsets = [2, 32], sizes = [2, 32], strides = [1, 1]} : vector<4x64xf32> to vector<2x32xf32>
    %600 = tpu.concatenate %598, %599 in 0 : vector<2x32xf32>, vector<2x32xf32> -> vector<4x32xf32>
    %601 = arith.addf %596, %600 : vector<4x32xf32>
    %602 = vector.extract_strided_slice %601 {offsets = [0, 0], sizes = [4, 24], strides = [1, 1]} : vector<4x32xf32> to vector<4x24xf32>
    %603 = arith.negf %602 : vector<4x24xf32>
    %604 = math.exp %603 : vector<4x24xf32>
    %cst_115 = arith.constant 1.000000e+00 : f32
    %605 = vector.broadcast %cst_115 : f32 to vector<4x24xf32>
    %606 = arith.addf %605, %604 : vector<4x24xf32>
    %607 = arith.divf %605, %606 : vector<4x24xf32>
    %608 = vector.extract_strided_slice %601 {offsets = [0, 24], sizes = [4, 8], strides = [1, 1]} : vector<4x32xf32> to vector<4x8xf32>
    %609 = math.tanh %608 : vector<4x8xf32>
    %610 = vector.extract_strided_slice %607 {offsets = [0, 0], sizes = [4, 8], strides = [1, 1]} : vector<4x24xf32> to vector<4x8xf32>
    %611 = vector.extract_strided_slice %607 {offsets = [0, 8], sizes = [4, 8], strides = [1, 1]} : vector<4x24xf32> to vector<4x8xf32>
    %612 = vector.extract_strided_slice %607 {offsets = [0, 16], sizes = [4, 8], strides = [1, 1]} : vector<4x24xf32> to vector<4x8xf32>
    %613 = arith.mulf %611, %592 : vector<4x8xf32>
    %614 = arith.mulf %610, %609 : vector<4x8xf32>
    %615 = arith.addf %613, %614 : vector<4x8xf32>
    %616 = math.tanh %615 : vector<4x8xf32>
    %617 = arith.mulf %612, %616 : vector<4x8xf32>
    %618 = vector.broadcast %593 : vector<4x1xf32> to vector<4x8xf32>
    %619 = arith.mulf %618, %617 : vector<4x8xf32>
    %620 = vector.extract_strided_slice %619 {offsets = [0, 0], sizes = [2, 8], strides = [1, 1]} : vector<4x8xf32> to vector<2x8xf32>
    %c12_116 = arith.constant 12 : index
    %c0_117 = arith.constant 0 : index
    %c0_118 = arith.constant 0 : index
    %621 = vector.load %arg16[%c12_116, %c0_117, %c0_118] : memref<24x2x16xf32, #tpu.memory_space<vmem>>, vector<1x2x8xf32>
    %622 = vector.shape_cast %621 : vector<1x2x8xf32> to vector<2x8xf32>
    %623 = vector.shape_cast %620 : vector<2x8xf32> to vector<1x2x8xf32>
    tpu.vector_store %arg16[%c12_116, %c0_117, %c0_118], %623 {strides = array<i32>} : memref<24x2x16xf32, #tpu.memory_space<vmem>>, vector<1x2x8xf32>,
    %624 = vector.extract_strided_slice %619 {offsets = [2, 0], sizes = [2, 8], strides = [1, 1]} : vector<4x8xf32> to vector<2x8xf32>
    %c3_119 = arith.constant 3 : index
    %c0_120 = arith.constant 0 : index
    %c8_121 = arith.constant 8 : index
    %625 = vector.load %arg16[%c3_119, %c0_120, %c8_121] : memref<24x2x16xf32, #tpu.memory_space<vmem>>, vector<1x2x8xf32>
    %626 = vector.shape_cast %625 : vector<1x2x8xf32> to vector<2x8xf32>
    %627 = vector.shape_cast %624 : vector<2x8xf32> to vector<1x2x8xf32>
    tpu.vector_store %arg16[%c3_119, %c0_120, %c8_121], %627 {strides = array<i32>} : memref<24x2x16xf32, #tpu.memory_space<vmem>>, vector<1x2x8xf32>,
    %628 = arith.subf %617, %588 : vector<4x8xf32>
    %629 = vector.broadcast %593 : vector<4x1xf32> to vector<4x8xf32>
    %630 = arith.mulf %629, %628 : vector<4x8xf32>
    %631 = arith.addf %588, %630 : vector<4x8xf32>
    %632 = arith.subf %615, %592 : vector<4x8xf32>
    %633 = vector.broadcast %593 : vector<4x1xf32> to vector<4x8xf32>
    %634 = arith.mulf %633, %632 : vector<4x8xf32>
    %635 = arith.addf %592, %634 : vector<4x8xf32>
    %636 = vector.extract_strided_slice %74 {offsets = [0, 13], sizes = [4, 1], strides = [1, 1]} : vector<4x24xf32> to vector<4x1xf32>
    %637 = vector.extract_strided_slice %72 {offsets = [26, 0], sizes = [2, 32], strides = [1, 1]} : vector<48x64xf32> to vector<2x32xf32>
    %638 = vector.extract_strided_slice %72 {offsets = [4, 32], sizes = [2, 32], strides = [1, 1]} : vector<48x64xf32> to vector<2x32xf32>
    %639 = tpu.concatenate %637, %638 in 0 : vector<2x32xf32>, vector<2x32xf32> -> vector<4x32xf32>
    %cst_122 = arith.constant dense<0.000000e+00> : vector<4x64xf32>
    %640 = tpu.matmul %631, %73, %cst_122 {dimension_numbers = #tpu.dot_dimension_numbers<[1], [0], [0], [1], [0, 0, 1, 1], [], []>} : vector<4x8xf32>, vector<8x64xf32>, vector<4x64xf32> -> vector<4x64xf32>
    %641 = vector.extract_strided_slice %640 {offsets = [0, 0], sizes = [2, 32], strides = [1, 1]} : vector<4x64xf32> to vector<2x32xf32>
    %642 = vector.extract_strided_slice %640 {offsets = [2, 32], sizes = [2, 32], strides = [1, 1]} : vector<4x64xf32> to vector<2x32xf32>
    %643 = tpu.concatenate %641, %642 in 0 : vector<2x32xf32>, vector<2x32xf32> -> vector<4x32xf32>
    %644 = arith.addf %639, %643 : vector<4x32xf32>
    %645 = vector.extract_strided_slice %644 {offsets = [0, 0], sizes = [4, 24], strides = [1, 1]} : vector<4x32xf32> to vector<4x24xf32>
    %646 = arith.negf %645 : vector<4x24xf32>
    %647 = math.exp %646 : vector<4x24xf32>
    %cst_123 = arith.constant 1.000000e+00 : f32
    %648 = vector.broadcast %cst_123 : f32 to vector<4x24xf32>
    %649 = arith.addf %648, %647 : vector<4x24xf32>
    %650 = arith.divf %648, %649 : vector<4x24xf32>
    %651 = vector.extract_strided_slice %644 {offsets = [0, 24], sizes = [4, 8], strides = [1, 1]} : vector<4x32xf32> to vector<4x8xf32>
    %652 = math.tanh %651 : vector<4x8xf32>
    %653 = vector.extract_strided_slice %650 {offsets = [0, 0], sizes = [4, 8], strides = [1, 1]} : vector<4x24xf32> to vector<4x8xf32>
    %654 = vector.extract_strided_slice %650 {offsets = [0, 8], sizes = [4, 8], strides = [1, 1]} : vector<4x24xf32> to vector<4x8xf32>
    %655 = vector.extract_strided_slice %650 {offsets = [0, 16], sizes = [4, 8], strides = [1, 1]} : vector<4x24xf32> to vector<4x8xf32>
    %656 = arith.mulf %654, %635 : vector<4x8xf32>
    %657 = arith.mulf %653, %652 : vector<4x8xf32>
    %658 = arith.addf %656, %657 : vector<4x8xf32>
    %659 = math.tanh %658 : vector<4x8xf32>
    %660 = arith.mulf %655, %659 : vector<4x8xf32>
    %661 = vector.broadcast %636 : vector<4x1xf32> to vector<4x8xf32>
    %662 = arith.mulf %661, %660 : vector<4x8xf32>
    %663 = vector.extract_strided_slice %662 {offsets = [0, 0], sizes = [2, 8], strides = [1, 1]} : vector<4x8xf32> to vector<2x8xf32>
    %c13_124 = arith.constant 13 : index
    %c0_125 = arith.constant 0 : index
    %c0_126 = arith.constant 0 : index
    %664 = vector.load %arg16[%c13_124, %c0_125, %c0_126] : memref<24x2x16xf32, #tpu.memory_space<vmem>>, vector<1x2x8xf32>
    %665 = vector.shape_cast %664 : vector<1x2x8xf32> to vector<2x8xf32>
    %666 = vector.shape_cast %663 : vector<2x8xf32> to vector<1x2x8xf32>
    tpu.vector_store %arg16[%c13_124, %c0_125, %c0_126], %666 {strides = array<i32>} : memref<24x2x16xf32, #tpu.memory_space<vmem>>, vector<1x2x8xf32>,
    %667 = vector.extract_strided_slice %662 {offsets = [2, 0], sizes = [2, 8], strides = [1, 1]} : vector<4x8xf32> to vector<2x8xf32>
    %c2_127 = arith.constant 2 : index
    %c0_128 = arith.constant 0 : index
    %c8_129 = arith.constant 8 : index
    %668 = vector.load %arg16[%c2_127, %c0_128, %c8_129] : memref<24x2x16xf32, #tpu.memory_space<vmem>>, vector<1x2x8xf32>
    %669 = vector.shape_cast %668 : vector<1x2x8xf32> to vector<2x8xf32>
    %670 = vector.shape_cast %667 : vector<2x8xf32> to vector<1x2x8xf32>
    tpu.vector_store %arg16[%c2_127, %c0_128, %c8_129], %670 {strides = array<i32>} : memref<24x2x16xf32, #tpu.memory_space<vmem>>, vector<1x2x8xf32>,
    %671 = arith.subf %660, %631 : vector<4x8xf32>
    %672 = vector.broadcast %636 : vector<4x1xf32> to vector<4x8xf32>
    %673 = arith.mulf %672, %671 : vector<4x8xf32>
    %674 = arith.addf %631, %673 : vector<4x8xf32>
    %675 = arith.subf %658, %635 : vector<4x8xf32>
    %676 = vector.broadcast %636 : vector<4x1xf32> to vector<4x8xf32>
    %677 = arith.mulf %676, %675 : vector<4x8xf32>
    %678 = arith.addf %635, %677 : vector<4x8xf32>
    %679 = vector.extract_strided_slice %74 {offsets = [0, 14], sizes = [4, 1], strides = [1, 1]} : vector<4x24xf32> to vector<4x1xf32>
    %680 = vector.extract_strided_slice %72 {offsets = [28, 0], sizes = [2, 32], strides = [1, 1]} : vector<48x64xf32> to vector<2x32xf32>
    %681 = vector.extract_strided_slice %72 {offsets = [2, 32], sizes = [2, 32], strides = [1, 1]} : vector<48x64xf32> to vector<2x32xf32>
    %682 = tpu.concatenate %680, %681 in 0 : vector<2x32xf32>, vector<2x32xf32> -> vector<4x32xf32>
    %cst_130 = arith.constant dense<0.000000e+00> : vector<4x64xf32>
    %683 = tpu.matmul %674, %73, %cst_130 {dimension_numbers = #tpu.dot_dimension_numbers<[1], [0], [0], [1], [0, 0, 1, 1], [], []>} : vector<4x8xf32>, vector<8x64xf32>, vector<4x64xf32> -> vector<4x64xf32>
    %684 = vector.extract_strided_slice %683 {offsets = [0, 0], sizes = [2, 32], strides = [1, 1]} : vector<4x64xf32> to vector<2x32xf32>
    %685 = vector.extract_strided_slice %683 {offsets = [2, 32], sizes = [2, 32], strides = [1, 1]} : vector<4x64xf32> to vector<2x32xf32>
    %686 = tpu.concatenate %684, %685 in 0 : vector<2x32xf32>, vector<2x32xf32> -> vector<4x32xf32>
    %687 = arith.addf %682, %686 : vector<4x32xf32>
    %688 = vector.extract_strided_slice %687 {offsets = [0, 0], sizes = [4, 24], strides = [1, 1]} : vector<4x32xf32> to vector<4x24xf32>
    %689 = arith.negf %688 : vector<4x24xf32>
    %690 = math.exp %689 : vector<4x24xf32>
    %cst_131 = arith.constant 1.000000e+00 : f32
    %691 = vector.broadcast %cst_131 : f32 to vector<4x24xf32>
    %692 = arith.addf %691, %690 : vector<4x24xf32>
    %693 = arith.divf %691, %692 : vector<4x24xf32>
    %694 = vector.extract_strided_slice %687 {offsets = [0, 24], sizes = [4, 8], strides = [1, 1]} : vector<4x32xf32> to vector<4x8xf32>
    %695 = math.tanh %694 : vector<4x8xf32>
    %696 = vector.extract_strided_slice %693 {offsets = [0, 0], sizes = [4, 8], strides = [1, 1]} : vector<4x24xf32> to vector<4x8xf32>
    %697 = vector.extract_strided_slice %693 {offsets = [0, 8], sizes = [4, 8], strides = [1, 1]} : vector<4x24xf32> to vector<4x8xf32>
    %698 = vector.extract_strided_slice %693 {offsets = [0, 16], sizes = [4, 8], strides = [1, 1]} : vector<4x24xf32> to vector<4x8xf32>
    %699 = arith.mulf %697, %678 : vector<4x8xf32>
    %700 = arith.mulf %696, %695 : vector<4x8xf32>
    %701 = arith.addf %699, %700 : vector<4x8xf32>
    %702 = math.tanh %701 : vector<4x8xf32>
    %703 = arith.mulf %698, %702 : vector<4x8xf32>
    %704 = vector.broadcast %679 : vector<4x1xf32> to vector<4x8xf32>
    %705 = arith.mulf %704, %703 : vector<4x8xf32>
    %706 = vector.extract_strided_slice %705 {offsets = [0, 0], sizes = [2, 8], strides = [1, 1]} : vector<4x8xf32> to vector<2x8xf32>
    %c14_132 = arith.constant 14 : index
    %c0_133 = arith.constant 0 : index
    %c0_134 = arith.constant 0 : index
    %707 = vector.load %arg16[%c14_132, %c0_133, %c0_134] : memref<24x2x16xf32, #tpu.memory_space<vmem>>, vector<1x2x8xf32>
    %708 = vector.shape_cast %707 : vector<1x2x8xf32> to vector<2x8xf32>
    %709 = vector.shape_cast %706 : vector<2x8xf32> to vector<1x2x8xf32>
    tpu.vector_store %arg16[%c14_132, %c0_133, %c0_134], %709 {strides = array<i32>} : memref<24x2x16xf32, #tpu.memory_space<vmem>>, vector<1x2x8xf32>,
    %710 = vector.extract_strided_slice %705 {offsets = [2, 0], sizes = [2, 8], strides = [1, 1]} : vector<4x8xf32> to vector<2x8xf32>
    %c1_135 = arith.constant 1 : index
    %c0_136 = arith.constant 0 : index
    %c8_137 = arith.constant 8 : index
    %711 = vector.load %arg16[%c1_135, %c0_136, %c8_137] : memref<24x2x16xf32, #tpu.memory_space<vmem>>, vector<1x2x8xf32>
    %712 = vector.shape_cast %711 : vector<1x2x8xf32> to vector<2x8xf32>
    %713 = vector.shape_cast %710 : vector<2x8xf32> to vector<1x2x8xf32>
    tpu.vector_store %arg16[%c1_135, %c0_136, %c8_137], %713 {strides = array<i32>} : memref<24x2x16xf32, #tpu.memory_space<vmem>>, vector<1x2x8xf32>,
    %714 = arith.subf %703, %674 : vector<4x8xf32>
    %715 = vector.broadcast %679 : vector<4x1xf32> to vector<4x8xf32>
    %716 = arith.mulf %715, %714 : vector<4x8xf32>
    %717 = arith.addf %674, %716 : vector<4x8xf32>
    %718 = arith.subf %701, %678 : vector<4x8xf32>
    %719 = vector.broadcast %679 : vector<4x1xf32> to vector<4x8xf32>
    %720 = arith.mulf %719, %718 : vector<4x8xf32>
    %721 = arith.addf %678, %720 : vector<4x8xf32>
    %722 = vector.extract_strided_slice %74 {offsets = [0, 15], sizes = [4, 1], strides = [1, 1]} : vector<4x24xf32> to vector<4x1xf32>
    %723 = vector.extract_strided_slice %72 {offsets = [30, 0], sizes = [2, 32], strides = [1, 1]} : vector<48x64xf32> to vector<2x32xf32>
    %724 = vector.extract_strided_slice %72 {offsets = [0, 32], sizes = [2, 32], strides = [1, 1]} : vector<48x64xf32> to vector<2x32xf32>
    %725 = tpu.concatenate %723, %724 in 0 : vector<2x32xf32>, vector<2x32xf32> -> vector<4x32xf32>
    %cst_138 = arith.constant dense<0.000000e+00> : vector<4x64xf32>
    %726 = tpu.matmul %717, %73, %cst_138 {dimension_numbers = #tpu.dot_dimension_numbers<[1], [0], [0], [1], [0, 0, 1, 1], [], []>} : vector<4x8xf32>, vector<8x64xf32>, vector<4x64xf32> -> vector<4x64xf32>
    %727 = vector.extract_strided_slice %726 {offsets = [0, 0], sizes = [2, 32], strides = [1, 1]} : vector<4x64xf32> to vector<2x32xf32>
    %728 = vector.extract_strided_slice %726 {offsets = [2, 32], sizes = [2, 32], strides = [1, 1]} : vector<4x64xf32> to vector<2x32xf32>
    %729 = tpu.concatenate %727, %728 in 0 : vector<2x32xf32>, vector<2x32xf32> -> vector<4x32xf32>
    %730 = arith.addf %725, %729 : vector<4x32xf32>
    %731 = vector.extract_strided_slice %730 {offsets = [0, 0], sizes = [4, 24], strides = [1, 1]} : vector<4x32xf32> to vector<4x24xf32>
    %732 = arith.negf %731 : vector<4x24xf32>
    %733 = math.exp %732 : vector<4x24xf32>
    %cst_139 = arith.constant 1.000000e+00 : f32
    %734 = vector.broadcast %cst_139 : f32 to vector<4x24xf32>
    %735 = arith.addf %734, %733 : vector<4x24xf32>
    %736 = arith.divf %734, %735 : vector<4x24xf32>
    %737 = vector.extract_strided_slice %730 {offsets = [0, 24], sizes = [4, 8], strides = [1, 1]} : vector<4x32xf32> to vector<4x8xf32>
    %738 = math.tanh %737 : vector<4x8xf32>
    %739 = vector.extract_strided_slice %736 {offsets = [0, 0], sizes = [4, 8], strides = [1, 1]} : vector<4x24xf32> to vector<4x8xf32>
    %740 = vector.extract_strided_slice %736 {offsets = [0, 8], sizes = [4, 8], strides = [1, 1]} : vector<4x24xf32> to vector<4x8xf32>
    %741 = vector.extract_strided_slice %736 {offsets = [0, 16], sizes = [4, 8], strides = [1, 1]} : vector<4x24xf32> to vector<4x8xf32>
    %742 = arith.mulf %740, %721 : vector<4x8xf32>
    %743 = arith.mulf %739, %738 : vector<4x8xf32>
    %744 = arith.addf %742, %743 : vector<4x8xf32>
    %745 = math.tanh %744 : vector<4x8xf32>
    %746 = arith.mulf %741, %745 : vector<4x8xf32>
    %747 = vector.broadcast %722 : vector<4x1xf32> to vector<4x8xf32>
    %748 = arith.mulf %747, %746 : vector<4x8xf32>
    %749 = vector.extract_strided_slice %748 {offsets = [0, 0], sizes = [2, 8], strides = [1, 1]} : vector<4x8xf32> to vector<2x8xf32>
    %c15_140 = arith.constant 15 : index
    %c0_141 = arith.constant 0 : index
    %c0_142 = arith.constant 0 : index
    %750 = vector.load %arg16[%c15_140, %c0_141, %c0_142] : memref<24x2x16xf32, #tpu.memory_space<vmem>>, vector<1x2x8xf32>
    %751 = vector.shape_cast %750 : vector<1x2x8xf32> to vector<2x8xf32>
    %752 = vector.shape_cast %749 : vector<2x8xf32> to vector<1x2x8xf32>
    tpu.vector_store %arg16[%c15_140, %c0_141, %c0_142], %752 {strides = array<i32>} : memref<24x2x16xf32, #tpu.memory_space<vmem>>, vector<1x2x8xf32>,
    %753 = vector.extract_strided_slice %748 {offsets = [2, 0], sizes = [2, 8], strides = [1, 1]} : vector<4x8xf32> to vector<2x8xf32>
    %c0_143 = arith.constant 0 : index
    %c0_144 = arith.constant 0 : index
    %c8_145 = arith.constant 8 : index
    %754 = vector.load %arg16[%c0_143, %c0_144, %c8_145] : memref<24x2x16xf32, #tpu.memory_space<vmem>>, vector<1x2x8xf32>
    %755 = vector.shape_cast %754 : vector<1x2x8xf32> to vector<2x8xf32>
    %756 = vector.shape_cast %753 : vector<2x8xf32> to vector<1x2x8xf32>
    tpu.vector_store %arg16[%c0_143, %c0_144, %c8_145], %756 {strides = array<i32>} : memref<24x2x16xf32, #tpu.memory_space<vmem>>, vector<1x2x8xf32>,
    %cst_146 = arith.constant 0.000000e+00 : f32
    %757 = vector.broadcast %cst_146 : f32 to vector<4x8xf32>
    %cst_147 = arith.constant 0.000000e+00 : f32
    %758 = vector.broadcast %cst_147 : f32 to vector<4x8xf32>
    %759 = vector.extract_strided_slice %74 {offsets = [0, 16], sizes = [4, 1], strides = [1, 1]} : vector<4x24xf32> to vector<4x1xf32>
    %760 = vector.extract_strided_slice %72 {offsets = [32, 0], sizes = [2, 32], strides = [1, 1]} : vector<48x64xf32> to vector<2x32xf32>
    %761 = vector.extract_strided_slice %72 {offsets = [46, 32], sizes = [2, 32], strides = [1, 1]} : vector<48x64xf32> to vector<2x32xf32>
    %762 = tpu.concatenate %760, %761 in 0 : vector<2x32xf32>, vector<2x32xf32> -> vector<4x32xf32>
    %cst_148 = arith.constant dense<0.000000e+00> : vector<4x64xf32>
    %763 = tpu.matmul %757, %73, %cst_148 {dimension_numbers = #tpu.dot_dimension_numbers<[1], [0], [0], [1], [0, 0, 1, 1], [], []>} : vector<4x8xf32>, vector<8x64xf32>, vector<4x64xf32> -> vector<4x64xf32>
    %764 = vector.extract_strided_slice %763 {offsets = [0, 0], sizes = [2, 32], strides = [1, 1]} : vector<4x64xf32> to vector<2x32xf32>
    %765 = vector.extract_strided_slice %763 {offsets = [2, 32], sizes = [2, 32], strides = [1, 1]} : vector<4x64xf32> to vector<2x32xf32>
    %766 = tpu.concatenate %764, %765 in 0 : vector<2x32xf32>, vector<2x32xf32> -> vector<4x32xf32>
    %767 = arith.addf %762, %766 : vector<4x32xf32>
    %768 = vector.extract_strided_slice %767 {offsets = [0, 0], sizes = [4, 24], strides = [1, 1]} : vector<4x32xf32> to vector<4x24xf32>
    %769 = arith.negf %768 : vector<4x24xf32>
    %770 = math.exp %769 : vector<4x24xf32>
    %cst_149 = arith.constant 1.000000e+00 : f32
    %771 = vector.broadcast %cst_149 : f32 to vector<4x24xf32>
    %772 = arith.addf %771, %770 : vector<4x24xf32>
    %773 = arith.divf %771, %772 : vector<4x24xf32>
    %774 = vector.extract_strided_slice %767 {offsets = [0, 24], sizes = [4, 8], strides = [1, 1]} : vector<4x32xf32> to vector<4x8xf32>
    %775 = math.tanh %774 : vector<4x8xf32>
    %776 = vector.extract_strided_slice %773 {offsets = [0, 0], sizes = [4, 8], strides = [1, 1]} : vector<4x24xf32> to vector<4x8xf32>
    %777 = vector.extract_strided_slice %773 {offsets = [0, 8], sizes = [4, 8], strides = [1, 1]} : vector<4x24xf32> to vector<4x8xf32>
    %778 = vector.extract_strided_slice %773 {offsets = [0, 16], sizes = [4, 8], strides = [1, 1]} : vector<4x24xf32> to vector<4x8xf32>
    %779 = arith.mulf %777, %758 : vector<4x8xf32>
    %780 = arith.mulf %776, %775 : vector<4x8xf32>
    %781 = arith.addf %779, %780 : vector<4x8xf32>
    %782 = math.tanh %781 : vector<4x8xf32>
    %783 = arith.mulf %778, %782 : vector<4x8xf32>
    %784 = vector.broadcast %759 : vector<4x1xf32> to vector<4x8xf32>
    %785 = arith.mulf %784, %783 : vector<4x8xf32>
    %786 = vector.extract_strided_slice %785 {offsets = [0, 0], sizes = [2, 8], strides = [1, 1]} : vector<4x8xf32> to vector<2x8xf32>
    %c16 = arith.constant 16 : index
    %c0_150 = arith.constant 0 : index
    %c0_151 = arith.constant 0 : index
    %787 = vector.load %arg16[%c16, %c0_150, %c0_151] : memref<24x2x16xf32, #tpu.memory_space<vmem>>, vector<1x2x8xf32>
    %788 = vector.shape_cast %787 : vector<1x2x8xf32> to vector<2x8xf32>
    %789 = vector.shape_cast %786 : vector<2x8xf32> to vector<1x2x8xf32>
    tpu.vector_store %arg16[%c16, %c0_150, %c0_151], %789 {strides = array<i32>} : memref<24x2x16xf32, #tpu.memory_space<vmem>>, vector<1x2x8xf32>,
    %790 = vector.extract_strided_slice %785 {offsets = [2, 0], sizes = [2, 8], strides = [1, 1]} : vector<4x8xf32> to vector<2x8xf32>
    %c23 = arith.constant 23 : index
    %c0_152 = arith.constant 0 : index
    %c8_153 = arith.constant 8 : index
    %791 = vector.load %arg16[%c23, %c0_152, %c8_153] : memref<24x2x16xf32, #tpu.memory_space<vmem>>, vector<1x2x8xf32>
    %792 = vector.shape_cast %791 : vector<1x2x8xf32> to vector<2x8xf32>
    %793 = vector.shape_cast %790 : vector<2x8xf32> to vector<1x2x8xf32>
    tpu.vector_store %arg16[%c23, %c0_152, %c8_153], %793 {strides = array<i32>} : memref<24x2x16xf32, #tpu.memory_space<vmem>>, vector<1x2x8xf32>,
    %794 = arith.subf %783, %757 : vector<4x8xf32>
    %795 = vector.broadcast %759 : vector<4x1xf32> to vector<4x8xf32>
    %796 = arith.mulf %795, %794 : vector<4x8xf32>
    %797 = arith.addf %757, %796 : vector<4x8xf32>
    %798 = arith.subf %781, %758 : vector<4x8xf32>
    %799 = vector.broadcast %759 : vector<4x1xf32> to vector<4x8xf32>
    %800 = arith.mulf %799, %798 : vector<4x8xf32>
    %801 = arith.addf %758, %800 : vector<4x8xf32>
    %802 = vector.extract_strided_slice %74 {offsets = [0, 17], sizes = [4, 1], strides = [1, 1]} : vector<4x24xf32> to vector<4x1xf32>
    %803 = vector.extract_strided_slice %72 {offsets = [34, 0], sizes = [2, 32], strides = [1, 1]} : vector<48x64xf32> to vector<2x32xf32>
    %804 = vector.extract_strided_slice %72 {offsets = [44, 32], sizes = [2, 32], strides = [1, 1]} : vector<48x64xf32> to vector<2x32xf32>
    %805 = tpu.concatenate %803, %804 in 0 : vector<2x32xf32>, vector<2x32xf32> -> vector<4x32xf32>
    %cst_154 = arith.constant dense<0.000000e+00> : vector<4x64xf32>
    %806 = tpu.matmul %797, %73, %cst_154 {dimension_numbers = #tpu.dot_dimension_numbers<[1], [0], [0], [1], [0, 0, 1, 1], [], []>} : vector<4x8xf32>, vector<8x64xf32>, vector<4x64xf32> -> vector<4x64xf32>
    %807 = vector.extract_strided_slice %806 {offsets = [0, 0], sizes = [2, 32], strides = [1, 1]} : vector<4x64xf32> to vector<2x32xf32>
    %808 = vector.extract_strided_slice %806 {offsets = [2, 32], sizes = [2, 32], strides = [1, 1]} : vector<4x64xf32> to vector<2x32xf32>
    %809 = tpu.concatenate %807, %808 in 0 : vector<2x32xf32>, vector<2x32xf32> -> vector<4x32xf32>
    %810 = arith.addf %805, %809 : vector<4x32xf32>
    %811 = vector.extract_strided_slice %810 {offsets = [0, 0], sizes = [4, 24], strides = [1, 1]} : vector<4x32xf32> to vector<4x24xf32>
    %812 = arith.negf %811 : vector<4x24xf32>
    %813 = math.exp %812 : vector<4x24xf32>
    %cst_155 = arith.constant 1.000000e+00 : f32
    %814 = vector.broadcast %cst_155 : f32 to vector<4x24xf32>
    %815 = arith.addf %814, %813 : vector<4x24xf32>
    %816 = arith.divf %814, %815 : vector<4x24xf32>
    %817 = vector.extract_strided_slice %810 {offsets = [0, 24], sizes = [4, 8], strides = [1, 1]} : vector<4x32xf32> to vector<4x8xf32>
    %818 = math.tanh %817 : vector<4x8xf32>
    %819 = vector.extract_strided_slice %816 {offsets = [0, 0], sizes = [4, 8], strides = [1, 1]} : vector<4x24xf32> to vector<4x8xf32>
    %820 = vector.extract_strided_slice %816 {offsets = [0, 8], sizes = [4, 8], strides = [1, 1]} : vector<4x24xf32> to vector<4x8xf32>
    %821 = vector.extract_strided_slice %816 {offsets = [0, 16], sizes = [4, 8], strides = [1, 1]} : vector<4x24xf32> to vector<4x8xf32>
    %822 = arith.mulf %820, %801 : vector<4x8xf32>
    %823 = arith.mulf %819, %818 : vector<4x8xf32>
    %824 = arith.addf %822, %823 : vector<4x8xf32>
    %825 = math.tanh %824 : vector<4x8xf32>
    %826 = arith.mulf %821, %825 : vector<4x8xf32>
    %827 = vector.broadcast %802 : vector<4x1xf32> to vector<4x8xf32>
    %828 = arith.mulf %827, %826 : vector<4x8xf32>
    %829 = vector.extract_strided_slice %828 {offsets = [0, 0], sizes = [2, 8], strides = [1, 1]} : vector<4x8xf32> to vector<2x8xf32>
    %c17 = arith.constant 17 : index
    %c0_156 = arith.constant 0 : index
    %c0_157 = arith.constant 0 : index
    %830 = vector.load %arg16[%c17, %c0_156, %c0_157] : memref<24x2x16xf32, #tpu.memory_space<vmem>>, vector<1x2x8xf32>
    %831 = vector.shape_cast %830 : vector<1x2x8xf32> to vector<2x8xf32>
    %832 = vector.shape_cast %829 : vector<2x8xf32> to vector<1x2x8xf32>
    tpu.vector_store %arg16[%c17, %c0_156, %c0_157], %832 {strides = array<i32>} : memref<24x2x16xf32, #tpu.memory_space<vmem>>, vector<1x2x8xf32>,
    %833 = vector.extract_strided_slice %828 {offsets = [2, 0], sizes = [2, 8], strides = [1, 1]} : vector<4x8xf32> to vector<2x8xf32>
    %c22 = arith.constant 22 : index
    %c0_158 = arith.constant 0 : index
    %c8_159 = arith.constant 8 : index
    %834 = vector.load %arg16[%c22, %c0_158, %c8_159] : memref<24x2x16xf32, #tpu.memory_space<vmem>>, vector<1x2x8xf32>
    %835 = vector.shape_cast %834 : vector<1x2x8xf32> to vector<2x8xf32>
    %836 = vector.shape_cast %833 : vector<2x8xf32> to vector<1x2x8xf32>
    tpu.vector_store %arg16[%c22, %c0_158, %c8_159], %836 {strides = array<i32>} : memref<24x2x16xf32, #tpu.memory_space<vmem>>, vector<1x2x8xf32>,
    %837 = arith.subf %826, %797 : vector<4x8xf32>
    %838 = vector.broadcast %802 : vector<4x1xf32> to vector<4x8xf32>
    %839 = arith.mulf %838, %837 : vector<4x8xf32>
    %840 = arith.addf %797, %839 : vector<4x8xf32>
    %841 = arith.subf %824, %801 : vector<4x8xf32>
    %842 = vector.broadcast %802 : vector<4x1xf32> to vector<4x8xf32>
    %843 = arith.mulf %842, %841 : vector<4x8xf32>
    %844 = arith.addf %801, %843 : vector<4x8xf32>
    %845 = vector.extract_strided_slice %74 {offsets = [0, 18], sizes = [4, 1], strides = [1, 1]} : vector<4x24xf32> to vector<4x1xf32>
    %846 = vector.extract_strided_slice %72 {offsets = [36, 0], sizes = [2, 32], strides = [1, 1]} : vector<48x64xf32> to vector<2x32xf32>
    %847 = vector.extract_strided_slice %72 {offsets = [42, 32], sizes = [2, 32], strides = [1, 1]} : vector<48x64xf32> to vector<2x32xf32>
    %848 = tpu.concatenate %846, %847 in 0 : vector<2x32xf32>, vector<2x32xf32> -> vector<4x32xf32>
    %cst_160 = arith.constant dense<0.000000e+00> : vector<4x64xf32>
    %849 = tpu.matmul %840, %73, %cst_160 {dimension_numbers = #tpu.dot_dimension_numbers<[1], [0], [0], [1], [0, 0, 1, 1], [], []>} : vector<4x8xf32>, vector<8x64xf32>, vector<4x64xf32> -> vector<4x64xf32>
    %850 = vector.extract_strided_slice %849 {offsets = [0, 0], sizes = [2, 32], strides = [1, 1]} : vector<4x64xf32> to vector<2x32xf32>
    %851 = vector.extract_strided_slice %849 {offsets = [2, 32], sizes = [2, 32], strides = [1, 1]} : vector<4x64xf32> to vector<2x32xf32>
    %852 = tpu.concatenate %850, %851 in 0 : vector<2x32xf32>, vector<2x32xf32> -> vector<4x32xf32>
    %853 = arith.addf %848, %852 : vector<4x32xf32>
    %854 = vector.extract_strided_slice %853 {offsets = [0, 0], sizes = [4, 24], strides = [1, 1]} : vector<4x32xf32> to vector<4x24xf32>
    %855 = arith.negf %854 : vector<4x24xf32>
    %856 = math.exp %855 : vector<4x24xf32>
    %cst_161 = arith.constant 1.000000e+00 : f32
    %857 = vector.broadcast %cst_161 : f32 to vector<4x24xf32>
    %858 = arith.addf %857, %856 : vector<4x24xf32>
    %859 = arith.divf %857, %858 : vector<4x24xf32>
    %860 = vector.extract_strided_slice %853 {offsets = [0, 24], sizes = [4, 8], strides = [1, 1]} : vector<4x32xf32> to vector<4x8xf32>
    %861 = math.tanh %860 : vector<4x8xf32>
    %862 = vector.extract_strided_slice %859 {offsets = [0, 0], sizes = [4, 8], strides = [1, 1]} : vector<4x24xf32> to vector<4x8xf32>
    %863 = vector.extract_strided_slice %859 {offsets = [0, 8], sizes = [4, 8], strides = [1, 1]} : vector<4x24xf32> to vector<4x8xf32>
    %864 = vector.extract_strided_slice %859 {offsets = [0, 16], sizes = [4, 8], strides = [1, 1]} : vector<4x24xf32> to vector<4x8xf32>
    %865 = arith.mulf %863, %844 : vector<4x8xf32>
    %866 = arith.mulf %862, %861 : vector<4x8xf32>
    %867 = arith.addf %865, %866 : vector<4x8xf32>
    %868 = math.tanh %867 : vector<4x8xf32>
    %869 = arith.mulf %864, %868 : vector<4x8xf32>
    %870 = vector.broadcast %845 : vector<4x1xf32> to vector<4x8xf32>
    %871 = arith.mulf %870, %869 : vector<4x8xf32>
    %872 = vector.extract_strided_slice %871 {offsets = [0, 0], sizes = [2, 8], strides = [1, 1]} : vector<4x8xf32> to vector<2x8xf32>
    %c18 = arith.constant 18 : index
    %c0_162 = arith.constant 0 : index
    %c0_163 = arith.constant 0 : index
    %873 = vector.load %arg16[%c18, %c0_162, %c0_163] : memref<24x2x16xf32, #tpu.memory_space<vmem>>, vector<1x2x8xf32>
    %874 = vector.shape_cast %873 : vector<1x2x8xf32> to vector<2x8xf32>
    %875 = vector.shape_cast %872 : vector<2x8xf32> to vector<1x2x8xf32>
    tpu.vector_store %arg16[%c18, %c0_162, %c0_163], %875 {strides = array<i32>} : memref<24x2x16xf32, #tpu.memory_space<vmem>>, vector<1x2x8xf32>,
    %876 = vector.extract_strided_slice %871 {offsets = [2, 0], sizes = [2, 8], strides = [1, 1]} : vector<4x8xf32> to vector<2x8xf32>
    %c21 = arith.constant 21 : index
    %c0_164 = arith.constant 0 : index
    %c8_165 = arith.constant 8 : index
    %877 = vector.load %arg16[%c21, %c0_164, %c8_165] : memref<24x2x16xf32, #tpu.memory_space<vmem>>, vector<1x2x8xf32>
    %878 = vector.shape_cast %877 : vector<1x2x8xf32> to vector<2x8xf32>
    %879 = vector.shape_cast %876 : vector<2x8xf32> to vector<1x2x8xf32>
    tpu.vector_store %arg16[%c21, %c0_164, %c8_165], %879 {strides = array<i32>} : memref<24x2x16xf32, #tpu.memory_space<vmem>>, vector<1x2x8xf32>,
    %880 = arith.subf %869, %840 : vector<4x8xf32>
    %881 = vector.broadcast %845 : vector<4x1xf32> to vector<4x8xf32>
    %882 = arith.mulf %881, %880 : vector<4x8xf32>
    %883 = arith.addf %840, %882 : vector<4x8xf32>
    %884 = arith.subf %867, %844 : vector<4x8xf32>
    %885 = vector.broadcast %845 : vector<4x1xf32> to vector<4x8xf32>
    %886 = arith.mulf %885, %884 : vector<4x8xf32>
    %887 = arith.addf %844, %886 : vector<4x8xf32>
    %888 = vector.extract_strided_slice %74 {offsets = [0, 19], sizes = [4, 1], strides = [1, 1]} : vector<4x24xf32> to vector<4x1xf32>
    %889 = vector.extract_strided_slice %72 {offsets = [38, 0], sizes = [2, 32], strides = [1, 1]} : vector<48x64xf32> to vector<2x32xf32>
    %890 = vector.extract_strided_slice %72 {offsets = [40, 32], sizes = [2, 32], strides = [1, 1]} : vector<48x64xf32> to vector<2x32xf32>
    %891 = tpu.concatenate %889, %890 in 0 : vector<2x32xf32>, vector<2x32xf32> -> vector<4x32xf32>
    %cst_166 = arith.constant dense<0.000000e+00> : vector<4x64xf32>
    %892 = tpu.matmul %883, %73, %cst_166 {dimension_numbers = #tpu.dot_dimension_numbers<[1], [0], [0], [1], [0, 0, 1, 1], [], []>} : vector<4x8xf32>, vector<8x64xf32>, vector<4x64xf32> -> vector<4x64xf32>
    %893 = vector.extract_strided_slice %892 {offsets = [0, 0], sizes = [2, 32], strides = [1, 1]} : vector<4x64xf32> to vector<2x32xf32>
    %894 = vector.extract_strided_slice %892 {offsets = [2, 32], sizes = [2, 32], strides = [1, 1]} : vector<4x64xf32> to vector<2x32xf32>
    %895 = tpu.concatenate %893, %894 in 0 : vector<2x32xf32>, vector<2x32xf32> -> vector<4x32xf32>
    %896 = arith.addf %891, %895 : vector<4x32xf32>
    %897 = vector.extract_strided_slice %896 {offsets = [0, 0], sizes = [4, 24], strides = [1, 1]} : vector<4x32xf32> to vector<4x24xf32>
    %898 = arith.negf %897 : vector<4x24xf32>
    %899 = math.exp %898 : vector<4x24xf32>
    %cst_167 = arith.constant 1.000000e+00 : f32
    %900 = vector.broadcast %cst_167 : f32 to vector<4x24xf32>
    %901 = arith.addf %900, %899 : vector<4x24xf32>
    %902 = arith.divf %900, %901 : vector<4x24xf32>
    %903 = vector.extract_strided_slice %896 {offsets = [0, 24], sizes = [4, 8], strides = [1, 1]} : vector<4x32xf32> to vector<4x8xf32>
    %904 = math.tanh %903 : vector<4x8xf32>
    %905 = vector.extract_strided_slice %902 {offsets = [0, 0], sizes = [4, 8], strides = [1, 1]} : vector<4x24xf32> to vector<4x8xf32>
    %906 = vector.extract_strided_slice %902 {offsets = [0, 8], sizes = [4, 8], strides = [1, 1]} : vector<4x24xf32> to vector<4x8xf32>
    %907 = vector.extract_strided_slice %902 {offsets = [0, 16], sizes = [4, 8], strides = [1, 1]} : vector<4x24xf32> to vector<4x8xf32>
    %908 = arith.mulf %906, %887 : vector<4x8xf32>
    %909 = arith.mulf %905, %904 : vector<4x8xf32>
    %910 = arith.addf %908, %909 : vector<4x8xf32>
    %911 = math.tanh %910 : vector<4x8xf32>
    %912 = arith.mulf %907, %911 : vector<4x8xf32>
    %913 = vector.broadcast %888 : vector<4x1xf32> to vector<4x8xf32>
    %914 = arith.mulf %913, %912 : vector<4x8xf32>
    %915 = vector.extract_strided_slice %914 {offsets = [0, 0], sizes = [2, 8], strides = [1, 1]} : vector<4x8xf32> to vector<2x8xf32>
    %c19 = arith.constant 19 : index
    %c0_168 = arith.constant 0 : index
    %c0_169 = arith.constant 0 : index
    %916 = vector.load %arg16[%c19, %c0_168, %c0_169] : memref<24x2x16xf32, #tpu.memory_space<vmem>>, vector<1x2x8xf32>
    %917 = vector.shape_cast %916 : vector<1x2x8xf32> to vector<2x8xf32>
    %918 = vector.shape_cast %915 : vector<2x8xf32> to vector<1x2x8xf32>
    tpu.vector_store %arg16[%c19, %c0_168, %c0_169], %918 {strides = array<i32>} : memref<24x2x16xf32, #tpu.memory_space<vmem>>, vector<1x2x8xf32>,
    %919 = vector.extract_strided_slice %914 {offsets = [2, 0], sizes = [2, 8], strides = [1, 1]} : vector<4x8xf32> to vector<2x8xf32>
    %c20 = arith.constant 20 : index
    %c0_170 = arith.constant 0 : index
    %c8_171 = arith.constant 8 : index
    %920 = vector.load %arg16[%c20, %c0_170, %c8_171] : memref<24x2x16xf32, #tpu.memory_space<vmem>>, vector<1x2x8xf32>
    %921 = vector.shape_cast %920 : vector<1x2x8xf32> to vector<2x8xf32>
    %922 = vector.shape_cast %919 : vector<2x8xf32> to vector<1x2x8xf32>
    tpu.vector_store %arg16[%c20, %c0_170, %c8_171], %922 {strides = array<i32>} : memref<24x2x16xf32, #tpu.memory_space<vmem>>, vector<1x2x8xf32>,
    %923 = arith.subf %912, %883 : vector<4x8xf32>
    %924 = vector.broadcast %888 : vector<4x1xf32> to vector<4x8xf32>
    %925 = arith.mulf %924, %923 : vector<4x8xf32>
    %926 = arith.addf %883, %925 : vector<4x8xf32>
    %927 = arith.subf %910, %887 : vector<4x8xf32>
    %928 = vector.broadcast %888 : vector<4x1xf32> to vector<4x8xf32>
    %929 = arith.mulf %928, %927 : vector<4x8xf32>
    %930 = arith.addf %887, %929 : vector<4x8xf32>
    %931 = vector.extract_strided_slice %74 {offsets = [0, 20], sizes = [4, 1], strides = [1, 1]} : vector<4x24xf32> to vector<4x1xf32>
    %932 = vector.extract_strided_slice %72 {offsets = [40, 0], sizes = [2, 32], strides = [1, 1]} : vector<48x64xf32> to vector<2x32xf32>
    %933 = vector.extract_strided_slice %72 {offsets = [38, 32], sizes = [2, 32], strides = [1, 1]} : vector<48x64xf32> to vector<2x32xf32>
    %934 = tpu.concatenate %932, %933 in 0 : vector<2x32xf32>, vector<2x32xf32> -> vector<4x32xf32>
    %cst_172 = arith.constant dense<0.000000e+00> : vector<4x64xf32>
    %935 = tpu.matmul %926, %73, %cst_172 {dimension_numbers = #tpu.dot_dimension_numbers<[1], [0], [0], [1], [0, 0, 1, 1], [], []>} : vector<4x8xf32>, vector<8x64xf32>, vector<4x64xf32> -> vector<4x64xf32>
    %936 = vector.extract_strided_slice %935 {offsets = [0, 0], sizes = [2, 32], strides = [1, 1]} : vector<4x64xf32> to vector<2x32xf32>
    %937 = vector.extract_strided_slice %935 {offsets = [2, 32], sizes = [2, 32], strides = [1, 1]} : vector<4x64xf32> to vector<2x32xf32>
    %938 = tpu.concatenate %936, %937 in 0 : vector<2x32xf32>, vector<2x32xf32> -> vector<4x32xf32>
    %939 = arith.addf %934, %938 : vector<4x32xf32>
    %940 = vector.extract_strided_slice %939 {offsets = [0, 0], sizes = [4, 24], strides = [1, 1]} : vector<4x32xf32> to vector<4x24xf32>
    %941 = arith.negf %940 : vector<4x24xf32>
    %942 = math.exp %941 : vector<4x24xf32>
    %cst_173 = arith.constant 1.000000e+00 : f32
    %943 = vector.broadcast %cst_173 : f32 to vector<4x24xf32>
    %944 = arith.addf %943, %942 : vector<4x24xf32>
    %945 = arith.divf %943, %944 : vector<4x24xf32>
    %946 = vector.extract_strided_slice %939 {offsets = [0, 24], sizes = [4, 8], strides = [1, 1]} : vector<4x32xf32> to vector<4x8xf32>
    %947 = math.tanh %946 : vector<4x8xf32>
    %948 = vector.extract_strided_slice %945 {offsets = [0, 0], sizes = [4, 8], strides = [1, 1]} : vector<4x24xf32> to vector<4x8xf32>
    %949 = vector.extract_strided_slice %945 {offsets = [0, 8], sizes = [4, 8], strides = [1, 1]} : vector<4x24xf32> to vector<4x8xf32>
    %950 = vector.extract_strided_slice %945 {offsets = [0, 16], sizes = [4, 8], strides = [1, 1]} : vector<4x24xf32> to vector<4x8xf32>
    %951 = arith.mulf %949, %930 : vector<4x8xf32>
    %952 = arith.mulf %948, %947 : vector<4x8xf32>
    %953 = arith.addf %951, %952 : vector<4x8xf32>
    %954 = math.tanh %953 : vector<4x8xf32>
    %955 = arith.mulf %950, %954 : vector<4x8xf32>
    %956 = vector.broadcast %931 : vector<4x1xf32> to vector<4x8xf32>
    %957 = arith.mulf %956, %955 : vector<4x8xf32>
    %958 = vector.extract_strided_slice %957 {offsets = [0, 0], sizes = [2, 8], strides = [1, 1]} : vector<4x8xf32> to vector<2x8xf32>
    %c20_174 = arith.constant 20 : index
    %c0_175 = arith.constant 0 : index
    %c0_176 = arith.constant 0 : index
    %959 = vector.load %arg16[%c20_174, %c0_175, %c0_176] : memref<24x2x16xf32, #tpu.memory_space<vmem>>, vector<1x2x8xf32>
    %960 = vector.shape_cast %959 : vector<1x2x8xf32> to vector<2x8xf32>
    %961 = vector.shape_cast %958 : vector<2x8xf32> to vector<1x2x8xf32>
    tpu.vector_store %arg16[%c20_174, %c0_175, %c0_176], %961 {strides = array<i32>} : memref<24x2x16xf32, #tpu.memory_space<vmem>>, vector<1x2x8xf32>,
    %962 = vector.extract_strided_slice %957 {offsets = [2, 0], sizes = [2, 8], strides = [1, 1]} : vector<4x8xf32> to vector<2x8xf32>
    %c19_177 = arith.constant 19 : index
    %c0_178 = arith.constant 0 : index
    %c8_179 = arith.constant 8 : index
    %963 = vector.load %arg16[%c19_177, %c0_178, %c8_179] : memref<24x2x16xf32, #tpu.memory_space<vmem>>, vector<1x2x8xf32>
    %964 = vector.shape_cast %963 : vector<1x2x8xf32> to vector<2x8xf32>
    %965 = vector.shape_cast %962 : vector<2x8xf32> to vector<1x2x8xf32>
    tpu.vector_store %arg16[%c19_177, %c0_178, %c8_179], %965 {strides = array<i32>} : memref<24x2x16xf32, #tpu.memory_space<vmem>>, vector<1x2x8xf32>,
    %966 = arith.subf %955, %926 : vector<4x8xf32>
    %967 = vector.broadcast %931 : vector<4x1xf32> to vector<4x8xf32>
    %968 = arith.mulf %967, %966 : vector<4x8xf32>
    %969 = arith.addf %926, %968 : vector<4x8xf32>
    %970 = arith.subf %953, %930 : vector<4x8xf32>
    %971 = vector.broadcast %931 : vector<4x1xf32> to vector<4x8xf32>
    %972 = arith.mulf %971, %970 : vector<4x8xf32>
    %973 = arith.addf %930, %972 : vector<4x8xf32>
    %974 = vector.extract_strided_slice %74 {offsets = [0, 21], sizes = [4, 1], strides = [1, 1]} : vector<4x24xf32> to vector<4x1xf32>
    %975 = vector.extract_strided_slice %72 {offsets = [42, 0], sizes = [2, 32], strides = [1, 1]} : vector<48x64xf32> to vector<2x32xf32>
    %976 = vector.extract_strided_slice %72 {offsets = [36, 32], sizes = [2, 32], strides = [1, 1]} : vector<48x64xf32> to vector<2x32xf32>
    %977 = tpu.concatenate %975, %976 in 0 : vector<2x32xf32>, vector<2x32xf32> -> vector<4x32xf32>
    %cst_180 = arith.constant dense<0.000000e+00> : vector<4x64xf32>
    %978 = tpu.matmul %969, %73, %cst_180 {dimension_numbers = #tpu.dot_dimension_numbers<[1], [0], [0], [1], [0, 0, 1, 1], [], []>} : vector<4x8xf32>, vector<8x64xf32>, vector<4x64xf32> -> vector<4x64xf32>
    %979 = vector.extract_strided_slice %978 {offsets = [0, 0], sizes = [2, 32], strides = [1, 1]} : vector<4x64xf32> to vector<2x32xf32>
    %980 = vector.extract_strided_slice %978 {offsets = [2, 32], sizes = [2, 32], strides = [1, 1]} : vector<4x64xf32> to vector<2x32xf32>
    %981 = tpu.concatenate %979, %980 in 0 : vector<2x32xf32>, vector<2x32xf32> -> vector<4x32xf32>
    %982 = arith.addf %977, %981 : vector<4x32xf32>
    %983 = vector.extract_strided_slice %982 {offsets = [0, 0], sizes = [4, 24], strides = [1, 1]} : vector<4x32xf32> to vector<4x24xf32>
    %984 = arith.negf %983 : vector<4x24xf32>
    %985 = math.exp %984 : vector<4x24xf32>
    %cst_181 = arith.constant 1.000000e+00 : f32
    %986 = vector.broadcast %cst_181 : f32 to vector<4x24xf32>
    %987 = arith.addf %986, %985 : vector<4x24xf32>
    %988 = arith.divf %986, %987 : vector<4x24xf32>
    %989 = vector.extract_strided_slice %982 {offsets = [0, 24], sizes = [4, 8], strides = [1, 1]} : vector<4x32xf32> to vector<4x8xf32>
    %990 = math.tanh %989 : vector<4x8xf32>
    %991 = vector.extract_strided_slice %988 {offsets = [0, 0], sizes = [4, 8], strides = [1, 1]} : vector<4x24xf32> to vector<4x8xf32>
    %992 = vector.extract_strided_slice %988 {offsets = [0, 8], sizes = [4, 8], strides = [1, 1]} : vector<4x24xf32> to vector<4x8xf32>
    %993 = vector.extract_strided_slice %988 {offsets = [0, 16], sizes = [4, 8], strides = [1, 1]} : vector<4x24xf32> to vector<4x8xf32>
    %994 = arith.mulf %992, %973 : vector<4x8xf32>
    %995 = arith.mulf %991, %990 : vector<4x8xf32>
    %996 = arith.addf %994, %995 : vector<4x8xf32>
    %997 = math.tanh %996 : vector<4x8xf32>
    %998 = arith.mulf %993, %997 : vector<4x8xf32>
    %999 = vector.broadcast %974 : vector<4x1xf32> to vector<4x8xf32>
    %1000 = arith.mulf %999, %998 : vector<4x8xf32>
    %1001 = vector.extract_strided_slice %1000 {offsets = [0, 0], sizes = [2, 8], strides = [1, 1]} : vector<4x8xf32> to vector<2x8xf32>
    %c21_182 = arith.constant 21 : index
    %c0_183 = arith.constant 0 : index
    %c0_184 = arith.constant 0 : index
    %1002 = vector.load %arg16[%c21_182, %c0_183, %c0_184] : memref<24x2x16xf32, #tpu.memory_space<vmem>>, vector<1x2x8xf32>
    %1003 = vector.shape_cast %1002 : vector<1x2x8xf32> to vector<2x8xf32>
    %1004 = vector.shape_cast %1001 : vector<2x8xf32> to vector<1x2x8xf32>
    tpu.vector_store %arg16[%c21_182, %c0_183, %c0_184], %1004 {strides = array<i32>} : memref<24x2x16xf32, #tpu.memory_space<vmem>>, vector<1x2x8xf32>,
    %1005 = vector.extract_strided_slice %1000 {offsets = [2, 0], sizes = [2, 8], strides = [1, 1]} : vector<4x8xf32> to vector<2x8xf32>
    %c18_185 = arith.constant 18 : index
    %c0_186 = arith.constant 0 : index
    %c8_187 = arith.constant 8 : index
    %1006 = vector.load %arg16[%c18_185, %c0_186, %c8_187] : memref<24x2x16xf32, #tpu.memory_space<vmem>>, vector<1x2x8xf32>
    %1007 = vector.shape_cast %1006 : vector<1x2x8xf32> to vector<2x8xf32>
    %1008 = vector.shape_cast %1005 : vector<2x8xf32> to vector<1x2x8xf32>
    tpu.vector_store %arg16[%c18_185, %c0_186, %c8_187], %1008 {strides = array<i32>} : memref<24x2x16xf32, #tpu.memory_space<vmem>>, vector<1x2x8xf32>,
    %1009 = arith.subf %998, %969 : vector<4x8xf32>
    %1010 = vector.broadcast %974 : vector<4x1xf32> to vector<4x8xf32>
    %1011 = arith.mulf %1010, %1009 : vector<4x8xf32>
    %1012 = arith.addf %969, %1011 : vector<4x8xf32>
    %1013 = arith.subf %996, %973 : vector<4x8xf32>
    %1014 = vector.broadcast %974 : vector<4x1xf32> to vector<4x8xf32>
    %1015 = arith.mulf %1014, %1013 : vector<4x8xf32>
    %1016 = arith.addf %973, %1015 : vector<4x8xf32>
    %1017 = vector.extract_strided_slice %74 {offsets = [0, 22], sizes = [4, 1], strides = [1, 1]} : vector<4x24xf32> to vector<4x1xf32>
    %1018 = vector.extract_strided_slice %72 {offsets = [44, 0], sizes = [2, 32], strides = [1, 1]} : vector<48x64xf32> to vector<2x32xf32>
    %1019 = vector.extract_strided_slice %72 {offsets = [34, 32], sizes = [2, 32], strides = [1, 1]} : vector<48x64xf32> to vector<2x32xf32>
    %1020 = tpu.concatenate %1018, %1019 in 0 : vector<2x32xf32>, vector<2x32xf32> -> vector<4x32xf32>
    %cst_188 = arith.constant dense<0.000000e+00> : vector<4x64xf32>
    %1021 = tpu.matmul %1012, %73, %cst_188 {dimension_numbers = #tpu.dot_dimension_numbers<[1], [0], [0], [1], [0, 0, 1, 1], [], []>} : vector<4x8xf32>, vector<8x64xf32>, vector<4x64xf32> -> vector<4x64xf32>
    %1022 = vector.extract_strided_slice %1021 {offsets = [0, 0], sizes = [2, 32], strides = [1, 1]} : vector<4x64xf32> to vector<2x32xf32>
    %1023 = vector.extract_strided_slice %1021 {offsets = [2, 32], sizes = [2, 32], strides = [1, 1]} : vector<4x64xf32> to vector<2x32xf32>
    %1024 = tpu.concatenate %1022, %1023 in 0 : vector<2x32xf32>, vector<2x32xf32> -> vector<4x32xf32>
    %1025 = arith.addf %1020, %1024 : vector<4x32xf32>
    %1026 = vector.extract_strided_slice %1025 {offsets = [0, 0], sizes = [4, 24], strides = [1, 1]} : vector<4x32xf32> to vector<4x24xf32>
    %1027 = arith.negf %1026 : vector<4x24xf32>
    %1028 = math.exp %1027 : vector<4x24xf32>
    %cst_189 = arith.constant 1.000000e+00 : f32
    %1029 = vector.broadcast %cst_189 : f32 to vector<4x24xf32>
    %1030 = arith.addf %1029, %1028 : vector<4x24xf32>
    %1031 = arith.divf %1029, %1030 : vector<4x24xf32>
    %1032 = vector.extract_strided_slice %1025 {offsets = [0, 24], sizes = [4, 8], strides = [1, 1]} : vector<4x32xf32> to vector<4x8xf32>
    %1033 = math.tanh %1032 : vector<4x8xf32>
    %1034 = vector.extract_strided_slice %1031 {offsets = [0, 0], sizes = [4, 8], strides = [1, 1]} : vector<4x24xf32> to vector<4x8xf32>
    %1035 = vector.extract_strided_slice %1031 {offsets = [0, 8], sizes = [4, 8], strides = [1, 1]} : vector<4x24xf32> to vector<4x8xf32>
    %1036 = vector.extract_strided_slice %1031 {offsets = [0, 16], sizes = [4, 8], strides = [1, 1]} : vector<4x24xf32> to vector<4x8xf32>
    %1037 = arith.mulf %1035, %1016 : vector<4x8xf32>
    %1038 = arith.mulf %1034, %1033 : vector<4x8xf32>
    %1039 = arith.addf %1037, %1038 : vector<4x8xf32>
    %1040 = math.tanh %1039 : vector<4x8xf32>
    %1041 = arith.mulf %1036, %1040 : vector<4x8xf32>
    %1042 = vector.broadcast %1017 : vector<4x1xf32> to vector<4x8xf32>
    %1043 = arith.mulf %1042, %1041 : vector<4x8xf32>
    %1044 = vector.extract_strided_slice %1043 {offsets = [0, 0], sizes = [2, 8], strides = [1, 1]} : vector<4x8xf32> to vector<2x8xf32>
    %c22_190 = arith.constant 22 : index
    %c0_191 = arith.constant 0 : index
    %c0_192 = arith.constant 0 : index
    %1045 = vector.load %arg16[%c22_190, %c0_191, %c0_192] : memref<24x2x16xf32, #tpu.memory_space<vmem>>, vector<1x2x8xf32>
    %1046 = vector.shape_cast %1045 : vector<1x2x8xf32> to vector<2x8xf32>
    %1047 = vector.shape_cast %1044 : vector<2x8xf32> to vector<1x2x8xf32>
    tpu.vector_store %arg16[%c22_190, %c0_191, %c0_192], %1047 {strides = array<i32>} : memref<24x2x16xf32, #tpu.memory_space<vmem>>, vector<1x2x8xf32>,
    %1048 = vector.extract_strided_slice %1043 {offsets = [2, 0], sizes = [2, 8], strides = [1, 1]} : vector<4x8xf32> to vector<2x8xf32>
    %c17_193 = arith.constant 17 : index
    %c0_194 = arith.constant 0 : index
    %c8_195 = arith.constant 8 : index
    %1049 = vector.load %arg16[%c17_193, %c0_194, %c8_195] : memref<24x2x16xf32, #tpu.memory_space<vmem>>, vector<1x2x8xf32>
    %1050 = vector.shape_cast %1049 : vector<1x2x8xf32> to vector<2x8xf32>
    %1051 = vector.shape_cast %1048 : vector<2x8xf32> to vector<1x2x8xf32>
    tpu.vector_store %arg16[%c17_193, %c0_194, %c8_195], %1051 {strides = array<i32>} : memref<24x2x16xf32, #tpu.memory_space<vmem>>, vector<1x2x8xf32>,
    %1052 = arith.subf %1041, %1012 : vector<4x8xf32>
    %1053 = vector.broadcast %1017 : vector<4x1xf32> to vector<4x8xf32>
    %1054 = arith.mulf %1053, %1052 : vector<4x8xf32>
    %1055 = arith.addf %1012, %1054 : vector<4x8xf32>
    %1056 = arith.subf %1039, %1016 : vector<4x8xf32>
    %1057 = vector.broadcast %1017 : vector<4x1xf32> to vector<4x8xf32>
    %1058 = arith.mulf %1057, %1056 : vector<4x8xf32>
    %1059 = arith.addf %1016, %1058 : vector<4x8xf32>
    %1060 = vector.extract_strided_slice %74 {offsets = [0, 23], sizes = [4, 1], strides = [1, 1]} : vector<4x24xf32> to vector<4x1xf32>
    %1061 = vector.extract_strided_slice %72 {offsets = [46, 0], sizes = [2, 32], strides = [1, 1]} : vector<48x64xf32> to vector<2x32xf32>
    %1062 = vector.extract_strided_slice %72 {offsets = [32, 32], sizes = [2, 32], strides = [1, 1]} : vector<48x64xf32> to vector<2x32xf32>
    %1063 = tpu.concatenate %1061, %1062 in 0 : vector<2x32xf32>, vector<2x32xf32> -> vector<4x32xf32>
    %cst_196 = arith.constant dense<0.000000e+00> : vector<4x64xf32>
    %1064 = tpu.matmul %1055, %73, %cst_196 {dimension_numbers = #tpu.dot_dimension_numbers<[1], [0], [0], [1], [0, 0, 1, 1], [], []>} : vector<4x8xf32>, vector<8x64xf32>, vector<4x64xf32> -> vector<4x64xf32>
    %1065 = vector.extract_strided_slice %1064 {offsets = [0, 0], sizes = [2, 32], strides = [1, 1]} : vector<4x64xf32> to vector<2x32xf32>
    %1066 = vector.extract_strided_slice %1064 {offsets = [2, 32], sizes = [2, 32], strides = [1, 1]} : vector<4x64xf32> to vector<2x32xf32>
    %1067 = tpu.concatenate %1065, %1066 in 0 : vector<2x32xf32>, vector<2x32xf32> -> vector<4x32xf32>
    %1068 = arith.addf %1063, %1067 : vector<4x32xf32>
    %1069 = vector.extract_strided_slice %1068 {offsets = [0, 0], sizes = [4, 24], strides = [1, 1]} : vector<4x32xf32> to vector<4x24xf32>
    %1070 = arith.negf %1069 : vector<4x24xf32>
    %1071 = math.exp %1070 : vector<4x24xf32>
    %cst_197 = arith.constant 1.000000e+00 : f32
    %1072 = vector.broadcast %cst_197 : f32 to vector<4x24xf32>
    %1073 = arith.addf %1072, %1071 : vector<4x24xf32>
    %1074 = arith.divf %1072, %1073 : vector<4x24xf32>
    %1075 = vector.extract_strided_slice %1068 {offsets = [0, 24], sizes = [4, 8], strides = [1, 1]} : vector<4x32xf32> to vector<4x8xf32>
    %1076 = math.tanh %1075 : vector<4x8xf32>
    %1077 = vector.extract_strided_slice %1074 {offsets = [0, 0], sizes = [4, 8], strides = [1, 1]} : vector<4x24xf32> to vector<4x8xf32>
    %1078 = vector.extract_strided_slice %1074 {offsets = [0, 8], sizes = [4, 8], strides = [1, 1]} : vector<4x24xf32> to vector<4x8xf32>
    %1079 = vector.extract_strided_slice %1074 {offsets = [0, 16], sizes = [4, 8], strides = [1, 1]} : vector<4x24xf32> to vector<4x8xf32>
    %1080 = arith.mulf %1078, %1059 : vector<4x8xf32>
    %1081 = arith.mulf %1077, %1076 : vector<4x8xf32>
    %1082 = arith.addf %1080, %1081 : vector<4x8xf32>
    %1083 = math.tanh %1082 : vector<4x8xf32>
    %1084 = arith.mulf %1079, %1083 : vector<4x8xf32>
    %1085 = vector.broadcast %1060 : vector<4x1xf32> to vector<4x8xf32>
    %1086 = arith.mulf %1085, %1084 : vector<4x8xf32>
    %1087 = vector.extract_strided_slice %1086 {offsets = [0, 0], sizes = [2, 8], strides = [1, 1]} : vector<4x8xf32> to vector<2x8xf32>
    %c23_198 = arith.constant 23 : index
    %c0_199 = arith.constant 0 : index
    %c0_200 = arith.constant 0 : index
    %1088 = vector.load %arg16[%c23_198, %c0_199, %c0_200] : memref<24x2x16xf32, #tpu.memory_space<vmem>>, vector<1x2x8xf32>
    %1089 = vector.shape_cast %1088 : vector<1x2x8xf32> to vector<2x8xf32>
    %1090 = vector.shape_cast %1087 : vector<2x8xf32> to vector<1x2x8xf32>
    tpu.vector_store %arg16[%c23_198, %c0_199, %c0_200], %1090 {strides = array<i32>} : memref<24x2x16xf32, #tpu.memory_space<vmem>>, vector<1x2x8xf32>,
    %1091 = vector.extract_strided_slice %1086 {offsets = [2, 0], sizes = [2, 8], strides = [1, 1]} : vector<4x8xf32> to vector<2x8xf32>
    %c16_201 = arith.constant 16 : index
    %c0_202 = arith.constant 0 : index
    %c8_203 = arith.constant 8 : index
    %1092 = vector.load %arg16[%c16_201, %c0_202, %c8_203] : memref<24x2x16xf32, #tpu.memory_space<vmem>>, vector<1x2x8xf32>
    %1093 = vector.shape_cast %1092 : vector<1x2x8xf32> to vector<2x8xf32>
    %1094 = vector.shape_cast %1091 : vector<2x8xf32> to vector<1x2x8xf32>
    tpu.vector_store %arg16[%c16_201, %c0_202, %c8_203], %1094 {strides = array<i32>} : memref<24x2x16xf32, #tpu.memory_space<vmem>>, vector<1x2x8xf32>,
    %c0_204 = arith.constant 0 : index
    %c0_205 = arith.constant 0 : index
    %c0_206 = arith.constant 0 : index
    %1095 = vector.load %arg16[%c0_204, %c0_205, %c0_206] : memref<24x2x16xf32, #tpu.memory_space<vmem>>, vector<24x2x16xf32>
    %1096 = vector.extract_strided_slice %1095 {offsets = [0, 0, 0], sizes = [16, 1, 16], strides = [1, 1, 1]} : vector<24x2x16xf32> to vector<16x1x16xf32>
    %1097 = vector.shape_cast %1096 : vector<16x1x16xf32> to vector<16x16xf32>
    %1098 = vector.extract_strided_slice %1095 {offsets = [0, 1, 0], sizes = [16, 1, 16], strides = [1, 1, 1]} : vector<24x2x16xf32> to vector<16x1x16xf32>
    %1099 = vector.shape_cast %1098 : vector<16x1x16xf32> to vector<16x16xf32>
    %1100 = vector.shape_cast %1097 : vector<16x16xf32> to vector<1x16x16xf32>
    %1101 = vector.shape_cast %1099 : vector<16x16xf32> to vector<1x16x16xf32>
    %1102 = tpu.concatenate %1100, %1101 in 0 : vector<1x16x16xf32>, vector<1x16x16xf32> -> vector<2x16x16xf32>
    %1103 = vector.extract_strided_slice %1095 {offsets = [16, 0, 0], sizes = [8, 1, 16], strides = [1, 1, 1]} : vector<24x2x16xf32> to vector<8x1x16xf32>
    %1104 = vector.shape_cast %1103 : vector<8x1x16xf32> to vector<8x16xf32>
    %1105 = vector.extract_strided_slice %1095 {offsets = [16, 1, 0], sizes = [8, 1, 16], strides = [1, 1, 1]} : vector<24x2x16xf32> to vector<8x1x16xf32>
    %1106 = vector.shape_cast %1105 : vector<8x1x16xf32> to vector<8x16xf32>
    %1107 = vector.shape_cast %1104 : vector<8x16xf32> to vector<1x8x16xf32>
    %1108 = vector.shape_cast %1106 : vector<8x16xf32> to vector<1x8x16xf32>
    %1109 = tpu.concatenate %1107, %1108 in 0 : vector<1x8x16xf32>, vector<1x8x16xf32> -> vector<2x8x16xf32>
    %c0_207 = arith.constant 0 : index
    %c0_208 = arith.constant 0 : index
    %c0_209 = arith.constant 0 : index
    %1110 = vector.load %arg3[%c0_207, %c0_208, %c0_209] : memref<2x16x1xf32, #tpu.memory_space<vmem>>, vector<2x16x1xf32>
    %c0_210 = arith.constant 0 : index
    %c0_211 = arith.constant 0 : index
    %c0_212 = arith.constant 0 : index
    %1111 = vector.load %arg4[%c0_210, %c0_211, %c0_212] : memref<2x1x8xf32, #tpu.memory_space<vmem>>, vector<2x1x8xf32>
    %cst_213 = arith.constant 1.000000e+00 : f32
    %1112 = vector.broadcast %cst_213 : f32 to vector<2x16x1xf32>
    %1113 = arith.subf %1112, %1110 : vector<2x16x1xf32>
    %cst_214 = arith.constant 1.000000e+00 : f32
    %1114 = vector.broadcast %cst_214 : f32 to vector<2x1x8xf32>
    %1115 = arith.subf %1114, %1111 : vector<2x1x8xf32>
    %c0_215 = arith.constant 0 : index
    %c0_216 = arith.constant 0 : index
    %1116 = vector.load %arg14[%c0_215, %c0_216] : memref<4x16xf32, #tpu.memory_space<vmem>>, vector<4x16xf32>
    %1117 = vector.extract_strided_slice %1116 {offsets = [0, 0], sizes = [1, 16], strides = [1, 1]} : vector<4x16xf32> to vector<1x16xf32>
    %1118 = vector.shape_cast %1117 : vector<1x16xf32> to vector<16xf32>
    %1119 = vector.extract_strided_slice %1116 {offsets = [1, 0], sizes = [1, 16], strides = [1, 1]} : vector<4x16xf32> to vector<1x16xf32>
    %1120 = vector.shape_cast %1119 : vector<1x16xf32> to vector<16xf32>
    %1121 = vector.extract_strided_slice %1116 {offsets = [2, 0], sizes = [1, 16], strides = [1, 1]} : vector<4x16xf32> to vector<1x16xf32>
    %1122 = vector.shape_cast %1121 : vector<1x16xf32> to vector<16xf32>
    %1123 = vector.extract_strided_slice %1116 {offsets = [3, 0], sizes = [1, 1], strides = [1, 1]} : vector<4x16xf32> to vector<1x1xf32>
    %1124 = vector.shape_cast %1118 : vector<16xf32> to vector<1x1x16xf32>
    %1125 = vector.broadcast %1124 : vector<1x1x16xf32> to vector<2x16x16xf32>
    %1126 = arith.mulf %1102, %1125 : vector<2x16x16xf32>
    %cst_217 = arith.constant dense<0.000000e+00> : vector<2x16xf32>
    %1127 = vector.multi_reduction <add>, %1126, %cst_217 [2] : vector<2x16x16xf32> to vector<2x16xf32>
    %1128 = vector.shape_cast %1127 : vector<2x16xf32> to vector<2x16x1xf32>
    %1129 = vector.shape_cast %1120 : vector<16xf32> to vector<1x1x16xf32>
    %1130 = vector.broadcast %1129 : vector<1x1x16xf32> to vector<2x8x16xf32>
    %1131 = arith.mulf %1109, %1130 : vector<2x8x16xf32>
    %cst_218 = arith.constant dense<0.000000e+00> : vector<2x8xf32>
    %1132 = vector.multi_reduction <add>, %1131, %cst_218 [2] : vector<2x8x16xf32> to vector<2x8xf32>
    %1133 = vector.shape_cast %1132 : vector<2x8xf32> to vector<2x8x1xf32>
    %1134 = vector.shape_cast %1123 : vector<1x1xf32> to vector<1x1x1xf32>
    %1135 = vector.broadcast %1134 : vector<1x1x1xf32> to vector<2x8x1xf32>
    %1136 = arith.addf %1133, %1135 : vector<2x8x1xf32>
    %1137 = vector.shape_cast %1122 : vector<16xf32> to vector<1x1x16xf32>
    %1138 = vector.broadcast %1137 : vector<1x1x16xf32> to vector<2x16x16xf32>
    %1139 = arith.mulf %1102, %1138 : vector<2x16x16xf32>
    %cst_219 = arith.constant 1.000000e+00 : f32
    %1140 = vector.broadcast %cst_219 : f32 to vector<2x16x1xf32>
    %1141 = tpu.concatenate %1139, %1128, %1140 in 2 : vector<2x16x16xf32>, vector<2x16x1xf32>, vector<2x16x1xf32> -> vector<2x16x18xf32>
    %cst_220 = arith.constant 1.000000e+00 : f32
    %1142 = vector.broadcast %cst_220 : f32 to vector<2x8x1xf32>
    %1143 = tpu.concatenate %1109, %1142, %1136 in 2 : vector<2x8x16xf32>, vector<2x8x1xf32>, vector<2x8x1xf32> -> vector<2x8x18xf32>
    "tpu.trace_start"() <{level = 10 : i32, message = "bcd,bqd->bcq"}> : () -> ()
    %cst_221 = arith.constant dense<0.000000e+00> : vector<2x16x8xf32>
    %1144 = tpu.matmul %1141, %1143, %cst_221 {dimension_numbers = #tpu.dot_dimension_numbers<[2], [2], [1], [1], [0, 0, 0, 1, 1, 1], [0], [0]>} : vector<2x16x18xf32>, vector<2x8x18xf32>, vector<2x16x8xf32> -> vector<2x16x8xf32>
    "tpu.trace_stop"() : () -> ()
    %1145 = vector.broadcast %1111 : vector<2x1x8xf32> to vector<2x16x8xf32>
    %1146 = arith.mulf %1145, %1144 : vector<2x16x8xf32>
    %cst_222 = arith.constant -1.000000e+30 : f32
    %1147 = vector.broadcast %cst_222 : f32 to vector<2x1x8xf32>
    %1148 = arith.mulf %1115, %1147 : vector<2x1x8xf32>
    %1149 = vector.broadcast %1148 : vector<2x1x8xf32> to vector<2x16x8xf32>
    %1150 = arith.addf %1146, %1149 : vector<2x16x8xf32>
    %cst_223 = arith.constant dense<0xFF800000> : vector<2x16xf32>
    %1151 = vector.multi_reduction <maximumf>, %1150, %cst_223 [2] : vector<2x16x8xf32> to vector<2x16xf32>
    %1152 = vector.shape_cast %1151 : vector<2x16xf32> to vector<2x16x1xf32>
    %1153 = vector.broadcast %1152 : vector<2x16x1xf32> to vector<2x16x8xf32>
    %1154 = arith.subf %1150, %1153 : vector<2x16x8xf32>
    %1155 = math.exp %1154 : vector<2x16x8xf32>
    %cst_224 = arith.constant dense<0.000000e+00> : vector<2x16xf32>
    %1156 = vector.multi_reduction <add>, %1155, %cst_224 [2] : vector<2x16x8xf32> to vector<2x16xf32>
    %1157 = vector.shape_cast %1156 : vector<2x16xf32> to vector<2x16x1xf32>
    %1158 = tpu.reciprocal %1157 {approx = true} : vector<2x16x1xf32> -> vector<2x16x1xf32>
    %1159 = vector.broadcast %1158 : vector<2x16x1xf32> to vector<2x16x8xf32>
    %1160 = arith.mulf %1155, %1159 : vector<2x16x8xf32>
    %1161 = vector.broadcast %1110 : vector<2x16x1xf32> to vector<2x16x8xf32>
    %1162 = arith.mulf %1161, %1144 : vector<2x16x8xf32>
    %cst_225 = arith.constant -1.000000e+30 : f32
    %1163 = vector.broadcast %cst_225 : f32 to vector<2x16x1xf32>
    %1164 = arith.mulf %1113, %1163 : vector<2x16x1xf32>
    %1165 = vector.broadcast %1164 : vector<2x16x1xf32> to vector<2x16x8xf32>
    %1166 = arith.addf %1162, %1165 : vector<2x16x8xf32>
    %cst_226 = arith.constant dense<0xFF800000> : vector<2x8xf32>
    %1167 = vector.multi_reduction <maximumf>, %1166, %cst_226 [1] : vector<2x16x8xf32> to vector<2x8xf32>
    %1168 = vector.shape_cast %1167 : vector<2x8xf32> to vector<2x1x8xf32>
    %1169 = vector.broadcast %1168 : vector<2x1x8xf32> to vector<2x16x8xf32>
    %1170 = arith.subf %1166, %1169 : vector<2x16x8xf32>
    %1171 = math.exp %1170 : vector<2x16x8xf32>
    %cst_227 = arith.constant dense<0.000000e+00> : vector<2x8xf32>
    %1172 = vector.multi_reduction <add>, %1171, %cst_227 [1] : vector<2x16x8xf32> to vector<2x8xf32>
    %1173 = vector.shape_cast %1172 : vector<2x8xf32> to vector<2x1x8xf32>
    %1174 = tpu.reciprocal %1173 {approx = true} : vector<2x1x8xf32> -> vector<2x1x8xf32>
    %1175 = vector.broadcast %1174 : vector<2x1x8xf32> to vector<2x16x8xf32>
    %1176 = arith.mulf %1171, %1175 : vector<2x16x8xf32>
    "tpu.trace_start"() <{level = 10 : i32, message = "bcq,bqd->bcd"}> : () -> ()
    %cst_228 = arith.constant dense<0.000000e+00> : vector<2x16x16xf32>
    %1177 = tpu.matmul %1160, %1109, %cst_228 {dimension_numbers = #tpu.dot_dimension_numbers<[2], [1], [1], [2], [0, 0, 0, 1, 1, 2], [0], [0]>} : vector<2x16x8xf32>, vector<2x8x16xf32>, vector<2x16x16xf32> -> vector<2x16x16xf32>
    "tpu.trace_stop"() : () -> ()
    "tpu.trace_start"() <{level = 10 : i32, message = "bcq,bkq->bck"}> : () -> ()
    %cst_229 = arith.constant dense<0.000000e+00> : vector<2x16x16xf32>
    %1178 = tpu.matmul %1160, %1176, %cst_229 {dimension_numbers = #tpu.dot_dimension_numbers<[2], [2], [1], [1], [0, 0, 0, 1, 1, 1], [0], [0]>} : vector<2x16x8xf32>, vector<2x16x8xf32>, vector<2x16x16xf32> -> vector<2x16x16xf32>
    "tpu.trace_stop"() : () -> ()
    "tpu.trace_start"() <{level = 10 : i32, message = "bck,bkd->bcd"}> : () -> ()
    %cst_230 = arith.constant dense<0.000000e+00> : vector<2x16x16xf32>
    %1179 = tpu.matmul %1178, %1102, %cst_230 {dimension_numbers = #tpu.dot_dimension_numbers<[2], [1], [1], [2], [0, 0, 0, 1, 1, 2], [0], [0]>} : vector<2x16x16xf32>, vector<2x16x16xf32>, vector<2x16x16xf32> -> vector<2x16x16xf32>
    "tpu.trace_stop"() : () -> ()
    %1180 = arith.mulf %1102, %1177 : vector<2x16x16xf32>
    %1181 = arith.mulf %1102, %1179 : vector<2x16x16xf32>
    %1182 = tpu.concatenate %1102, %1177, %1180, %1181 in 2 : vector<2x16x16xf32>, vector<2x16x16xf32>, vector<2x16x16xf32>, vector<2x16x16xf32> -> vector<2x16x64xf32>
    %1183 = vector.extract_strided_slice %1182 {offsets = [0, 0, 0], sizes = [1, 16, 64], strides = [1, 1, 1]} : vector<2x16x64xf32> to vector<1x16x64xf32>
    %1184 = vector.shape_cast %1183 : vector<1x16x64xf32> to vector<16x64xf32>
    %1185 = vector.extract_strided_slice %1182 {offsets = [1, 0, 0], sizes = [1, 16, 64], strides = [1, 1, 1]} : vector<2x16x64xf32> to vector<1x16x64xf32>
    %1186 = vector.shape_cast %1185 : vector<1x16x64xf32> to vector<16x64xf32>
    %1187 = tpu.concatenate %1184, %1186 in 1 : vector<16x64xf32>, vector<16x64xf32> -> vector<16x128xf32>
    %c0_231 = arith.constant 0 : index
    %c0_232 = arith.constant 0 : index
    %1188 = vector.load %arg15[%c0_231, %c0_232] : memref<16x128xf32, #tpu.memory_space<vmem>>, vector<16x128xf32>
    tpu.vector_store %arg15[%c0_231, %c0_232], %1187 {strides = array<i32>} : memref<16x128xf32, #tpu.memory_space<vmem>>, vector<16x128xf32>,
    return
  }
  func.func @transform_0(%arg0: i32) -> (i32, i32) {
    %c0_i32 = arith.constant 0 : i32
    %c0_i32_0 = arith.constant 0 : i32
    %c0_i32_1 = arith.constant 0 : i32
    return %c0_i32, %c0_i32_0 : i32, i32
  }
  func.func @transform_1(%arg0: i32) -> (i32, i32) {
    %c0_i32 = arith.constant 0 : i32
    %c0_i32_0 = arith.constant 0 : i32
    %c0_i32_1 = arith.constant 0 : i32
    return %c0_i32, %c0_i32_0 : i32, i32
  }
  func.func @transform_2(%arg0: i32) -> (i32, i32, i32) {
    %c0_i32 = arith.constant 0 : i32
    %c0_i32_0 = arith.constant 0 : i32
    %c0_i32_1 = arith.constant 0 : i32
    %c0_i32_2 = arith.constant 0 : i32
    return %c0_i32, %c0_i32_0, %c0_i32_1 : i32, i32, i32
  }
  func.func @transform_3(%arg0: i32) -> (i32, i32, i32) {
    %c0_i32 = arith.constant 0 : i32
    %c0_i32_0 = arith.constant 0 : i32
    %c0_i32_1 = arith.constant 0 : i32
    %c0_i32_2 = arith.constant 0 : i32
    return %c0_i32, %c0_i32_0, %c0_i32_1 : i32, i32, i32
  }
  func.func @transform_4(%arg0: i32) -> (i32, i32) {
    %c0_i32 = arith.constant 0 : i32
    %c0_i32_0 = arith.constant 0 : i32
    %c0_i32_1 = arith.constant 0 : i32
    return %c0_i32, %c0_i32_0 : i32, i32
  }
  func.func @transform_5(%arg0: i32) -> (i32, i32) {
    %c0_i32 = arith.constant 0 : i32
    %c0_i32_0 = arith.constant 0 : i32
    %c0_i32_1 = arith.constant 0 : i32
    return %c0_i32, %c0_i32_0 : i32, i32
  }
  func.func @transform_6(%arg0: i32) -> (i32, i32) {
    %c0_i32 = arith.constant 0 : i32
    %c0_i32_0 = arith.constant 0 : i32
    %c0_i32_1 = arith.constant 0 : i32
    return %c0_i32, %c0_i32_0 : i32, i32
  }
  func.func @transform_7(%arg0: i32) -> (i32, i32) {
    %c0_i32 = arith.constant 0 : i32
    %c0_i32_0 = arith.constant 0 : i32
    %c0_i32_1 = arith.constant 0 : i32
    return %c0_i32, %c0_i32_0 : i32, i32
  }
  func.func @transform_8(%arg0: i32) -> (i32, i32) {
    %c0_i32 = arith.constant 0 : i32
    %c0_i32_0 = arith.constant 0 : i32
    %c0_i32_1 = arith.constant 0 : i32
    return %c0_i32, %c0_i32_0 : i32, i32
  }
  func.func @transform_9(%arg0: i32) -> (i32, i32) {
    %c0_i32 = arith.constant 0 : i32
    %c0_i32_0 = arith.constant 0 : i32
    %c0_i32_1 = arith.constant 0 : i32
    return %c0_i32, %c0_i32_0 : i32, i32
  }
  func.func @transform_10(%arg0: i32) -> (i32, i32) {
    %c0_i32 = arith.constant 0 : i32
    %c0_i32_0 = arith.constant 0 : i32
    %c0_i32_1 = arith.constant 0 : i32
    return %c0_i32, %c0_i32_0 : i32, i32
  }
  func.func @transform_11(%arg0: i32) -> (i32, i32) {
    %c0_i32 = arith.constant 0 : i32
    %c0_i32_0 = arith.constant 0 : i32
    %c0_i32_1 = arith.constant 0 : i32
    return %c0_i32, %c0_i32_0 : i32, i32
  }
  func.func @transform_12(%arg0: i32) -> (i32, i32) {
    %c0_i32 = arith.constant 0 : i32
    %c0_i32_0 = arith.constant 0 : i32
    %c0_i32_1 = arith.constant 0 : i32
    return %c0_i32, %c0_i32_0 : i32, i32
  }
  func.func @transform_13(%arg0: i32) -> (i32, i32) {
    %c0_i32 = arith.constant 0 : i32
    %c0_i32_0 = arith.constant 0 : i32
    %c0_i32_1 = arith.constant 0 : i32
    return %c0_i32, %c0_i32_0 : i32, i32
  }
  func.func @transform_14(%arg0: i32) -> (i32, i32) {
    %c0_i32 = arith.constant 0 : i32
    %c0_i32_0 = arith.constant 0 : i32
    %c0_i32_1 = arith.constant 0 : i32
    return %c0_i32, %c0_i32_0 : i32, i32
  }
}

</mosaic_0001>

<llo_original>
// kernel: tile.8
$region0: #{tile.8}
  #allocation0 [shape = 's32[1]{0}', space=sflag, size = 0x4, scoped, tag = 'scoped memory for tile.8']
  %s0 = inlined_call_operand.vmem [shape: f32[8], index: 0, kind: input, shape index: {}]
  %s1 = inlined_call_operand.vmem [shape: f32[10,8], index: 1, kind: output, shape index: {}]
  // Predicated region
  $region2: #{tile.8} parent=0 // pred_check
    _
  $region3: #{tile.8} parent=0 // pred_check_branch
    %3 = sbr.rel (0) target = $region5
  $region4: #{tile.8} parent=0 // pred_region
    _
  $region5: #{tile.8} parent=0 // pred_fallthru
    _
  %v4 = vld [vmem:[%s0] ss:$0 sm:$0xff]
  %5 = vst [vmem:[%s1] sm:$0xff] %v4
  %s6 = scalar_lea.vmem %s1, 8
  %7 = vst [vmem:[%s6] sm:$0xff] %v4

// kernel: tile.9
$region0: #{tile.9}
  %s0 = inlined_call_operand.vmem [shape: f32[10,8], index: 0, kind: input, shape index: {}]
  %s1 = inlined_call_operand.vmem [shape: f32[1,80], index: 1, kind: output, shape index: {}]
  $region1: #{tile.9} parent=0
    #allocation0 [shape = 'u8[4096]{0}', space=vmem, size = 0x1000, scoped, tag = 'scoped mem for output reshape']
    %v2 = vld [vmem:[%s0] sm:$0x1]
    %vm3 = vcmask 64512
    %4 = vst.msk [vmem:[#allocation0] sm:$0x1] %vm3, %v2
    %s5 = scalar_lea.vmem %s0, 9
    %v6 = vld [vmem:[%s5] sm:$0x1]
    %7 = vrot.lane.b32.xlu0 %v6, 72
    %v8 = vpop.permute.xlu0 %7
    %vm9 = vcmask 654912
    %10 = vst.msk [vmem:[#allocation0] sm:$0x1] %vm9, %v8
    %s11 = scalar_lea.vmem %s0, 8
    %v12 = vld [vmem:[%s11] sm:$0x1]
    %13 = vrot.lane.b32.xlu0 %v12, 64
    %v14 = vpop.permute.xlu0 %13
    %vm15 = vcmask 589312
    %16 = vst.msk [vmem:[#allocation0] sm:$0x1] %vm15, %v14
    %s17 = scalar_lea.vmem %s0, 7
    %v18 = vld [vmem:[%s17] sm:$0x1]
    %19 = vrot.lane.b32.xlu0 %v18, 56
    %v20 = vpop.permute.xlu0 %19
    %vm21 = vcmask 523712
    %22 = vst.msk [vmem:[#allocation0] sm:$0x1] %vm21, %v20
    %s23 = scalar_lea.vmem %s0, 6
    %v24 = vld [vmem:[%s23] sm:$0x1]
    %25 = vrot.lane.b32.xlu0 %v24, 48
    %v26 = vpop.permute.xlu0 %25
    %vm27 = vcmask 458112
    %28 = vst.msk [vmem:[#allocation0] sm:$0x1] %vm27, %v26
    %s29 = scalar_lea.vmem %s0, 5
    %v30 = vld [vmem:[%s29] sm:$0x1]
    %31 = vrot.lane.b32.xlu0 %v30, 40
    %v32 = vpop.permute.xlu0 %31
    %vm33 = vcmask 392512
    %34 = vst.msk [vmem:[#allocation0] sm:$0x1] %vm33, %v32
    %s35 = scalar_lea.vmem %s0, 4
    %v36 = vld [vmem:[%s35] sm:$0x1]
    %37 = vrot.lane.b32.xlu0 %v36, 32
    %v38 = vpop.permute.xlu0 %37
    %vm39 = vcmask 326912
    %40 = vst.msk [vmem:[#allocation0] sm:$0x1] %vm39, %v38
    %s41 = scalar_lea.vmem %s0, 3
    %v42 = vld [vmem:[%s41] sm:$0x1]
    %43 = vrot.lane.b32.xlu0 %v42, 24
    %v44 = vpop.permute.xlu0 %43
    %vm45 = vcmask 261312
    %46 = vst.msk [vmem:[#allocation0] sm:$0x1] %vm45, %v44
    %s47 = scalar_lea.vmem %s0, 2
    %v48 = vld [vmem:[%s47] sm:$0x1]
    %49 = vrot.lane.b32.xlu0 %v48, 16
    %v50 = vpop.permute.xlu0 %49
    %vm51 = vcmask 195712
    %52 = vst.msk [vmem:[#allocation0] sm:$0x1] %vm51, %v50
    %s53 = scalar_lea.vmem %s0, 1
    %v54 = vld [vmem:[%s53] sm:$0x1]
    %55 = vrot.lane.b32.xlu0 %v54, 8
    %v56 = vpop.permute.xlu0 %55
    %vm57 = vcmask 130112
    %58 = vst.msk [vmem:[#allocation0] sm:$0x1] %vm57, %v56
    %s60 = ssub.s32 2, 1
    %v61 = vld [vmem:[#allocation0] sm:%s60]
    %s63 = ssub.s32 2, 1
    %64 = vst [vmem:[%s1] sm:%s63] %v61

// kernel: bidaf_forward.1
$region0: #{bidaf_forward.1}
  #allocation0 [shape = 'u32[]', space=smem, size = 0x4, offset = 0x4, fixed_abs, tag = 'smem constant byte address 0x4 - core index']
  #allocation1 [shape = 'u32[72,128]{1,0:T(1,128)}', space=vmem, size = 0x9000, scoped, tag = 'internal scratch']
  #allocation2 [shape = 'f32[24,2,16]{2,1,0:T(2,128)}', space=vmem, size = 0x6000, scoped, tag = 'scratch operand']
  %s0 = inlined_call_operand.vmem [shape: f32[48,112], index: 0, kind: input, shape index: {}]
  %s1 = inlined_call_operand.vmem [shape: f32[4,24], index: 1, kind: input, shape index: {}]
  %s2 = inlined_call_operand.vmem [shape: f32[2,16,1], index: 2, kind: input, shape index: {}]
  %s3 = inlined_call_operand.vmem [shape: f32[2,1,8], index: 3, kind: input, shape index: {}]
  %s4 = inlined_call_operand.vmem [shape: f32[112,88], index: 4, kind: input, shape index: {}]
  %s5 = inlined_call_operand.vmem [shape: f32[1,80], index: 5, kind: input, shape index: {}]
  %s6 = inlined_call_operand.vmem [shape: f32[16,32], index: 6, kind: input, shape index: {}]
  %s7 = inlined_call_operand.vmem [shape: f32[1,32], index: 7, kind: input, shape index: {}]
  %s8 = inlined_call_operand.vmem [shape: f32[16,32], index: 8, kind: input, shape index: {}]
  %s9 = inlined_call_operand.vmem [shape: f32[1,32], index: 9, kind: input, shape index: {}]
  %s10 = inlined_call_operand.vmem [shape: f32[16,64], index: 10, kind: input, shape index: {}]
  %s11 = inlined_call_operand.vmem [shape: f32[1,64], index: 11, kind: input, shape index: {}]
  %s12 = inlined_call_operand.vmem [shape: f32[8,64], index: 12, kind: input, shape index: {}]
  %s13 = inlined_call_operand.vmem [shape: f32[4,16], index: 13, kind: input, shape index: {}]
  %s14 = inlined_call_operand.vmem [shape: f32[16,128], index: 14, kind: output, shape index: {}]
  %s15 = sld [smem:[#allocation0]]
  $region66: #{bidaf_forward.1} parent=0
    _
  %s17 = ssub.s32 1, %s15
  %s18 = scalar_select 0, %s17, %s15
  // Predicated region
  $region2: #{bidaf_forward.1} parent=0 // pred_check
    _
  $region3: #{bidaf_forward.1} parent=0 // pred_check_branch
    %20 = sbr.rel (0) target = $region5
  $region4: #{bidaf_forward.1} parent=0 // pred_region
    _
  $region5: #{bidaf_forward.1} parent=0 // pred_fallthru
    _
  // Predicated region
  $region6: #{bidaf_forward.1} parent=0 // pred_check
    _
  $region7: #{bidaf_forward.1} parent=0 // pred_check_branch
    %22 = sbr.rel (0) target = $region9
  $region8: #{bidaf_forward.1} parent=0 // pred_region
    _
  $region9: #{bidaf_forward.1} parent=0 // pred_fallthru
    _
  // Predicated region
  $region10: #{bidaf_forward.1} parent=0 // pred_check
    _
  $region11: #{bidaf_forward.1} parent=0 // pred_check_branch
    %24 = sbr.rel (0) target = $region13
  $region12: #{bidaf_forward.1} parent=0 // pred_region
    _
  $region13: #{bidaf_forward.1} parent=0 // pred_fallthru
    _
  // Predicated region
  $region14: #{bidaf_forward.1} parent=0 // pred_check
    _
  $region15: #{bidaf_forward.1} parent=0 // pred_check_branch
    %26 = sbr.rel (0) target = $region17
  $region16: #{bidaf_forward.1} parent=0 // pred_region
    _
  $region17: #{bidaf_forward.1} parent=0 // pred_fallthru
    _
  // Predicated region
  $region18: #{bidaf_forward.1} parent=0 // pred_check
    _
  $region19: #{bidaf_forward.1} parent=0 // pred_check_branch
    %28 = sbr.rel (0) target = $region21
  $region20: #{bidaf_forward.1} parent=0 // pred_region
    _
  $region21: #{bidaf_forward.1} parent=0 // pred_fallthru
    _
  // Predicated region
  $region22: #{bidaf_forward.1} parent=0 // pred_check
    _
  $region23: #{bidaf_forward.1} parent=0 // pred_check_branch
    %30 = sbr.rel (0) target = $region25
  $region24: #{bidaf_forward.1} parent=0 // pred_region
    _
  $region25: #{bidaf_forward.1} parent=0 // pred_fallthru
    _
  // Predicated region
  $region26: #{bidaf_forward.1} parent=0 // pred_check
    _
  $region27: #{bidaf_forward.1} parent=0 // pred_check_branch
    %32 = sbr.rel (0) target = $region29
  $region28: #{bidaf_forward.1} parent=0 // pred_region
    _
  $region29: #{bidaf_forward.1} parent=0 // pred_fallthru
    _
  // Predicated region
  $region30: #{bidaf_forward.1} parent=0 // pred_check
    _
  $region31: #{bidaf_forward.1} parent=0 // pred_check_branch
    %34 = sbr.rel (0) target = $region33
  $region32: #{bidaf_forward.1} parent=0 // pred_region
    _
  $region33: #{bidaf_forward.1} parent=0 // pred_fallthru
    _
  // Predicated region
  $region34: #{bidaf_forward.1} parent=0 // pred_check
    _
  $region35: #{bidaf_forward.1} parent=0 // pred_check_branch
    %36 = sbr.rel (0) target = $region37
  $region36: #{bidaf_forward.1} parent=0 // pred_region
    _
  $region37: #{bidaf_forward.1} parent=0 // pred_fallthru
    _
  // Predicated region
  $region38: #{bidaf_forward.1} parent=0 // pred_check
    _
  $region39: #{bidaf_forward.1} parent=0 // pred_check_branch
    %38 = sbr.rel (0) target = $region41
  $region40: #{bidaf_forward.1} parent=0 // pred_region
    _
  $region41: #{bidaf_forward.1} parent=0 // pred_fallthru
    _
  // Predicated region
  $region42: #{bidaf_forward.1} parent=0 // pred_check
    _
  $region43: #{bidaf_forward.1} parent=0 // pred_check_branch
    %40 = sbr.rel (0) target = $region45
  $region44: #{bidaf_forward.1} parent=0 // pred_region
    _
  $region45: #{bidaf_forward.1} parent=0 // pred_fallthru
    _
  // Predicated region
  $region46: #{bidaf_forward.1} parent=0 // pred_check
    _
  $region47: #{bidaf_forward.1} parent=0 // pred_check_branch
    %42 = sbr.rel (0) target = $region49
  $region48: #{bidaf_forward.1} parent=0 // pred_region
    _
  $region49: #{bidaf_forward.1} parent=0 // pred_fallthru
    _
  // Predicated region
  $region50: #{bidaf_forward.1} parent=0 // pred_check
    _
  $region51: #{bidaf_forward.1} parent=0 // pred_check_branch
    %44 = sbr.rel (0) target = $region53
  $region52: #{bidaf_forward.1} parent=0 // pred_region
    _
  $region53: #{bidaf_forward.1} parent=0 // pred_fallthru
    _
  // Predicated region
  $region54: #{bidaf_forward.1} parent=0 // pred_check
    _
  $region55: #{bidaf_forward.1} parent=0 // pred_check_branch
    %46 = sbr.rel (0) target = $region57
  $region56: #{bidaf_forward.1} parent=0 // pred_region
    _
  $region57: #{bidaf_forward.1} parent=0 // pred_fallthru
    _
  %v47 = vld [vmem:[%s0] sm:$0xff]
  %v48 = vld [vmem:[%s0 + $0x8] sm:$0xff]
  %v49 = vld [vmem:[%s0 + $0x10] sm:$0xff]
  %v50 = vld [vmem:[%s0 + $0x18] sm:$0xff]
  %v51 = vld [vmem:[%s0 + $0x20] sm:$0xff]
  %v52 = vld [vmem:[%s0 + $0x28] sm:$0xff]
  %v53 = vld [vmem:[%s4] sm:$0xff]
  %v54 = vld [vmem:[%s4 + $0x8] sm:$0xff]
  %v55 = vld [vmem:[%s4 + $0x10] sm:$0xff]
  %v56 = vld [vmem:[%s4 + $0x18] sm:$0xff]
  %v57 = vld [vmem:[%s4 + $0x20] sm:$0xff]
  %v58 = vld [vmem:[%s4 + $0x28] sm:$0xff]
  %v59 = vld [vmem:[%s4 + $0x30] sm:$0xff]
  %v60 = vld [vmem:[%s4 + $0x38] sm:$0xff]
  %v61 = vld [vmem:[%s4 + $0x40] sm:$0xff]
  %v62 = vld [vmem:[%s4 + $0x48] sm:$0xff]
  %v63 = vld [vmem:[%s4 + $0x50] sm:$0xff]
  %v64 = vld [vmem:[%s4 + $0x58] sm:$0xff]
  %v65 = vld [vmem:[%s4 + $0x60] sm:$0xff]
  %v66 = vld [vmem:[%s4 + $0x68] sm:$0xff]
  %vm67 = vcmask 916480
  %v69 = vsel %vm67, %v47, 0
  %v72 = vsel %vm67, %v48, 0
  %v75 = vsel %vm67, %v49, 0
  %v78 = vsel %vm67, %v50, 0
  %v81 = vsel %vm67, %v51, 0
  %v84 = vsel %vm67, %v52, 0
  %86 = vmatpush.msra.mxu0 0.0
  %87 = vmatpush.msra.mxu0 0.0
  %88 = vmatpush.msra.mxu0 %v66
  %89 = vmatpush.msra.mxu0 %v65
  %90 = vmatpush.msra.mxu0 %v64
  %91 = vmatpush.msra.mxu0 %v63
  %92 = vmatpush.msra.mxu0 %v62
  %93 = vmatpush.msra.mxu0 %v61
  %94 = vmatpush.msra.mxu0 %v60
  %95 = vmatpush.msra.mxu0 %v59
  %96 = vmatpush.msra.mxu0 %v58
  %97 = vmatpush.msra.mxu0 %v57
  %98 = vmatpush.msra.mxu0 %v56
  %99 = vmatpush.msra.mxu0 %v55
  %100 = vmatpush.msra.mxu0 %v54
  %101 = vmatpush.msra.mxu0 %v53
  %102 = vmatmul.f32.gmra.mxu0 %v69
  %v103 = vpop.f32.mrf.mxu0
  %v104 = vadd.f32 0.0, %v103
  %105 = vmatmul.f32.gmra.mxu0 %v72
  %v106 = vpop.f32.mrf.mxu0
  %v107 = vadd.f32 0.0, %v106
  %108 = vmatmul.f32.gmra.mxu0 %v75
  %v109 = vpop.f32.mrf.mxu0
  %v110 = vadd.f32 0.0, %v109
  %111 = vmatmul.f32.gmra.mxu0 %v78
  %v112 = vpop.f32.mrf.mxu0
  %v113 = vadd.f32 0.0, %v112
  %114 = vmatmul.f32.gmra.mxu0 %v81
  %v115 = vpop.f32.mrf.mxu0
  %v116 = vadd.f32 0.0, %v115
  %117 = vmatmul.f32.gmra.mxu0 %v84
  %v118 = vpop.f32.mrf.mxu0
  %v119 = vadd.f32 0.0, %v118
  %120 = vdwg.mxu0
  %v121 = vld [vmem:[%s5] sm:$0x1]
  %v123 = vperm.slane %v121, 0
  %124 = vrot.lane.b32.xlu0 %v123, 8
  %v125 = vpop.permute.xlu0 %124
  %v127 = vadd.f32 %v104, %v125
  %v128 = vadd.f32 %v107, %v125
  %v129 = vadd.f32 %v110, %v125
  %v130 = vadd.f32 %v113, %v125
  %v131 = vadd.f32 %v116, %v125
  %v132 = vadd.f32 %v119, %v125
  %v133 = vmax.f32 %v127, 0.0
  %v134 = vmax.f32 %v128, 0.0
  %v135 = vmax.f32 %v129, 0.0
  %v136 = vmax.f32 %v130, 0.0
  %v137 = vmax.f32 %v131, 0.0
  %v138 = vmax.f32 %v132, 0.0
  %145 = vrot.lane.b32.xlu0 %v133, 120
  %v146 = vpop.permute.xlu0 %145
  %147 = vrot.lane.b32.xlu0 %v134, 120
  %v148 = vpop.permute.xlu0 %147
  %149 = vrot.lane.b32.xlu0 %v135, 120
  %v150 = vpop.permute.xlu0 %149
  %151 = vrot.lane.b32.xlu0 %v136, 120
  %v152 = vpop.permute.xlu0 %151
  %153 = vrot.lane.b32.xlu0 %v137, 120
  %v154 = vpop.permute.xlu0 %153
  %155 = vrot.lane.b32.xlu0 %v138, 120
  %v156 = vpop.permute.xlu0 %155
  %v163 = vmax.f32 %v133, %v146
  %v164 = vmax.f32 %v134, %v148
  %v165 = vmax.f32 %v135, %v150
  %v166 = vmax.f32 %v136, %v152
  %v167 = vmax.f32 %v137, %v154
  %v168 = vmax.f32 %v138, %v156
  %175 = vrot.lane.b32.xlu0 %v163, 112
  %v176 = vpop.permute.xlu0 %175
  %177 = vrot.lane.b32.xlu0 %v164, 112
  %v178 = vpop.permute.xlu0 %177
  %179 = vrot.lane.b32.xlu0 %v165, 112
  %v180 = vpop.permute.xlu0 %179
  %181 = vrot.lane.b32.xlu0 %v166, 112
  %v182 = vpop.permute.xlu0 %181
  %183 = vrot.lane.b32.xlu0 %v167, 112
  %v184 = vpop.permute.xlu0 %183
  %185 = vrot.lane.b32.xlu0 %v168, 112
  %v186 = vpop.permute.xlu0 %185
  %v193 = vmax.f32 %v163, %v176
  %v194 = vmax.f32 %v164, %v178
  %v195 = vmax.f32 %v165, %v180
  %v196 = vmax.f32 %v166, %v182
  %v197 = vmax.f32 %v167, %v184
  %v198 = vmax.f32 %v168, %v186
  %205 = vrot.lane.b32.xlu0 %v193, 96
  %v206 = vpop.permute.xlu0 %205
  %207 = vrot.lane.b32.xlu0 %v194, 96
  %v208 = vpop.permute.xlu0 %207
  %209 = vrot.lane.b32.xlu0 %v195, 96
  %v210 = vpop.permute.xlu0 %209
  %211 = vrot.lane.b32.xlu0 %v196, 96
  %v212 = vpop.permute.xlu0 %211
  %213 = vrot.lane.b32.xlu0 %v197, 96
  %v214 = vpop.permute.xlu0 %213
  %215 = vrot.lane.b32.xlu0 %v198, 96
  %v216 = vpop.permute.xlu0 %215
  %v223 = vmax.f32 %v193, %v206
  %v224 = vmax.f32 %v194, %v208
  %v225 = vmax.f32 %v195, %v210
  %v226 = vmax.f32 %v196, %v212
  %v227 = vmax.f32 %v197, %v214
  %v228 = vmax.f32 %v198, %v216
  %229 = vrot.lane.b32.xlu0 %v163, 64
  %v230 = vpop.permute.xlu0 %229
  %231 = vrot.lane.b32.xlu0 %v164, 64
  %v232 = vpop.permute.xlu0 %231
  %233 = vrot.lane.b32.xlu0 %v165, 64
  %v234 = vpop.permute.xlu0 %233
  %235 = vrot.lane.b32.xlu0 %v166, 64
  %v236 = vpop.permute.xlu0 %235
  %237 = vrot.lane.b32.xlu0 %v167, 64
  %v238 = vpop.permute.xlu0 %237
  %239 = vrot.lane.b32.xlu0 %v168, 64
  %v240 = vpop.permute.xlu0 %239
  %v247 = vmax.f32 %v223, %v230
  %v248 = vmax.f32 %v224, %v232
  %v249 = vmax.f32 %v225, %v234
  %v250 = vmax.f32 %v226, %v236
  %v251 = vmax.f32 %v227, %v238
  %v252 = vmax.f32 %v228, %v240
  %vm253 = vcmask 64512
  %v254 = vsel %vm253, %v104, %v247
  %v255 = vsel %vm253, %v107, %v248
  %v256 = vsel %vm253, %v110, %v249
  %v257 = vsel %vm253, %v113, %v250
  %v258 = vsel %vm253, %v116, %v251
  %v259 = vsel %vm253, %v119, %v252
  %v260 = vld [vmem:[%s6] sm:$0xff]
  %v261 = vld [vmem:[%s6 + $0x8] sm:$0xff]
  %v262 = vld [vmem:[%s7] sm:$0x1]
  %v264 = vperm.slane %v262, 0
  %vm266 = vcmask 130048
  %v268 = vsel %vm266, %v254, 0
  %v271 = vsel %vm266, %v255, 0
  %v274 = vsel %vm266, %v256, 0
  %v277 = vsel %vm266, %v257, 0
  %v280 = vsel %vm266, %v258, 0
  %v283 = vsel %vm266, %v259, 0
  %285 = vmatpush.msra.mxu0 0.0
  %286 = vmatpush.msra.mxu0 0.0
  %287 = vmatpush.msra.mxu0 0.0
  %288 = vmatpush.msra.mxu0 0.0
  %289 = vmatpush.msra.mxu0 0.0
  %290 = vmatpush.msra.mxu0 0.0
  %291 = vmatpush.msra.mxu0 0.0
  %292 = vmatpush.msra.mxu0 0.0
  %293 = vmatpush.msra.mxu0 0.0
  %294 = vmatpush.msra.mxu0 0.0
  %295 = vmatpush.msra.mxu0 0.0
  %296 = vmatpush.msra.mxu0 0.0
  %297 = vmatpush.msra.mxu0 0.0
  %298 = vmatpush.msra.mxu0 0.0
  %299 = vmatpush.msra.mxu0 %v261
  %300 = vmatpush.msra.mxu0 %v260
  %301 = vmatmul.f32.gmra.mxu0 %v268
  %v302 = vpop.f32.mrf.mxu0
  %v303 = vadd.f32 %v264, %v302
  %304 = vmatmul.f32.gmra.mxu0 %v271
  %v305 = vpop.f32.mrf.mxu0
  %v306 = vadd.f32 %v264, %v305
  %307 = vmatmul.f32.gmra.mxu0 %v274
  %v308 = vpop.f32.mrf.mxu0
  %v309 = vadd.f32 %v264, %v308
  %310 = vmatmul.f32.gmra.mxu0 %v277
  %v311 = vpop.f32.mrf.mxu0
  %v312 = vadd.f32 %v264, %v311
  %313 = vmatmul.f32.gmra.mxu0 %v280
  %v314 = vpop.f32.mrf.mxu0
  %v315 = vadd.f32 %v264, %v314
  %316 = vmatmul.f32.gmra.mxu0 %v283
  %v317 = vpop.f32.mrf.mxu0
  %v318 = vadd.f32 %v264, %v317
  %319 = vdwg.mxu0
  %v320 = vmax.f32 %v303, 0.0
  %v321 = vmax.f32 %v306, 0.0
  %v322 = vmax.f32 %v309, 0.0
  %v323 = vmax.f32 %v312, 0.0
  %v324 = vmax.f32 %v315, 0.0
  %v325 = vmax.f32 %v318, 0.0
  %v326 = vxor.u32 %v303, 2147483648
  %v327 = vxor.u32 %v306, 2147483648
  %v328 = vxor.u32 %v309, 2147483648
  %v329 = vxor.u32 %v312, 2147483648
  %v330 = vxor.u32 %v315, 2147483648
  %v331 = vxor.u32 %v318, 2147483648
  %v332 = vmul.f32 %v326, 1.442695
  %v333 = vpow.pop %v332
  %v334 = vmul.f32 %v327, 1.442695
  %v335 = vpow.pop %v334
  %v336 = vmul.f32 %v328, 1.442695
  %v337 = vpow.pop %v336
  %v338 = vmul.f32 %v329, 1.442695
  %v339 = vpow.pop %v338
  %v340 = vmul.f32 %v330, 1.442695
  %v341 = vpow.pop %v340
  %v342 = vmul.f32 %v331, 1.442695
  %v343 = vpow.pop %v342
  %v344 = vadd.f32 %v333, 1.0
  %v345 = vadd.f32 %v335, 1.0
  %v346 = vadd.f32 %v337, 1.0
  %v347 = vadd.f32 %v339, 1.0
  %v348 = vadd.f32 %v341, 1.0
  %v349 = vadd.f32 %v343, 1.0
  %v350 = vrcp.pop %v344
  %v351 = vmul.f32 %v344, %v350
  %v352 = vsub.f32 1.0, %v351
  %v353 = vmul.f32 %v350, %v352
  %v354 = vadd.f32 %v350, %v353
  %vm355 = vweird.f32 %v344
  %vm356 = vweird.f32 %v350
  %vm357 = vmor %vm355, %vm356
  %v358 = vsel %vm357, %v350, %v354
  %v359 = vand.u32 2147483647, %v344
  %vm360 = vcmp.eq.f32.partialorder %v359, 8.507059e+37
  %v361 = vand.u32 %v344, 2147483648
  %v362 = vor.u32 1.1754944e-38, %v361
  %v363 = vsel %vm360, %v362, %v358
  %v364 = vmul.f32 1.0, %v363
  %v365 = vrcp.pop %v345
  %v366 = vmul.f32 %v345, %v365
  %v367 = vsub.f32 1.0, %v366
  %v368 = vmul.f32 %v365, %v367
  %v369 = vadd.f32 %v365, %v368
  %vm370 = vweird.f32 %v345
  %vm371 = vweird.f32 %v365
  %vm372 = vmor %vm370, %vm371
  %v373 = vsel %vm372, %v365, %v369
  %v374 = vand.u32 2147483647, %v345
  %vm375 = vcmp.eq.f32.partialorder %v374, 8.507059e+37
  %v376 = vand.u32 %v345, 2147483648
  %v377 = vor.u32 1.1754944e-38, %v376
  %v378 = vsel %vm375, %v377, %v373
  %v379 = vmul.f32 1.0, %v378
  %v380 = vrcp.pop %v346
  %v381 = vmul.f32 %v346, %v380
  %v382 = vsub.f32 1.0, %v381
  %v383 = vmul.f32 %v380, %v382
  %v384 = vadd.f32 %v380, %v383
  %vm385 = vweird.f32 %v346
  %vm386 = vweird.f32 %v380
  %vm387 = vmor %vm385, %vm386
  %v388 = vsel %vm387, %v380, %v384
  %v389 = vand.u32 2147483647, %v346
  %vm390 = vcmp.eq.f32.partialorder %v389, 8.507059e+37
  %v391 = vand.u32 %v346, 2147483648
  %v392 = vor.u32 1.1754944e-38, %v391
  %v393 = vsel %vm390, %v392, %v388
  %v394 = vmul.f32 1.0, %v393
  %v395 = vrcp.pop %v347
  %v396 = vmul.f32 %v347, %v395
  %v397 = vsub.f32 1.0, %v396
  %v398 = vmul.f32 %v395, %v397
  %v399 = vadd.f32 %v395, %v398
  %vm400 = vweird.f32 %v347
  %vm401 = vweird.f32 %v395
  %vm402 = vmor %vm400, %vm401
  %v403 = vsel %vm402, %v395, %v399
  %v404 = vand.u32 2147483647, %v347
  %vm405 = vcmp.eq.f32.partialorder %v404, 8.507059e+37
  %v406 = vand.u32 %v347, 2147483648
  %v407 = vor.u32 1.1754944e-38, %v406
  %v408 = vsel %vm405, %v407, %v403
  %v409 = vmul.f32 1.0, %v408
  %v410 = vrcp.pop %v348
  %v411 = vmul.f32 %v348, %v410
  %v412 = vsub.f32 1.0, %v411
  %v413 = vmul.f32 %v410, %v412
  %v414 = vadd.f32 %v410, %v413
  %vm415 = vweird.f32 %v348
  %vm416 = vweird.f32 %v410
  %vm417 = vmor %vm415, %vm416
  %v418 = vsel %vm417, %v410, %v414
  %v419 = vand.u32 2147483647, %v348
  %vm420 = vcmp.eq.f32.partialorder %v419, 8.507059e+37
  %v421 = vand.u32 %v348, 2147483648
  %v422 = vor.u32 1.1754944e-38, %v421
  %v423 = vsel %vm420, %v422, %v418
  %v424 = vmul.f32 1.0, %v423
  %v425 = vrcp.pop %v349
  %v426 = vmul.f32 %v349, %v425
  %v427 = vsub.f32 1.0, %v426
  %v428 = vmul.f32 %v425, %v427
  %v429 = vadd.f32 %v425, %v428
  %vm430 = vweird.f32 %v349
  %vm431 = vweird.f32 %v425
  %vm432 = vmor %vm430, %vm431
  %v433 = vsel %vm432, %v425, %v429
  %v434 = vand.u32 2147483647, %v349
  %vm435 = vcmp.eq.f32.partialorder %v434, 8.507059e+37
  %v436 = vand.u32 %v349, 2147483648
  %v437 = vor.u32 1.1754944e-38, %v436
  %v438 = vsel %vm435, %v437, %v433
  %v439 = vmul.f32 1.0, %v438
  %446 = vrot.lane.b32.xlu0 %v320, 16
  %v447 = vpop.permute.xlu0 %446
  %448 = vrot.lane.b32.xlu0 %v321, 16
  %v449 = vpop.permute.xlu0 %448
  %450 = vrot.lane.b32.xlu0 %v322, 16
  %v451 = vpop.permute.xlu0 %450
  %452 = vrot.lane.b32.xlu0 %v323, 16
  %v453 = vpop.permute.xlu0 %452
  %454 = vrot.lane.b32.xlu0 %v324, 16
  %v455 = vpop.permute.xlu0 %454
  %456 = vrot.lane.b32.xlu0 %v325, 16
  %v457 = vpop.permute.xlu0 %456
  %v464 = vmul.f32 %v364, %v447
  %v465 = vmul.f32 %v379, %v449
  %v466 = vmul.f32 %v394, %v451
  %v467 = vmul.f32 %v409, %v453
  %v468 = vmul.f32 %v424, %v455
  %v469 = vmul.f32 %v439, %v457
  %v470 = vsub.f32 1.0, %v364
  %v471 = vsub.f32 1.0, %v379
  %v472 = vsub.f32 1.0, %v394
  %v473 = vsub.f32 1.0, %v409
  %v474 = vsub.f32 1.0, %v424
  %v475 = vsub.f32 1.0, %v439
  %476 = vrot.lane.b32.xlu0 %v254, 16
  %v477 = vpop.permute.xlu0 %476
  %478 = vrot.lane.b32.xlu0 %v255, 16
  %v479 = vpop.permute.xlu0 %478
  %480 = vrot.lane.b32.xlu0 %v256, 16
  %v481 = vpop.permute.xlu0 %480
  %482 = vrot.lane.b32.xlu0 %v257, 16
  %v483 = vpop.permute.xlu0 %482
  %484 = vrot.lane.b32.xlu0 %v258, 16
  %v485 = vpop.permute.xlu0 %484
  %486 = vrot.lane.b32.xlu0 %v259, 16
  %v487 = vpop.permute.xlu0 %486
  %v494 = vmul.f32 %v470, %v477
  %v495 = vmul.f32 %v471, %v479
  %v496 = vmul.f32 %v472, %v481
  %v497 = vmul.f32 %v473, %v483
  %v498 = vmul.f32 %v474, %v485
  %v499 = vmul.f32 %v475, %v487
  %v500 = vadd.f32 %v464, %v494
  %v501 = vadd.f32 %v465, %v495
  %v502 = vadd.f32 %v466, %v496
  %v503 = vadd.f32 %v467, %v497
  %v504 = vadd.f32 %v468, %v498
  %v505 = vadd.f32 %v469, %v499
  %v506 = vld [vmem:[%s8] sm:$0xff]
  %v507 = vld [vmem:[%s8 + $0x8] sm:$0xff]
  %v508 = vld [vmem:[%s9] sm:$0x1]
  %v510 = vperm.slane %v508, 0
  %518 = vrot.lane.b32.xlu0 %v500, 112
  %v519 = vpop.permute.xlu0 %518
  %520 = vrot.lane.b32.xlu0 %v501, 112
  %v521 = vpop.permute.xlu0 %520
  %522 = vrot.lane.b32.xlu0 %v502, 112
  %v523 = vpop.permute.xlu0 %522
  %524 = vrot.lane.b32.xlu0 %v503, 112
  %v525 = vpop.permute.xlu0 %524
  %526 = vrot.lane.b32.xlu0 %v504, 112
  %v527 = vpop.permute.xlu0 %526
  %528 = vrot.lane.b32.xlu0 %v505, 112
  %v529 = vpop.permute.xlu0 %528
  %v530 = vsel %vm266, %v519, 0
  %v532 = vsel %vm266, %v521, 0
  %v534 = vsel %vm266, %v523, 0
  %v536 = vsel %vm266, %v525, 0
  %v538 = vsel %vm266, %v527, 0
  %v540 = vsel %vm266, %v529, 0
  %542 = vmatpush.msra.mxu0 0.0
  %543 = vmatpush.msra.mxu0 0.0
  %544 = vmatpush.msra.mxu0 0.0
  %545 = vmatpush.msra.mxu0 0.0
  %546 = vmatpush.msra.mxu0 0.0
  %547 = vmatpush.msra.mxu0 0.0
  %548 = vmatpush.msra.mxu0 0.0
  %549 = vmatpush.msra.mxu0 0.0
  %550 = vmatpush.msra.mxu0 0.0
  %551 = vmatpush.msra.mxu0 0.0
  %552 = vmatpush.msra.mxu0 0.0
  %553 = vmatpush.msra.mxu0 0.0
  %554 = vmatpush.msra.mxu0 0.0
  %555 = vmatpush.msra.mxu0 0.0
  %556 = vmatpush.msra.mxu0 %v507
  %557 = vmatpush.msra.mxu0 %v506
  %558 = vmatmul.f32.gmra.mxu0 %v530
  %v559 = vpop.f32.mrf.mxu0
  %v560 = vadd.f32 %v510, %v559
  %561 = vmatmul.f32.gmra.mxu0 %v532
  %v562 = vpop.f32.mrf.mxu0
  %v563 = vadd.f32 %v510, %v562
  %564 = vmatmul.f32.gmra.mxu0 %v534
  %v565 = vpop.f32.mrf.mxu0
  %v566 = vadd.f32 %v510, %v565
  %567 = vmatmul.f32.gmra.mxu0 %v536
  %v568 = vpop.f32.mrf.mxu0
  %v569 = vadd.f32 %v510, %v568
  %570 = vmatmul.f32.gmra.mxu0 %v538
  %v571 = vpop.f32.mrf.mxu0
  %v572 = vadd.f32 %v510, %v571
  %573 = vmatmul.f32.gmra.mxu0 %v540
  %v574 = vpop.f32.mrf.mxu0
  %v575 = vadd.f32 %v510, %v574
  %576 = vdwg.mxu0
  %v577 = vmax.f32 %v560, 0.0
  %v578 = vmax.f32 %v563, 0.0
  %v579 = vmax.f32 %v566, 0.0
  %v580 = vmax.f32 %v569, 0.0
  %v581 = vmax.f32 %v572, 0.0
  %v582 = vmax.f32 %v575, 0.0
  %v583 = vxor.u32 %v560, 2147483648
  %v584 = vxor.u32 %v563, 2147483648
  %v585 = vxor.u32 %v566, 2147483648
  %v586 = vxor.u32 %v569, 2147483648
  %v587 = vxor.u32 %v572, 2147483648
  %v588 = vxor.u32 %v575, 2147483648
  %v589 = vmul.f32 %v583, 1.442695
  %v590 = vpow.pop %v589
  %v591 = vmul.f32 %v584, 1.442695
  %v592 = vpow.pop %v591
  %v593 = vmul.f32 %v585, 1.442695
  %v594 = vpow.pop %v593
  %v595 = vmul.f32 %v586, 1.442695
  %v596 = vpow.pop %v595
  %v597 = vmul.f32 %v587, 1.442695
  %v598 = vpow.pop %v597
  %v599 = vmul.f32 %v588, 1.442695
  %v600 = vpow.pop %v599
  %v601 = vadd.f32 %v590, 1.0
  %v602 = vadd.f32 %v592, 1.0
  %v603 = vadd.f32 %v594, 1.0
  %v604 = vadd.f32 %v596, 1.0
  %v605 = vadd.f32 %v598, 1.0
  %v606 = vadd.f32 %v600, 1.0
  %v607 = vrcp.pop %v601
  %v608 = vmul.f32 %v601, %v607
  %v609 = vsub.f32 1.0, %v608
  %v610 = vmul.f32 %v607, %v609
  %v611 = vadd.f32 %v607, %v610
  %vm612 = vweird.f32 %v601
  %vm613 = vweird.f32 %v607
  %vm614 = vmor %vm612, %vm613
  %v615 = vsel %vm614, %v607, %v611
  %v616 = vand.u32 2147483647, %v601
  %vm617 = vcmp.eq.f32.partialorder %v616, 8.507059e+37
  %v618 = vand.u32 %v601, 2147483648
  %v619 = vor.u32 1.1754944e-38, %v618
  %v620 = vsel %vm617, %v619, %v615
  %v621 = vmul.f32 1.0, %v620
  %v622 = vrcp.pop %v602
  %v623 = vmul.f32 %v602, %v622
  %v624 = vsub.f32 1.0, %v623
  %v625 = vmul.f32 %v622, %v624
  %v626 = vadd.f32 %v622, %v625
  %vm627 = vweird.f32 %v602
  %vm628 = vweird.f32 %v622
  %vm629 = vmor %vm627, %vm628
  %v630 = vsel %vm629, %v622, %v626
  %v631 = vand.u32 2147483647, %v602
  %vm632 = vcmp.eq.f32.partialorder %v631, 8.507059e+37
  %v633 = vand.u32 %v602, 2147483648
  %v634 = vor.u32 1.1754944e-38, %v633
  %v635 = vsel %vm632, %v634, %v630
  %v636 = vmul.f32 1.0, %v635
  %v637 = vrcp.pop %v603
  %v638 = vmul.f32 %v603, %v637
  %v639 = vsub.f32 1.0, %v638
  %v640 = vmul.f32 %v637, %v639
  %v641 = vadd.f32 %v637, %v640
  %vm642 = vweird.f32 %v603
  %vm643 = vweird.f32 %v637
  %vm644 = vmor %vm642, %vm643
  %v645 = vsel %vm644, %v637, %v641
  %v646 = vand.u32 2147483647, %v603
  %vm647 = vcmp.eq.f32.partialorder %v646, 8.507059e+37
  %v648 = vand.u32 %v603, 2147483648
  %v649 = vor.u32 1.1754944e-38, %v648
  %v650 = vsel %vm647, %v649, %v645
  %v651 = vmul.f32 1.0, %v650
  %v652 = vrcp.pop %v604
  %v653 = vmul.f32 %v604, %v652
  %v654 = vsub.f32 1.0, %v653
  %v655 = vmul.f32 %v652, %v654
  %v656 = vadd.f32 %v652, %v655
  %vm657 = vweird.f32 %v604
  %vm658 = vweird.f32 %v652
  %vm659 = vmor %vm657, %vm658
  %v660 = vsel %vm659, %v652, %v656
  %v661 = vand.u32 2147483647, %v604
  %vm662 = vcmp.eq.f32.partialorder %v661, 8.507059e+37
  %v663 = vand.u32 %v604, 2147483648
  %v664 = vor.u32 1.1754944e-38, %v663
  %v665 = vsel %vm662, %v664, %v660
  %v666 = vmul.f32 1.0, %v665
  %v667 = vrcp.pop %v605
  %v668 = vmul.f32 %v605, %v667
  %v669 = vsub.f32 1.0, %v668
  %v670 = vmul.f32 %v667, %v669
  %v671 = vadd.f32 %v667, %v670
  %vm672 = vweird.f32 %v605
  %vm673 = vweird.f32 %v667
  %vm674 = vmor %vm672, %vm673
  %v675 = vsel %vm674, %v667, %v671
  %v676 = vand.u32 2147483647, %v605
  %vm677 = vcmp.eq.f32.partialorder %v676, 8.507059e+37
  %v678 = vand.u32 %v605, 2147483648
  %v679 = vor.u32 1.1754944e-38, %v678
  %v680 = vsel %vm677, %v679, %v675
  %v681 = vmul.f32 1.0, %v680
  %v682 = vrcp.pop %v606
  %v683 = vmul.f32 %v606, %v682
  %v684 = vsub.f32 1.0, %v683
  %v685 = vmul.f32 %v682, %v684
  %v686 = vadd.f32 %v682, %v685
  %vm687 = vweird.f32 %v606
  %vm688 = vweird.f32 %v682
  %vm689 = vmor %vm687, %vm688
  %v690 = vsel %vm689, %v682, %v686
  %v691 = vand.u32 2147483647, %v606
  %vm692 = vcmp.eq.f32.partialorder %v691, 8.507059e+37
  %v693 = vand.u32 %v606, 2147483648
  %v694 = vor.u32 1.1754944e-38, %v693
  %v695 = vsel %vm692, %v694, %v690
  %v696 = vmul.f32 1.0, %v695
  %703 = vrot.lane.b32.xlu0 %v577, 16
  %v704 = vpop.permute.xlu0 %703
  %705 = vrot.lane.b32.xlu0 %v578, 16
  %v706 = vpop.permute.xlu0 %705
  %707 = vrot.lane.b32.xlu0 %v579, 16
  %v708 = vpop.permute.xlu0 %707
  %709 = vrot.lane.b32.xlu0 %v580, 16
  %v710 = vpop.permute.xlu0 %709
  %711 = vrot.lane.b32.xlu0 %v581, 16
  %v712 = vpop.permute.xlu0 %711
  %713 = vrot.lane.b32.xlu0 %v582, 16
  %v714 = vpop.permute.xlu0 %713
  %v721 = vmul.f32 %v621, %v704
  %v722 = vmul.f32 %v636, %v706
  %v723 = vmul.f32 %v651, %v708
  %v724 = vmul.f32 %v666, %v710
  %v725 = vmul.f32 %v681, %v712
  %v726 = vmul.f32 %v696, %v714
  %v727 = vsub.f32 1.0, %v621
  %v728 = vsub.f32 1.0, %v636
  %v729 = vsub.f32 1.0, %v651
  %v730 = vsub.f32 1.0, %v666
  %v731 = vsub.f32 1.0, %v681
  %v732 = vsub.f32 1.0, %v696
  %v733 = vmul.f32 %v727, %v500
  %v734 = vmul.f32 %v728, %v501
  %v735 = vmul.f32 %v729, %v502
  %v736 = vmul.f32 %v730, %v503
  %v737 = vmul.f32 %v731, %v504
  %v738 = vmul.f32 %v732, %v505
  %v739 = vadd.f32 %v721, %v733
  %v740 = vadd.f32 %v722, %v734
  %v741 = vadd.f32 %v723, %v735
  %v742 = vadd.f32 %v724, %v736
  %v743 = vadd.f32 %v725, %v737
  %v744 = vadd.f32 %v726, %v738
  %v745 = vld [vmem:[%s10] sm:$0xff]
  %v746 = vld [vmem:[%s10 + $0x8] sm:$0xff]
  %v747 = vld [vmem:[%s11] sm:$0x1]
  %v749 = vperm.slane %v747, 0
  %757 = vrot.lane.b32.xlu0 %v739, 112
  %v758 = vpop.permute.xlu0 %757
  %759 = vrot.lane.b32.xlu0 %v740, 112
  %v760 = vpop.permute.xlu0 %759
  %761 = vrot.lane.b32.xlu0 %v741, 112
  %v762 = vpop.permute.xlu0 %761
  %763 = vrot.lane.b32.xlu0 %v742, 112
  %v764 = vpop.permute.xlu0 %763
  %765 = vrot.lane.b32.xlu0 %v743, 112
  %v766 = vpop.permute.xlu0 %765
  %767 = vrot.lane.b32.xlu0 %v744, 112
  %v768 = vpop.permute.xlu0 %767
  %v769 = vsel %vm266, %v758, 0
  %v771 = vsel %vm266, %v760, 0
  %v773 = vsel %vm266, %v762, 0
  %v775 = vsel %vm266, %v764, 0
  %v777 = vsel %vm266, %v766, 0
  %v779 = vsel %vm266, %v768, 0
  %781 = vmatpush.msra.mxu0 0.0
  %782 = vmatpush.msra.mxu0 0.0
  %783 = vmatpush.msra.mxu0 0.0
  %784 = vmatpush.msra.mxu0 0.0
  %785 = vmatpush.msra.mxu0 0.0
  %786 = vmatpush.msra.mxu0 0.0
  %787 = vmatpush.msra.mxu0 0.0
  %788 = vmatpush.msra.mxu0 0.0
  %789 = vmatpush.msra.mxu0 0.0
  %790 = vmatpush.msra.mxu0 0.0
  %791 = vmatpush.msra.mxu0 0.0
  %792 = vmatpush.msra.mxu0 0.0
  %793 = vmatpush.msra.mxu0 0.0
  %794 = vmatpush.msra.mxu0 0.0
  %795 = vmatpush.msra.mxu0 %v746
  %796 = vmatpush.msra.mxu0 %v745
  %797 = vmatmul.f32.gmra.mxu0 %v769
  %v798 = vpop.f32.mrf.mxu0
  %v799 = vadd.f32 %v749, %v798
  %800 = vmatmul.f32.gmra.mxu0 %v771
  %v801 = vpop.f32.mrf.mxu0
  %v802 = vadd.f32 %v749, %v801
  %803 = vmatmul.f32.gmra.mxu0 %v773
  %v804 = vpop.f32.mrf.mxu0
  %v805 = vadd.f32 %v749, %v804
  %806 = vmatmul.f32.gmra.mxu0 %v775
  %v807 = vpop.f32.mrf.mxu0
  %v808 = vadd.f32 %v749, %v807
  %809 = vmatmul.f32.gmra.mxu0 %v777
  %v810 = vpop.f32.mrf.mxu0
  %v811 = vadd.f32 %v749, %v810
  %812 = vmatmul.f32.gmra.mxu0 %v779
  %v813 = vpop.f32.mrf.mxu0
  %v814 = vadd.f32 %v749, %v813
  %815 = vdwg.mxu0
  %v816 = vld [vmem:[%s12] sm:$0xff]
  %v817 = vld [vmem:[%s1] sm:$0xf]
  %v819 = vrot.slane %v808, 4
  %820 = vrot.lane.b32.xlu0 %v819, 96
  %v821 = vpop.permute.xlu0 %820
  %vm823 = vcmask 1041408
  %v824 = vsel %vm823, %v799, %v821
  %v826 = vsel %vm253, 0.0, 0
  %828 = vmatpush.msra.mxu0 0.0
  %829 = vmatpush.msra.mxu0 0.0
  %830 = vmatpush.msra.mxu0 0.0
  %831 = vmatpush.msra.mxu0 0.0
  %832 = vmatpush.msra.mxu0 0.0
  %833 = vmatpush.msra.mxu0 0.0
  %834 = vmatpush.msra.mxu0 0.0
  %835 = vmatpush.msra.mxu0 0.0
  %836 = vmatpush.msra.mxu0 0.0
  %837 = vmatpush.msra.mxu0 0.0
  %838 = vmatpush.msra.mxu0 0.0
  %839 = vmatpush.msra.mxu0 0.0
  %840 = vmatpush.msra.mxu0 0.0
  %841 = vmatpush.msra.mxu0 0.0
  %842 = vmatpush.msra.mxu0 0.0
  %843 = vmatpush.msra.mxu0 %v816
  %844 = vmatmul.f32.gmra.mxu0 %v826
  %v845 = vpop.f32.mrf.mxu0
  %v846 = vadd.f32 0.0, %v845
  %847 = vdwg.mxu0
  %849 = vrot.lane.b32.xlu0 %v846, 96
  %v850 = vpop.permute.xlu0 %849
  %v852 = vsel %vm823, %v846, %v850
  %v853 = vadd.f32 %v824, %v852
  %v854 = vxor.u32 %v853, 2147483648
  %v855 = vmul.f32 %v854, 1.442695
  %v856 = vpow.pop %v855
  %v857 = vadd.f32 %v856, 1.0
  %v858 = vrcp.pop %v857
  %v859 = vmul.f32 %v857, %v858
  %v860 = vsub.f32 1.0, %v859
  %v861 = vmul.f32 %v858, %v860
  %v862 = vadd.f32 %v858, %v861
  %vm863 = vweird.f32 %v857
  %vm864 = vweird.f32 %v858
  %vm865 = vmor %vm863, %vm864
  %v866 = vsel %vm865, %v858, %v862
  %v867 = vand.u32 2147483647, %v857
  %vm868 = vcmp.eq.f32.partialorder %v867, 8.507059e+37
  %v869 = vand.u32 %v857, 2147483648
  %v870 = vor.u32 1.1754944e-38, %v869
  %v871 = vsel %vm868, %v870, %v866
  %v872 = vmul.f32 1.0, %v871
  %v873 = vtanh.pop %v853
  %v874 = vmul.f32 %v872, 0.0
  %876 = vrot.lane.b32.xlu0 %v873, 104
  %v877 = vpop.permute.xlu0 %876
  %v879 = vmul.f32 %v872, %v877
  %881 = vrot.lane.b32.xlu0 %v879, 8
  %v882 = vpop.permute.xlu0 %881
  %v884 = vadd.f32 %v874, %v882
  %v885 = vtanh.pop %v884
  %887 = vrot.lane.b32.xlu0 %v885, 8
  %v888 = vpop.permute.xlu0 %887
  %v890 = vmul.f32 %v872, %v888
  %892 = vset.pattern.permute.xlu0 0
  %893 = vperm.xlu0 %892, %v817
  %v894 = vpop.permute.xlu0 %893
  %v896 = vmul.f32 %v894, %v890
  %898 = vrot.lane.b32.xlu0 %v896, 112
  %v899 = vpop.permute.xlu0 %898
  %vm901 = vcmask 58368
  %902 = vst.msk [vmem:[#allocation2] sm:$0x3] %vm901, %v899
  %903 = vrot.lane.b32.xlu0 %v896, 120
  %v904 = vpop.permute.xlu0 %903
  %s906 = scalar_lea.vmem [#allocation2], 30
  %vm907 = vcmask 126018
  %908 = vst.msk [vmem:[%s906 - $0x2] sm:$0xc] %vm907, %v904
  %v909 = vadd.f32 %v896, 0.0
  %v910 = vmul.f32 %v894, %v884
  %v911 = vadd.f32 %v910, 0.0
  %v913 = vrot.slane %v799, 2
  %v915 = vrot.slane %v808, 2
  %916 = vrot.lane.b32.xlu0 %v915, 96
  %v917 = vpop.permute.xlu0 %916
  %v919 = vsel %vm823, %v913, %v917
  %921 = vrot.lane.b32.xlu0 %v909, 112
  %v922 = vpop.permute.xlu0 %921
  %v923 = vsel %vm253, %v922, 0
  %925 = vmatpush.msra.mxu0 0.0
  %926 = vmatpush.msra.mxu0 0.0
  %927 = vmatpush.msra.mxu0 0.0
  %928 = vmatpush.msra.mxu0 0.0
  %929 = vmatpush.msra.mxu0 0.0
  %930 = vmatpush.msra.mxu0 0.0
  %931 = vmatpush.msra.mxu0 0.0
  %932 = vmatpush.msra.mxu0 0.0
  %933 = vmatpush.msra.mxu0 0.0
  %934 = vmatpush.msra.mxu0 0.0
  %935 = vmatpush.msra.mxu0 0.0
  %936 = vmatpush.msra.mxu0 0.0
  %937 = vmatpush.msra.mxu0 0.0
  %938 = vmatpush.msra.mxu0 0.0
  %939 = vmatpush.msra.mxu0 0.0
  %940 = vmatpush.msra.mxu0 %v816
  %941 = vmatmul.f32.gmra.mxu0 %v923
  %v942 = vpop.f32.mrf.mxu0
  %v943 = vadd.f32 0.0, %v942
  %944 = vdwg.mxu0
  %946 = vrot.lane.b32.xlu0 %v943, 96
  %v947 = vpop.permute.xlu0 %946
  %v949 = vsel %vm823, %v943, %v947
  %v950 = vadd.f32 %v919, %v949
  %v951 = vxor.u32 %v950, 2147483648
  %v952 = vmul.f32 %v951, 1.442695
  %v953 = vpow.pop %v952
  %v954 = vadd.f32 %v953, 1.0
  %v955 = vrcp.pop %v954
  %v956 = vmul.f32 %v954, %v955
  %v957 = vsub.f32 1.0, %v956
  %v958 = vmul.f32 %v955, %v957
  %v959 = vadd.f32 %v955, %v958
  %vm960 = vweird.f32 %v954
  %vm961 = vweird.f32 %v955
  %vm962 = vmor %vm960, %vm961
  %v963 = vsel %vm962, %v955, %v959
  %v964 = vand.u32 2147483647, %v954
  %vm965 = vcmp.eq.f32.partialorder %v964, 8.507059e+37
  %v966 = vand.u32 %v954, 2147483648
  %v967 = vor.u32 1.1754944e-38, %v966
  %v968 = vsel %vm965, %v967, %v963
  %v969 = vmul.f32 1.0, %v968
  %v970 = vtanh.pop %v950
  %v971 = vmul.f32 %v969, %v911
  %973 = vrot.lane.b32.xlu0 %v970, 104
  %v974 = vpop.permute.xlu0 %973
  %v976 = vmul.f32 %v969, %v974
  %978 = vrot.lane.b32.xlu0 %v976, 8
  %v979 = vpop.permute.xlu0 %978
  %v981 = vadd.f32 %v971, %v979
  %v982 = vtanh.pop %v981
  %984 = vrot.lane.b32.xlu0 %v982, 8
  %v985 = vpop.permute.xlu0 %984
  %v987 = vmul.f32 %v969, %v985
  %988 = vset.pattern.permute.xlu0 1
  %989 = vperm.xlu0 %988, %v817
  %v990 = vpop.permute.xlu0 %989
  %v992 = vmul.f32 %v990, %v987
  %994 = vrot.lane.b32.xlu0 %v992, 112
  %v995 = vpop.permute.xlu0 %994
  %s997 = scalar_lea.vmem [#allocation2], 2
  %998 = vst.msk [vmem:[%s997] sm:$0x3] %vm901, %v995
  %999 = vrot.lane.b32.xlu0 %v992, 120
  %v1000 = vpop.permute.xlu0 %999
  %s1002 = scalar_lea.vmem [#allocation2], 28
  %1003 = vst.msk [vmem:[%s1002 - $0x2] sm:$0xc] %vm907, %v1000
  %v1004 = vsub.f32 %v987, %v909
  %v1005 = vmul.f32 %v990, %v1004
  %v1006 = vadd.f32 %v909, %v1005
  %v1007 = vsub.f32 %v981, %v911
  %v1008 = vmul.f32 %v990, %v1007
  %v1009 = vadd.f32 %v911, %v1008
  %v1010 = vrot.slane %v799, 4
  %1012 = vrot.lane.b32.xlu0 %v808, 96
  %v1013 = vpop.permute.xlu0 %1012
  %v1015 = vsel %vm823, %v1010, %v1013
  %1017 = vrot.lane.b32.xlu0 %v1006, 112
  %v1018 = vpop.permute.xlu0 %1017
  %v1019 = vsel %vm253, %v1018, 0
  %1021 = vmatpush.msra.mxu0 0.0
  %1022 = vmatpush.msra.mxu0 0.0
  %1023 = vmatpush.msra.mxu0 0.0
  %1024 = vmatpush.msra.mxu0 0.0
  %1025 = vmatpush.msra.mxu0 0.0
  %1026 = vmatpush.msra.mxu0 0.0
  %1027 = vmatpush.msra.mxu0 0.0
  %1028 = vmatpush.msra.mxu0 0.0
  %1029 = vmatpush.msra.mxu0 0.0
  %1030 = vmatpush.msra.mxu0 0.0
  %1031 = vmatpush.msra.mxu0 0.0
  %1032 = vmatpush.msra.mxu0 0.0
  %1033 = vmatpush.msra.mxu0 0.0
  %1034 = vmatpush.msra.mxu0 0.0
  %1035 = vmatpush.msra.mxu0 0.0
  %1036 = vmatpush.msra.mxu0 %v816
  %1037 = vmatmul.f32.gmra.mxu0 %v1019
  %v1038 = vpop.f32.mrf.mxu0
  %v1039 = vadd.f32 0.0, %v1038
  %1040 = vdwg.mxu0
  %1042 = vrot.lane.b32.xlu0 %v1039, 96
  %v1043 = vpop.permute.xlu0 %1042
  %v1045 = vsel %vm823, %v1039, %v1043
  %v1046 = vadd.f32 %v1015, %v1045
  %v1047 = vxor.u32 %v1046, 2147483648
  %v1048 = vmul.f32 %v1047, 1.442695
  %v1049 = vpow.pop %v1048
  %v1050 = vadd.f32 %v1049, 1.0
  %v1051 = vrcp.pop %v1050
  %v1052 = vmul.f32 %v1050, %v1051
  %v1053 = vsub.f32 1.0, %v1052
  %v1054 = vmul.f32 %v1051, %v1053
  %v1055 = vadd.f32 %v1051, %v1054
  %vm1056 = vweird.f32 %v1050
  %vm1057 = vweird.f32 %v1051
  %vm1058 = vmor %vm1056, %vm1057
  %v1059 = vsel %vm1058, %v1051, %v1055
  %v1060 = vand.u32 2147483647, %v1050
  %vm1061 = vcmp.eq.f32.partialorder %v1060, 8.507059e+37
  %v1062 = vand.u32 %v1050, 2147483648
  %v1063 = vor.u32 1.1754944e-38, %v1062
  %v1064 = vsel %vm1061, %v1063, %v1059
  %v1065 = vmul.f32 1.0, %v1064
  %v1066 = vtanh.pop %v1046
  %v1067 = vmul.f32 %v1065, %v1009
  %1069 = vrot.lane.b32.xlu0 %v1066, 104
  %v1070 = vpop.permute.xlu0 %1069
  %v1072 = vmul.f32 %v1065, %v1070
  %1074 = vrot.lane.b32.xlu0 %v1072, 8
  %v1075 = vpop.permute.xlu0 %1074
  %v1077 = vadd.f32 %v1067, %v1075
  %v1078 = vtanh.pop %v1077
  %1080 = vrot.lane.b32.xlu0 %v1078, 8
  %v1081 = vpop.permute.xlu0 %1080
  %v1083 = vmul.f32 %v1065, %v1081
  %1084 = vset.pattern.permute.xlu0 2
  %1085 = vperm.xlu0 %1084, %v817
  %v1086 = vpop.permute.xlu0 %1085
  %v1088 = vmul.f32 %v1086, %v1083
  %1090 = vrot.lane.b32.xlu0 %v1088, 112
  %v1091 = vpop.permute.xlu0 %1090
  %s1093 = scalar_lea.vmem [#allocation2], 4
  %1094 = vst.msk [vmem:[%s1093] sm:$0x3] %vm901, %v1091
  %1095 = vrot.lane.b32.xlu0 %v1088, 120
  %v1096 = vpop.permute.xlu0 %1095
  %s1098 = scalar_lea.vmem [#allocation2], 26
  %1099 = vst.msk [vmem:[%s1098 - $0x2] sm:$0xc] %vm907, %v1096
  %v1100 = vsub.f32 %v1083, %v1006
  %v1101 = vmul.f32 %v1086, %v1100
  %v1102 = vadd.f32 %v1006, %v1101
  %v1103 = vsub.f32 %v1077, %v1009
  %v1104 = vmul.f32 %v1086, %v1103
  %v1105 = vadd.f32 %v1009, %v1104
  %v1106 = vrot.slane %v799, 6
  %v1108 = vrot.slane %v808, 6
  %1109 = vrot.lane.b32.xlu0 %v1108, 96
  %v1110 = vpop.permute.xlu0 %1109
  %v1112 = vsel %vm823, %v1106, %v1110
  %1114 = vrot.lane.b32.xlu0 %v1102, 112
  %v1115 = vpop.permute.xlu0 %1114
  %v1116 = vsel %vm253, %v1115, 0
  %1118 = vmatpush.msra.mxu0 0.0
  %1119 = vmatpush.msra.mxu0 0.0
  %1120 = vmatpush.msra.mxu0 0.0
  %1121 = vmatpush.msra.mxu0 0.0
  %1122 = vmatpush.msra.mxu0 0.0
  %1123 = vmatpush.msra.mxu0 0.0
  %1124 = vmatpush.msra.mxu0 0.0
  %1125 = vmatpush.msra.mxu0 0.0
  %1126 = vmatpush.msra.mxu0 0.0
  %1127 = vmatpush.msra.mxu0 0.0
  %1128 = vmatpush.msra.mxu0 0.0
  %1129 = vmatpush.msra.mxu0 0.0
  %1130 = vmatpush.msra.mxu0 0.0
  %1131 = vmatpush.msra.mxu0 0.0
  %1132 = vmatpush.msra.mxu0 0.0
  %1133 = vmatpush.msra.mxu0 %v816
  %1134 = vmatmul.f32.gmra.mxu0 %v1116
  %v1135 = vpop.f32.mrf.mxu0
  %v1136 = vadd.f32 0.0, %v1135
  %1137 = vdwg.mxu0
  %1139 = vrot.lane.b32.xlu0 %v1136, 96
  %v1140 = vpop.permute.xlu0 %1139
  %v1142 = vsel %vm823, %v1136, %v1140
  %v1143 = vadd.f32 %v1112, %v1142
  %v1144 = vxor.u32 %v1143, 2147483648
  %v1145 = vmul.f32 %v1144, 1.442695
  %v1146 = vpow.pop %v1145
  %v1147 = vadd.f32 %v1146, 1.0
  %v1148 = vrcp.pop %v1147
  %v1149 = vmul.f32 %v1147, %v1148
  %v1150 = vsub.f32 1.0, %v1149
  %v1151 = vmul.f32 %v1148, %v1150
  %v1152 = vadd.f32 %v1148, %v1151
  %vm1153 = vweird.f32 %v1147
  %vm1154 = vweird.f32 %v1148
  %vm1155 = vmor %vm1153, %vm1154
  %v1156 = vsel %vm1155, %v1148, %v1152
  %v1157 = vand.u32 2147483647, %v1147
  %vm1158 = vcmp.eq.f32.partialorder %v1157, 8.507059e+37
  %v1159 = vand.u32 %v1147, 2147483648
  %v1160 = vor.u32 1.1754944e-38, %v1159
  %v1161 = vsel %vm1158, %v1160, %v1156
  %v1162 = vmul.f32 1.0, %v1161
  %v1163 = vtanh.pop %v1143
  %v1164 = vmul.f32 %v1162, %v1105
  %1166 = vrot.lane.b32.xlu0 %v1163, 104
  %v1167 = vpop.permute.xlu0 %1166
  %v1169 = vmul.f32 %v1162, %v1167
  %1171 = vrot.lane.b32.xlu0 %v1169, 8
  %v1172 = vpop.permute.xlu0 %1171
  %v1174 = vadd.f32 %v1164, %v1172
  %v1175 = vtanh.pop %v1174
  %1177 = vrot.lane.b32.xlu0 %v1175, 8
  %v1178 = vpop.permute.xlu0 %1177
  %v1180 = vmul.f32 %v1162, %v1178
  %1181 = vset.pattern.permute.xlu0 3
  %1182 = vperm.xlu0 %1181, %v817
  %v1183 = vpop.permute.xlu0 %1182
  %v1185 = vmul.f32 %v1183, %v1180
  %1187 = vrot.lane.b32.xlu0 %v1185, 112
  %v1188 = vpop.permute.xlu0 %1187
  %s1190 = scalar_lea.vmem [#allocation2], 6
  %1191 = vst.msk [vmem:[%s1190] sm:$0x3] %vm901, %v1188
  %1192 = vrot.lane.b32.xlu0 %v1185, 120
  %v1193 = vpop.permute.xlu0 %1192
  %s1195 = scalar_lea.vmem [#allocation2], 24
  %1196 = vst.msk [vmem:[%s1195 - $0x2] sm:$0xc] %vm907, %v1193
  %v1197 = vsub.f32 %v1180, %v1102
  %v1198 = vmul.f32 %v1183, %v1197
  %v1199 = vadd.f32 %v1102, %v1198
  %v1200 = vsub.f32 %v1174, %v1105
  %v1201 = vmul.f32 %v1183, %v1200
  %v1202 = vadd.f32 %v1105, %v1201
  %v1204 = vrot.slane %v805, 4
  %1205 = vrot.lane.b32.xlu0 %v1204, 96
  %v1206 = vpop.permute.xlu0 %1205
  %v1208 = vsel %vm823, %v802, %v1206
  %1210 = vrot.lane.b32.xlu0 %v1199, 112
  %v1211 = vpop.permute.xlu0 %1210
  %v1212 = vsel %vm253, %v1211, 0
  %1214 = vmatpush.msra.mxu0 0.0
  %1215 = vmatpush.msra.mxu0 0.0
  %1216 = vmatpush.msra.mxu0 0.0
  %1217 = vmatpush.msra.mxu0 0.0
  %1218 = vmatpush.msra.mxu0 0.0
  %1219 = vmatpush.msra.mxu0 0.0
  %1220 = vmatpush.msra.mxu0 0.0
  %1221 = vmatpush.msra.mxu0 0.0
  %1222 = vmatpush.msra.mxu0 0.0
  %1223 = vmatpush.msra.mxu0 0.0
  %1224 = vmatpush.msra.mxu0 0.0
  %1225 = vmatpush.msra.mxu0 0.0
  %1226 = vmatpush.msra.mxu0 0.0
  %1227 = vmatpush.msra.mxu0 0.0
  %1228 = vmatpush.msra.mxu0 0.0
  %1229 = vmatpush.msra.mxu0 %v816
  %1230 = vmatmul.f32.gmra.mxu0 %v1212
  %v1231 = vpop.f32.mrf.mxu0
  %v1232 = vadd.f32 0.0, %v1231
  %1233 = vdwg.mxu0
  %1235 = vrot.lane.b32.xlu0 %v1232, 96
  %v1236 = vpop.permute.xlu0 %1235
  %v1238 = vsel %vm823, %v1232, %v1236
  %v1239 = vadd.f32 %v1208, %v1238
  %v1240 = vxor.u32 %v1239, 2147483648
  %v1241 = vmul.f32 %v1240, 1.442695
  %v1242 = vpow.pop %v1241
  %v1243 = vadd.f32 %v1242, 1.0
  %v1244 = vrcp.pop %v1243
  %v1245 = vmul.f32 %v1243, %v1244
  %v1246 = vsub.f32 1.0, %v1245
  %v1247 = vmul.f32 %v1244, %v1246
  %v1248 = vadd.f32 %v1244, %v1247
  %vm1249 = vweird.f32 %v1243
  %vm1250 = vweird.f32 %v1244
  %vm1251 = vmor %vm1249, %vm1250
  %v1252 = vsel %vm1251, %v1244, %v1248
  %v1253 = vand.u32 2147483647, %v1243
  %vm1254 = vcmp.eq.f32.partialorder %v1253, 8.507059e+37
  %v1255 = vand.u32 %v1243, 2147483648
  %v1256 = vor.u32 1.1754944e-38, %v1255
  %v1257 = vsel %vm1254, %v1256, %v1252
  %v1258 = vmul.f32 1.0, %v1257
  %v1259 = vtanh.pop %v1239
  %v1260 = vmul.f32 %v1258, %v1202
  %1262 = vrot.lane.b32.xlu0 %v1259, 104
  %v1263 = vpop.permute.xlu0 %1262
  %v1265 = vmul.f32 %v1258, %v1263
  %1267 = vrot.lane.b32.xlu0 %v1265, 8
  %v1268 = vpop.permute.xlu0 %1267
  %v1270 = vadd.f32 %v1260, %v1268
  %v1271 = vtanh.pop %v1270
  %1273 = vrot.lane.b32.xlu0 %v1271, 8
  %v1274 = vpop.permute.xlu0 %1273
  %v1276 = vmul.f32 %v1258, %v1274
  %1277 = vset.pattern.permute.xlu0 4
  %1278 = vperm.xlu0 %1277, %v817
  %v1279 = vpop.permute.xlu0 %1278
  %v1281 = vmul.f32 %v1279, %v1276
  %1283 = vrot.lane.b32.xlu0 %v1281, 112
  %v1284 = vpop.permute.xlu0 %1283
  %s1286 = scalar_lea.vmem [#allocation2], 8
  %1287 = vst.msk [vmem:[%s1286] sm:$0x3] %vm901, %v1284
  %1288 = vrot.lane.b32.xlu0 %v1281, 120
  %v1289 = vpop.permute.xlu0 %1288
  %s1291 = scalar_lea.vmem [#allocation2], 22
  %1292 = vst.msk [vmem:[%s1291 - $0x2] sm:$0xc] %vm907, %v1289
  %v1293 = vsub.f32 %v1276, %v1199
  %v1294 = vmul.f32 %v1279, %v1293
  %v1295 = vadd.f32 %v1199, %v1294
  %v1296 = vsub.f32 %v1270, %v1202
  %v1297 = vmul.f32 %v1279, %v1296
  %v1298 = vadd.f32 %v1202, %v1297
  %v1300 = vrot.slane %v802, 2
  %v1302 = vrot.slane %v805, 2
  %1303 = vrot.lane.b32.xlu0 %v1302, 96
  %v1304 = vpop.permute.xlu0 %1303
  %v1306 = vsel %vm823, %v1300, %v1304
  %1308 = vrot.lane.b32.xlu0 %v1295, 112
  %v1309 = vpop.permute.xlu0 %1308
  %v1310 = vsel %vm253, %v1309, 0
  %1312 = vmatpush.msra.mxu0 0.0
  %1313 = vmatpush.msra.mxu0 0.0
  %1314 = vmatpush.msra.mxu0 0.0
  %1315 = vmatpush.msra.mxu0 0.0
  %1316 = vmatpush.msra.mxu0 0.0
  %1317 = vmatpush.msra.mxu0 0.0
  %1318 = vmatpush.msra.mxu0 0.0
  %1319 = vmatpush.msra.mxu0 0.0
  %1320 = vmatpush.msra.mxu0 0.0
  %1321 = vmatpush.msra.mxu0 0.0
  %1322 = vmatpush.msra.mxu0 0.0
  %1323 = vmatpush.msra.mxu0 0.0
  %1324 = vmatpush.msra.mxu0 0.0
  %1325 = vmatpush.msra.mxu0 0.0
  %1326 = vmatpush.msra.mxu0 0.0
  %1327 = vmatpush.msra.mxu0 %v816
  %1328 = vmatmul.f32.gmra.mxu0 %v1310
  %v1329 = vpop.f32.mrf.mxu0
  %v1330 = vadd.f32 0.0, %v1329
  %1331 = vdwg.mxu0
  %1333 = vrot.lane.b32.xlu0 %v1330, 96
  %v1334 = vpop.permute.xlu0 %1333
  %v1336 = vsel %vm823, %v1330, %v1334
  %v1337 = vadd.f32 %v1306, %v1336
  %v1338 = vxor.u32 %v1337, 2147483648
  %v1339 = vmul.f32 %v1338, 1.442695
  %v1340 = vpow.pop %v1339
  %v1341 = vadd.f32 %v1340, 1.0
  %v1342 = vrcp.pop %v1341
  %v1343 = vmul.f32 %v1341, %v1342
  %v1344 = vsub.f32 1.0, %v1343
  %v1345 = vmul.f32 %v1342, %v1344
  %v1346 = vadd.f32 %v1342, %v1345
  %vm1347 = vweird.f32 %v1341
  %vm1348 = vweird.f32 %v1342
  %vm1349 = vmor %vm1347, %vm1348
  %v1350 = vsel %vm1349, %v1342, %v1346
  %v1351 = vand.u32 2147483647, %v1341
  %vm1352 = vcmp.eq.f32.partialorder %v1351, 8.507059e+37
  %v1353 = vand.u32 %v1341, 2147483648
  %v1354 = vor.u32 1.1754944e-38, %v1353
  %v1355 = vsel %vm1352, %v1354, %v1350
  %v1356 = vmul.f32 1.0, %v1355
  %v1357 = vtanh.pop %v1337
  %v1358 = vmul.f32 %v1356, %v1298
  %1360 = vrot.lane.b32.xlu0 %v1357, 104
  %v1361 = vpop.permute.xlu0 %1360
  %v1363 = vmul.f32 %v1356, %v1361
  %1365 = vrot.lane.b32.xlu0 %v1363, 8
  %v1366 = vpop.permute.xlu0 %1365
  %v1368 = vadd.f32 %v1358, %v1366
  %v1369 = vtanh.pop %v1368
  %1371 = vrot.lane.b32.xlu0 %v1369, 8
  %v1372 = vpop.permute.xlu0 %1371
  %v1374 = vmul.f32 %v1356, %v1372
  %1375 = vset.pattern.permute.xlu0 5
  %1376 = vperm.xlu0 %1375, %v817
  %v1377 = vpop.permute.xlu0 %1376
  %v1379 = vmul.f32 %v1377, %v1374
  %1381 = vrot.lane.b32.xlu0 %v1379, 112
  %v1382 = vpop.permute.xlu0 %1381
  %s1384 = scalar_lea.vmem [#allocation2], 10
  %1385 = vst.msk [vmem:[%s1384] sm:$0x3] %vm901, %v1382
  %1386 = vrot.lane.b32.xlu0 %v1379, 120
  %v1387 = vpop.permute.xlu0 %1386
  %s1389 = scalar_lea.vmem [#allocation2], 20
  %1390 = vst.msk [vmem:[%s1389 - $0x2] sm:$0xc] %vm907, %v1387
  %v1391 = vsub.f32 %v1374, %v1295
  %v1392 = vmul.f32 %v1377, %v1391
  %v1393 = vadd.f32 %v1295, %v1392
  %v1394 = vsub.f32 %v1368, %v1298
  %v1395 = vmul.f32 %v1377, %v1394
  %v1396 = vadd.f32 %v1298, %v1395
  %v1397 = vrot.slane %v802, 4
  %1399 = vrot.lane.b32.xlu0 %v805, 96
  %v1400 = vpop.permute.xlu0 %1399
  %v1402 = vsel %vm823, %v1397, %v1400
  %1404 = vrot.lane.b32.xlu0 %v1393, 112
  %v1405 = vpop.permute.xlu0 %1404
  %v1406 = vsel %vm253, %v1405, 0
  %1408 = vmatpush.msra.mxu0 0.0
  %1409 = vmatpush.msra.mxu0 0.0
  %1410 = vmatpush.msra.mxu0 0.0
  %1411 = vmatpush.msra.mxu0 0.0
  %1412 = vmatpush.msra.mxu0 0.0
  %1413 = vmatpush.msra.mxu0 0.0
  %1414 = vmatpush.msra.mxu0 0.0
  %1415 = vmatpush.msra.mxu0 0.0
  %1416 = vmatpush.msra.mxu0 0.0
  %1417 = vmatpush.msra.mxu0 0.0
  %1418 = vmatpush.msra.mxu0 0.0
  %1419 = vmatpush.msra.mxu0 0.0
  %1420 = vmatpush.msra.mxu0 0.0
  %1421 = vmatpush.msra.mxu0 0.0
  %1422 = vmatpush.msra.mxu0 0.0
  %1423 = vmatpush.msra.mxu0 %v816
  %1424 = vmatmul.f32.gmra.mxu0 %v1406
  %v1425 = vpop.f32.mrf.mxu0
  %v1426 = vadd.f32 0.0, %v1425
  %1427 = vdwg.mxu0
  %1429 = vrot.lane.b32.xlu0 %v1426, 96
  %v1430 = vpop.permute.xlu0 %1429
  %v1432 = vsel %vm823, %v1426, %v1430
  %v1433 = vadd.f32 %v1402, %v1432
  %v1434 = vxor.u32 %v1433, 2147483648
  %v1435 = vmul.f32 %v1434, 1.442695
  %v1436 = vpow.pop %v1435
  %v1437 = vadd.f32 %v1436, 1.0
  %v1438 = vrcp.pop %v1437
  %v1439 = vmul.f32 %v1437, %v1438
  %v1440 = vsub.f32 1.0, %v1439
  %v1441 = vmul.f32 %v1438, %v1440
  %v1442 = vadd.f32 %v1438, %v1441
  %vm1443 = vweird.f32 %v1437
  %vm1444 = vweird.f32 %v1438
  %vm1445 = vmor %vm1443, %vm1444
  %v1446 = vsel %vm1445, %v1438, %v1442
  %v1447 = vand.u32 2147483647, %v1437
  %vm1448 = vcmp.eq.f32.partialorder %v1447, 8.507059e+37
  %v1449 = vand.u32 %v1437, 2147483648
  %v1450 = vor.u32 1.1754944e-38, %v1449
  %v1451 = vsel %vm1448, %v1450, %v1446
  %v1452 = vmul.f32 1.0, %v1451
  %v1453 = vtanh.pop %v1433
  %v1454 = vmul.f32 %v1452, %v1396
  %1456 = vrot.lane.b32.xlu0 %v1453, 104
  %v1457 = vpop.permute.xlu0 %1456
  %v1459 = vmul.f32 %v1452, %v1457
  %1461 = vrot.lane.b32.xlu0 %v1459, 8
  %v1462 = vpop.permute.xlu0 %1461
  %v1464 = vadd.f32 %v1454, %v1462
  %v1465 = vtanh.pop %v1464
  %1467 = vrot.lane.b32.xlu0 %v1465, 8
  %v1468 = vpop.permute.xlu0 %1467
  %v1470 = vmul.f32 %v1452, %v1468
  %1471 = vset.pattern.permute.xlu0 6
  %1472 = vperm.xlu0 %1471, %v817
  %v1473 = vpop.permute.xlu0 %1472
  %v1475 = vmul.f32 %v1473, %v1470
  %1477 = vrot.lane.b32.xlu0 %v1475, 112
  %v1478 = vpop.permute.xlu0 %1477
  %s1480 = scalar_lea.vmem [#allocation2], 12
  %1481 = vst.msk [vmem:[%s1480] sm:$0x3] %vm901, %v1478
  %1482 = vrot.lane.b32.xlu0 %v1475, 120
  %v1483 = vpop.permute.xlu0 %1482
  %s1485 = scalar_lea.vmem [#allocation2], 18
  %1486 = vst.msk [vmem:[%s1485 - $0x2] sm:$0xc] %vm907, %v1483
  %v1487 = vsub.f32 %v1470, %v1393
  %v1488 = vmul.f32 %v1473, %v1487
  %v1489 = vadd.f32 %v1393, %v1488
  %v1490 = vsub.f32 %v1464, %v1396
  %v1491 = vmul.f32 %v1473, %v1490
  %v1492 = vadd.f32 %v1396, %v1491
  %v1493 = vrot.slane %v802, 6
  %v1495 = vrot.slane %v805, 6
  %1496 = vrot.lane.b32.xlu0 %v1495, 96
  %v1497 = vpop.permute.xlu0 %1496
  %v1499 = vsel %vm823, %v1493, %v1497
  %1501 = vrot.lane.b32.xlu0 %v1489, 112
  %v1502 = vpop.permute.xlu0 %1501
  %v1503 = vsel %vm253, %v1502, 0
  %1505 = vmatpush.msra.mxu0 0.0
  %1506 = vmatpush.msra.mxu0 0.0
  %1507 = vmatpush.msra.mxu0 0.0
  %1508 = vmatpush.msra.mxu0 0.0
  %1509 = vmatpush.msra.mxu0 0.0
  %1510 = vmatpush.msra.mxu0 0.0
  %1511 = vmatpush.msra.mxu0 0.0
  %1512 = vmatpush.msra.mxu0 0.0
  %1513 = vmatpush.msra.mxu0 0.0
  %1514 = vmatpush.msra.mxu0 0.0
  %1515 = vmatpush.msra.mxu0 0.0
  %1516 = vmatpush.msra.mxu0 0.0
  %1517 = vmatpush.msra.mxu0 0.0
  %1518 = vmatpush.msra.mxu0 0.0
  %1519 = vmatpush.msra.mxu0 0.0
  %1520 = vmatpush.msra.mxu0 %v816
  %1521 = vmatmul.f32.gmra.mxu0 %v1503
  %v1522 = vpop.f32.mrf.mxu0
  %v1523 = vadd.f32 0.0, %v1522
  %1524 = vdwg.mxu0
  %1526 = vrot.lane.b32.xlu0 %v1523, 96
  %v1527 = vpop.permute.xlu0 %1526
  %v1529 = vsel %vm823, %v1523, %v1527
  %v1530 = vadd.f32 %v1499, %v1529
  %v1531 = vxor.u32 %v1530, 2147483648
  %v1532 = vmul.f32 %v1531, 1.442695
  %v1533 = vpow.pop %v1532
  %v1534 = vadd.f32 %v1533, 1.0
  %v1535 = vrcp.pop %v1534
  %v1536 = vmul.f32 %v1534, %v1535
  %v1537 = vsub.f32 1.0, %v1536
  %v1538 = vmul.f32 %v1535, %v1537
  %v1539 = vadd.f32 %v1535, %v1538
  %vm1540 = vweird.f32 %v1534
  %vm1541 = vweird.f32 %v1535
  %vm1542 = vmor %vm1540, %vm1541
  %v1543 = vsel %vm1542, %v1535, %v1539
  %v1544 = vand.u32 2147483647, %v1534
  %vm1545 = vcmp.eq.f32.partialorder %v1544, 8.507059e+37
  %v1546 = vand.u32 %v1534, 2147483648
  %v1547 = vor.u32 1.1754944e-38, %v1546
  %v1548 = vsel %vm1545, %v1547, %v1543
  %v1549 = vmul.f32 1.0, %v1548
  %v1550 = vtanh.pop %v1530
  %v1551 = vmul.f32 %v1549, %v1492
  %1553 = vrot.lane.b32.xlu0 %v1550, 104
  %v1554 = vpop.permute.xlu0 %1553
  %v1556 = vmul.f32 %v1549, %v1554
  %1558 = vrot.lane.b32.xlu0 %v1556, 8
  %v1559 = vpop.permute.xlu0 %1558
  %v1561 = vadd.f32 %v1551, %v1559
  %v1562 = vtanh.pop %v1561
  %1564 = vrot.lane.b32.xlu0 %v1562, 8
  %v1565 = vpop.permute.xlu0 %1564
  %v1567 = vmul.f32 %v1549, %v1565
  %1568 = vset.pattern.permute.xlu0 7
  %1569 = vperm.xlu0 %1568, %v817
  %v1570 = vpop.permute.xlu0 %1569
  %v1572 = vmul.f32 %v1570, %v1567
  %1574 = vrot.lane.b32.xlu0 %v1572, 112
  %v1575 = vpop.permute.xlu0 %1574
  %s1577 = scalar_lea.vmem [#allocation2], 14
  %1578 = vst.msk [vmem:[%s1577] sm:$0x3] %vm901, %v1575
  %1579 = vrot.lane.b32.xlu0 %v1572, 120
  %v1580 = vpop.permute.xlu0 %1579
  %s1582 = scalar_lea.vmem [#allocation2], 16
  %1583 = vst.msk [vmem:[%s1582 - $0x2] sm:$0xc] %vm907, %v1580
  %v1584 = vsub.f32 %v1567, %v1489
  %v1585 = vmul.f32 %v1570, %v1584
  %v1586 = vadd.f32 %v1489, %v1585
  %v1587 = vsub.f32 %v1561, %v1492
  %v1588 = vmul.f32 %v1570, %v1587
  %v1589 = vadd.f32 %v1492, %v1588
  %1590 = vrot.lane.b32.xlu0 %v1397, 96
  %v1591 = vpop.permute.xlu0 %1590
  %v1593 = vsel %vm823, %v805, %v1591
  %1595 = vrot.lane.b32.xlu0 %v1586, 112
  %v1596 = vpop.permute.xlu0 %1595
  %v1597 = vsel %vm253, %v1596, 0
  %1599 = vmatpush.msra.mxu0 0.0
  %1600 = vmatpush.msra.mxu0 0.0
  %1601 = vmatpush.msra.mxu0 0.0
  %1602 = vmatpush.msra.mxu0 0.0
  %1603 = vmatpush.msra.mxu0 0.0
  %1604 = vmatpush.msra.mxu0 0.0
  %1605 = vmatpush.msra.mxu0 0.0
  %1606 = vmatpush.msra.mxu0 0.0
  %1607 = vmatpush.msra.mxu0 0.0
  %1608 = vmatpush.msra.mxu0 0.0
  %1609 = vmatpush.msra.mxu0 0.0
  %1610 = vmatpush.msra.mxu0 0.0
  %1611 = vmatpush.msra.mxu0 0.0
  %1612 = vmatpush.msra.mxu0 0.0
  %1613 = vmatpush.msra.mxu0 0.0
  %1614 = vmatpush.msra.mxu0 %v816
  %1615 = vmatmul.f32.gmra.mxu0 %v1597
  %v1616 = vpop.f32.mrf.mxu0
  %v1617 = vadd.f32 0.0, %v1616
  %1618 = vdwg.mxu0
  %1620 = vrot.lane.b32.xlu0 %v1617, 96
  %v1621 = vpop.permute.xlu0 %1620
  %v1623 = vsel %vm823, %v1617, %v1621
  %v1624 = vadd.f32 %v1593, %v1623
  %v1625 = vxor.u32 %v1624, 2147483648
  %v1626 = vmul.f32 %v1625, 1.442695
  %v1627 = vpow.pop %v1626
  %v1628 = vadd.f32 %v1627, 1.0
  %v1629 = vrcp.pop %v1628
  %v1630 = vmul.f32 %v1628, %v1629
  %v1631 = vsub.f32 1.0, %v1630
  %v1632 = vmul.f32 %v1629, %v1631
  %v1633 = vadd.f32 %v1629, %v1632
  %vm1634 = vweird.f32 %v1628
  %vm1635 = vweird.f32 %v1629
  %vm1636 = vmor %vm1634, %vm1635
  %v1637 = vsel %vm1636, %v1629, %v1633
  %v1638 = vand.u32 2147483647, %v1628
  %vm1639 = vcmp.eq.f32.partialorder %v1638, 8.507059e+37
  %v1640 = vand.u32 %v1628, 2147483648
  %v1641 = vor.u32 1.1754944e-38, %v1640
  %v1642 = vsel %vm1639, %v1641, %v1637
  %v1643 = vmul.f32 1.0, %v1642
  %v1644 = vtanh.pop %v1624
  %v1645 = vmul.f32 %v1643, %v1589
  %1647 = vrot.lane.b32.xlu0 %v1644, 104
  %v1648 = vpop.permute.xlu0 %1647
  %v1650 = vmul.f32 %v1643, %v1648
  %1652 = vrot.lane.b32.xlu0 %v1650, 8
  %v1653 = vpop.permute.xlu0 %1652
  %v1655 = vadd.f32 %v1645, %v1653
  %v1656 = vtanh.pop %v1655
  %1658 = vrot.lane.b32.xlu0 %v1656, 8
  %v1659 = vpop.permute.xlu0 %1658
  %v1661 = vmul.f32 %v1643, %v1659
  %1662 = vset.pattern.permute.xlu0 8
  %1663 = vperm.xlu0 %1662, %v817
  %v1664 = vpop.permute.xlu0 %1663
  %v1666 = vmul.f32 %v1664, %v1661
  %1668 = vrot.lane.b32.xlu0 %v1666, 112
  %v1669 = vpop.permute.xlu0 %1668
  %1671 = vst.msk [vmem:[%s1582] sm:$0x3] %vm901, %v1669
  %1672 = vrot.lane.b32.xlu0 %v1666, 120
  %v1673 = vpop.permute.xlu0 %1672
  %1675 = vst.msk [vmem:[%s1577 - $0x2] sm:$0xc] %vm907, %v1673
  %v1676 = vsub.f32 %v1661, %v1586
  %v1677 = vmul.f32 %v1664, %v1676
  %v1678 = vadd.f32 %v1586, %v1677
  %v1679 = vsub.f32 %v1655, %v1589
  %v1680 = vmul.f32 %v1664, %v1679
  %v1681 = vadd.f32 %v1589, %v1680
  %1683 = vrot.lane.b32.xlu0 %v1300, 96
  %v1684 = vpop.permute.xlu0 %1683
  %v1686 = vsel %vm823, %v1302, %v1684
  %1688 = vrot.lane.b32.xlu0 %v1678, 112
  %v1689 = vpop.permute.xlu0 %1688
  %v1690 = vsel %vm253, %v1689, 0
  %1692 = vmatpush.msra.mxu0 0.0
  %1693 = vmatpush.msra.mxu0 0.0
  %1694 = vmatpush.msra.mxu0 0.0
  %1695 = vmatpush.msra.mxu0 0.0
  %1696 = vmatpush.msra.mxu0 0.0
  %1697 = vmatpush.msra.mxu0 0.0
  %1698 = vmatpush.msra.mxu0 0.0
  %1699 = vmatpush.msra.mxu0 0.0
  %1700 = vmatpush.msra.mxu0 0.0
  %1701 = vmatpush.msra.mxu0 0.0
  %1702 = vmatpush.msra.mxu0 0.0
  %1703 = vmatpush.msra.mxu0 0.0
  %1704 = vmatpush.msra.mxu0 0.0
  %1705 = vmatpush.msra.mxu0 0.0
  %1706 = vmatpush.msra.mxu0 0.0
  %1707 = vmatpush.msra.mxu0 %v816
  %1708 = vmatmul.f32.gmra.mxu0 %v1690
  %v1709 = vpop.f32.mrf.mxu0
  %v1710 = vadd.f32 0.0, %v1709
  %1711 = vdwg.mxu0
  %1713 = vrot.lane.b32.xlu0 %v1710, 96
  %v1714 = vpop.permute.xlu0 %1713
  %v1716 = vsel %vm823, %v1710, %v1714
  %v1717 = vadd.f32 %v1686, %v1716
  %v1718 = vxor.u32 %v1717, 2147483648
  %v1719 = vmul.f32 %v1718, 1.442695
  %v1720 = vpow.pop %v1719
  %v1721 = vadd.f32 %v1720, 1.0
  %v1722 = vrcp.pop %v1721
  %v1723 = vmul.f32 %v1721, %v1722
  %v1724 = vsub.f32 1.0, %v1723
  %v1725 = vmul.f32 %v1722, %v1724
  %v1726 = vadd.f32 %v1722, %v1725
  %vm1727 = vweird.f32 %v1721
  %vm1728 = vweird.f32 %v1722
  %vm1729 = vmor %vm1727, %vm1728
  %v1730 = vsel %vm1729, %v1722, %v1726
  %v1731 = vand.u32 2147483647, %v1721
  %vm1732 = vcmp.eq.f32.partialorder %v1731, 8.507059e+37
  %v1733 = vand.u32 %v1721, 2147483648
  %v1734 = vor.u32 1.1754944e-38, %v1733
  %v1735 = vsel %vm1732, %v1734, %v1730
  %v1736 = vmul.f32 1.0, %v1735
  %v1737 = vtanh.pop %v1717
  %v1738 = vmul.f32 %v1736, %v1681
  %1740 = vrot.lane.b32.xlu0 %v1737, 104
  %v1741 = vpop.permute.xlu0 %1740
  %v1743 = vmul.f32 %v1736, %v1741
  %1745 = vrot.lane.b32.xlu0 %v1743, 8
  %v1746 = vpop.permute.xlu0 %1745
  %v1748 = vadd.f32 %v1738, %v1746
  %v1749 = vtanh.pop %v1748
  %1751 = vrot.lane.b32.xlu0 %v1749, 8
  %v1752 = vpop.permute.xlu0 %1751
  %v1754 = vmul.f32 %v1736, %v1752
  %1755 = vset.pattern.permute.xlu0 9
  %1756 = vperm.xlu0 %1755, %v817
  %v1757 = vpop.permute.xlu0 %1756
  %v1759 = vmul.f32 %v1757, %v1754
  %1761 = vrot.lane.b32.xlu0 %v1759, 112
  %v1762 = vpop.permute.xlu0 %1761
  %1764 = vst.msk [vmem:[%s1485] sm:$0x3] %vm901, %v1762
  %1765 = vrot.lane.b32.xlu0 %v1759, 120
  %v1766 = vpop.permute.xlu0 %1765
  %1768 = vst.msk [vmem:[%s1480 - $0x2] sm:$0xc] %vm907, %v1766
  %v1769 = vsub.f32 %v1754, %v1678
  %v1770 = vmul.f32 %v1757, %v1769
  %v1771 = vadd.f32 %v1678, %v1770
  %v1772 = vsub.f32 %v1748, %v1681
  %v1773 = vmul.f32 %v1757, %v1772
  %v1774 = vadd.f32 %v1681, %v1773
  %1776 = vrot.lane.b32.xlu0 %v802, 96
  %v1777 = vpop.permute.xlu0 %1776
  %v1779 = vsel %vm823, %v1204, %v1777
  %1781 = vrot.lane.b32.xlu0 %v1771, 112
  %v1782 = vpop.permute.xlu0 %1781
  %v1783 = vsel %vm253, %v1782, 0
  %1785 = vmatpush.msra.mxu0 0.0
  %1786 = vmatpush.msra.mxu0 0.0
  %1787 = vmatpush.msra.mxu0 0.0
  %1788 = vmatpush.msra.mxu0 0.0
  %1789 = vmatpush.msra.mxu0 0.0
  %1790 = vmatpush.msra.mxu0 0.0
  %1791 = vmatpush.msra.mxu0 0.0
  %1792 = vmatpush.msra.mxu0 0.0
  %1793 = vmatpush.msra.mxu0 0.0
  %1794 = vmatpush.msra.mxu0 0.0
  %1795 = vmatpush.msra.mxu0 0.0
  %1796 = vmatpush.msra.mxu0 0.0
  %1797 = vmatpush.msra.mxu0 0.0
  %1798 = vmatpush.msra.mxu0 0.0
  %1799 = vmatpush.msra.mxu0 0.0
  %1800 = vmatpush.msra.mxu0 %v816
  %1801 = vmatmul.f32.gmra.mxu0 %v1783
  %v1802 = vpop.f32.mrf.mxu0
  %v1803 = vadd.f32 0.0, %v1802
  %1804 = vdwg.mxu0
  %1806 = vrot.lane.b32.xlu0 %v1803, 96
  %v1807 = vpop.permute.xlu0 %1806
  %v1809 = vsel %vm823, %v1803, %v1807
  %v1810 = vadd.f32 %v1779, %v1809
  %v1811 = vxor.u32 %v1810, 2147483648
  %v1812 = vmul.f32 %v1811, 1.442695
  %v1813 = vpow.pop %v1812
  %v1814 = vadd.f32 %v1813, 1.0
  %v1815 = vrcp.pop %v1814
  %v1816 = vmul.f32 %v1814, %v1815
  %v1817 = vsub.f32 1.0, %v1816
  %v1818 = vmul.f32 %v1815, %v1817
  %v1819 = vadd.f32 %v1815, %v1818
  %vm1820 = vweird.f32 %v1814
  %vm1821 = vweird.f32 %v1815
  %vm1822 = vmor %vm1820, %vm1821
  %v1823 = vsel %vm1822, %v1815, %v1819
  %v1824 = vand.u32 2147483647, %v1814
  %vm1825 = vcmp.eq.f32.partialorder %v1824, 8.507059e+37
  %v1826 = vand.u32 %v1814, 2147483648
  %v1827 = vor.u32 1.1754944e-38, %v1826
  %v1828 = vsel %vm1825, %v1827, %v1823
  %v1829 = vmul.f32 1.0, %v1828
  %v1830 = vtanh.pop %v1810
  %v1831 = vmul.f32 %v1829, %v1774
  %1833 = vrot.lane.b32.xlu0 %v1830, 104
  %v1834 = vpop.permute.xlu0 %1833
  %v1836 = vmul.f32 %v1829, %v1834
  %1838 = vrot.lane.b32.xlu0 %v1836, 8
  %v1839 = vpop.permute.xlu0 %1838
  %v1841 = vadd.f32 %v1831, %v1839
  %v1842 = vtanh.pop %v1841
  %1844 = vrot.lane.b32.xlu0 %v1842, 8
  %v1845 = vpop.permute.xlu0 %1844
  %v1847 = vmul.f32 %v1829, %v1845
  %1848 = vset.pattern.permute.xlu0 10
  %1849 = vperm.xlu0 %1848, %v817
  %v1850 = vpop.permute.xlu0 %1849
  %v1852 = vmul.f32 %v1850, %v1847
  %1854 = vrot.lane.b32.xlu0 %v1852, 112
  %v1855 = vpop.permute.xlu0 %1854
  %1857 = vst.msk [vmem:[%s1389] sm:$0x3] %vm901, %v1855
  %1858 = vrot.lane.b32.xlu0 %v1852, 120
  %v1859 = vpop.permute.xlu0 %1858
  %1861 = vst.msk [vmem:[%s1384 - $0x2] sm:$0xc] %vm907, %v1859
  %v1862 = vsub.f32 %v1847, %v1771
  %v1863 = vmul.f32 %v1850, %v1862
  %v1864 = vadd.f32 %v1771, %v1863
  %v1865 = vsub.f32 %v1841, %v1774
  %v1866 = vmul.f32 %v1850, %v1865
  %v1867 = vadd.f32 %v1774, %v1866
  %1869 = vrot.lane.b32.xlu0 %v1493, 96
  %v1870 = vpop.permute.xlu0 %1869
  %v1872 = vsel %vm823, %v1495, %v1870
  %1874 = vrot.lane.b32.xlu0 %v1864, 112
  %v1875 = vpop.permute.xlu0 %1874
  %v1876 = vsel %vm253, %v1875, 0
  %1878 = vmatpush.msra.mxu0 0.0
  %1879 = vmatpush.msra.mxu0 0.0
  %1880 = vmatpush.msra.mxu0 0.0
  %1881 = vmatpush.msra.mxu0 0.0
  %1882 = vmatpush.msra.mxu0 0.0
  %1883 = vmatpush.msra.mxu0 0.0
  %1884 = vmatpush.msra.mxu0 0.0
  %1885 = vmatpush.msra.mxu0 0.0
  %1886 = vmatpush.msra.mxu0 0.0
  %1887 = vmatpush.msra.mxu0 0.0
  %1888 = vmatpush.msra.mxu0 0.0
  %1889 = vmatpush.msra.mxu0 0.0
  %1890 = vmatpush.msra.mxu0 0.0
  %1891 = vmatpush.msra.mxu0 0.0
  %1892 = vmatpush.msra.mxu0 0.0
  %1893 = vmatpush.msra.mxu0 %v816
  %1894 = vmatmul.f32.gmra.mxu0 %v1876
  %v1895 = vpop.f32.mrf.mxu0
  %v1896 = vadd.f32 0.0, %v1895
  %1897 = vdwg.mxu0
  %1899 = vrot.lane.b32.xlu0 %v1896, 96
  %v1900 = vpop.permute.xlu0 %1899
  %v1902 = vsel %vm823, %v1896, %v1900
  %v1903 = vadd.f32 %v1872, %v1902
  %v1904 = vxor.u32 %v1903, 2147483648
  %v1905 = vmul.f32 %v1904, 1.442695
  %v1906 = vpow.pop %v1905
  %v1907 = vadd.f32 %v1906, 1.0
  %v1908 = vrcp.pop %v1907
  %v1909 = vmul.f32 %v1907, %v1908
  %v1910 = vsub.f32 1.0, %v1909
  %v1911 = vmul.f32 %v1908, %v1910
  %v1912 = vadd.f32 %v1908, %v1911
  %vm1913 = vweird.f32 %v1907
  %vm1914 = vweird.f32 %v1908
  %vm1915 = vmor %vm1913, %vm1914
  %v1916 = vsel %vm1915, %v1908, %v1912
  %v1917 = vand.u32 2147483647, %v1907
  %vm1918 = vcmp.eq.f32.partialorder %v1917, 8.507059e+37
  %v1919 = vand.u32 %v1907, 2147483648
  %v1920 = vor.u32 1.1754944e-38, %v1919
  %v1921 = vsel %vm1918, %v1920, %v1916
  %v1922 = vmul.f32 1.0, %v1921
  %v1923 = vtanh.pop %v1903
  %v1924 = vmul.f32 %v1922, %v1867
  %1926 = vrot.lane.b32.xlu0 %v1923, 104
  %v1927 = vpop.permute.xlu0 %1926
  %v1929 = vmul.f32 %v1922, %v1927
  %1931 = vrot.lane.b32.xlu0 %v1929, 8
  %v1932 = vpop.permute.xlu0 %1931
  %v1934 = vadd.f32 %v1924, %v1932
  %v1935 = vtanh.pop %v1934
  %1937 = vrot.lane.b32.xlu0 %v1935, 8
  %v1938 = vpop.permute.xlu0 %1937
  %v1940 = vmul.f32 %v1922, %v1938
  %1941 = vset.pattern.permute.xlu0 11
  %1942 = vperm.xlu0 %1941, %v817
  %v1943 = vpop.permute.xlu0 %1942
  %v1945 = vmul.f32 %v1943, %v1940
  %1947 = vrot.lane.b32.xlu0 %v1945, 112
  %v1948 = vpop.permute.xlu0 %1947
  %1950 = vst.msk [vmem:[%s1291] sm:$0x3] %vm901, %v1948
  %1951 = vrot.lane.b32.xlu0 %v1945, 120
  %v1952 = vpop.permute.xlu0 %1951
  %1954 = vst.msk [vmem:[%s1286 - $0x2] sm:$0xc] %vm907, %v1952
  %v1955 = vsub.f32 %v1940, %v1864
  %v1956 = vmul.f32 %v1943, %v1955
  %v1957 = vadd.f32 %v1864, %v1956
  %v1958 = vsub.f32 %v1934, %v1867
  %v1959 = vmul.f32 %v1943, %v1958
  %v1960 = vadd.f32 %v1867, %v1959
  %1961 = vrot.lane.b32.xlu0 %v1010, 96
  %v1962 = vpop.permute.xlu0 %1961
  %v1964 = vsel %vm823, %v808, %v1962
  %1966 = vrot.lane.b32.xlu0 %v1957, 112
  %v1967 = vpop.permute.xlu0 %1966
  %v1968 = vsel %vm253, %v1967, 0
  %1970 = vmatpush.msra.mxu0 0.0
  %1971 = vmatpush.msra.mxu0 0.0
  %1972 = vmatpush.msra.mxu0 0.0
  %1973 = vmatpush.msra.mxu0 0.0
  %1974 = vmatpush.msra.mxu0 0.0
  %1975 = vmatpush.msra.mxu0 0.0
  %1976 = vmatpush.msra.mxu0 0.0
  %1977 = vmatpush.msra.mxu0 0.0
  %1978 = vmatpush.msra.mxu0 0.0
  %1979 = vmatpush.msra.mxu0 0.0
  %1980 = vmatpush.msra.mxu0 0.0
  %1981 = vmatpush.msra.mxu0 0.0
  %1982 = vmatpush.msra.mxu0 0.0
  %1983 = vmatpush.msra.mxu0 0.0
  %1984 = vmatpush.msra.mxu0 0.0
  %1985 = vmatpush.msra.mxu0 %v816
  %1986 = vmatmul.f32.gmra.mxu0 %v1968
  %v1987 = vpop.f32.mrf.mxu0
  %v1988 = vadd.f32 0.0, %v1987
  %1989 = vdwg.mxu0
  %1991 = vrot.lane.b32.xlu0 %v1988, 96
  %v1992 = vpop.permute.xlu0 %1991
  %v1994 = vsel %vm823, %v1988, %v1992
  %v1995 = vadd.f32 %v1964, %v1994
  %v1996 = vxor.u32 %v1995, 2147483648
  %v1997 = vmul.f32 %v1996, 1.442695
  %v1998 = vpow.pop %v1997
  %v1999 = vadd.f32 %v1998, 1.0
  %v2000 = vrcp.pop %v1999
  %v2001 = vmul.f32 %v1999, %v2000
  %v2002 = vsub.f32 1.0, %v2001
  %v2003 = vmul.f32 %v2000, %v2002
  %v2004 = vadd.f32 %v2000, %v2003
  %vm2005 = vweird.f32 %v1999
  %vm2006 = vweird.f32 %v2000
  %vm2007 = vmor %vm2005, %vm2006
  %v2008 = vsel %vm2007, %v2000, %v2004
  %v2009 = vand.u32 2147483647, %v1999
  %vm2010 = vcmp.eq.f32.partialorder %v2009, 8.507059e+37
  %v2011 = vand.u32 %v1999, 2147483648
  %v2012 = vor.u32 1.1754944e-38, %v2011
  %v2013 = vsel %vm2010, %v2012, %v2008
  %v2014 = vmul.f32 1.0, %v2013
  %v2015 = vtanh.pop %v1995
  %v2016 = vmul.f32 %v2014, %v1960
  %2018 = vrot.lane.b32.xlu0 %v2015, 104
  %v2019 = vpop.permute.xlu0 %2018
  %v2021 = vmul.f32 %v2014, %v2019
  %2023 = vrot.lane.b32.xlu0 %v2021, 8
  %v2024 = vpop.permute.xlu0 %2023
  %v2026 = vadd.f32 %v2016, %v2024
  %v2027 = vtanh.pop %v2026
  %2029 = vrot.lane.b32.xlu0 %v2027, 8
  %v2030 = vpop.permute.xlu0 %2029
  %v2032 = vmul.f32 %v2014, %v2030
  %2033 = vset.pattern.permute.xlu0 12
  %2034 = vperm.xlu0 %2033, %v817
  %v2035 = vpop.permute.xlu0 %2034
  %v2037 = vmul.f32 %v2035, %v2032
  %2039 = vrot.lane.b32.xlu0 %v2037, 112
  %v2040 = vpop.permute.xlu0 %2039
  %2042 = vst.msk [vmem:[%s1195] sm:$0x3] %vm901, %v2040
  %2043 = vrot.lane.b32.xlu0 %v2037, 120
  %v2044 = vpop.permute.xlu0 %2043
  %2046 = vst.msk [vmem:[%s1190 - $0x2] sm:$0xc] %vm907, %v2044
  %v2047 = vsub.f32 %v2032, %v1957
  %v2048 = vmul.f32 %v2035, %v2047
  %v2049 = vadd.f32 %v1957, %v2048
  %v2050 = vsub.f32 %v2026, %v1960
  %v2051 = vmul.f32 %v2035, %v2050
  %v2052 = vadd.f32 %v1960, %v2051
  %2054 = vrot.lane.b32.xlu0 %v913, 96
  %v2055 = vpop.permute.xlu0 %2054
  %v2057 = vsel %vm823, %v915, %v2055
  %2059 = vrot.lane.b32.xlu0 %v2049, 112
  %v2060 = vpop.permute.xlu0 %2059
  %v2061 = vsel %vm253, %v2060, 0
  %2063 = vmatpush.msra.mxu0 0.0
  %2064 = vmatpush.msra.mxu0 0.0
  %2065 = vmatpush.msra.mxu0 0.0
  %2066 = vmatpush.msra.mxu0 0.0
  %2067 = vmatpush.msra.mxu0 0.0
  %2068 = vmatpush.msra.mxu0 0.0
  %2069 = vmatpush.msra.mxu0 0.0
  %2070 = vmatpush.msra.mxu0 0.0
  %2071 = vmatpush.msra.mxu0 0.0
  %2072 = vmatpush.msra.mxu0 0.0
  %2073 = vmatpush.msra.mxu0 0.0
  %2074 = vmatpush.msra.mxu0 0.0
  %2075 = vmatpush.msra.mxu0 0.0
  %2076 = vmatpush.msra.mxu0 0.0
  %2077 = vmatpush.msra.mxu0 0.0
  %2078 = vmatpush.msra.mxu0 %v816
  %2079 = vmatmul.f32.gmra.mxu0 %v2061
  %v2080 = vpop.f32.mrf.mxu0
  %v2081 = vadd.f32 0.0, %v2080
  %2082 = vdwg.mxu0
  %2084 = vrot.lane.b32.xlu0 %v2081, 96
  %v2085 = vpop.permute.xlu0 %2084
  %v2087 = vsel %vm823, %v2081, %v2085
  %v2088 = vadd.f32 %v2057, %v2087
  %v2089 = vxor.u32 %v2088, 2147483648
  %v2090 = vmul.f32 %v2089, 1.442695
  %v2091 = vpow.pop %v2090
  %v2092 = vadd.f32 %v2091, 1.0
  %v2093 = vrcp.pop %v2092
  %v2094 = vmul.f32 %v2092, %v2093
  %v2095 = vsub.f32 1.0, %v2094
  %v2096 = vmul.f32 %v2093, %v2095
  %v2097 = vadd.f32 %v2093, %v2096
  %vm2098 = vweird.f32 %v2092
  %vm2099 = vweird.f32 %v2093
  %vm2100 = vmor %vm2098, %vm2099
  %v2101 = vsel %vm2100, %v2093, %v2097
  %v2102 = vand.u32 2147483647, %v2092
  %vm2103 = vcmp.eq.f32.partialorder %v2102, 8.507059e+37
  %v2104 = vand.u32 %v2092, 2147483648
  %v2105 = vor.u32 1.1754944e-38, %v2104
  %v2106 = vsel %vm2103, %v2105, %v2101
  %v2107 = vmul.f32 1.0, %v2106
  %v2108 = vtanh.pop %v2088
  %v2109 = vmul.f32 %v2107, %v2052
  %2111 = vrot.lane.b32.xlu0 %v2108, 104
  %v2112 = vpop.permute.xlu0 %2111
  %v2114 = vmul.f32 %v2107, %v2112
  %2116 = vrot.lane.b32.xlu0 %v2114, 8
  %v2117 = vpop.permute.xlu0 %2116
  %v2119 = vadd.f32 %v2109, %v2117
  %v2120 = vtanh.pop %v2119
  %2122 = vrot.lane.b32.xlu0 %v2120, 8
  %v2123 = vpop.permute.xlu0 %2122
  %v2125 = vmul.f32 %v2107, %v2123
  %2126 = vset.pattern.permute.xlu0 13
  %2127 = vperm.xlu0 %2126, %v817
  %v2128 = vpop.permute.xlu0 %2127
  %v2130 = vmul.f32 %v2128, %v2125
  %2132 = vrot.lane.b32.xlu0 %v2130, 112
  %v2133 = vpop.permute.xlu0 %2132
  %2135 = vst.msk [vmem:[%s1098] sm:$0x3] %vm901, %v2133
  %2136 = vrot.lane.b32.xlu0 %v2130, 120
  %v2137 = vpop.permute.xlu0 %2136
  %2139 = vst.msk [vmem:[%s1093 - $0x2] sm:$0xc] %vm907, %v2137
  %v2140 = vsub.f32 %v2125, %v2049
  %v2141 = vmul.f32 %v2128, %v2140
  %v2142 = vadd.f32 %v2049, %v2141
  %v2143 = vsub.f32 %v2119, %v2052
  %v2144 = vmul.f32 %v2128, %v2143
  %v2145 = vadd.f32 %v2052, %v2144
  %2147 = vrot.lane.b32.xlu0 %v799, 96
  %v2148 = vpop.permute.xlu0 %2147
  %v2150 = vsel %vm823, %v819, %v2148
  %2152 = vrot.lane.b32.xlu0 %v2142, 112
  %v2153 = vpop.permute.xlu0 %2152
  %v2154 = vsel %vm253, %v2153, 0
  %2156 = vmatpush.msra.mxu0 0.0
  %2157 = vmatpush.msra.mxu0 0.0
  %2158 = vmatpush.msra.mxu0 0.0
  %2159 = vmatpush.msra.mxu0 0.0
  %2160 = vmatpush.msra.mxu0 0.0
  %2161 = vmatpush.msra.mxu0 0.0
  %2162 = vmatpush.msra.mxu0 0.0
  %2163 = vmatpush.msra.mxu0 0.0
  %2164 = vmatpush.msra.mxu0 0.0
  %2165 = vmatpush.msra.mxu0 0.0
  %2166 = vmatpush.msra.mxu0 0.0
  %2167 = vmatpush.msra.mxu0 0.0
  %2168 = vmatpush.msra.mxu0 0.0
  %2169 = vmatpush.msra.mxu0 0.0
  %2170 = vmatpush.msra.mxu0 0.0
  %2171 = vmatpush.msra.mxu0 %v816
  %2172 = vmatmul.f32.gmra.mxu0 %v2154
  %v2173 = vpop.f32.mrf.mxu0
  %v2174 = vadd.f32 0.0, %v2173
  %2175 = vdwg.mxu0
  %2177 = vrot.lane.b32.xlu0 %v2174, 96
  %v2178 = vpop.permute.xlu0 %2177
  %v2180 = vsel %vm823, %v2174, %v2178
  %v2181 = vadd.f32 %v2150, %v2180
  %v2182 = vxor.u32 %v2181, 2147483648
  %v2183 = vmul.f32 %v2182, 1.442695
  %v2184 = vpow.pop %v2183
  %v2185 = vadd.f32 %v2184, 1.0
  %v2186 = vrcp.pop %v2185
  %v2187 = vmul.f32 %v2185, %v2186
  %v2188 = vsub.f32 1.0, %v2187
  %v2189 = vmul.f32 %v2186, %v2188
  %v2190 = vadd.f32 %v2186, %v2189
  %vm2191 = vweird.f32 %v2185
  %vm2192 = vweird.f32 %v2186
  %vm2193 = vmor %vm2191, %vm2192
  %v2194 = vsel %vm2193, %v2186, %v2190
  %v2195 = vand.u32 2147483647, %v2185
  %vm2196 = vcmp.eq.f32.partialorder %v2195, 8.507059e+37
  %v2197 = vand.u32 %v2185, 2147483648
  %v2198 = vor.u32 1.1754944e-38, %v2197
  %v2199 = vsel %vm2196, %v2198, %v2194
  %v2200 = vmul.f32 1.0, %v2199
  %v2201 = vtanh.pop %v2181
  %v2202 = vmul.f32 %v2200, %v2145
  %2204 = vrot.lane.b32.xlu0 %v2201, 104
  %v2205 = vpop.permute.xlu0 %2204
  %v2207 = vmul.f32 %v2200, %v2205
  %2209 = vrot.lane.b32.xlu0 %v2207, 8
  %v2210 = vpop.permute.xlu0 %2209
  %v2212 = vadd.f32 %v2202, %v2210
  %v2213 = vtanh.pop %v2212
  %2215 = vrot.lane.b32.xlu0 %v2213, 8
  %v2216 = vpop.permute.xlu0 %2215
  %v2218 = vmul.f32 %v2200, %v2216
  %2219 = vset.pattern.permute.xlu0 14
  %2220 = vperm.xlu0 %2219, %v817
  %v2221 = vpop.permute.xlu0 %2220
  %v2223 = vmul.f32 %v2221, %v2218
  %2225 = vrot.lane.b32.xlu0 %v2223, 112
  %v2226 = vpop.permute.xlu0 %2225
  %2228 = vst.msk [vmem:[%s1002] sm:$0x3] %vm901, %v2226
  %2229 = vrot.lane.b32.xlu0 %v2223, 120
  %v2230 = vpop.permute.xlu0 %2229
  %2232 = vst.msk [vmem:[%s997 - $0x2] sm:$0xc] %vm907, %v2230
  %v2233 = vsub.f32 %v2218, %v2142
  %v2234 = vmul.f32 %v2221, %v2233
  %v2235 = vadd.f32 %v2142, %v2234
  %v2236 = vsub.f32 %v2212, %v2145
  %v2237 = vmul.f32 %v2221, %v2236
  %v2238 = vadd.f32 %v2145, %v2237
  %2240 = vrot.lane.b32.xlu0 %v1106, 96
  %v2241 = vpop.permute.xlu0 %2240
  %v2243 = vsel %vm823, %v1108, %v2241
  %2245 = vrot.lane.b32.xlu0 %v2235, 112
  %v2246 = vpop.permute.xlu0 %2245
  %v2247 = vsel %vm253, %v2246, 0
  %2249 = vmatpush.msra.mxu0 0.0
  %2250 = vmatpush.msra.mxu0 0.0
  %2251 = vmatpush.msra.mxu0 0.0
  %2252 = vmatpush.msra.mxu0 0.0
  %2253 = vmatpush.msra.mxu0 0.0
  %2254 = vmatpush.msra.mxu0 0.0
  %2255 = vmatpush.msra.mxu0 0.0
  %2256 = vmatpush.msra.mxu0 0.0
  %2257 = vmatpush.msra.mxu0 0.0
  %2258 = vmatpush.msra.mxu0 0.0
  %2259 = vmatpush.msra.mxu0 0.0
  %2260 = vmatpush.msra.mxu0 0.0
  %2261 = vmatpush.msra.mxu0 0.0
  %2262 = vmatpush.msra.mxu0 0.0
  %2263 = vmatpush.msra.mxu0 0.0
  %2264 = vmatpush.msra.mxu0 %v816
  %2265 = vmatmul.f32.gmra.mxu0 %v2247
  %v2266 = vpop.f32.mrf.mxu0
  %v2267 = vadd.f32 0.0, %v2266
  %2268 = vdwg.mxu0
  %2270 = vrot.lane.b32.xlu0 %v2267, 96
  %v2271 = vpop.permute.xlu0 %2270
  %v2273 = vsel %vm823, %v2267, %v2271
  %v2274 = vadd.f32 %v2243, %v2273
  %v2275 = vxor.u32 %v2274, 2147483648
  %v2276 = vmul.f32 %v2275, 1.442695
  %v2277 = vpow.pop %v2276
  %v2278 = vadd.f32 %v2277, 1.0
  %v2279 = vrcp.pop %v2278
  %v2280 = vmul.f32 %v2278, %v2279
  %v2281 = vsub.f32 1.0, %v2280
  %v2282 = vmul.f32 %v2279, %v2281
  %v2283 = vadd.f32 %v2279, %v2282
  %vm2284 = vweird.f32 %v2278
  %vm2285 = vweird.f32 %v2279
  %vm2286 = vmor %vm2284, %vm2285
  %v2287 = vsel %vm2286, %v2279, %v2283
  %v2288 = vand.u32 2147483647, %v2278
  %vm2289 = vcmp.eq.f32.partialorder %v2288, 8.507059e+37
  %v2290 = vand.u32 %v2278, 2147483648
  %v2291 = vor.u32 1.1754944e-38, %v2290
  %v2292 = vsel %vm2289, %v2291, %v2287
  %v2293 = vmul.f32 1.0, %v2292
  %v2294 = vtanh.pop %v2274
  %v2295 = vmul.f32 %v2293, %v2238
  %2297 = vrot.lane.b32.xlu0 %v2294, 104
  %v2298 = vpop.permute.xlu0 %2297
  %v2300 = vmul.f32 %v2293, %v2298
  %2302 = vrot.lane.b32.xlu0 %v2300, 8
  %v2303 = vpop.permute.xlu0 %2302
  %v2305 = vadd.f32 %v2295, %v2303
  %v2306 = vtanh.pop %v2305
  %2308 = vrot.lane.b32.xlu0 %v2306, 8
  %v2309 = vpop.permute.xlu0 %2308
  %v2311 = vmul.f32 %v2293, %v2309
  %2312 = vset.pattern.permute.xlu0 15
  %2313 = vperm.xlu0 %2312, %v817
  %v2314 = vpop.permute.xlu0 %2313
  %v2316 = vmul.f32 %v2314, %v2311
  %2318 = vrot.lane.b32.xlu0 %v2316, 112
  %v2319 = vpop.permute.xlu0 %2318
  %2321 = vst.msk [vmem:[%s906] sm:$0x3] %vm901, %v2319
  %2322 = vrot.lane.b32.xlu0 %v2316, 120
  %v2323 = vpop.permute.xlu0 %2322
  %2325 = vst.msk [vmem:[#allocation2 - $0x2] sm:$0xc] %vm907, %v2323
  %v2327 = vrot.slane %v814, 4
  %2328 = vrot.lane.b32.xlu0 %v2327, 96
  %v2329 = vpop.permute.xlu0 %2328
  %v2331 = vsel %vm823, %v811, %v2329
  %v2332 = vadd.f32 %v2331, %v852
  %v2333 = vxor.u32 %v2332, 2147483648
  %v2334 = vmul.f32 %v2333, 1.442695
  %v2335 = vpow.pop %v2334
  %v2336 = vadd.f32 %v2335, 1.0
  %v2337 = vrcp.pop %v2336
  %v2338 = vmul.f32 %v2336, %v2337
  %v2339 = vsub.f32 1.0, %v2338
  %v2340 = vmul.f32 %v2337, %v2339
  %v2341 = vadd.f32 %v2337, %v2340
  %vm2342 = vweird.f32 %v2336
  %vm2343 = vweird.f32 %v2337
  %vm2344 = vmor %vm2342, %vm2343
  %v2345 = vsel %vm2344, %v2337, %v2341
  %v2346 = vand.u32 2147483647, %v2336
  %vm2347 = vcmp.eq.f32.partialorder %v2346, 8.507059e+37
  %v2348 = vand.u32 %v2336, 2147483648
  %v2349 = vor.u32 1.1754944e-38, %v2348
  %v2350 = vsel %vm2347, %v2349, %v2345
  %v2351 = vmul.f32 1.0, %v2350
  %v2352 = vtanh.pop %v2332
  %v2353 = vmul.f32 %v2351, 0.0
  %2355 = vrot.lane.b32.xlu0 %v2352, 104
  %v2356 = vpop.permute.xlu0 %2355
  %v2358 = vmul.f32 %v2351, %v2356
  %2360 = vrot.lane.b32.xlu0 %v2358, 8
  %v2361 = vpop.permute.xlu0 %2360
  %v2363 = vadd.f32 %v2353, %v2361
  %v2364 = vtanh.pop %v2363
  %2366 = vrot.lane.b32.xlu0 %v2364, 8
  %v2367 = vpop.permute.xlu0 %2366
  %v2369 = vmul.f32 %v2351, %v2367
  %2370 = vset.pattern.permute.xlu0 16
  %2371 = vperm.xlu0 %2370, %v817
  %v2372 = vpop.permute.xlu0 %2371
  %v2374 = vmul.f32 %v2372, %v2369
  %2376 = vrot.lane.b32.xlu0 %v2374, 112
  %v2377 = vpop.permute.xlu0 %2376
  %s2379 = scalar_lea.vmem [#allocation2], 32
  %2380 = vst.msk [vmem:[%s2379] sm:$0x3] %vm901, %v2377
  %2381 = vrot.lane.b32.xlu0 %v2374, 120
  %v2382 = vpop.permute.xlu0 %2381
  %s2384 = scalar_lea.vmem [#allocation2], 46
  %2385 = vst.msk [vmem:[%s2384 - $0x2] sm:$0xc] %vm907, %v2382
  %v2386 = vadd.f32 %v2374, 0.0
  %v2387 = vmul.f32 %v2372, %v2363
  %v2388 = vadd.f32 %v2387, 0.0
  %v2390 = vrot.slane %v811, 2
  %v2392 = vrot.slane %v814, 2
  %2393 = vrot.lane.b32.xlu0 %v2392, 96
  %v2394 = vpop.permute.xlu0 %2393
  %v2396 = vsel %vm823, %v2390, %v2394
  %2398 = vrot.lane.b32.xlu0 %v2386, 112
  %v2399 = vpop.permute.xlu0 %2398
  %v2400 = vsel %vm253, %v2399, 0
  %2402 = vmatpush.msra.mxu0 0.0
  %2403 = vmatpush.msra.mxu0 0.0
  %2404 = vmatpush.msra.mxu0 0.0
  %2405 = vmatpush.msra.mxu0 0.0
  %2406 = vmatpush.msra.mxu0 0.0
  %2407 = vmatpush.msra.mxu0 0.0
  %2408 = vmatpush.msra.mxu0 0.0
  %2409 = vmatpush.msra.mxu0 0.0
  %2410 = vmatpush.msra.mxu0 0.0
  %2411 = vmatpush.msra.mxu0 0.0
  %2412 = vmatpush.msra.mxu0 0.0
  %2413 = vmatpush.msra.mxu0 0.0
  %2414 = vmatpush.msra.mxu0 0.0
  %2415 = vmatpush.msra.mxu0 0.0
  %2416 = vmatpush.msra.mxu0 0.0
  %2417 = vmatpush.msra.mxu0 %v816
  %2418 = vmatmul.f32.gmra.mxu0 %v2400
  %v2419 = vpop.f32.mrf.mxu0
  %v2420 = vadd.f32 0.0, %v2419
  %2421 = vdwg.mxu0
  %2423 = vrot.lane.b32.xlu0 %v2420, 96
  %v2424 = vpop.permute.xlu0 %2423
  %v2426 = vsel %vm823, %v2420, %v2424
  %v2427 = vadd.f32 %v2396, %v2426
  %v2428 = vxor.u32 %v2427, 2147483648
  %v2429 = vmul.f32 %v2428, 1.442695
  %v2430 = vpow.pop %v2429
  %v2431 = vadd.f32 %v2430, 1.0
  %v2432 = vrcp.pop %v2431
  %v2433 = vmul.f32 %v2431, %v2432
  %v2434 = vsub.f32 1.0, %v2433
  %v2435 = vmul.f32 %v2432, %v2434
  %v2436 = vadd.f32 %v2432, %v2435
  %vm2437 = vweird.f32 %v2431
  %vm2438 = vweird.f32 %v2432
  %vm2439 = vmor %vm2437, %vm2438
  %v2440 = vsel %vm2439, %v2432, %v2436
  %v2441 = vand.u32 2147483647, %v2431
  %vm2442 = vcmp.eq.f32.partialorder %v2441, 8.507059e+37
  %v2443 = vand.u32 %v2431, 2147483648
  %v2444 = vor.u32 1.1754944e-38, %v2443
  %v2445 = vsel %vm2442, %v2444, %v2440
  %v2446 = vmul.f32 1.0, %v2445
  %v2447 = vtanh.pop %v2427
  %v2448 = vmul.f32 %v2446, %v2388
  %2450 = vrot.lane.b32.xlu0 %v2447, 104
  %v2451 = vpop.permute.xlu0 %2450
  %v2453 = vmul.f32 %v2446, %v2451
  %2455 = vrot.lane.b32.xlu0 %v2453, 8
  %v2456 = vpop.permute.xlu0 %2455
  %v2458 = vadd.f32 %v2448, %v2456
  %v2459 = vtanh.pop %v2458
  %2461 = vrot.lane.b32.xlu0 %v2459, 8
  %v2462 = vpop.permute.xlu0 %2461
  %v2464 = vmul.f32 %v2446, %v2462
  %2465 = vset.pattern.permute.xlu0 17
  %2466 = vperm.xlu0 %2465, %v817
  %v2467 = vpop.permute.xlu0 %2466
  %v2469 = vmul.f32 %v2467, %v2464
  %2471 = vrot.lane.b32.xlu0 %v2469, 112
  %v2472 = vpop.permute.xlu0 %2471
  %s2474 = scalar_lea.vmem [#allocation2], 34
  %2475 = vst.msk [vmem:[%s2474] sm:$0x3] %vm901, %v2472
  %2476 = vrot.lane.b32.xlu0 %v2469, 120
  %v2477 = vpop.permute.xlu0 %2476
  %s2479 = scalar_lea.vmem [#allocation2], 44
  %2480 = vst.msk [vmem:[%s2479 - $0x2] sm:$0xc] %vm907, %v2477
  %v2481 = vsub.f32 %v2464, %v2386
  %v2482 = vmul.f32 %v2467, %v2481
  %v2483 = vadd.f32 %v2386, %v2482
  %v2484 = vsub.f32 %v2458, %v2388
  %v2485 = vmul.f32 %v2467, %v2484
  %v2486 = vadd.f32 %v2388, %v2485
  %v2487 = vrot.slane %v811, 4
  %2489 = vrot.lane.b32.xlu0 %v814, 96
  %v2490 = vpop.permute.xlu0 %2489
  %v2492 = vsel %vm823, %v2487, %v2490
  %2494 = vrot.lane.b32.xlu0 %v2483, 112
  %v2495 = vpop.permute.xlu0 %2494
  %v2496 = vsel %vm253, %v2495, 0
  %2498 = vmatpush.msra.mxu0 0.0
  %2499 = vmatpush.msra.mxu0 0.0
  %2500 = vmatpush.msra.mxu0 0.0
  %2501 = vmatpush.msra.mxu0 0.0
  %2502 = vmatpush.msra.mxu0 0.0
  %2503 = vmatpush.msra.mxu0 0.0
  %2504 = vmatpush.msra.mxu0 0.0
  %2505 = vmatpush.msra.mxu0 0.0
  %2506 = vmatpush.msra.mxu0 0.0
  %2507 = vmatpush.msra.mxu0 0.0
  %2508 = vmatpush.msra.mxu0 0.0
  %2509 = vmatpush.msra.mxu0 0.0
  %2510 = vmatpush.msra.mxu0 0.0
  %2511 = vmatpush.msra.mxu0 0.0
  %2512 = vmatpush.msra.mxu0 0.0
  %2513 = vmatpush.msra.mxu0 %v816
  %2514 = vmatmul.f32.gmra.mxu0 %v2496
  %v2515 = vpop.f32.mrf.mxu0
  %v2516 = vadd.f32 0.0, %v2515
  %2517 = vdwg.mxu0
  %2519 = vrot.lane.b32.xlu0 %v2516, 96
  %v2520 = vpop.permute.xlu0 %2519
  %v2522 = vsel %vm823, %v2516, %v2520
  %v2523 = vadd.f32 %v2492, %v2522
  %v2524 = vxor.u32 %v2523, 2147483648
  %v2525 = vmul.f32 %v2524, 1.442695
  %v2526 = vpow.pop %v2525
  %v2527 = vadd.f32 %v2526, 1.0
  %v2528 = vrcp.pop %v2527
  %v2529 = vmul.f32 %v2527, %v2528
  %v2530 = vsub.f32 1.0, %v2529
  %v2531 = vmul.f32 %v2528, %v2530
  %v2532 = vadd.f32 %v2528, %v2531
  %vm2533 = vweird.f32 %v2527
  %vm2534 = vweird.f32 %v2528
  %vm2535 = vmor %vm2533, %vm2534
  %v2536 = vsel %vm2535, %v2528, %v2532
  %v2537 = vand.u32 2147483647, %v2527
  %vm2538 = vcmp.eq.f32.partialorder %v2537, 8.507059e+37
  %v2539 = vand.u32 %v2527, 2147483648
  %v2540 = vor.u32 1.1754944e-38, %v2539
  %v2541 = vsel %vm2538, %v2540, %v2536
  %v2542 = vmul.f32 1.0, %v2541
  %v2543 = vtanh.pop %v2523
  %v2544 = vmul.f32 %v2542, %v2486
  %2546 = vrot.lane.b32.xlu0 %v2543, 104
  %v2547 = vpop.permute.xlu0 %2546
  %v2549 = vmul.f32 %v2542, %v2547
  %2551 = vrot.lane.b32.xlu0 %v2549, 8
  %v2552 = vpop.permute.xlu0 %2551
  %v2554 = vadd.f32 %v2544, %v2552
  %v2555 = vtanh.pop %v2554
  %2557 = vrot.lane.b32.xlu0 %v2555, 8
  %v2558 = vpop.permute.xlu0 %2557
  %v2560 = vmul.f32 %v2542, %v2558
  %2561 = vset.pattern.permute.xlu0 18
  %2562 = vperm.xlu0 %2561, %v817
  %v2563 = vpop.permute.xlu0 %2562
  %v2565 = vmul.f32 %v2563, %v2560
  %2567 = vrot.lane.b32.xlu0 %v2565, 112
  %v2568 = vpop.permute.xlu0 %2567
  %s2570 = scalar_lea.vmem [#allocation2], 36
  %2571 = vst.msk [vmem:[%s2570] sm:$0x3] %vm901, %v2568
  %2572 = vrot.lane.b32.xlu0 %v2565, 120
  %v2573 = vpop.permute.xlu0 %2572
  %s2575 = scalar_lea.vmem [#allocation2], 42
  %2576 = vst.msk [vmem:[%s2575 - $0x2] sm:$0xc] %vm907, %v2573
  %v2577 = vsub.f32 %v2560, %v2483
  %v2578 = vmul.f32 %v2563, %v2577
  %v2579 = vadd.f32 %v2483, %v2578
  %v2580 = vsub.f32 %v2554, %v2486
  %v2581 = vmul.f32 %v2563, %v2580
  %v2582 = vadd.f32 %v2486, %v2581
  %v2583 = vrot.slane %v811, 6
  %v2585 = vrot.slane %v814, 6
  %2586 = vrot.lane.b32.xlu0 %v2585, 96
  %v2587 = vpop.permute.xlu0 %2586
  %v2589 = vsel %vm823, %v2583, %v2587
  %2591 = vrot.lane.b32.xlu0 %v2579, 112
  %v2592 = vpop.permute.xlu0 %2591
  %v2593 = vsel %vm253, %v2592, 0
  %2595 = vmatpush.msra.mxu0 0.0
  %2596 = vmatpush.msra.mxu0 0.0
  %2597 = vmatpush.msra.mxu0 0.0
  %2598 = vmatpush.msra.mxu0 0.0
  %2599 = vmatpush.msra.mxu0 0.0
  %2600 = vmatpush.msra.mxu0 0.0
  %2601 = vmatpush.msra.mxu0 0.0
  %2602 = vmatpush.msra.mxu0 0.0
  %2603 = vmatpush.msra.mxu0 0.0
  %2604 = vmatpush.msra.mxu0 0.0
  %2605 = vmatpush.msra.mxu0 0.0
  %2606 = vmatpush.msra.mxu0 0.0
  %2607 = vmatpush.msra.mxu0 0.0
  %2608 = vmatpush.msra.mxu0 0.0
  %2609 = vmatpush.msra.mxu0 0.0
  %2610 = vmatpush.msra.mxu0 %v816
  %2611 = vmatmul.f32.gmra.mxu0 %v2593
  %v2612 = vpop.f32.mrf.mxu0
  %v2613 = vadd.f32 0.0, %v2612
  %2614 = vdwg.mxu0
  %2616 = vrot.lane.b32.xlu0 %v2613, 96
  %v2617 = vpop.permute.xlu0 %2616
  %v2619 = vsel %vm823, %v2613, %v2617
  %v2620 = vadd.f32 %v2589, %v2619
  %v2621 = vxor.u32 %v2620, 2147483648
  %v2622 = vmul.f32 %v2621, 1.442695
  %v2623 = vpow.pop %v2622
  %v2624 = vadd.f32 %v2623, 1.0
  %v2625 = vrcp.pop %v2624
  %v2626 = vmul.f32 %v2624, %v2625
  %v2627 = vsub.f32 1.0, %v2626
  %v2628 = vmul.f32 %v2625, %v2627
  %v2629 = vadd.f32 %v2625, %v2628
  %vm2630 = vweird.f32 %v2624
  %vm2631 = vweird.f32 %v2625
  %vm2632 = vmor %vm2630, %vm2631
  %v2633 = vsel %vm2632, %v2625, %v2629
  %v2634 = vand.u32 2147483647, %v2624
  %vm2635 = vcmp.eq.f32.partialorder %v2634, 8.507059e+37
  %v2636 = vand.u32 %v2624, 2147483648
  %v2637 = vor.u32 1.1754944e-38, %v2636
  %v2638 = vsel %vm2635, %v2637, %v2633
  %v2639 = vmul.f32 1.0, %v2638
  %v2640 = vtanh.pop %v2620
  %v2641 = vmul.f32 %v2639, %v2582
  %2643 = vrot.lane.b32.xlu0 %v2640, 104
  %v2644 = vpop.permute.xlu0 %2643
  %v2646 = vmul.f32 %v2639, %v2644
  %2648 = vrot.lane.b32.xlu0 %v2646, 8
  %v2649 = vpop.permute.xlu0 %2648
  %v2651 = vadd.f32 %v2641, %v2649
  %v2652 = vtanh.pop %v2651
  %2654 = vrot.lane.b32.xlu0 %v2652, 8
  %v2655 = vpop.permute.xlu0 %2654
  %v2657 = vmul.f32 %v2639, %v2655
  %2658 = vset.pattern.permute.xlu0 19
  %2659 = vperm.xlu0 %2658, %v817
  %v2660 = vpop.permute.xlu0 %2659
  %v2662 = vmul.f32 %v2660, %v2657
  %2664 = vrot.lane.b32.xlu0 %v2662, 112
  %v2665 = vpop.permute.xlu0 %2664
  %s2667 = scalar_lea.vmem [#allocation2], 38
  %2668 = vst.msk [vmem:[%s2667] sm:$0x3] %vm901, %v2665
  %2669 = vrot.lane.b32.xlu0 %v2662, 120
  %v2670 = vpop.permute.xlu0 %2669
  %s2672 = scalar_lea.vmem [#allocation2], 40
  %2673 = vst.msk [vmem:[%s2672 - $0x2] sm:$0xc] %vm907, %v2670
  %v2674 = vsub.f32 %v2657, %v2579
  %v2675 = vmul.f32 %v2660, %v2674
  %v2676 = vadd.f32 %v2579, %v2675
  %v2677 = vsub.f32 %v2651, %v2582
  %v2678 = vmul.f32 %v2660, %v2677
  %v2679 = vadd.f32 %v2582, %v2678
  %2680 = vrot.lane.b32.xlu0 %v2487, 96
  %v2681 = vpop.permute.xlu0 %2680
  %v2683 = vsel %vm823, %v814, %v2681
  %2685 = vrot.lane.b32.xlu0 %v2676, 112
  %v2686 = vpop.permute.xlu0 %2685
  %v2687 = vsel %vm253, %v2686, 0
  %2689 = vmatpush.msra.mxu0 0.0
  %2690 = vmatpush.msra.mxu0 0.0
  %2691 = vmatpush.msra.mxu0 0.0
  %2692 = vmatpush.msra.mxu0 0.0
  %2693 = vmatpush.msra.mxu0 0.0
  %2694 = vmatpush.msra.mxu0 0.0
  %2695 = vmatpush.msra.mxu0 0.0
  %2696 = vmatpush.msra.mxu0 0.0
  %2697 = vmatpush.msra.mxu0 0.0
  %2698 = vmatpush.msra.mxu0 0.0
  %2699 = vmatpush.msra.mxu0 0.0
  %2700 = vmatpush.msra.mxu0 0.0
  %2701 = vmatpush.msra.mxu0 0.0
  %2702 = vmatpush.msra.mxu0 0.0
  %2703 = vmatpush.msra.mxu0 0.0
  %2704 = vmatpush.msra.mxu0 %v816
  %2705 = vmatmul.f32.gmra.mxu0 %v2687
  %v2706 = vpop.f32.mrf.mxu0
  %v2707 = vadd.f32 0.0, %v2706
  %2708 = vdwg.mxu0
  %2710 = vrot.lane.b32.xlu0 %v2707, 96
  %v2711 = vpop.permute.xlu0 %2710
  %v2713 = vsel %vm823, %v2707, %v2711
  %v2714 = vadd.f32 %v2683, %v2713
  %v2715 = vxor.u32 %v2714, 2147483648
  %v2716 = vmul.f32 %v2715, 1.442695
  %v2717 = vpow.pop %v2716
  %v2718 = vadd.f32 %v2717, 1.0
  %v2719 = vrcp.pop %v2718
  %v2720 = vmul.f32 %v2718, %v2719
  %v2721 = vsub.f32 1.0, %v2720
  %v2722 = vmul.f32 %v2719, %v2721
  %v2723 = vadd.f32 %v2719, %v2722
  %vm2724 = vweird.f32 %v2718
  %vm2725 = vweird.f32 %v2719
  %vm2726 = vmor %vm2724, %vm2725
  %v2727 = vsel %vm2726, %v2719, %v2723
  %v2728 = vand.u32 2147483647, %v2718
  %vm2729 = vcmp.eq.f32.partialorder %v2728, 8.507059e+37
  %v2730 = vand.u32 %v2718, 2147483648
  %v2731 = vor.u32 1.1754944e-38, %v2730
  %v2732 = vsel %vm2729, %v2731, %v2727
  %v2733 = vmul.f32 1.0, %v2732
  %v2734 = vtanh.pop %v2714
  %v2735 = vmul.f32 %v2733, %v2679
  %2737 = vrot.lane.b32.xlu0 %v2734, 104
  %v2738 = vpop.permute.xlu0 %2737
  %v2740 = vmul.f32 %v2733, %v2738
  %2742 = vrot.lane.b32.xlu0 %v2740, 8
  %v2743 = vpop.permute.xlu0 %2742
  %v2745 = vadd.f32 %v2735, %v2743
  %v2746 = vtanh.pop %v2745
  %2748 = vrot.lane.b32.xlu0 %v2746, 8
  %v2749 = vpop.permute.xlu0 %2748
  %v2751 = vmul.f32 %v2733, %v2749
  %2752 = vset.pattern.permute.xlu0 20
  %2753 = vperm.xlu0 %2752, %v817
  %v2754 = vpop.permute.xlu0 %2753
  %v2756 = vmul.f32 %v2754, %v2751
  %2758 = vrot.lane.b32.xlu0 %v2756, 112
  %v2759 = vpop.permute.xlu0 %2758
  %2761 = vst.msk [vmem:[%s2672] sm:$0x3] %vm901, %v2759
  %2762 = vrot.lane.b32.xlu0 %v2756, 120
  %v2763 = vpop.permute.xlu0 %2762
  %2765 = vst.msk [vmem:[%s2667 - $0x2] sm:$0xc] %vm907, %v2763
  %v2766 = vsub.f32 %v2751, %v2676
  %v2767 = vmul.f32 %v2754, %v2766
  %v2768 = vadd.f32 %v2676, %v2767
  %v2769 = vsub.f32 %v2745, %v2679
  %v2770 = vmul.f32 %v2754, %v2769
  %v2771 = vadd.f32 %v2679, %v2770
  %2773 = vrot.lane.b32.xlu0 %v2390, 96
  %v2774 = vpop.permute.xlu0 %2773
  %v2776 = vsel %vm823, %v2392, %v2774
  %2778 = vrot.lane.b32.xlu0 %v2768, 112
  %v2779 = vpop.permute.xlu0 %2778
  %v2780 = vsel %vm253, %v2779, 0
  %2782 = vmatpush.msra.mxu0 0.0
  %2783 = vmatpush.msra.mxu0 0.0
  %2784 = vmatpush.msra.mxu0 0.0
  %2785 = vmatpush.msra.mxu0 0.0
  %2786 = vmatpush.msra.mxu0 0.0
  %2787 = vmatpush.msra.mxu0 0.0
  %2788 = vmatpush.msra.mxu0 0.0
  %2789 = vmatpush.msra.mxu0 0.0
  %2790 = vmatpush.msra.mxu0 0.0
  %2791 = vmatpush.msra.mxu0 0.0
  %2792 = vmatpush.msra.mxu0 0.0
  %2793 = vmatpush.msra.mxu0 0.0
  %2794 = vmatpush.msra.mxu0 0.0
  %2795 = vmatpush.msra.mxu0 0.0
  %2796 = vmatpush.msra.mxu0 0.0
  %2797 = vmatpush.msra.mxu0 %v816
  %2798 = vmatmul.f32.gmra.mxu0 %v2780
  %v2799 = vpop.f32.mrf.mxu0
  %v2800 = vadd.f32 0.0, %v2799
  %2801 = vdwg.mxu0
  %2803 = vrot.lane.b32.xlu0 %v2800, 96
  %v2804 = vpop.permute.xlu0 %2803
  %v2806 = vsel %vm823, %v2800, %v2804
  %v2807 = vadd.f32 %v2776, %v2806
  %v2808 = vxor.u32 %v2807, 2147483648
  %v2809 = vmul.f32 %v2808, 1.442695
  %v2810 = vpow.pop %v2809
  %v2811 = vadd.f32 %v2810, 1.0
  %v2812 = vrcp.pop %v2811
  %v2813 = vmul.f32 %v2811, %v2812
  %v2814 = vsub.f32 1.0, %v2813
  %v2815 = vmul.f32 %v2812, %v2814
  %v2816 = vadd.f32 %v2812, %v2815
  %vm2817 = vweird.f32 %v2811
  %vm2818 = vweird.f32 %v2812
  %vm2819 = vmor %vm2817, %vm2818
  %v2820 = vsel %vm2819, %v2812, %v2816
  %v2821 = vand.u32 2147483647, %v2811
  %vm2822 = vcmp.eq.f32.partialorder %v2821, 8.507059e+37
  %v2823 = vand.u32 %v2811, 2147483648
  %v2824 = vor.u32 1.1754944e-38, %v2823
  %v2825 = vsel %vm2822, %v2824, %v2820
  %v2826 = vmul.f32 1.0, %v2825
  %v2827 = vtanh.pop %v2807
  %v2828 = vmul.f32 %v2826, %v2771
  %2830 = vrot.lane.b32.xlu0 %v2827, 104
  %v2831 = vpop.permute.xlu0 %2830
  %v2833 = vmul.f32 %v2826, %v2831
  %2835 = vrot.lane.b32.xlu0 %v2833, 8
  %v2836 = vpop.permute.xlu0 %2835
  %v2838 = vadd.f32 %v2828, %v2836
  %v2839 = vtanh.pop %v2838
  %2841 = vrot.lane.b32.xlu0 %v2839, 8
  %v2842 = vpop.permute.xlu0 %2841
  %v2844 = vmul.f32 %v2826, %v2842
  %2845 = vset.pattern.permute.xlu0 21
  %2846 = vperm.xlu0 %2845, %v817
  %v2847 = vpop.permute.xlu0 %2846
  %v2849 = vmul.f32 %v2847, %v2844
  %2851 = vrot.lane.b32.xlu0 %v2849, 112
  %v2852 = vpop.permute.xlu0 %2851
  %2854 = vst.msk [vmem:[%s2575] sm:$0x3] %vm901, %v2852
  %2855 = vrot.lane.b32.xlu0 %v2849, 120
  %v2856 = vpop.permute.xlu0 %2855
  %2858 = vst.msk [vmem:[%s2570 - $0x2] sm:$0xc] %vm907, %v2856
  %v2859 = vsub.f32 %v2844, %v2768
  %v2860 = vmul.f32 %v2847, %v2859
  %v2861 = vadd.f32 %v2768, %v2860
  %v2862 = vsub.f32 %v2838, %v2771
  %v2863 = vmul.f32 %v2847, %v2862
  %v2864 = vadd.f32 %v2771, %v2863
  %2866 = vrot.lane.b32.xlu0 %v811, 96
  %v2867 = vpop.permute.xlu0 %2866
  %v2869 = vsel %vm823, %v2327, %v2867
  %2871 = vrot.lane.b32.xlu0 %v2861, 112
  %v2872 = vpop.permute.xlu0 %2871
  %v2873 = vsel %vm253, %v2872, 0
  %2875 = vmatpush.msra.mxu0 0.0
  %2876 = vmatpush.msra.mxu0 0.0
  %2877 = vmatpush.msra.mxu0 0.0
  %2878 = vmatpush.msra.mxu0 0.0
  %2879 = vmatpush.msra.mxu0 0.0
  %2880 = vmatpush.msra.mxu0 0.0
  %2881 = vmatpush.msra.mxu0 0.0
  %2882 = vmatpush.msra.mxu0 0.0
  %2883 = vmatpush.msra.mxu0 0.0
  %2884 = vmatpush.msra.mxu0 0.0
  %2885 = vmatpush.msra.mxu0 0.0
  %2886 = vmatpush.msra.mxu0 0.0
  %2887 = vmatpush.msra.mxu0 0.0
  %2888 = vmatpush.msra.mxu0 0.0
  %2889 = vmatpush.msra.mxu0 0.0
  %2890 = vmatpush.msra.mxu0 %v816
  %2891 = vmatmul.f32.gmra.mxu0 %v2873
  %v2892 = vpop.f32.mrf.mxu0
  %v2893 = vadd.f32 0.0, %v2892
  %2894 = vdwg.mxu0
  %2896 = vrot.lane.b32.xlu0 %v2893, 96
  %v2897 = vpop.permute.xlu0 %2896
  %v2899 = vsel %vm823, %v2893, %v2897
  %v2900 = vadd.f32 %v2869, %v2899
  %v2901 = vxor.u32 %v2900, 2147483648
  %v2902 = vmul.f32 %v2901, 1.442695
  %v2903 = vpow.pop %v2902
  %v2904 = vadd.f32 %v2903, 1.0
  %v2905 = vrcp.pop %v2904
  %v2906 = vmul.f32 %v2904, %v2905
  %v2907 = vsub.f32 1.0, %v2906
  %v2908 = vmul.f32 %v2905, %v2907
  %v2909 = vadd.f32 %v2905, %v2908
  %vm2910 = vweird.f32 %v2904
  %vm2911 = vweird.f32 %v2905
  %vm2912 = vmor %vm2910, %vm2911
  %v2913 = vsel %vm2912, %v2905, %v2909
  %v2914 = vand.u32 2147483647, %v2904
  %vm2915 = vcmp.eq.f32.partialorder %v2914, 8.507059e+37
  %v2916 = vand.u32 %v2904, 2147483648
  %v2917 = vor.u32 1.1754944e-38, %v2916
  %v2918 = vsel %vm2915, %v2917, %v2913
  %v2919 = vmul.f32 1.0, %v2918
  %v2920 = vtanh.pop %v2900
  %v2921 = vmul.f32 %v2919, %v2864
  %2923 = vrot.lane.b32.xlu0 %v2920, 104
  %v2924 = vpop.permute.xlu0 %2923
  %v2926 = vmul.f32 %v2919, %v2924
  %2928 = vrot.lane.b32.xlu0 %v2926, 8
  %v2929 = vpop.permute.xlu0 %2928
  %v2931 = vadd.f32 %v2921, %v2929
  %v2932 = vtanh.pop %v2931
  %2934 = vrot.lane.b32.xlu0 %v2932, 8
  %v2935 = vpop.permute.xlu0 %2934
  %v2937 = vmul.f32 %v2919, %v2935
  %2938 = vset.pattern.permute.xlu0 22
  %2939 = vperm.xlu0 %2938, %v817
  %v2940 = vpop.permute.xlu0 %2939
  %v2942 = vmul.f32 %v2940, %v2937
  %2944 = vrot.lane.b32.xlu0 %v2942, 112
  %v2945 = vpop.permute.xlu0 %2944
  %2947 = vst.msk [vmem:[%s2479] sm:$0x3] %vm901, %v2945
  %2948 = vrot.lane.b32.xlu0 %v2942, 120
  %v2949 = vpop.permute.xlu0 %2948
  %2951 = vst.msk [vmem:[%s2474 - $0x2] sm:$0xc] %vm907, %v2949
  %v2952 = vsub.f32 %v2937, %v2861
  %v2953 = vmul.f32 %v2940, %v2952
  %v2954 = vadd.f32 %v2861, %v2953
  %v2955 = vsub.f32 %v2931, %v2864
  %v2956 = vmul.f32 %v2940, %v2955
  %v2957 = vadd.f32 %v2864, %v2956
  %2959 = vrot.lane.b32.xlu0 %v2583, 96
  %v2960 = vpop.permute.xlu0 %2959
  %v2962 = vsel %vm823, %v2585, %v2960
  %2964 = vrot.lane.b32.xlu0 %v2954, 112
  %v2965 = vpop.permute.xlu0 %2964
  %v2966 = vsel %vm253, %v2965, 0
  %2968 = vmatpush.msra.mxu0 0.0
  %2969 = vmatpush.msra.mxu0 0.0
  %2970 = vmatpush.msra.mxu0 0.0
  %2971 = vmatpush.msra.mxu0 0.0
  %2972 = vmatpush.msra.mxu0 0.0
  %2973 = vmatpush.msra.mxu0 0.0
  %2974 = vmatpush.msra.mxu0 0.0
  %2975 = vmatpush.msra.mxu0 0.0
  %2976 = vmatpush.msra.mxu0 0.0
  %2977 = vmatpush.msra.mxu0 0.0
  %2978 = vmatpush.msra.mxu0 0.0
  %2979 = vmatpush.msra.mxu0 0.0
  %2980 = vmatpush.msra.mxu0 0.0
  %2981 = vmatpush.msra.mxu0 0.0
  %2982 = vmatpush.msra.mxu0 0.0
  %2983 = vmatpush.msra.mxu0 %v816
  %2984 = vmatmul.f32.gmra.mxu0 %v2966
  %v2985 = vpop.f32.mrf.mxu0
  %v2986 = vadd.f32 0.0, %v2985
  %2987 = vdwg.mxu0
  %2989 = vrot.lane.b32.xlu0 %v2986, 96
  %v2990 = vpop.permute.xlu0 %2989
  %v2992 = vsel %vm823, %v2986, %v2990
  %v2993 = vadd.f32 %v2962, %v2992
  %v2994 = vxor.u32 %v2993, 2147483648
  %v2995 = vmul.f32 %v2994, 1.442695
  %v2996 = vpow.pop %v2995
  %v2997 = vadd.f32 %v2996, 1.0
  %v2998 = vrcp.pop %v2997
  %v2999 = vmul.f32 %v2997, %v2998
  %v3000 = vsub.f32 1.0, %v2999
  %v3001 = vmul.f32 %v2998, %v3000
  %v3002 = vadd.f32 %v2998, %v3001
  %vm3003 = vweird.f32 %v2997
  %vm3004 = vweird.f32 %v2998
  %vm3005 = vmor %vm3003, %vm3004
  %v3006 = vsel %vm3005, %v2998, %v3002
  %v3007 = vand.u32 2147483647, %v2997
  %vm3008 = vcmp.eq.f32.partialorder %v3007, 8.507059e+37
  %v3009 = vand.u32 %v2997, 2147483648
  %v3010 = vor.u32 1.1754944e-38, %v3009
  %v3011 = vsel %vm3008, %v3010, %v3006
  %v3012 = vmul.f32 1.0, %v3011
  %v3013 = vtanh.pop %v2993
  %v3014 = vmul.f32 %v3012, %v2957
  %3016 = vrot.lane.b32.xlu0 %v3013, 104
  %v3017 = vpop.permute.xlu0 %3016
  %v3019 = vmul.f32 %v3012, %v3017
  %3021 = vrot.lane.b32.xlu0 %v3019, 8
  %v3022 = vpop.permute.xlu0 %3021
  %v3024 = vadd.f32 %v3014, %v3022
  %v3025 = vtanh.pop %v3024
  %3027 = vrot.lane.b32.xlu0 %v3025, 8
  %v3028 = vpop.permute.xlu0 %3027
  %v3030 = vmul.f32 %v3012, %v3028
  %3031 = vset.pattern.permute.xlu0 23
  %3032 = vperm.xlu0 %3031, %v817
  %v3033 = vpop.permute.xlu0 %3032
  %v3035 = vmul.f32 %v3033, %v3030
  %3037 = vrot.lane.b32.xlu0 %v3035, 112
  %v3038 = vpop.permute.xlu0 %3037
  %3040 = vst.msk [vmem:[%s2384] sm:$0x3] %vm901, %v3038
  %3041 = vrot.lane.b32.xlu0 %v3035, 120
  %v3042 = vpop.permute.xlu0 %3041
  %3044 = vst.msk [vmem:[%s2379 - $0x2] sm:$0xc] %vm907, %v3042
  %v3045 = vld [vmem:[#allocation2] sm:$0x3]
  %v3046 = vld [vmem:[#allocation2 + $0x2] sm:$0x3]
  %v3047 = vld [vmem:[#allocation2 + $0x4] sm:$0x3]
  %v3048 = vld [vmem:[#allocation2 + $0x6] sm:$0x3]
  %v3049 = vld [vmem:[#allocation2 + $0x8] sm:$0x3]
  %v3050 = vld [vmem:[#allocation2 + $0xa] sm:$0x3]
  %v3051 = vld [vmem:[#allocation2 + $0xc] sm:$0x3]
  %v3052 = vld [vmem:[#allocation2 + $0xe] sm:$0x3]
  %v3053 = vld [vmem:[#allocation2 + $0x10] sm:$0x3]
  %v3054 = vld [vmem:[#allocation2 + $0x12] sm:$0x3]
  %v3055 = vld [vmem:[#allocation2 + $0x14] sm:$0x3]
  %v3056 = vld [vmem:[#allocation2 + $0x16] sm:$0x3]
  %v3057 = vld [vmem:[#allocation2 + $0x18] sm:$0x3]
  %v3058 = vld [vmem:[#allocation2 + $0x1a] sm:$0x3]
  %v3059 = vld [vmem:[#allocation2 + $0x1c] sm:$0x3]
  %v3060 = vld [vmem:[#allocation2 + $0x1e] sm:$0x3]
  %v3061 = vld [vmem:[#allocation2 + $0x20] sm:$0x3]
  %v3062 = vld [vmem:[#allocation2 + $0x22] sm:$0x3]
  %v3063 = vld [vmem:[#allocation2 + $0x24] sm:$0x3]
  %v3064 = vld [vmem:[#allocation2 + $0x26] sm:$0x3]
  %v3065 = vld [vmem:[#allocation2 + $0x28] sm:$0x3]
  %v3066 = vld [vmem:[#allocation2 + $0x2a] sm:$0x3]
  %v3067 = vld [vmem:[#allocation2 + $0x2c] sm:$0x3]
  %v3068 = vld [vmem:[#allocation2 + $0x2e] sm:$0x3]
  %v3085 = vrot.slane %v3045, 1
  %v3086 = vrot.slane %v3046, 1
  %v3087 = vrot.slane %v3047, 1
  %v3088 = vrot.slane %v3048, 1
  %v3089 = vrot.slane %v3049, 1
  %v3090 = vrot.slane %v3050, 1
  %v3091 = vrot.slane %v3051, 1
  %v3092 = vrot.slane %v3052, 1
  %v3093 = vrot.slane %v3053, 1
  %v3094 = vrot.slane %v3054, 1
  %v3095 = vrot.slane %v3055, 1
  %v3096 = vrot.slane %v3056, 1
  %v3097 = vrot.slane %v3057, 1
  %v3098 = vrot.slane %v3058, 1
  %v3099 = vrot.slane %v3059, 1
  %v3100 = vrot.slane %v3060, 1
  %v3125 = vrot.slane %v3061, 1
  %v3126 = vrot.slane %v3062, 1
  %v3127 = vrot.slane %v3063, 1
  %v3128 = vrot.slane %v3064, 1
  %v3129 = vrot.slane %v3065, 1
  %v3130 = vrot.slane %v3066, 1
  %v3131 = vrot.slane %v3067, 1
  %v3132 = vrot.slane %v3068, 1
  %v3141 = vld [vmem:[%s2] sm:$0xff]
  %v3142 = vld [vmem:[%s2 + $0x8] sm:$0xff]
  %v3143 = vld [vmem:[%s2 + $0x10] sm:$0xff]
  %v3144 = vld [vmem:[%s2 + $0x18] sm:$0xff]
  %v3145 = vld [vmem:[%s3] sm:$0x1]
  %v3146 = vld [vmem:[%s3 + $0x1] sm:$0x1]
  %v3147 = vsub.f32 1.0, %v3141
  %v3148 = vsub.f32 1.0, %v3142
  %v3149 = vsub.f32 1.0, %v3143
  %v3150 = vsub.f32 1.0, %v3144
  %v3151 = vsub.f32 1.0, %v3145
  %v3152 = vsub.f32 1.0, %v3146
  %v3153 = vld [vmem:[%s13] sm:$0xf]
  %v3154 = vperm.slane %v3153, 0
  %v3155 = vmul.f32 %v3045, %v3154
  %v3156 = vmul.f32 %v3046, %v3154
  %v3157 = vmul.f32 %v3047, %v3154
  %v3158 = vmul.f32 %v3048, %v3154
  %v3159 = vmul.f32 %v3049, %v3154
  %v3160 = vmul.f32 %v3050, %v3154
  %v3161 = vmul.f32 %v3051, %v3154
  %v3162 = vmul.f32 %v3052, %v3154
  %v3163 = vmul.f32 %v3053, %v3154
  %v3164 = vmul.f32 %v3054, %v3154
  %v3165 = vmul.f32 %v3055, %v3154
  %v3166 = vmul.f32 %v3056, %v3154
  %v3167 = vmul.f32 %v3057, %v3154
  %v3168 = vmul.f32 %v3058, %v3154
  %v3169 = vmul.f32 %v3059, %v3154
  %v3170 = vmul.f32 %v3060, %v3154
  %v3171 = vmul.f32 %v3085, %v3154
  %v3172 = vmul.f32 %v3086, %v3154
  %v3173 = vmul.f32 %v3087, %v3154
  %v3174 = vmul.f32 %v3088, %v3154
  %v3175 = vmul.f32 %v3089, %v3154
  %v3176 = vmul.f32 %v3090, %v3154
  %v3177 = vmul.f32 %v3091, %v3154
  %v3178 = vmul.f32 %v3092, %v3154
  %v3179 = vmul.f32 %v3093, %v3154
  %v3180 = vmul.f32 %v3094, %v3154
  %v3181 = vmul.f32 %v3095, %v3154
  %v3182 = vmul.f32 %v3096, %v3154
  %v3183 = vmul.f32 %v3097, %v3154
  %v3184 = vmul.f32 %v3098, %v3154
  %v3185 = vmul.f32 %v3099, %v3154
  %v3186 = vmul.f32 %v3100, %v3154
  %v3219 = vrot.slane %v3156, 7
  %vm3220 = vcmask 1041409
  %v3221 = vsel %vm3220, %v3219, %v3155
  %v3222 = vrot.slane %v3157, 6
  %vm3223 = vcmask 1042434
  %v3224 = vsel %vm3223, %v3222, %v3221
  %v3225 = vrot.slane %v3158, 5
  %vm3226 = vcmask 1043459
  %v3227 = vsel %vm3226, %v3225, %v3224
  %v3228 = vrot.slane %v3159, 4
  %vm3229 = vcmask 1044484
  %v3230 = vsel %vm3229, %v3228, %v3227
  %v3231 = vrot.slane %v3160, 3
  %vm3232 = vcmask 1045509
  %v3233 = vsel %vm3232, %v3231, %v3230
  %v3234 = vrot.slane %v3161, 2
  %vm3235 = vcmask 1046534
  %v3236 = vsel %vm3235, %v3234, %v3233
  %v3237 = vrot.slane %v3162, 1
  %vm3238 = vcmask 1047559
  %v3239 = vsel %vm3238, %v3237, %v3236
  %v3240 = vrot.slane %v3164, 7
  %v3241 = vsel %vm3220, %v3240, %v3163
  %v3242 = vrot.slane %v3165, 6
  %v3243 = vsel %vm3223, %v3242, %v3241
  %v3244 = vrot.slane %v3166, 5
  %v3245 = vsel %vm3226, %v3244, %v3243
  %v3246 = vrot.slane %v3167, 4
  %v3247 = vsel %vm3229, %v3246, %v3245
  %v3248 = vrot.slane %v3168, 3
  %v3249 = vsel %vm3232, %v3248, %v3247
  %v3250 = vrot.slane %v3169, 2
  %v3251 = vsel %vm3235, %v3250, %v3249
  %v3252 = vrot.slane %v3170, 1
  %v3253 = vsel %vm3238, %v3252, %v3251
  %v3254 = vrot.slane %v3172, 7
  %v3255 = vsel %vm3220, %v3254, %v3171
  %v3256 = vrot.slane %v3173, 6
  %v3257 = vsel %vm3223, %v3256, %v3255
  %v3258 = vrot.slane %v3174, 5
  %v3259 = vsel %vm3226, %v3258, %v3257
  %v3260 = vrot.slane %v3175, 4
  %v3261 = vsel %vm3229, %v3260, %v3259
  %v3262 = vrot.slane %v3176, 3
  %v3263 = vsel %vm3232, %v3262, %v3261
  %v3264 = vrot.slane %v3177, 2
  %v3265 = vsel %vm3235, %v3264, %v3263
  %v3266 = vrot.slane %v3178, 1
  %v3267 = vsel %vm3238, %v3266, %v3265
  %v3268 = vrot.slane %v3180, 7
  %v3269 = vsel %vm3220, %v3268, %v3179
  %v3270 = vrot.slane %v3181, 6
  %v3271 = vsel %vm3223, %v3270, %v3269
  %v3272 = vrot.slane %v3182, 5
  %v3273 = vsel %vm3226, %v3272, %v3271
  %v3274 = vrot.slane %v3183, 4
  %v3275 = vsel %vm3229, %v3274, %v3273
  %v3276 = vrot.slane %v3184, 3
  %v3277 = vsel %vm3232, %v3276, %v3275
  %v3278 = vrot.slane %v3185, 2
  %v3279 = vsel %vm3235, %v3278, %v3277
  %v3280 = vrot.slane %v3186, 1
  %v3281 = vsel %vm3238, %v3280, %v3279
  %v3286 = vsel %vm266, %v3239, 0.0
  %3287 = vadd.xlane.f32.xlu0 %v3286
  %v3288 = vpop.xlane.xlu0 %3287
  %v3289 = vsel %vm266, %v3253, 0.0
  %3290 = vadd.xlane.f32.xlu0 %v3289
  %v3291 = vpop.xlane.xlu0 %3290
  %v3292 = vsel %vm266, %v3267, 0.0
  %3293 = vadd.xlane.f32.xlu0 %v3292
  %v3294 = vpop.xlane.xlu0 %3293
  %v3295 = vsel %vm266, %v3281, 0.0
  %3296 = vadd.xlane.f32.xlu0 %v3295
  %v3297 = vpop.xlane.xlu0 %3296
  %v3298 = vperm.slane %v3153, 1
  %v3299 = vmul.f32 %v3061, %v3298
  %v3300 = vmul.f32 %v3062, %v3298
  %v3301 = vmul.f32 %v3063, %v3298
  %v3302 = vmul.f32 %v3064, %v3298
  %v3303 = vmul.f32 %v3065, %v3298
  %v3304 = vmul.f32 %v3066, %v3298
  %v3305 = vmul.f32 %v3067, %v3298
  %v3306 = vmul.f32 %v3068, %v3298
  %v3307 = vmul.f32 %v3125, %v3298
  %v3308 = vmul.f32 %v3126, %v3298
  %v3309 = vmul.f32 %v3127, %v3298
  %v3310 = vmul.f32 %v3128, %v3298
  %v3311 = vmul.f32 %v3129, %v3298
  %v3312 = vmul.f32 %v3130, %v3298
  %v3313 = vmul.f32 %v3131, %v3298
  %v3314 = vmul.f32 %v3132, %v3298
  %v3331 = vrot.slane %v3300, 7
  %v3332 = vsel %vm3220, %v3331, %v3299
  %v3333 = vrot.slane %v3301, 6
  %v3334 = vsel %vm3223, %v3333, %v3332
  %v3335 = vrot.slane %v3302, 5
  %v3336 = vsel %vm3226, %v3335, %v3334
  %v3337 = vrot.slane %v3303, 4
  %v3338 = vsel %vm3229, %v3337, %v3336
  %v3339 = vrot.slane %v3304, 3
  %v3340 = vsel %vm3232, %v3339, %v3338
  %v3341 = vrot.slane %v3305, 2
  %v3342 = vsel %vm3235, %v3341, %v3340
  %v3343 = vrot.slane %v3306, 1
  %v3344 = vsel %vm3238, %v3343, %v3342
  %v3345 = vrot.slane %v3308, 7
  %v3346 = vsel %vm3220, %v3345, %v3307
  %v3347 = vrot.slane %v3309, 6
  %v3348 = vsel %vm3223, %v3347, %v3346
  %v3349 = vrot.slane %v3310, 5
  %v3350 = vsel %vm3226, %v3349, %v3348
  %v3351 = vrot.slane %v3311, 4
  %v3352 = vsel %vm3229, %v3351, %v3350
  %v3353 = vrot.slane %v3312, 3
  %v3354 = vsel %vm3232, %v3353, %v3352
  %v3355 = vrot.slane %v3313, 2
  %v3356 = vsel %vm3235, %v3355, %v3354
  %v3357 = vrot.slane %v3314, 1
  %v3358 = vsel %vm3238, %v3357, %v3356
  %v3361 = vsel %vm266, %v3344, 0.0
  %3362 = vadd.xlane.f32.xlu0 %v3361
  %v3363 = vpop.xlane.xlu0 %3362
  %v3364 = vsel %vm266, %v3358, 0.0
  %3365 = vadd.xlane.f32.xlu0 %v3364
  %v3366 = vpop.xlane.xlu0 %3365
  %v3367 = vperm.slane %v3153, 3
  %v3368 = vadd.f32 %v3363, %v3367
  %v3369 = vadd.f32 %v3366, %v3367
  %v3370 = vperm.slane %v3153, 2
  %v3371 = vmul.f32 %v3045, %v3370
  %v3372 = vmul.f32 %v3046, %v3370
  %v3373 = vmul.f32 %v3047, %v3370
  %v3374 = vmul.f32 %v3048, %v3370
  %v3375 = vmul.f32 %v3049, %v3370
  %v3376 = vmul.f32 %v3050, %v3370
  %v3377 = vmul.f32 %v3051, %v3370
  %v3378 = vmul.f32 %v3052, %v3370
  %v3379 = vmul.f32 %v3053, %v3370
  %v3380 = vmul.f32 %v3054, %v3370
  %v3381 = vmul.f32 %v3055, %v3370
  %v3382 = vmul.f32 %v3056, %v3370
  %v3383 = vmul.f32 %v3057, %v3370
  %v3384 = vmul.f32 %v3058, %v3370
  %v3385 = vmul.f32 %v3059, %v3370
  %v3386 = vmul.f32 %v3060, %v3370
  %v3387 = vmul.f32 %v3085, %v3370
  %v3388 = vmul.f32 %v3086, %v3370
  %v3389 = vmul.f32 %v3087, %v3370
  %v3390 = vmul.f32 %v3088, %v3370
  %v3391 = vmul.f32 %v3089, %v3370
  %v3392 = vmul.f32 %v3090, %v3370
  %v3393 = vmul.f32 %v3091, %v3370
  %v3394 = vmul.f32 %v3092, %v3370
  %v3395 = vmul.f32 %v3093, %v3370
  %v3396 = vmul.f32 %v3094, %v3370
  %v3397 = vmul.f32 %v3095, %v3370
  %v3398 = vmul.f32 %v3096, %v3370
  %v3399 = vmul.f32 %v3097, %v3370
  %v3400 = vmul.f32 %v3098, %v3370
  %v3401 = vmul.f32 %v3099, %v3370
  %v3402 = vmul.f32 %v3100, %v3370
  %v3435 = vrot.slane %v3372, 7
  %v3436 = vsel %vm3220, %v3435, %v3371
  %v3437 = vrot.slane %v3373, 6
  %v3438 = vsel %vm3223, %v3437, %v3436
  %v3439 = vrot.slane %v3374, 5
  %v3440 = vsel %vm3226, %v3439, %v3438
  %v3441 = vrot.slane %v3375, 4
  %v3442 = vsel %vm3229, %v3441, %v3440
  %v3443 = vrot.slane %v3376, 3
  %v3444 = vsel %vm3232, %v3443, %v3442
  %v3445 = vrot.slane %v3377, 2
  %v3446 = vsel %vm3235, %v3445, %v3444
  %v3447 = vrot.slane %v3378, 1
  %v3448 = vsel %vm3238, %v3447, %v3446
  %v3449 = vrot.slane %v3380, 7
  %v3450 = vsel %vm3220, %v3449, %v3379
  %v3451 = vrot.slane %v3381, 6
  %v3452 = vsel %vm3223, %v3451, %v3450
  %v3453 = vrot.slane %v3382, 5
  %v3454 = vsel %vm3226, %v3453, %v3452
  %v3455 = vrot.slane %v3383, 4
  %v3456 = vsel %vm3229, %v3455, %v3454
  %v3457 = vrot.slane %v3384, 3
  %v3458 = vsel %vm3232, %v3457, %v3456
  %v3459 = vrot.slane %v3385, 2
  %v3460 = vsel %vm3235, %v3459, %v3458
  %v3461 = vrot.slane %v3386, 1
  %v3462 = vsel %vm3238, %v3461, %v3460
  %v3463 = vrot.slane %v3388, 7
  %v3464 = vsel %vm3220, %v3463, %v3387
  %v3465 = vrot.slane %v3389, 6
  %v3466 = vsel %vm3223, %v3465, %v3464
  %v3467 = vrot.slane %v3390, 5
  %v3468 = vsel %vm3226, %v3467, %v3466
  %v3469 = vrot.slane %v3391, 4
  %v3470 = vsel %vm3229, %v3469, %v3468
  %v3471 = vrot.slane %v3392, 3
  %v3472 = vsel %vm3232, %v3471, %v3470
  %v3473 = vrot.slane %v3393, 2
  %v3474 = vsel %vm3235, %v3473, %v3472
  %v3475 = vrot.slane %v3394, 1
  %v3476 = vsel %vm3238, %v3475, %v3474
  %v3477 = vrot.slane %v3396, 7
  %v3478 = vsel %vm3220, %v3477, %v3395
  %v3479 = vrot.slane %v3397, 6
  %v3480 = vsel %vm3223, %v3479, %v3478
  %v3481 = vrot.slane %v3398, 5
  %v3482 = vsel %vm3226, %v3481, %v3480
  %v3483 = vrot.slane %v3399, 4
  %v3484 = vsel %vm3229, %v3483, %v3482
  %v3485 = vrot.slane %v3400, 3
  %v3486 = vsel %vm3232, %v3485, %v3484
  %v3487 = vrot.slane %v3401, 2
  %v3488 = vsel %vm3235, %v3487, %v3486
  %v3489 = vrot.slane %v3402, 1
  %v3490 = vsel %vm3238, %v3489, %v3488
  %v3495 = vsel %vm266, %v3448, %v3288
  %v3496 = vsel %vm266, %v3462, %v3291
  %v3497 = vsel %vm266, %v3476, %v3294
  %v3498 = vsel %vm266, %v3490, %v3297
  %vm3499 = vcmask 138240
  %v3500 = vsel %vm3499, %v3495, 1.0
  %v3501 = vsel %vm3499, %v3496, 1.0
  %v3502 = vsel %vm3499, %v3497, 1.0
  %v3503 = vsel %vm3499, %v3498, 1.0
  %v3504 = vrot.slane %v3062, 7
  %v3505 = vsel %vm3220, %v3504, %v3061
  %v3506 = vrot.slane %v3063, 6
  %v3507 = vsel %vm3223, %v3506, %v3505
  %v3508 = vrot.slane %v3064, 5
  %v3509 = vsel %vm3226, %v3508, %v3507
  %v3510 = vrot.slane %v3065, 4
  %v3511 = vsel %vm3229, %v3510, %v3509
  %v3512 = vrot.slane %v3066, 3
  %v3513 = vsel %vm3232, %v3512, %v3511
  %v3514 = vrot.slane %v3067, 2
  %v3515 = vsel %vm3235, %v3514, %v3513
  %v3516 = vsel %vm3238, %v3132, %v3515
  %v3517 = vrot.slane %v3126, 7
  %v3518 = vsel %vm3220, %v3517, %v3125
  %v3519 = vrot.slane %v3127, 6
  %v3520 = vsel %vm3223, %v3519, %v3518
  %v3521 = vrot.slane %v3128, 5
  %v3522 = vsel %vm3226, %v3521, %v3520
  %v3523 = vrot.slane %v3129, 4
  %v3524 = vsel %vm3229, %v3523, %v3522
  %v3525 = vrot.slane %v3130, 3
  %v3526 = vsel %vm3232, %v3525, %v3524
  %v3527 = vrot.slane %v3131, 2
  %v3528 = vsel %vm3235, %v3527, %v3526
  %v3529 = vrot.slane %v3132, 1
  %v3530 = vsel %vm3238, %v3529, %v3528
  %3535 = vrot.lane.b32.xlu0 %v3368, 17
  %v3536 = vpop.permute.xlu0 %3535
  %3537 = vrot.lane.b32.xlu0 %v3369, 17
  %v3538 = vpop.permute.xlu0 %3537
  %v3541 = vsel %vm266, %v3516, 1.0
  %v3542 = vsel %vm266, %v3530, 1.0
  %v3543 = vsel %vm3499, %v3541, %v3536
  %v3544 = vsel %vm3499, %v3542, %v3538
  %vm3545 = vcmask 146432
  %v3547 = vsel %vm3545, %v3500, 0
  %v3550 = vsel %vm3545, %v3501, 0
  %v3553 = vsel %vm3545, %v3543, 0
  %3555 = vmatpush.xpose.msra.mxu0 0.0
  %3556 = vmatpush.xpose.msra.mxu0 0.0
  %3557 = vmatpush.xpose.msra.mxu0 0.0
  %3558 = vmatpush.xpose.msra.mxu0 0.0
  %3559 = vmatpush.xpose.msra.mxu0 0.0
  %3560 = vmatpush.xpose.msra.mxu0 0.0
  %3561 = vmatpush.xpose.msra.mxu0 0.0
  %3562 = vmatpush.xpose.msra.mxu0 0.0
  %3563 = vmatpush.xpose.msra.mxu0 0.0
  %3564 = vmatpush.xpose.msra.mxu0 0.0
  %3565 = vmatpush.xpose.msra.mxu0 0.0
  %3566 = vmatpush.xpose.msra.mxu0 0.0
  %3567 = vmatpush.xpose.msra.mxu0 0.0
  %3568 = vmatpush.xpose.msra.mxu0 0.0
  %3569 = vmatpush.xpose.msra.mxu0 0.0
  %3570 = vmatpush.xpose.msra.mxu0 %v3553
  %3571 = vmatmul.f32.gmra.mxu0 %v3547
  %v3572 = vpop.f32.mrf.mxu0
  %v3573 = vadd.f32 0.0, %v3572
  %3574 = vmatmul.f32.gmra.mxu0 %v3550
  %v3575 = vpop.f32.mrf.mxu0
  %v3576 = vadd.f32 0.0, %v3575
  %3577 = vdwg.mxu0
  %v3579 = vsel %vm3545, %v3502, 0
  %v3582 = vsel %vm3545, %v3503, 0
  %v3585 = vsel %vm3545, %v3544, 0
  %3587 = vmatpush.xpose.msra.mxu0 0.0
  %3588 = vmatpush.xpose.msra.mxu0 0.0
  %3589 = vmatpush.xpose.msra.mxu0 0.0
  %3590 = vmatpush.xpose.msra.mxu0 0.0
  %3591 = vmatpush.xpose.msra.mxu0 0.0
  %3592 = vmatpush.xpose.msra.mxu0 0.0
  %3593 = vmatpush.xpose.msra.mxu0 0.0
  %3594 = vmatpush.xpose.msra.mxu0 0.0
  %3595 = vmatpush.xpose.msra.mxu0 0.0
  %3596 = vmatpush.xpose.msra.mxu0 0.0
  %3597 = vmatpush.xpose.msra.mxu0 0.0
  %3598 = vmatpush.xpose.msra.mxu0 0.0
  %3599 = vmatpush.xpose.msra.mxu0 0.0
  %3600 = vmatpush.xpose.msra.mxu0 0.0
  %3601 = vmatpush.xpose.msra.mxu0 0.0
  %3602 = vmatpush.xpose.msra.mxu0 %v3585
  %3603 = vmatmul.f32.gmra.mxu0 %v3579
  %v3604 = vpop.f32.mrf.mxu0
  %v3605 = vadd.f32 0.0, %v3604
  %3606 = vmatmul.f32.gmra.mxu0 %v3582
  %v3607 = vpop.f32.mrf.mxu0
  %v3608 = vadd.f32 0.0, %v3607
  %3609 = vdwg.mxu0
  %v3612 = vperm.slane %v3145, 0
  %v3613 = vperm.slane %v3146, 0
  %v3616 = vmul.f32 %v3612, %v3573
  %v3617 = vmul.f32 %v3612, %v3576
  %v3618 = vmul.f32 %v3613, %v3605
  %v3619 = vmul.f32 %v3613, %v3608
  %v3620 = vmul.f32 %v3151, -1e+30
  %v3621 = vmul.f32 %v3152, -1e+30
  %v3624 = vperm.slane %v3620, 0
  %v3625 = vperm.slane %v3621, 0
  %v3628 = vadd.f32 %v3616, %v3624
  %v3629 = vadd.f32 %v3617, %v3624
  %v3630 = vadd.f32 %v3618, %v3625
  %v3631 = vadd.f32 %v3619, %v3625
  %v3632 = vsel %vm253, %v3628, -inf
  %3633 = vmax.xlane.f32.xlu0 %v3632
  %v3634 = vpop.xlane.xlu0 %3633
  %v3635 = vsel %vm253, %v3629, -inf
  %3636 = vmax.xlane.f32.xlu0 %v3635
  %v3637 = vpop.xlane.xlu0 %3636
  %v3638 = vsel %vm253, %v3630, -inf
  %3639 = vmax.xlane.f32.xlu0 %v3638
  %v3640 = vpop.xlane.xlu0 %3639
  %v3641 = vsel %vm253, %v3631, -inf
  %3642 = vmax.xlane.f32.xlu0 %v3641
  %v3643 = vpop.xlane.xlu0 %3642
  %v3644 = vsub.f32 %v3628, %v3634
  %v3645 = vsub.f32 %v3629, %v3637
  %v3646 = vsub.f32 %v3630, %v3640
  %v3647 = vsub.f32 %v3631, %v3643
  %v3648 = vmul.f32 %v3644, 1.442695
  %v3649 = vpow.pop %v3648
  %v3650 = vmul.f32 %v3645, 1.442695
  %v3651 = vpow.pop %v3650
  %v3652 = vmul.f32 %v3646, 1.442695
  %v3653 = vpow.pop %v3652
  %v3654 = vmul.f32 %v3647, 1.442695
  %v3655 = vpow.pop %v3654
  %v3656 = vsel %vm253, %v3649, 0.0
  %3657 = vadd.xlane.f32.xlu0 %v3656
  %v3658 = vpop.xlane.xlu0 %3657
  %v3659 = vsel %vm253, %v3651, 0.0
  %3660 = vadd.xlane.f32.xlu0 %v3659
  %v3661 = vpop.xlane.xlu0 %3660
  %v3662 = vsel %vm253, %v3653, 0.0
  %3663 = vadd.xlane.f32.xlu0 %v3662
  %v3664 = vpop.xlane.xlu0 %3663
  %v3665 = vsel %vm253, %v3655, 0.0
  %3666 = vadd.xlane.f32.xlu0 %v3665
  %v3667 = vpop.xlane.xlu0 %3666
  %v3668 = vrcp.pop %v3658
  %v3669 = vrcp.pop %v3661
  %v3670 = vrcp.pop %v3664
  %v3671 = vrcp.pop %v3667
  %v3672 = vmul.f32 %v3649, %v3668
  %v3673 = vmul.f32 %v3651, %v3669
  %v3674 = vmul.f32 %v3653, %v3670
  %v3675 = vmul.f32 %v3655, %v3671
  %3677 = vset.pattern.permute.xlu0 0
  %3678 = vperm.xlu0 %3677, %v3141
  %v3679 = vpop.permute.xlu0 %3678
  %3682 = vset.pattern.permute.xlu0 0
  %3683 = vperm.xlu0 %3682, %v3142
  %v3684 = vpop.permute.xlu0 %3683
  %3687 = vset.pattern.permute.xlu0 0
  %3688 = vperm.xlu0 %3687, %v3143
  %v3689 = vpop.permute.xlu0 %3688
  %3692 = vset.pattern.permute.xlu0 0
  %3693 = vperm.xlu0 %3692, %v3144
  %v3694 = vpop.permute.xlu0 %3693
  %v3696 = vmul.f32 %v3679, %v3573
  %v3697 = vmul.f32 %v3684, %v3576
  %v3698 = vmul.f32 %v3689, %v3605
  %v3699 = vmul.f32 %v3694, %v3608
  %v3700 = vmul.f32 %v3147, -1e+30
  %v3701 = vmul.f32 %v3148, -1e+30
  %v3702 = vmul.f32 %v3149, -1e+30
  %v3703 = vmul.f32 %v3150, -1e+30
  %3705 = vset.pattern.permute.xlu0 0
  %3706 = vperm.xlu0 %3705, %v3700
  %v3707 = vpop.permute.xlu0 %3706
  %3710 = vset.pattern.permute.xlu0 0
  %3711 = vperm.xlu0 %3710, %v3701
  %v3712 = vpop.permute.xlu0 %3711
  %3715 = vset.pattern.permute.xlu0 0
  %3716 = vperm.xlu0 %3715, %v3702
  %v3717 = vpop.permute.xlu0 %3716
  %3720 = vset.pattern.permute.xlu0 0
  %3721 = vperm.xlu0 %3720, %v3703
  %v3722 = vpop.permute.xlu0 %3721
  %v3724 = vadd.f32 %v3696, %v3707
  %v3725 = vadd.f32 %v3697, %v3712
  %v3726 = vadd.f32 %v3698, %v3717
  %v3727 = vadd.f32 %v3699, %v3722
  %v3728 = vsel %vm253, %v3724, -inf
  %v3729 = vsel %vm253, %v3725, -inf
  %v3730 = vmax.f32 %v3728, %v3729
  %v3731 = vrot.slane %v3730, 4
  %v3732 = vmax.f32 %v3730, %v3731
  %v3733 = vrot.slane %v3732, 2
  %v3734 = vmax.f32 %v3732, %v3733
  %v3735 = vrot.slane %v3734, 1
  %v3736 = vmax.f32 %v3734, %v3735
  %v3737 = vsel %vm253, %v3726, -inf
  %v3738 = vsel %vm253, %v3727, -inf
  %v3739 = vmax.f32 %v3737, %v3738
  %v3740 = vrot.slane %v3739, 4
  %v3741 = vmax.f32 %v3739, %v3740
  %v3742 = vrot.slane %v3741, 2
  %v3743 = vmax.f32 %v3741, %v3742
  %v3744 = vrot.slane %v3743, 1
  %v3745 = vmax.f32 %v3743, %v3744
  %v3746 = vsub.f32 %v3724, %v3736
  %v3747 = vsub.f32 %v3725, %v3736
  %v3748 = vsub.f32 %v3726, %v3745
  %v3749 = vsub.f32 %v3727, %v3745
  %v3750 = vmul.f32 %v3746, 1.442695
  %v3751 = vpow.pop %v3750
  %v3752 = vmul.f32 %v3747, 1.442695
  %v3753 = vpow.pop %v3752
  %v3754 = vmul.f32 %v3748, 1.442695
  %v3755 = vpow.pop %v3754
  %v3756 = vmul.f32 %v3749, 1.442695
  %v3757 = vpow.pop %v3756
  %v3758 = vsel %vm253, %v3751, 0.0
  %v3759 = vsel %vm253, %v3753, 0.0
  %v3760 = vadd.f32 %v3758, %v3759
  %v3761 = vrot.slane %v3760, 4
  %v3762 = vadd.f32 %v3760, %v3761
  %v3763 = vrot.slane %v3762, 2
  %v3764 = vadd.f32 %v3762, %v3763
  %v3765 = vrot.slane %v3764, 1
  %v3766 = vadd.f32 %v3764, %v3765
  %v3767 = vsel %vm253, %v3755, 0.0
  %v3768 = vsel %vm253, %v3757, 0.0
  %v3769 = vadd.f32 %v3767, %v3768
  %v3770 = vrot.slane %v3769, 4
  %v3771 = vadd.f32 %v3769, %v3770
  %v3772 = vrot.slane %v3771, 2
  %v3773 = vadd.f32 %v3771, %v3772
  %v3774 = vrot.slane %v3773, 1
  %v3775 = vadd.f32 %v3773, %v3774
  %v3776 = vrcp.pop %v3766
  %v3777 = vrcp.pop %v3775
  %v3778 = vmul.f32 %v3751, %v3776
  %v3779 = vmul.f32 %v3753, %v3776
  %v3780 = vmul.f32 %v3755, %v3777
  %v3781 = vmul.f32 %v3757, %v3777
  %v3783 = vsel %vm253, %v3672, 0
  %v3786 = vsel %vm253, %v3673, 0
  %3788 = vmatpush.msra.mxu0 0.0
  %3789 = vmatpush.msra.mxu0 0.0
  %3790 = vmatpush.msra.mxu0 0.0
  %3791 = vmatpush.msra.mxu0 0.0
  %3792 = vmatpush.msra.mxu0 0.0
  %3793 = vmatpush.msra.mxu0 0.0
  %3794 = vmatpush.msra.mxu0 0.0
  %3795 = vmatpush.msra.mxu0 0.0
  %3796 = vmatpush.msra.mxu0 0.0
  %3797 = vmatpush.msra.mxu0 0.0
  %3798 = vmatpush.msra.mxu0 0.0
  %3799 = vmatpush.msra.mxu0 0.0
  %3800 = vmatpush.msra.mxu0 0.0
  %3801 = vmatpush.msra.mxu0 0.0
  %3802 = vmatpush.msra.mxu0 0.0
  %3803 = vmatpush.msra.mxu0 %v3516
  %3804 = vmatmul.f32.gmra.mxu0 %v3783
  %v3805 = vpop.f32.mrf.mxu0
  %v3806 = vadd.f32 0.0, %v3805
  %3807 = vmatmul.f32.gmra.mxu0 %v3786
  %v3808 = vpop.f32.mrf.mxu0
  %v3809 = vadd.f32 0.0, %v3808
  %3810 = vdwg.mxu0
  %v3812 = vsel %vm253, %v3674, 0
  %v3815 = vsel %vm253, %v3675, 0
  %3817 = vmatpush.msra.mxu0 0.0
  %3818 = vmatpush.msra.mxu0 0.0
  %3819 = vmatpush.msra.mxu0 0.0
  %3820 = vmatpush.msra.mxu0 0.0
  %3821 = vmatpush.msra.mxu0 0.0
  %3822 = vmatpush.msra.mxu0 0.0
  %3823 = vmatpush.msra.mxu0 0.0
  %3824 = vmatpush.msra.mxu0 0.0
  %3825 = vmatpush.msra.mxu0 0.0
  %3826 = vmatpush.msra.mxu0 0.0
  %3827 = vmatpush.msra.mxu0 0.0
  %3828 = vmatpush.msra.mxu0 0.0
  %3829 = vmatpush.msra.mxu0 0.0
  %3830 = vmatpush.msra.mxu0 0.0
  %3831 = vmatpush.msra.mxu0 0.0
  %3832 = vmatpush.msra.mxu0 %v3530
  %3833 = vmatmul.f32.gmra.mxu0 %v3812
  %v3834 = vpop.f32.mrf.mxu0
  %v3835 = vadd.f32 0.0, %v3834
  %3836 = vmatmul.f32.gmra.mxu0 %v3815
  %v3837 = vpop.f32.mrf.mxu0
  %v3838 = vadd.f32 0.0, %v3837
  %3839 = vdwg.mxu0
  %v3841 = vsel %vm253, %v3778, 0
  %v3844 = vsel %vm253, %v3779, 0
  %3846 = vmatpush.xpose.msra.mxu0 0.0
  %3847 = vmatpush.xpose.msra.mxu0 0.0
  %3848 = vmatpush.xpose.msra.mxu0 0.0
  %3849 = vmatpush.xpose.msra.mxu0 0.0
  %3850 = vmatpush.xpose.msra.mxu0 0.0
  %3851 = vmatpush.xpose.msra.mxu0 0.0
  %3852 = vmatpush.xpose.msra.mxu0 0.0
  %3853 = vmatpush.xpose.msra.mxu0 0.0
  %3854 = vmatpush.xpose.msra.mxu0 0.0
  %3855 = vmatpush.xpose.msra.mxu0 0.0
  %3856 = vmatpush.xpose.msra.mxu0 0.0
  %3857 = vmatpush.xpose.msra.mxu0 0.0
  %3858 = vmatpush.xpose.msra.mxu0 0.0
  %3859 = vmatpush.xpose.msra.mxu0 0.0
  %3860 = vmatpush.xpose.msra.mxu0 %v3844
  %3861 = vmatpush.xpose.msra.mxu0 %v3841
  %3862 = vmatmul.f32.gmra.mxu0 %v3783
  %v3863 = vpop.f32.mrf.mxu0
  %v3864 = vadd.f32 0.0, %v3863
  %3865 = vmatmul.f32.gmra.mxu0 %v3786
  %v3866 = vpop.f32.mrf.mxu0
  %v3867 = vadd.f32 0.0, %v3866
  %3868 = vdwg.mxu0
  %v3870 = vsel %vm253, %v3780, 0
  %v3873 = vsel %vm253, %v3781, 0
  %3875 = vmatpush.xpose.msra.mxu0 0.0
  %3876 = vmatpush.xpose.msra.mxu0 0.0
  %3877 = vmatpush.xpose.msra.mxu0 0.0
  %3878 = vmatpush.xpose.msra.mxu0 0.0
  %3879 = vmatpush.xpose.msra.mxu0 0.0
  %3880 = vmatpush.xpose.msra.mxu0 0.0
  %3881 = vmatpush.xpose.msra.mxu0 0.0
  %3882 = vmatpush.xpose.msra.mxu0 0.0
  %3883 = vmatpush.xpose.msra.mxu0 0.0
  %3884 = vmatpush.xpose.msra.mxu0 0.0
  %3885 = vmatpush.xpose.msra.mxu0 0.0
  %3886 = vmatpush.xpose.msra.mxu0 0.0
  %3887 = vmatpush.xpose.msra.mxu0 0.0
  %3888 = vmatpush.xpose.msra.mxu0 0.0
  %3889 = vmatpush.xpose.msra.mxu0 %v3873
  %3890 = vmatpush.xpose.msra.mxu0 %v3870
  %3891 = vmatmul.f32.gmra.mxu0 %v3812
  %v3892 = vpop.f32.mrf.mxu0
  %v3893 = vadd.f32 0.0, %v3892
  %3894 = vmatmul.f32.gmra.mxu0 %v3815
  %v3895 = vpop.f32.mrf.mxu0
  %v3896 = vadd.f32 0.0, %v3895
  %3897 = vdwg.mxu0
  %v3898 = vrot.slane %v3046, 7
  %v3899 = vsel %vm3220, %v3898, %v3045
  %v3900 = vrot.slane %v3047, 6
  %v3901 = vsel %vm3223, %v3900, %v3899
  %v3902 = vrot.slane %v3048, 5
  %v3903 = vsel %vm3226, %v3902, %v3901
  %v3904 = vrot.slane %v3049, 4
  %v3905 = vsel %vm3229, %v3904, %v3903
  %v3906 = vrot.slane %v3050, 3
  %v3907 = vsel %vm3232, %v3906, %v3905
  %v3908 = vrot.slane %v3051, 2
  %v3909 = vsel %vm3235, %v3908, %v3907
  %v3910 = vsel %vm3238, %v3092, %v3909
  %v3911 = vrot.slane %v3054, 7
  %v3912 = vsel %vm3220, %v3911, %v3053
  %v3913 = vrot.slane %v3055, 6
  %v3914 = vsel %vm3223, %v3913, %v3912
  %v3915 = vrot.slane %v3056, 5
  %v3916 = vsel %vm3226, %v3915, %v3914
  %v3917 = vrot.slane %v3057, 4
  %v3918 = vsel %vm3229, %v3917, %v3916
  %v3919 = vrot.slane %v3058, 3
  %v3920 = vsel %vm3232, %v3919, %v3918
  %v3921 = vrot.slane %v3059, 2
  %v3922 = vsel %vm3235, %v3921, %v3920
  %v3923 = vsel %vm3238, %v3100, %v3922
  %v3927 = vsel %vm266, %v3864, 0
  %v3930 = vsel %vm266, %v3867, 0
  %3932 = vmatpush.msra.mxu0 0.0
  %3933 = vmatpush.msra.mxu0 0.0
  %3934 = vmatpush.msra.mxu0 0.0
  %3935 = vmatpush.msra.mxu0 0.0
  %3936 = vmatpush.msra.mxu0 0.0
  %3937 = vmatpush.msra.mxu0 0.0
  %3938 = vmatpush.msra.mxu0 0.0
  %3939 = vmatpush.msra.mxu0 0.0
  %3940 = vmatpush.msra.mxu0 0.0
  %3941 = vmatpush.msra.mxu0 0.0
  %3942 = vmatpush.msra.mxu0 0.0
  %3943 = vmatpush.msra.mxu0 0.0
  %3944 = vmatpush.msra.mxu0 0.0
  %3945 = vmatpush.msra.mxu0 0.0
  %3946 = vmatpush.msra.mxu0 %v3923
  %3947 = vmatpush.msra.mxu0 %v3910
  %3948 = vmatmul.f32.gmra.mxu0 %v3927
  %v3949 = vpop.f32.mrf.mxu0
  %v3950 = vadd.f32 0.0, %v3949
  %3951 = vmatmul.f32.gmra.mxu0 %v3930
  %v3952 = vpop.f32.mrf.mxu0
  %v3953 = vadd.f32 0.0, %v3952
  %3954 = vdwg.mxu0
  %v3955 = vrot.slane %v3086, 7
  %v3956 = vsel %vm3220, %v3955, %v3085
  %v3957 = vrot.slane %v3087, 6
  %v3958 = vsel %vm3223, %v3957, %v3956
  %v3959 = vrot.slane %v3088, 5
  %v3960 = vsel %vm3226, %v3959, %v3958
  %v3961 = vrot.slane %v3089, 4
  %v3962 = vsel %vm3229, %v3961, %v3960
  %v3963 = vrot.slane %v3090, 3
  %v3964 = vsel %vm3232, %v3963, %v3962
  %v3965 = vrot.slane %v3091, 2
  %v3966 = vsel %vm3235, %v3965, %v3964
  %v3967 = vrot.slane %v3092, 1
  %v3968 = vsel %vm3238, %v3967, %v3966
  %v3969 = vrot.slane %v3094, 7
  %v3970 = vsel %vm3220, %v3969, %v3093
  %v3971 = vrot.slane %v3095, 6
  %v3972 = vsel %vm3223, %v3971, %v3970
  %v3973 = vrot.slane %v3096, 5
  %v3974 = vsel %vm3226, %v3973, %v3972
  %v3975 = vrot.slane %v3097, 4
  %v3976 = vsel %vm3229, %v3975, %v3974
  %v3977 = vrot.slane %v3098, 3
  %v3978 = vsel %vm3232, %v3977, %v3976
  %v3979 = vrot.slane %v3099, 2
  %v3980 = vsel %vm3235, %v3979, %v3978
  %v3981 = vrot.slane %v3100, 1
  %v3982 = vsel %vm3238, %v3981, %v3980
  %v3986 = vsel %vm266, %v3893, 0
  %v3989 = vsel %vm266, %v3896, 0
  %3991 = vmatpush.msra.mxu0 0.0
  %3992 = vmatpush.msra.mxu0 0.0
  %3993 = vmatpush.msra.mxu0 0.0
  %3994 = vmatpush.msra.mxu0 0.0
  %3995 = vmatpush.msra.mxu0 0.0
  %3996 = vmatpush.msra.mxu0 0.0
  %3997 = vmatpush.msra.mxu0 0.0
  %3998 = vmatpush.msra.mxu0 0.0
  %3999 = vmatpush.msra.mxu0 0.0
  %4000 = vmatpush.msra.mxu0 0.0
  %4001 = vmatpush.msra.mxu0 0.0
  %4002 = vmatpush.msra.mxu0 0.0
  %4003 = vmatpush.msra.mxu0 0.0
  %4004 = vmatpush.msra.mxu0 0.0
  %4005 = vmatpush.msra.mxu0 %v3982
  %4006 = vmatpush.msra.mxu0 %v3968
  %4007 = vmatmul.f32.gmra.mxu0 %v3986
  %v4008 = vpop.f32.mrf.mxu0
  %v4009 = vadd.f32 0.0, %v4008
  %4010 = vmatmul.f32.gmra.mxu0 %v3989
  %v4011 = vpop.f32.mrf.mxu0
  %v4012 = vadd.f32 0.0, %v4011
  %4013 = vdwg.mxu0
  %v4018 = vrot.slane %v3806, 1
  %v4019 = vrot.slane %v3806, 2
  %v4020 = vrot.slane %v3806, 3
  %v4021 = vrot.slane %v3806, 4
  %v4022 = vrot.slane %v3806, 5
  %v4023 = vrot.slane %v3806, 6
  %v4024 = vrot.slane %v3806, 7
  %v4025 = vrot.slane %v3809, 1
  %v4026 = vrot.slane %v3809, 2
  %v4027 = vrot.slane %v3809, 3
  %v4028 = vrot.slane %v3809, 4
  %v4029 = vrot.slane %v3809, 5
  %v4030 = vrot.slane %v3809, 6
  %v4031 = vrot.slane %v3809, 7
  %v4032 = vrot.slane %v3835, 1
  %v4033 = vrot.slane %v3835, 2
  %v4034 = vrot.slane %v3835, 3
  %v4035 = vrot.slane %v3835, 4
  %v4036 = vrot.slane %v3835, 5
  %v4037 = vrot.slane %v3835, 6
  %v4038 = vrot.slane %v3835, 7
  %v4039 = vrot.slane %v3838, 1
  %v4040 = vrot.slane %v3838, 2
  %v4041 = vrot.slane %v3838, 3
  %v4042 = vrot.slane %v3838, 4
  %v4043 = vrot.slane %v3838, 5
  %v4044 = vrot.slane %v3838, 6
  %v4045 = vrot.slane %v3838, 7
  %v4078 = vmul.f32 %v3045, %v3806
  %v4079 = vmul.f32 %v3046, %v4018
  %v4080 = vmul.f32 %v3047, %v4019
  %v4081 = vmul.f32 %v3048, %v4020
  %v4082 = vmul.f32 %v3049, %v4021
  %v4083 = vmul.f32 %v3050, %v4022
  %v4084 = vmul.f32 %v3051, %v4023
  %v4085 = vmul.f32 %v3052, %v4024
  %v4086 = vmul.f32 %v3053, %v3809
  %v4087 = vmul.f32 %v3054, %v4025
  %v4088 = vmul.f32 %v3055, %v4026
  %v4089 = vmul.f32 %v3056, %v4027
  %v4090 = vmul.f32 %v3057, %v4028
  %v4091 = vmul.f32 %v3058, %v4029
  %v4092 = vmul.f32 %v3059, %v4030
  %v4093 = vmul.f32 %v3060, %v4031
  %v4094 = vmul.f32 %v3085, %v3835
  %v4095 = vmul.f32 %v3086, %v4032
  %v4096 = vmul.f32 %v3087, %v4033
  %v4097 = vmul.f32 %v3088, %v4034
  %v4098 = vmul.f32 %v3089, %v4035
  %v4099 = vmul.f32 %v3090, %v4036
  %v4100 = vmul.f32 %v3091, %v4037
  %v4101 = vmul.f32 %v3092, %v4038
  %v4102 = vmul.f32 %v3093, %v3838
  %v4103 = vmul.f32 %v3094, %v4039
  %v4104 = vmul.f32 %v3095, %v4040
  %v4105 = vmul.f32 %v3096, %v4041
  %v4106 = vmul.f32 %v3097, %v4042
  %v4107 = vmul.f32 %v3098, %v4043
  %v4108 = vmul.f32 %v3099, %v4044
  %v4109 = vmul.f32 %v3100, %v4045
  %v4114 = vrot.slane %v3950, 1
  %v4115 = vrot.slane %v3950, 2
  %v4116 = vrot.slane %v3950, 3
  %v4117 = vrot.slane %v3950, 4
  %v4118 = vrot.slane %v3950, 5
  %v4119 = vrot.slane %v3950, 6
  %v4120 = vrot.slane %v3950, 7
  %v4121 = vrot.slane %v3953, 1
  %v4122 = vrot.slane %v3953, 2
  %v4123 = vrot.slane %v3953, 3
  %v4124 = vrot.slane %v3953, 4
  %v4125 = vrot.slane %v3953, 5
  %v4126 = vrot.slane %v3953, 6
  %v4127 = vrot.slane %v3953, 7
  %v4128 = vrot.slane %v4009, 1
  %v4129 = vrot.slane %v4009, 2
  %v4130 = vrot.slane %v4009, 3
  %v4131 = vrot.slane %v4009, 4
  %v4132 = vrot.slane %v4009, 5
  %v4133 = vrot.slane %v4009, 6
  %v4134 = vrot.slane %v4009, 7
  %v4135 = vrot.slane %v4012, 1
  %v4136 = vrot.slane %v4012, 2
  %v4137 = vrot.slane %v4012, 3
  %v4138 = vrot.slane %v4012, 4
  %v4139 = vrot.slane %v4012, 5
  %v4140 = vrot.slane %v4012, 6
  %v4141 = vrot.slane %v4012, 7
  %v4174 = vmul.f32 %v3045, %v3950
  %v4175 = vmul.f32 %v3046, %v4114
  %v4176 = vmul.f32 %v3047, %v4115
  %v4177 = vmul.f32 %v3048, %v4116
  %v4178 = vmul.f32 %v3049, %v4117
  %v4179 = vmul.f32 %v3050, %v4118
  %v4180 = vmul.f32 %v3051, %v4119
  %v4181 = vmul.f32 %v3052, %v4120
  %v4182 = vmul.f32 %v3053, %v3953
  %v4183 = vmul.f32 %v3054, %v4121
  %v4184 = vmul.f32 %v3055, %v4122
  %v4185 = vmul.f32 %v3056, %v4123
  %v4186 = vmul.f32 %v3057, %v4124
  %v4187 = vmul.f32 %v3058, %v4125
  %v4188 = vmul.f32 %v3059, %v4126
  %v4189 = vmul.f32 %v3060, %v4127
  %v4190 = vmul.f32 %v3085, %v4009
  %v4191 = vmul.f32 %v3086, %v4128
  %v4192 = vmul.f32 %v3087, %v4129
  %v4193 = vmul.f32 %v3088, %v4130
  %v4194 = vmul.f32 %v3089, %v4131
  %v4195 = vmul.f32 %v3090, %v4132
  %v4196 = vmul.f32 %v3091, %v4133
  %v4197 = vmul.f32 %v3092, %v4134
  %v4198 = vmul.f32 %v3093, %v4012
  %v4199 = vmul.f32 %v3094, %v4135
  %v4200 = vmul.f32 %v3095, %v4136
  %v4201 = vmul.f32 %v3096, %v4137
  %v4202 = vmul.f32 %v3097, %v4138
  %v4203 = vmul.f32 %v3098, %v4139
  %v4204 = vmul.f32 %v3099, %v4140
  %v4205 = vmul.f32 %v3100, %v4141
  %4206 = vrot.lane.b32.xlu0 %v3806, 16
  %v4207 = vpop.permute.xlu0 %4206
  %4208 = vrot.lane.b32.xlu0 %v3809, 16
  %v4209 = vpop.permute.xlu0 %4208
  %4210 = vrot.lane.b32.xlu0 %v3835, 16
  %v4211 = vpop.permute.xlu0 %4210
  %4212 = vrot.lane.b32.xlu0 %v3838, 16
  %v4213 = vpop.permute.xlu0 %4212
  %v4250 = vrot.slane %v4079, 7
  %v4251 = vsel %vm3220, %v4250, %v4078
  %v4252 = vrot.slane %v4080, 6
  %v4253 = vsel %vm3223, %v4252, %v4251
  %v4254 = vrot.slane %v4081, 5
  %v4255 = vsel %vm3226, %v4254, %v4253
  %v4256 = vrot.slane %v4082, 4
  %v4257 = vsel %vm3229, %v4256, %v4255
  %v4258 = vrot.slane %v4083, 3
  %v4259 = vsel %vm3232, %v4258, %v4257
  %v4260 = vrot.slane %v4084, 2
  %v4261 = vsel %vm3235, %v4260, %v4259
  %v4262 = vrot.slane %v4085, 1
  %v4263 = vsel %vm3238, %v4262, %v4261
  %v4264 = vrot.slane %v4087, 7
  %v4265 = vsel %vm3220, %v4264, %v4086
  %v4266 = vrot.slane %v4088, 6
  %v4267 = vsel %vm3223, %v4266, %v4265
  %v4268 = vrot.slane %v4089, 5
  %v4269 = vsel %vm3226, %v4268, %v4267
  %v4270 = vrot.slane %v4090, 4
  %v4271 = vsel %vm3229, %v4270, %v4269
  %v4272 = vrot.slane %v4091, 3
  %v4273 = vsel %vm3232, %v4272, %v4271
  %v4274 = vrot.slane %v4092, 2
  %v4275 = vsel %vm3235, %v4274, %v4273
  %v4276 = vrot.slane %v4093, 1
  %v4277 = vsel %vm3238, %v4276, %v4275
  %v4278 = vrot.slane %v4095, 7
  %v4279 = vsel %vm3220, %v4278, %v4094
  %v4280 = vrot.slane %v4096, 6
  %v4281 = vsel %vm3223, %v4280, %v4279
  %v4282 = vrot.slane %v4097, 5
  %v4283 = vsel %vm3226, %v4282, %v4281
  %v4284 = vrot.slane %v4098, 4
  %v4285 = vsel %vm3229, %v4284, %v4283
  %v4286 = vrot.slane %v4099, 3
  %v4287 = vsel %vm3232, %v4286, %v4285
  %v4288 = vrot.slane %v4100, 2
  %v4289 = vsel %vm3235, %v4288, %v4287
  %v4290 = vrot.slane %v4101, 1
  %v4291 = vsel %vm3238, %v4290, %v4289
  %v4292 = vrot.slane %v4103, 7
  %v4293 = vsel %vm3220, %v4292, %v4102
  %v4294 = vrot.slane %v4104, 6
  %v4295 = vsel %vm3223, %v4294, %v4293
  %v4296 = vrot.slane %v4105, 5
  %v4297 = vsel %vm3226, %v4296, %v4295
  %v4298 = vrot.slane %v4106, 4
  %v4299 = vsel %vm3229, %v4298, %v4297
  %v4300 = vrot.slane %v4107, 3
  %v4301 = vsel %vm3232, %v4300, %v4299
  %v4302 = vrot.slane %v4108, 2
  %v4303 = vsel %vm3235, %v4302, %v4301
  %v4304 = vrot.slane %v4109, 1
  %v4305 = vsel %vm3238, %v4304, %v4303
  %4306 = vrot.lane.b32.xlu0 %v4263, 32
  %v4307 = vpop.permute.xlu0 %4306
  %4308 = vrot.lane.b32.xlu0 %v4277, 32
  %v4309 = vpop.permute.xlu0 %4308
  %4310 = vrot.lane.b32.xlu0 %v4291, 32
  %v4311 = vpop.permute.xlu0 %4310
  %4312 = vrot.lane.b32.xlu0 %v4305, 32
  %v4313 = vpop.permute.xlu0 %4312
  %v4350 = vrot.slane %v4175, 7
  %v4351 = vsel %vm3220, %v4350, %v4174
  %v4352 = vrot.slane %v4176, 6
  %v4353 = vsel %vm3223, %v4352, %v4351
  %v4354 = vrot.slane %v4177, 5
  %v4355 = vsel %vm3226, %v4354, %v4353
  %v4356 = vrot.slane %v4178, 4
  %v4357 = vsel %vm3229, %v4356, %v4355
  %v4358 = vrot.slane %v4179, 3
  %v4359 = vsel %vm3232, %v4358, %v4357
  %v4360 = vrot.slane %v4180, 2
  %v4361 = vsel %vm3235, %v4360, %v4359
  %v4362 = vrot.slane %v4181, 1
  %v4363 = vsel %vm3238, %v4362, %v4361
  %v4364 = vrot.slane %v4183, 7
  %v4365 = vsel %vm3220, %v4364, %v4182
  %v4366 = vrot.slane %v4184, 6
  %v4367 = vsel %vm3223, %v4366, %v4365
  %v4368 = vrot.slane %v4185, 5
  %v4369 = vsel %vm3226, %v4368, %v4367
  %v4370 = vrot.slane %v4186, 4
  %v4371 = vsel %vm3229, %v4370, %v4369
  %v4372 = vrot.slane %v4187, 3
  %v4373 = vsel %vm3232, %v4372, %v4371
  %v4374 = vrot.slane %v4188, 2
  %v4375 = vsel %vm3235, %v4374, %v4373
  %v4376 = vrot.slane %v4189, 1
  %v4377 = vsel %vm3238, %v4376, %v4375
  %v4378 = vrot.slane %v4191, 7
  %v4379 = vsel %vm3220, %v4378, %v4190
  %v4380 = vrot.slane %v4192, 6
  %v4381 = vsel %vm3223, %v4380, %v4379
  %v4382 = vrot.slane %v4193, 5
  %v4383 = vsel %vm3226, %v4382, %v4381
  %v4384 = vrot.slane %v4194, 4
  %v4385 = vsel %vm3229, %v4384, %v4383
  %v4386 = vrot.slane %v4195, 3
  %v4387 = vsel %vm3232, %v4386, %v4385
  %v4388 = vrot.slane %v4196, 2
  %v4389 = vsel %vm3235, %v4388, %v4387
  %v4390 = vrot.slane %v4197, 1
  %v4391 = vsel %vm3238, %v4390, %v4389
  %v4392 = vrot.slane %v4199, 7
  %v4393 = vsel %vm3220, %v4392, %v4198
  %v4394 = vrot.slane %v4200, 6
  %v4395 = vsel %vm3223, %v4394, %v4393
  %v4396 = vrot.slane %v4201, 5
  %v4397 = vsel %vm3226, %v4396, %v4395
  %v4398 = vrot.slane %v4202, 4
  %v4399 = vsel %vm3229, %v4398, %v4397
  %v4400 = vrot.slane %v4203, 3
  %v4401 = vsel %vm3232, %v4400, %v4399
  %v4402 = vrot.slane %v4204, 2
  %v4403 = vsel %vm3235, %v4402, %v4401
  %v4404 = vrot.slane %v4205, 1
  %v4405 = vsel %vm3238, %v4404, %v4403
  %4406 = vrot.lane.b32.xlu0 %v4363, 48
  %v4407 = vpop.permute.xlu0 %4406
  %4408 = vrot.lane.b32.xlu0 %v4377, 48
  %v4409 = vpop.permute.xlu0 %4408
  %4410 = vrot.lane.b32.xlu0 %v4391, 48
  %v4411 = vpop.permute.xlu0 %4410
  %4412 = vrot.lane.b32.xlu0 %v4405, 48
  %v4413 = vpop.permute.xlu0 %4412
  %v4418 = vsel %vm266, %v3910, %v4207
  %v4419 = vsel %vm266, %v3923, %v4209
  %v4420 = vsel %vm266, %v3968, %v4211
  %v4421 = vsel %vm266, %v3982, %v4213
  %vm4422 = vcmask 261120
  %v4423 = vsel %vm4422, %v4418, %v4307
  %v4424 = vsel %vm4422, %v4419, %v4309
  %v4425 = vsel %vm4422, %v4420, %v4311
  %v4426 = vsel %vm4422, %v4421, %v4313
  %vm4427 = vcmask 392192
  %v4428 = vsel %vm4427, %v4423, %v4407
  %v4429 = vsel %vm4427, %v4424, %v4409
  %v4430 = vsel %vm4427, %v4425, %v4411
  %v4431 = vsel %vm4427, %v4426, %v4413
  %4434 = vrot.lane.b32.xlu0 %v4430, 64
  %v4435 = vpop.permute.xlu0 %4434
  %4436 = vrot.lane.b32.xlu0 %v4431, 64
  %v4437 = vpop.permute.xlu0 %4436
  %vm4440 = vcmask 523264
  %v4441 = vsel %vm4440, %v4428, %v4435
  %v4442 = vsel %vm4440, %v4429, %v4437
  %4443 = vst [vmem:[%s14] sm:$0xff] %v4441
  %4444 = vst [vmem:[%s14 + $0x8] sm:$0xff] %v4442
  // Predicated region
  $region58: #{bidaf_forward.1} parent=0 // pred_check
    _
  $region59: #{bidaf_forward.1} parent=0 // pred_check_branch
    %4446 = sbr.rel (0) target = $region61
  $region60: #{bidaf_forward.1} parent=0 // pred_region
    _
  $region61: #{bidaf_forward.1} parent=0 // pred_fallthru
    _
  // Predicated region
  $region62: #{bidaf_forward.1} parent=0 // pred_check
    _
  $region63: #{bidaf_forward.1} parent=0 // pred_check_branch
    %4448 = sbr.rel (0) target = $region65
  $region64: #{bidaf_forward.1} parent=0 // pred_region
    _
  $region65: #{bidaf_forward.1} parent=0 // pred_fallthru
    _

</llo_original>
